<compile_context>
chip_gen: v7x
topology: tpu7x:2x2x1
jax: 0.10.0
libtpu: 0.0.40
codegen_flags: <defaults>
</compile_context>

<pallas_src>
import functools

import jax
import jax.numpy as jnp
from jax.experimental import pallas as pl
from jax.experimental.pallas import tpu as pltpu


def _mlp_kernel(x_ref, w1_ref, b1_ref, w2_ref, b2_ref, w3_ref, b3_ref, o_ref):
    # Layer 1: (tb, 9) @ (9, 64) + (1, 64) -> ReLU   (MXU + VPU)
    h1 = jnp.dot(x_ref[...], w1_ref[...], preferred_element_type=jnp.float32)
    h1 = jnp.maximum(h1 + b1_ref[...], 0.0)
    # Dropout(0.2) in eval mode == identity.
    # Layer 2: (tb, 64) @ (64, 32) + (1, 32) -> ReLU  (MXU + VPU)
    h2 = jnp.dot(h1, w2_ref[...], preferred_element_type=jnp.float32)
    h2 = jnp.maximum(h2 + b2_ref[...], 0.0)
    # Layer 3 (32 -> 1): VPU multiply + lane reduction instead of a (tb,32)@(32,1)
    # MXU dot, written lane-dense with batch on the lane axis.
    y = jnp.sum(h2 * w3_ref[...], axis=-1)                        # (tb,)
    o_ref[...] = (y[None, :] + b3_ref[...]).astype(o_ref.dtype)   # (1, tb)


@functools.partial(jax.jit, static_argnames=("block_b",))
def wind_speed_predictor(x, params, block_b=1024):
    """x: (B, 9) float32 -> (B, 1) float32."""
    w1, b1, w2, b2, w3, b3 = params
    B, F = x.shape
    assert F == 9
    assert block_b % 128 == 0, "block_b must be a multiple of 128 (lane-dense output)"

    # Pad the batch up to a multiple of block_b; padded rows are dropped below.
    num_blocks = (B + block_b - 1) // block_b
    B_pad = num_blocks * block_b
    if B_pad != B:
        x = jnp.pad(x, ((0, B_pad - B), (0, 0)))

    # Final-layer weight as a (1, 32) row vector for the VPU formulation.
    w3_row = w3.reshape(1, 32)

    # Weights/biases are tiny; pass them as whole-array resident blocks.
    full = lambda shape: pl.BlockSpec(shape, lambda i: (0, 0))

    flops = 2 * B_pad * (9 * 64 + 64 * 32 + 32 * 1)
    bytes_accessed = 4 * (B_pad * 9 + B_pad + 9 * 64 + 64 + 64 * 32 + 32 + 32 + 1)

    out = pl.pallas_call(
        _mlp_kernel,
        out_shape=jax.ShapeDtypeStruct((1, B_pad), jnp.float32),
        grid_spec=pltpu.PrefetchScalarGridSpec(
            num_scalar_prefetch=0,
            grid=(num_blocks,),
            in_specs=[
                pl.BlockSpec((block_b, 9), lambda i: (i, 0)),   # x tile (batch on sublanes)
                full((9, 64)),                                  # w1
                full((1, 64)),                                  # b1
                full((64, 32)),                                 # w2
                full((1, 32)),                                  # b2
                full((1, 32)),                                  # w3 (row)
                full((1, 1)),                                   # b3
            ],
            # Lane-dense output: batch lives on the lane axis.
            out_specs=pl.BlockSpec((1, block_b), lambda i: (0, i)),
        ),
        compiler_params=pltpu.CompilerParams(
            dimension_semantics=("parallel",),
        ),
        cost_estimate=pl.CostEstimate(
            flops=flops, transcendentals=0, bytes_accessed=bytes_accessed),
    )(x, w1, b1, w2, b2, w3_row, b3)

    # (1, B_pad) lane-major -> (B, 1), dropping padded rows.
    return out[0, :B][:, None]


def init_params(key):
    """Deterministic init matching PyTorch nn.Linear default shapes.

    Weights stored transposed relative to PyTorch ((in, out) instead of
    (out, in)) so the kernel does x @ W.
    """
    dims = [(9, 64), (64, 32), (32, 1)]
    params = []
    for (fan_in, fan_out) in dims:
        key, kw, kb = jax.random.split(key, 3)
        bound = 1.0 / jnp.sqrt(fan_in)
        w = jax.random.uniform(kw, (fan_in, fan_out), jnp.float32, -bound, bound)
        b = jax.random.uniform(kb, (1, fan_out), jnp.float32, -bound, bound)
        params += [w, b]
    return tuple(params)


def reference_forward(x, params):
    w1, b1, w2, b2, w3, b3 = params
    h1 = jnp.maximum(x @ w1 + b1, 0.0)
    h2 = jnp.maximum(h1 @ w2 + b2, 0.0)
    return h2 @ w3 + b3


if __name__ == "__main__":
    key = jax.random.PRNGKey(0)
    key, kx = jax.random.split(key)
    params = init_params(key)

    # Small, ragged batch: exercises the padding path (200 -> 1024 with the default
    # block) and, with block_b=128, a multi-step "parallel" grid (2 steps).
    B = 200
    x = jax.random.normal(kx, (B, 9), jnp.float32)
    ref = reference_forward(x, params)

    out_default = jax.block_until_ready(wind_speed_predictor(x, params))
    out_small = jax.block_until_ready(wind_speed_predictor(x, params, block_b=128))

    for out in (out_default, out_small):
        assert out.shape == (B, 1), out.shape
        assert jnp.allclose(out, ref, atol=1e-5, rtol=1e-5), (
            f"max abs err {jnp.max(jnp.abs(out - ref))}"
        )

    print("KERNEL_OK")
</pallas_src>

<mosaic_0001>
module attributes {stable_mosaic.version = 11 : i64} {
  func.func @_mlp_kernel(%arg0: i32, %arg1: memref<1024x9xf32, #tpu.memory_space<vmem>>, %arg2: memref<9x64xf32, #tpu.memory_space<vmem>>, %arg3: memref<1x64xf32, #tpu.memory_space<vmem>>, %arg4: memref<64x32xf32, #tpu.memory_space<vmem>>, %arg5: memref<1x32xf32, #tpu.memory_space<vmem>>, %arg6: memref<1x32xf32, #tpu.memory_space<vmem>>, %arg7: memref<1x1xf32, #tpu.memory_space<vmem>>, %arg8: memref<1x1024xf32, #tpu.memory_space<vmem>>) attributes {dimension_semantics = [#tpu.dimension_semantics<parallel>], iteration_bounds = array<i64: 1>, scalar_prefetch = 0 : i64, scratch_operands = 0 : i64, tpu.core_type = #tpu.core_type<tc>, window_params = [{transform_indices = @transform_0, window_bounds = array<i64: 1024, 9>}, {pipeline_mode = #tpu.pipeline_mode<synchronous>, transform_indices = @transform_1, window_bounds = array<i64: 9, 64>}, {pipeline_mode = #tpu.pipeline_mode<synchronous>, transform_indices = @transform_2, window_bounds = array<i64: 1, 64>}, {pipeline_mode = #tpu.pipeline_mode<synchronous>, transform_indices = @transform_3, window_bounds = array<i64: 64, 32>}, {pipeline_mode = #tpu.pipeline_mode<synchronous>, transform_indices = @transform_4, window_bounds = array<i64: 1, 32>}, {pipeline_mode = #tpu.pipeline_mode<synchronous>, transform_indices = @transform_5, window_bounds = array<i64: 1, 32>}, {pipeline_mode = #tpu.pipeline_mode<synchronous>, transform_indices = @transform_6, window_bounds = array<i64: 1, 1>}, {transform_indices = @transform_7, window_bounds = array<i64: 1, 1024>}]} {
    %c0 = arith.constant 0 : index
    %c0_0 = arith.constant 0 : index
    %0 = vector.load %arg1[%c0, %c0_0] : memref<1024x9xf32, #tpu.memory_space<vmem>>, vector<1024x9xf32>
    %c0_1 = arith.constant 0 : index
    %c0_2 = arith.constant 0 : index
    %1 = vector.load %arg2[%c0_1, %c0_2] : memref<9x64xf32, #tpu.memory_space<vmem>>, vector<9x64xf32>
    %cst = arith.constant dense<0.000000e+00> : vector<1024x64xf32>
    %2 = tpu.matmul %0, %1, %cst {dimension_numbers = #tpu.dot_dimension_numbers<[1], [0], [0], [1], [0, 0, 1, 1], [], []>} : vector<1024x9xf32>, vector<9x64xf32>, vector<1024x64xf32> -> vector<1024x64xf32>
    %c0_3 = arith.constant 0 : index
    %c0_4 = arith.constant 0 : index
    %3 = vector.load %arg3[%c0_3, %c0_4] : memref<1x64xf32, #tpu.memory_space<vmem>>, vector<1x64xf32>
    %4 = vector.broadcast %3 : vector<1x64xf32> to vector<1024x64xf32>
    %5 = arith.addf %2, %4 : vector<1024x64xf32>
    %cst_5 = arith.constant 0.000000e+00 : f32
    %6 = vector.broadcast %cst_5 : f32 to vector<1024x64xf32>
    %7 = arith.maximumf %5, %6 : vector<1024x64xf32>
    %c0_6 = arith.constant 0 : index
    %c0_7 = arith.constant 0 : index
    %8 = vector.load %arg4[%c0_6, %c0_7] : memref<64x32xf32, #tpu.memory_space<vmem>>, vector<64x32xf32>
    %cst_8 = arith.constant dense<0.000000e+00> : vector<1024x32xf32>
    %9 = tpu.matmul %7, %8, %cst_8 {dimension_numbers = #tpu.dot_dimension_numbers<[1], [0], [0], [1], [0, 0, 1, 1], [], []>} : vector<1024x64xf32>, vector<64x32xf32>, vector<1024x32xf32> -> vector<1024x32xf32>
    %c0_9 = arith.constant 0 : index
    %c0_10 = arith.constant 0 : index
    %10 = vector.load %arg5[%c0_9, %c0_10] : memref<1x32xf32, #tpu.memory_space<vmem>>, vector<1x32xf32>
    %11 = vector.broadcast %10 : vector<1x32xf32> to vector<1024x32xf32>
    %12 = arith.addf %9, %11 : vector<1024x32xf32>
    %cst_11 = arith.constant 0.000000e+00 : f32
    %13 = vector.broadcast %cst_11 : f32 to vector<1024x32xf32>
    %14 = arith.maximumf %12, %13 : vector<1024x32xf32>
    %c0_12 = arith.constant 0 : index
    %c0_13 = arith.constant 0 : index
    %15 = vector.load %arg6[%c0_12, %c0_13] : memref<1x32xf32, #tpu.memory_space<vmem>>, vector<1x32xf32>
    %16 = vector.broadcast %15 : vector<1x32xf32> to vector<1024x32xf32>
    %17 = arith.mulf %14, %16 : vector<1024x32xf32>
    %cst_14 = arith.constant dense<0.000000e+00> : vector<1024xf32>
    %18 = vector.multi_reduction <add>, %17, %cst_14 [1] : vector<1024x32xf32> to vector<1024xf32>
    %19 = vector.shape_cast %18 : vector<1024xf32> to vector<1x1024xf32>
    %c0_15 = arith.constant 0 : index
    %c0_16 = arith.constant 0 : index
    %20 = vector.load %arg7[%c0_15, %c0_16] : memref<1x1xf32, #tpu.memory_space<vmem>>, vector<1x1xf32>
    %21 = vector.broadcast %20 : vector<1x1xf32> to vector<1x1024xf32>
    %22 = arith.addf %19, %21 : vector<1x1024xf32>
    %c0_17 = arith.constant 0 : index
    %c0_18 = arith.constant 0 : index
    %23 = vector.load %arg8[%c0_17, %c0_18] : memref<1x1024xf32, #tpu.memory_space<vmem>>, vector<1x1024xf32>
    tpu.vector_store %arg8[%c0_17, %c0_18], %22 {strides = array<i32>} : memref<1x1024xf32, #tpu.memory_space<vmem>>, vector<1x1024xf32>,
    return
  }
  func.func @transform_0(%arg0: i32) -> (i32, i32) {
    %c0_i32 = arith.constant 0 : i32
    %c0_i32_0 = arith.constant 0 : i32
    return %arg0, %c0_i32 : i32, i32
  }
  func.func @transform_1(%arg0: i32) -> (i32, i32) {
    %c0_i32 = arith.constant 0 : i32
    %c0_i32_0 = arith.constant 0 : i32
    %c0_i32_1 = arith.constant 0 : i32
    return %c0_i32, %c0_i32_0 : i32, i32
  }
  func.func @transform_2(%arg0: i32) -> (i32, i32) {
    %c0_i32 = arith.constant 0 : i32
    %c0_i32_0 = arith.constant 0 : i32
    %c0_i32_1 = arith.constant 0 : i32
    return %c0_i32, %c0_i32_0 : i32, i32
  }
  func.func @transform_3(%arg0: i32) -> (i32, i32) {
    %c0_i32 = arith.constant 0 : i32
    %c0_i32_0 = arith.constant 0 : i32
    %c0_i32_1 = arith.constant 0 : i32
    return %c0_i32, %c0_i32_0 : i32, i32
  }
  func.func @transform_4(%arg0: i32) -> (i32, i32) {
    %c0_i32 = arith.constant 0 : i32
    %c0_i32_0 = arith.constant 0 : i32
    %c0_i32_1 = arith.constant 0 : i32
    return %c0_i32, %c0_i32_0 : i32, i32
  }
  func.func @transform_5(%arg0: i32) -> (i32, i32) {
    %c0_i32 = arith.constant 0 : i32
    %c0_i32_0 = arith.constant 0 : i32
    %c0_i32_1 = arith.constant 0 : i32
    return %c0_i32, %c0_i32_0 : i32, i32
  }
  func.func @transform_6(%arg0: i32) -> (i32, i32) {
    %c0_i32 = arith.constant 0 : i32
    %c0_i32_0 = arith.constant 0 : i32
    %c0_i32_1 = arith.constant 0 : i32
    return %c0_i32, %c0_i32_0 : i32, i32
  }
  func.func @transform_7(%arg0: i32) -> (i32, i32) {
    %c0_i32 = arith.constant 0 : i32
    %c0_i32_0 = arith.constant 0 : i32
    return %c0_i32, %arg0 : i32, i32
  }
}

</mosaic_0001>

<llo_original>
// kernel: wind_speed_predictor.1
$region0: #{wind_speed_predictor.1}
  #allocation0 [shape = 'u32[]', space=smem, size = 0x4, offset = 0x4, fixed_abs, tag = 'smem constant byte address 0x4 - core index']
  #allocation1 [shape = 'u32[144,128]{1,0:T(1,128)}', space=vmem, size = 0x12000, scoped, tag = 'internal scratch']
  #allocation2 [shape = 'f32[1,1]{1,0:T(1,128)S(1)}', space=vmem, size = 0x200, scoped, tag = 'scoped memory for wind_speed_predictor.1']
  %s0 = inlined_call_operand.vmem [shape: f32[1024,9], index: 0, kind: input, shape index: {}]
  %s1 = inlined_call_operand.vmem [shape: f32[9,64], index: 1, kind: input, shape index: {}]
  %s2 = inlined_call_operand.vmem [shape: f32[1,64], index: 2, kind: input, shape index: {}]
  %s3 = inlined_call_operand.vmem [shape: f32[64,32], index: 3, kind: input, shape index: {}]
  %s4 = inlined_call_operand.vmem [shape: f32[1,32], index: 4, kind: input, shape index: {}]
  %s5 = inlined_call_operand.vmem [shape: f32[1,32], index: 5, kind: input, shape index: {}]
  %s6 = inlined_call_operand.<no memory space> [shape: f32[1,1], index: 6, kind: input, shape index: {}]
  %s7 = inlined_call_operand.vmem [shape: f32[1,1024], index: 7, kind: output, shape index: {}]
  %s8 = sld [smem:[#allocation0]]
  $region38: #{wind_speed_predictor.1} parent=0
    _
  %s10 = ssub.s32 1, %s8
  %s11 = scalar_select 0, %s10, %s8
  %v12 = vstv %s6
  %13 = vst [vmem:[#allocation2] sm:$0x1] %v12
  // Predicated region
  $region2: #{wind_speed_predictor.1} parent=0 // pred_check
    _
  $region3: #{wind_speed_predictor.1} parent=0 // pred_check_branch
    %15 = sbr.rel (0) target = $region5
  $region4: #{wind_speed_predictor.1} parent=0 // pred_region
    _
  $region5: #{wind_speed_predictor.1} parent=0 // pred_fallthru
    _
  // Predicated region
  $region6: #{wind_speed_predictor.1} parent=0 // pred_check
    _
  $region7: #{wind_speed_predictor.1} parent=0 // pred_check_branch
    %17 = sbr.rel (0) target = $region9
  $region8: #{wind_speed_predictor.1} parent=0 // pred_region
    _
  $region9: #{wind_speed_predictor.1} parent=0 // pred_fallthru
    _
  // Predicated region
  $region10: #{wind_speed_predictor.1} parent=0 // pred_check
    _
  $region11: #{wind_speed_predictor.1} parent=0 // pred_check_branch
    %19 = sbr.rel (0) target = $region13
  $region12: #{wind_speed_predictor.1} parent=0 // pred_region
    _
  $region13: #{wind_speed_predictor.1} parent=0 // pred_fallthru
    _
  // Predicated region
  $region14: #{wind_speed_predictor.1} parent=0 // pred_check
    _
  $region15: #{wind_speed_predictor.1} parent=0 // pred_check_branch
    %21 = sbr.rel (0) target = $region17
  $region16: #{wind_speed_predictor.1} parent=0 // pred_region
    _
  $region17: #{wind_speed_predictor.1} parent=0 // pred_fallthru
    _
  // Predicated region
  $region18: #{wind_speed_predictor.1} parent=0 // pred_check
    _
  $region19: #{wind_speed_predictor.1} parent=0 // pred_check_branch
    %23 = sbr.rel (0) target = $region21
  $region20: #{wind_speed_predictor.1} parent=0 // pred_region
    _
  $region21: #{wind_speed_predictor.1} parent=0 // pred_fallthru
    _
  // Predicated region
  $region22: #{wind_speed_predictor.1} parent=0 // pred_check
    _
  $region23: #{wind_speed_predictor.1} parent=0 // pred_check_branch
    %25 = sbr.rel (0) target = $region25
  $region24: #{wind_speed_predictor.1} parent=0 // pred_region
    _
  $region25: #{wind_speed_predictor.1} parent=0 // pred_fallthru
    _
  // Predicated region
  $region26: #{wind_speed_predictor.1} parent=0 // pred_check
    _
  $region27: #{wind_speed_predictor.1} parent=0 // pred_check_branch
    %27 = sbr.rel (0) target = $region29
  $region28: #{wind_speed_predictor.1} parent=0 // pred_region
    _
  $region29: #{wind_speed_predictor.1} parent=0 // pred_fallthru
    _
  %v28 = vld [vmem:[%s0] sm:$0xff]
  %v29 = vld [vmem:[%s0 + $0x8] sm:$0xff]
  %v30 = vld [vmem:[%s0 + $0x10] sm:$0xff]
  %v31 = vld [vmem:[%s0 + $0x18] sm:$0xff]
  %v32 = vld [vmem:[%s0 + $0x20] sm:$0xff]
  %v33 = vld [vmem:[%s0 + $0x28] sm:$0xff]
  %v34 = vld [vmem:[%s0 + $0x30] sm:$0xff]
  %v35 = vld [vmem:[%s0 + $0x38] sm:$0xff]
  %v36 = vld [vmem:[%s0 + $0x40] sm:$0xff]
  %v37 = vld [vmem:[%s0 + $0x48] sm:$0xff]
  %v38 = vld [vmem:[%s0 + $0x50] sm:$0xff]
  %v39 = vld [vmem:[%s0 + $0x58] sm:$0xff]
  %v40 = vld [vmem:[%s0 + $0x60] sm:$0xff]
  %v41 = vld [vmem:[%s0 + $0x68] sm:$0xff]
  %v42 = vld [vmem:[%s0 + $0x70] sm:$0xff]
  %v43 = vld [vmem:[%s0 + $0x78] sm:$0xff]
  %v44 = vld [vmem:[%s0 + $0x80] sm:$0xff]
  %v45 = vld [vmem:[%s0 + $0x88] sm:$0xff]
  %v46 = vld [vmem:[%s0 + $0x90] sm:$0xff]
  %v47 = vld [vmem:[%s0 + $0x98] sm:$0xff]
  %v48 = vld [vmem:[%s0 + $0xa0] sm:$0xff]
  %v49 = vld [vmem:[%s0 + $0xa8] sm:$0xff]
  %v50 = vld [vmem:[%s0 + $0xb0] sm:$0xff]
  %v51 = vld [vmem:[%s0 + $0xb8] sm:$0xff]
  %v52 = vld [vmem:[%s0 + $0xc0] sm:$0xff]
  %v53 = vld [vmem:[%s0 + $0xc8] sm:$0xff]
  %v54 = vld [vmem:[%s0 + $0xd0] sm:$0xff]
  %v55 = vld [vmem:[%s0 + $0xd8] sm:$0xff]
  %v56 = vld [vmem:[%s0 + $0xe0] sm:$0xff]
  %v57 = vld [vmem:[%s0 + $0xe8] sm:$0xff]
  %v58 = vld [vmem:[%s0 + $0xf0] sm:$0xff]
  %v59 = vld [vmem:[%s0 + $0xf8] sm:$0xff]
  %v60 = vld [vmem:[%s0 + $0x100] sm:$0xff]
  %v61 = vld [vmem:[%s0 + $0x108] sm:$0xff]
  %v62 = vld [vmem:[%s0 + $0x110] sm:$0xff]
  %v63 = vld [vmem:[%s0 + $0x118] sm:$0xff]
  %v64 = vld [vmem:[%s0 + $0x120] sm:$0xff]
  %v65 = vld [vmem:[%s0 + $0x128] sm:$0xff]
  %v66 = vld [vmem:[%s0 + $0x130] sm:$0xff]
  %v67 = vld [vmem:[%s0 + $0x138] sm:$0xff]
  %v68 = vld [vmem:[%s0 + $0x140] sm:$0xff]
  %v69 = vld [vmem:[%s0 + $0x148] sm:$0xff]
  %v70 = vld [vmem:[%s0 + $0x150] sm:$0xff]
  %v71 = vld [vmem:[%s0 + $0x158] sm:$0xff]
  %v72 = vld [vmem:[%s0 + $0x160] sm:$0xff]
  %v73 = vld [vmem:[%s0 + $0x168] sm:$0xff]
  %v74 = vld [vmem:[%s0 + $0x170] sm:$0xff]
  %v75 = vld [vmem:[%s0 + $0x178] sm:$0xff]
  %v76 = vld [vmem:[%s0 + $0x180] sm:$0xff]
  %v77 = vld [vmem:[%s0 + $0x188] sm:$0xff]
  %v78 = vld [vmem:[%s0 + $0x190] sm:$0xff]
  %v79 = vld [vmem:[%s0 + $0x198] sm:$0xff]
  %v80 = vld [vmem:[%s0 + $0x1a0] sm:$0xff]
  %v81 = vld [vmem:[%s0 + $0x1a8] sm:$0xff]
  %v82 = vld [vmem:[%s0 + $0x1b0] sm:$0xff]
  %v83 = vld [vmem:[%s0 + $0x1b8] sm:$0xff]
  %v84 = vld [vmem:[%s0 + $0x1c0] sm:$0xff]
  %v85 = vld [vmem:[%s0 + $0x1c8] sm:$0xff]
  %v86 = vld [vmem:[%s0 + $0x1d0] sm:$0xff]
  %v87 = vld [vmem:[%s0 + $0x1d8] sm:$0xff]
  %v88 = vld [vmem:[%s0 + $0x1e0] sm:$0xff]
  %v89 = vld [vmem:[%s0 + $0x1e8] sm:$0xff]
  %v90 = vld [vmem:[%s0 + $0x1f0] sm:$0xff]
  %v91 = vld [vmem:[%s0 + $0x1f8] sm:$0xff]
  %v92 = vld [vmem:[%s0 + $0x200] sm:$0xff]
  %v93 = vld [vmem:[%s0 + $0x208] sm:$0xff]
  %v94 = vld [vmem:[%s0 + $0x210] sm:$0xff]
  %v95 = vld [vmem:[%s0 + $0x218] sm:$0xff]
  %v96 = vld [vmem:[%s0 + $0x220] sm:$0xff]
  %v97 = vld [vmem:[%s0 + $0x228] sm:$0xff]
  %v98 = vld [vmem:[%s0 + $0x230] sm:$0xff]
  %v99 = vld [vmem:[%s0 + $0x238] sm:$0xff]
  %v100 = vld [vmem:[%s0 + $0x240] sm:$0xff]
  %v101 = vld [vmem:[%s0 + $0x248] sm:$0xff]
  %v102 = vld [vmem:[%s0 + $0x250] sm:$0xff]
  %v103 = vld [vmem:[%s0 + $0x258] sm:$0xff]
  %v104 = vld [vmem:[%s0 + $0x260] sm:$0xff]
  %v105 = vld [vmem:[%s0 + $0x268] sm:$0xff]
  %v106 = vld [vmem:[%s0 + $0x270] sm:$0xff]
  %v107 = vld [vmem:[%s0 + $0x278] sm:$0xff]
  %v108 = vld [vmem:[%s0 + $0x280] sm:$0xff]
  %v109 = vld [vmem:[%s0 + $0x288] sm:$0xff]
  %v110 = vld [vmem:[%s0 + $0x290] sm:$0xff]
  %v111 = vld [vmem:[%s0 + $0x298] sm:$0xff]
  %v112 = vld [vmem:[%s0 + $0x2a0] sm:$0xff]
  %v113 = vld [vmem:[%s0 + $0x2a8] sm:$0xff]
  %v114 = vld [vmem:[%s0 + $0x2b0] sm:$0xff]
  %v115 = vld [vmem:[%s0 + $0x2b8] sm:$0xff]
  %v116 = vld [vmem:[%s0 + $0x2c0] sm:$0xff]
  %v117 = vld [vmem:[%s0 + $0x2c8] sm:$0xff]
  %v118 = vld [vmem:[%s0 + $0x2d0] sm:$0xff]
  %v119 = vld [vmem:[%s0 + $0x2d8] sm:$0xff]
  %v120 = vld [vmem:[%s0 + $0x2e0] sm:$0xff]
  %v121 = vld [vmem:[%s0 + $0x2e8] sm:$0xff]
  %v122 = vld [vmem:[%s0 + $0x2f0] sm:$0xff]
  %v123 = vld [vmem:[%s0 + $0x2f8] sm:$0xff]
  %v124 = vld [vmem:[%s0 + $0x300] sm:$0xff]
  %v125 = vld [vmem:[%s0 + $0x308] sm:$0xff]
  %v126 = vld [vmem:[%s0 + $0x310] sm:$0xff]
  %v127 = vld [vmem:[%s0 + $0x318] sm:$0xff]
  %v128 = vld [vmem:[%s0 + $0x320] sm:$0xff]
  %v129 = vld [vmem:[%s0 + $0x328] sm:$0xff]
  %v130 = vld [vmem:[%s0 + $0x330] sm:$0xff]
  %v131 = vld [vmem:[%s0 + $0x338] sm:$0xff]
  %v132 = vld [vmem:[%s0 + $0x340] sm:$0xff]
  %v133 = vld [vmem:[%s0 + $0x348] sm:$0xff]
  %v134 = vld [vmem:[%s0 + $0x350] sm:$0xff]
  %v135 = vld [vmem:[%s0 + $0x358] sm:$0xff]
  %v136 = vld [vmem:[%s0 + $0x360] sm:$0xff]
  %v137 = vld [vmem:[%s0 + $0x368] sm:$0xff]
  %v138 = vld [vmem:[%s0 + $0x370] sm:$0xff]
  %v139 = vld [vmem:[%s0 + $0x378] sm:$0xff]
  %v140 = vld [vmem:[%s0 + $0x380] sm:$0xff]
  %v141 = vld [vmem:[%s0 + $0x388] sm:$0xff]
  %v142 = vld [vmem:[%s0 + $0x390] sm:$0xff]
  %v143 = vld [vmem:[%s0 + $0x398] sm:$0xff]
  %v144 = vld [vmem:[%s0 + $0x3a0] sm:$0xff]
  %v145 = vld [vmem:[%s0 + $0x3a8] sm:$0xff]
  %v146 = vld [vmem:[%s0 + $0x3b0] sm:$0xff]
  %v147 = vld [vmem:[%s0 + $0x3b8] sm:$0xff]
  %v148 = vld [vmem:[%s0 + $0x3c0] sm:$0xff]
  %v149 = vld [vmem:[%s0 + $0x3c8] sm:$0xff]
  %v150 = vld [vmem:[%s0 + $0x3d0] sm:$0xff]
  %v151 = vld [vmem:[%s0 + $0x3d8] sm:$0xff]
  %v152 = vld [vmem:[%s0 + $0x3e0] sm:$0xff]
  %v153 = vld [vmem:[%s0 + $0x3e8] sm:$0xff]
  %v154 = vld [vmem:[%s0 + $0x3f0] sm:$0xff]
  %v155 = vld [vmem:[%s0 + $0x3f8] sm:$0xff]
  %v156 = vld [vmem:[%s1] sm:$0xff]
  %v157 = vld [vmem:[%s1 + $0x8] sm:$0x1]
  %v158 = vld [vmem:[%s2] sm:$0x1]
  %v160 = vlaneseq
  %v161 = vshrl.u32 %v160, 7
  %v162 = vsub.s32 0, %v161
  %v163 = vrot.slane %v158, %v162
  %vm165 = vcmask 72704
  %v167 = vsel %vm165, %v28, 0
  %v170 = vsel %vm165, %v29, 0
  %v173 = vsel %vm165, %v30, 0
  %v176 = vsel %vm165, %v31, 0
  %v179 = vsel %vm165, %v32, 0
  %v182 = vsel %vm165, %v33, 0
  %v185 = vsel %vm165, %v34, 0
  %v188 = vsel %vm165, %v35, 0
  %v191 = vsel %vm165, %v36, 0
  %v194 = vsel %vm165, %v37, 0
  %v197 = vsel %vm165, %v38, 0
  %v200 = vsel %vm165, %v39, 0
  %v203 = vsel %vm165, %v40, 0
  %v206 = vsel %vm165, %v41, 0
  %v209 = vsel %vm165, %v42, 0
  %v212 = vsel %vm165, %v43, 0
  %v215 = vsel %vm165, %v44, 0
  %v218 = vsel %vm165, %v45, 0
  %v221 = vsel %vm165, %v46, 0
  %v224 = vsel %vm165, %v47, 0
  %v227 = vsel %vm165, %v48, 0
  %v230 = vsel %vm165, %v49, 0
  %v233 = vsel %vm165, %v50, 0
  %v236 = vsel %vm165, %v51, 0
  %v239 = vsel %vm165, %v52, 0
  %v242 = vsel %vm165, %v53, 0
  %v245 = vsel %vm165, %v54, 0
  %v248 = vsel %vm165, %v55, 0
  %v251 = vsel %vm165, %v56, 0
  %v254 = vsel %vm165, %v57, 0
  %v257 = vsel %vm165, %v58, 0
  %v260 = vsel %vm165, %v59, 0
  %v263 = vsel %vm165, %v60, 0
  %v266 = vsel %vm165, %v61, 0
  %v269 = vsel %vm165, %v62, 0
  %v272 = vsel %vm165, %v63, 0
  %v275 = vsel %vm165, %v64, 0
  %v278 = vsel %vm165, %v65, 0
  %v281 = vsel %vm165, %v66, 0
  %v284 = vsel %vm165, %v67, 0
  %v287 = vsel %vm165, %v68, 0
  %v290 = vsel %vm165, %v69, 0
  %v293 = vsel %vm165, %v70, 0
  %v296 = vsel %vm165, %v71, 0
  %v299 = vsel %vm165, %v72, 0
  %v302 = vsel %vm165, %v73, 0
  %v305 = vsel %vm165, %v74, 0
  %v308 = vsel %vm165, %v75, 0
  %v311 = vsel %vm165, %v76, 0
  %v314 = vsel %vm165, %v77, 0
  %v317 = vsel %vm165, %v78, 0
  %v320 = vsel %vm165, %v79, 0
  %v323 = vsel %vm165, %v80, 0
  %v326 = vsel %vm165, %v81, 0
  %v329 = vsel %vm165, %v82, 0
  %v332 = vsel %vm165, %v83, 0
  %v335 = vsel %vm165, %v84, 0
  %v338 = vsel %vm165, %v85, 0
  %v341 = vsel %vm165, %v86, 0
  %v344 = vsel %vm165, %v87, 0
  %v347 = vsel %vm165, %v88, 0
  %v350 = vsel %vm165, %v89, 0
  %v353 = vsel %vm165, %v90, 0
  %v356 = vsel %vm165, %v91, 0
  %v359 = vsel %vm165, %v92, 0
  %v362 = vsel %vm165, %v93, 0
  %v365 = vsel %vm165, %v94, 0
  %v368 = vsel %vm165, %v95, 0
  %v371 = vsel %vm165, %v96, 0
  %v374 = vsel %vm165, %v97, 0
  %v377 = vsel %vm165, %v98, 0
  %v380 = vsel %vm165, %v99, 0
  %v383 = vsel %vm165, %v100, 0
  %v386 = vsel %vm165, %v101, 0
  %v389 = vsel %vm165, %v102, 0
  %v392 = vsel %vm165, %v103, 0
  %v395 = vsel %vm165, %v104, 0
  %v398 = vsel %vm165, %v105, 0
  %v401 = vsel %vm165, %v106, 0
  %v404 = vsel %vm165, %v107, 0
  %v407 = vsel %vm165, %v108, 0
  %v410 = vsel %vm165, %v109, 0
  %v413 = vsel %vm165, %v110, 0
  %v416 = vsel %vm165, %v111, 0
  %v419 = vsel %vm165, %v112, 0
  %v422 = vsel %vm165, %v113, 0
  %v425 = vsel %vm165, %v114, 0
  %v428 = vsel %vm165, %v115, 0
  %v431 = vsel %vm165, %v116, 0
  %v434 = vsel %vm165, %v117, 0
  %v437 = vsel %vm165, %v118, 0
  %v440 = vsel %vm165, %v119, 0
  %v443 = vsel %vm165, %v120, 0
  %v446 = vsel %vm165, %v121, 0
  %v449 = vsel %vm165, %v122, 0
  %v452 = vsel %vm165, %v123, 0
  %v455 = vsel %vm165, %v124, 0
  %v458 = vsel %vm165, %v125, 0
  %v461 = vsel %vm165, %v126, 0
  %v464 = vsel %vm165, %v127, 0
  %v467 = vsel %vm165, %v128, 0
  %v470 = vsel %vm165, %v129, 0
  %v473 = vsel %vm165, %v130, 0
  %v476 = vsel %vm165, %v131, 0
  %v479 = vsel %vm165, %v132, 0
  %v482 = vsel %vm165, %v133, 0
  %v485 = vsel %vm165, %v134, 0
  %v488 = vsel %vm165, %v135, 0
  %v491 = vsel %vm165, %v136, 0
  %v494 = vsel %vm165, %v137, 0
  %v497 = vsel %vm165, %v138, 0
  %v500 = vsel %vm165, %v139, 0
  %v503 = vsel %vm165, %v140, 0
  %v506 = vsel %vm165, %v141, 0
  %v509 = vsel %vm165, %v142, 0
  %v512 = vsel %vm165, %v143, 0
  %v515 = vsel %vm165, %v144, 0
  %v518 = vsel %vm165, %v145, 0
  %v521 = vsel %vm165, %v146, 0
  %v524 = vsel %vm165, %v147, 0
  %v527 = vsel %vm165, %v148, 0
  %v530 = vsel %vm165, %v149, 0
  %v533 = vsel %vm165, %v150, 0
  %v536 = vsel %vm165, %v151, 0
  %v539 = vsel %vm165, %v152, 0
  %v542 = vsel %vm165, %v153, 0
  %v545 = vsel %vm165, %v154, 0
  %v548 = vsel %vm165, %v155, 0
  %vm550 = vcmask 1040384
  %v552 = vsel %vm550, %v157, 0
  %554 = vmatprep.subr.mxu0 0.0
  %555 = vmatpush1.msra.mxu0 %v156
  %556 = vmatprep.subr.mxu0 0.0
  %557 = vmatpush1.msra.mxu0 %v552
  %558 = vmatprep.subr.mxu0 0.0
  %559 = vmatpush1.msra.mxu0 0.0
  %560 = vmatprep.subr.mxu0 0.0
  %561 = vmatpush1.msra.mxu0 0.0
  %562 = vmatprep.subr.mxu0 0.0
  %563 = vmatpush1.msra.mxu0 0.0
  %564 = vmatprep.subr.mxu0 0.0
  %565 = vmatpush1.msra.mxu0 0.0
  %566 = vmatprep.subr.mxu0 0.0
  %567 = vmatpush1.msra.mxu0 0.0
  %568 = vmatprep.subr.mxu0 0.0
  %569 = vmatpush1.msra.mxu0 0.0
  %570 = vmatprep.subr.mxu0 0.0
  %571 = vmatpush1.msra.mxu0 0.0
  %572 = vmatprep.subr.mxu0 0.0
  %573 = vmatpush1.msra.mxu0 0.0
  %574 = vmatprep.subr.mxu0 0.0
  %575 = vmatpush1.msra.mxu0 0.0
  %576 = vmatprep.subr.mxu0 0.0
  %577 = vmatpush1.msra.mxu0 0.0
  %578 = vmatprep.subr.mxu0 0.0
  %579 = vmatpush1.msra.mxu0 0.0
  %580 = vmatprep.subr.mxu0 0.0
  %581 = vmatpush1.msra.mxu0 0.0
  %582 = vmatprep.subr.mxu0 0.0
  %583 = vmatpush1.msra.mxu0 0.0
  %584 = vmatprep.subr.mxu0 0.0
  %585 = vmatpush1.msra.mxu0 0.0
  %586 = vmatprep.subr.mxu0 0.0
  %587 = vmatpush1.msra.mxu0 0.0
  %588 = vmatprep.subr.mxu0 0.0
  %589 = vmatpush1.msra.mxu0 0.0
  %590 = vmatprep.subr.mxu0 0.0
  %591 = vmatpush1.msra.mxu0 0.0
  %592 = vmatprep.subr.mxu0 0.0
  %593 = vmatpush1.msra.mxu0 0.0
  %594 = vmatprep.subr.mxu0 0.0
  %595 = vmatpush1.msra.mxu0 0.0
  %596 = vmatprep.subr.mxu0 0.0
  %597 = vmatpush1.msra.mxu0 0.0
  %598 = vmatprep.subr.mxu0 0.0
  %599 = vmatpush1.msra.mxu0 0.0
  %600 = vmatprep.subr.mxu0 0.0
  %601 = vmatpush1.msra.mxu0 0.0
  %602 = vmatprep.subr.mxu0 0.0
  %603 = vmatpush1.msra.mxu0 0.0
  %604 = vmatprep.subr.mxu0 0.0
  %605 = vmatpush1.msra.mxu0 0.0
  %606 = vmatprep.subr.mxu0 0.0
  %607 = vmatpush1.msra.mxu0 0.0
  %608 = vmatprep.subr.mxu0 0.0
  %609 = vmatpush1.msra.mxu0 0.0
  %610 = vmatprep.subr.mxu0 0.0
  %611 = vmatpush1.msra.mxu0 0.0
  %612 = vmatprep.subr.mxu0 0.0
  %613 = vmatpush1.msra.mxu0 0.0
  %614 = vmatprep.subr.mxu0 0.0
  %615 = vmatpush1.msra.mxu0 0.0
  %616 = vmatprep.subr.mxu0 0.0
  %617 = vmatpush1.msra.mxu0 0.0
  %618 = vmatprep.mubr.f32.mxu0 0.0
  %619 = vmatmul.mubr.f32.gmra.mrb[0].mxu0 %v167
  %v620 = vpop.f32.mrb[0].mxu0
  %v621 = vadd.f32 %v163, %v620
  %v622 = vpop.f32.mrb[0].mxu0
  %623 = vmatprep.mubr.f32.mxu0 0.0
  %624 = vmatmul.mubr.f32.gmra.mrb[0].mxu0 %v170
  %v625 = vpop.f32.mrb[0].mxu0
  %v626 = vadd.f32 %v163, %v625
  %v627 = vpop.f32.mrb[0].mxu0
  %628 = vmatprep.mubr.f32.mxu0 0.0
  %629 = vmatmul.mubr.f32.gmra.mrb[0].mxu0 %v173
  %v630 = vpop.f32.mrb[0].mxu0
  %v631 = vadd.f32 %v163, %v630
  %v632 = vpop.f32.mrb[0].mxu0
  %633 = vmatprep.mubr.f32.mxu0 0.0
  %634 = vmatmul.mubr.f32.gmra.mrb[0].mxu0 %v176
  %v635 = vpop.f32.mrb[0].mxu0
  %v636 = vadd.f32 %v163, %v635
  %v637 = vpop.f32.mrb[0].mxu0
  %638 = vmatprep.mubr.f32.mxu0 0.0
  %639 = vmatmul.mubr.f32.gmra.mrb[0].mxu0 %v179
  %v640 = vpop.f32.mrb[0].mxu0
  %v641 = vadd.f32 %v163, %v640
  %v642 = vpop.f32.mrb[0].mxu0
  %643 = vmatprep.mubr.f32.mxu0 0.0
  %644 = vmatmul.mubr.f32.gmra.mrb[0].mxu0 %v182
  %v645 = vpop.f32.mrb[0].mxu0
  %v646 = vadd.f32 %v163, %v645
  %v647 = vpop.f32.mrb[0].mxu0
  %648 = vmatprep.mubr.f32.mxu0 0.0
  %649 = vmatmul.mubr.f32.gmra.mrb[0].mxu0 %v185
  %v650 = vpop.f32.mrb[0].mxu0
  %v651 = vadd.f32 %v163, %v650
  %v652 = vpop.f32.mrb[0].mxu0
  %653 = vmatprep.mubr.f32.mxu0 0.0
  %654 = vmatmul.mubr.f32.gmra.mrb[0].mxu0 %v188
  %v655 = vpop.f32.mrb[0].mxu0
  %v656 = vadd.f32 %v163, %v655
  %v657 = vpop.f32.mrb[0].mxu0
  %658 = vmatprep.mubr.f32.mxu0 0.0
  %659 = vmatmul.mubr.f32.gmra.mrb[0].mxu0 %v191
  %v660 = vpop.f32.mrb[0].mxu0
  %v661 = vadd.f32 %v163, %v660
  %v662 = vpop.f32.mrb[0].mxu0
  %663 = vmatprep.mubr.f32.mxu0 0.0
  %664 = vmatmul.mubr.f32.gmra.mrb[0].mxu0 %v194
  %v665 = vpop.f32.mrb[0].mxu0
  %v666 = vadd.f32 %v163, %v665
  %v667 = vpop.f32.mrb[0].mxu0
  %668 = vmatprep.mubr.f32.mxu0 0.0
  %669 = vmatmul.mubr.f32.gmra.mrb[0].mxu0 %v197
  %v670 = vpop.f32.mrb[0].mxu0
  %v671 = vadd.f32 %v163, %v670
  %v672 = vpop.f32.mrb[0].mxu0
  %673 = vmatprep.mubr.f32.mxu0 0.0
  %674 = vmatmul.mubr.f32.gmra.mrb[0].mxu0 %v200
  %v675 = vpop.f32.mrb[0].mxu0
  %v676 = vadd.f32 %v163, %v675
  %v677 = vpop.f32.mrb[0].mxu0
  %678 = vmatprep.mubr.f32.mxu0 0.0
  %679 = vmatmul.mubr.f32.gmra.mrb[0].mxu0 %v203
  %v680 = vpop.f32.mrb[0].mxu0
  %v681 = vadd.f32 %v163, %v680
  %v682 = vpop.f32.mrb[0].mxu0
  %683 = vmatprep.mubr.f32.mxu0 0.0
  %684 = vmatmul.mubr.f32.gmra.mrb[0].mxu0 %v206
  %v685 = vpop.f32.mrb[0].mxu0
  %v686 = vadd.f32 %v163, %v685
  %v687 = vpop.f32.mrb[0].mxu0
  %688 = vmatprep.mubr.f32.mxu0 0.0
  %689 = vmatmul.mubr.f32.gmra.mrb[0].mxu0 %v209
  %v690 = vpop.f32.mrb[0].mxu0
  %v691 = vadd.f32 %v163, %v690
  %v692 = vpop.f32.mrb[0].mxu0
  %693 = vmatprep.mubr.f32.mxu0 0.0
  %694 = vmatmul.mubr.f32.gmra.mrb[0].mxu0 %v212
  %v695 = vpop.f32.mrb[0].mxu0
  %v696 = vadd.f32 %v163, %v695
  %v697 = vpop.f32.mrb[0].mxu0
  %698 = vmatprep.mubr.f32.mxu0 0.0
  %699 = vmatmul.mubr.f32.gmra.mrb[0].mxu0 %v215
  %v700 = vpop.f32.mrb[0].mxu0
  %v701 = vadd.f32 %v163, %v700
  %v702 = vpop.f32.mrb[0].mxu0
  %703 = vmatprep.mubr.f32.mxu0 0.0
  %704 = vmatmul.mubr.f32.gmra.mrb[0].mxu0 %v218
  %v705 = vpop.f32.mrb[0].mxu0
  %v706 = vadd.f32 %v163, %v705
  %v707 = vpop.f32.mrb[0].mxu0
  %708 = vmatprep.mubr.f32.mxu0 0.0
  %709 = vmatmul.mubr.f32.gmra.mrb[0].mxu0 %v221
  %v710 = vpop.f32.mrb[0].mxu0
  %v711 = vadd.f32 %v163, %v710
  %v712 = vpop.f32.mrb[0].mxu0
  %713 = vmatprep.mubr.f32.mxu0 0.0
  %714 = vmatmul.mubr.f32.gmra.mrb[0].mxu0 %v224
  %v715 = vpop.f32.mrb[0].mxu0
  %v716 = vadd.f32 %v163, %v715
  %v717 = vpop.f32.mrb[0].mxu0
  %718 = vmatprep.mubr.f32.mxu0 0.0
  %719 = vmatmul.mubr.f32.gmra.mrb[0].mxu0 %v227
  %v720 = vpop.f32.mrb[0].mxu0
  %v721 = vadd.f32 %v163, %v720
  %v722 = vpop.f32.mrb[0].mxu0
  %723 = vmatprep.mubr.f32.mxu0 0.0
  %724 = vmatmul.mubr.f32.gmra.mrb[0].mxu0 %v230
  %v725 = vpop.f32.mrb[0].mxu0
  %v726 = vadd.f32 %v163, %v725
  %v727 = vpop.f32.mrb[0].mxu0
  %728 = vmatprep.mubr.f32.mxu0 0.0
  %729 = vmatmul.mubr.f32.gmra.mrb[0].mxu0 %v233
  %v730 = vpop.f32.mrb[0].mxu0
  %v731 = vadd.f32 %v163, %v730
  %v732 = vpop.f32.mrb[0].mxu0
  %733 = vmatprep.mubr.f32.mxu0 0.0
  %734 = vmatmul.mubr.f32.gmra.mrb[0].mxu0 %v236
  %v735 = vpop.f32.mrb[0].mxu0
  %v736 = vadd.f32 %v163, %v735
  %v737 = vpop.f32.mrb[0].mxu0
  %738 = vmatprep.mubr.f32.mxu0 0.0
  %739 = vmatmul.mubr.f32.gmra.mrb[0].mxu0 %v239
  %v740 = vpop.f32.mrb[0].mxu0
  %v741 = vadd.f32 %v163, %v740
  %v742 = vpop.f32.mrb[0].mxu0
  %743 = vmatprep.mubr.f32.mxu0 0.0
  %744 = vmatmul.mubr.f32.gmra.mrb[0].mxu0 %v242
  %v745 = vpop.f32.mrb[0].mxu0
  %v746 = vadd.f32 %v163, %v745
  %v747 = vpop.f32.mrb[0].mxu0
  %748 = vmatprep.mubr.f32.mxu0 0.0
  %749 = vmatmul.mubr.f32.gmra.mrb[0].mxu0 %v245
  %v750 = vpop.f32.mrb[0].mxu0
  %v751 = vadd.f32 %v163, %v750
  %v752 = vpop.f32.mrb[0].mxu0
  %753 = vmatprep.mubr.f32.mxu0 0.0
  %754 = vmatmul.mubr.f32.gmra.mrb[0].mxu0 %v248
  %v755 = vpop.f32.mrb[0].mxu0
  %v756 = vadd.f32 %v163, %v755
  %v757 = vpop.f32.mrb[0].mxu0
  %758 = vmatprep.mubr.f32.mxu0 0.0
  %759 = vmatmul.mubr.f32.gmra.mrb[0].mxu0 %v251
  %v760 = vpop.f32.mrb[0].mxu0
  %v761 = vadd.f32 %v163, %v760
  %v762 = vpop.f32.mrb[0].mxu0
  %763 = vmatprep.mubr.f32.mxu0 0.0
  %764 = vmatmul.mubr.f32.gmra.mrb[0].mxu0 %v254
  %v765 = vpop.f32.mrb[0].mxu0
  %v766 = vadd.f32 %v163, %v765
  %v767 = vpop.f32.mrb[0].mxu0
  %768 = vmatprep.mubr.f32.mxu0 0.0
  %769 = vmatmul.mubr.f32.gmra.mrb[0].mxu0 %v257
  %v770 = vpop.f32.mrb[0].mxu0
  %v771 = vadd.f32 %v163, %v770
  %v772 = vpop.f32.mrb[0].mxu0
  %773 = vmatprep.mubr.f32.mxu0 0.0
  %774 = vmatmul.mubr.f32.gmra.mrb[0].mxu0 %v260
  %v775 = vpop.f32.mrb[0].mxu0
  %v776 = vadd.f32 %v163, %v775
  %v777 = vpop.f32.mrb[0].mxu0
  %778 = vmatprep.mubr.f32.mxu0 0.0
  %779 = vmatmul.mubr.f32.gmra.mrb[0].mxu0 %v263
  %v780 = vpop.f32.mrb[0].mxu0
  %v781 = vadd.f32 %v163, %v780
  %v782 = vpop.f32.mrb[0].mxu0
  %783 = vmatprep.mubr.f32.mxu0 0.0
  %784 = vmatmul.mubr.f32.gmra.mrb[0].mxu0 %v266
  %v785 = vpop.f32.mrb[0].mxu0
  %v786 = vadd.f32 %v163, %v785
  %v787 = vpop.f32.mrb[0].mxu0
  %788 = vmatprep.mubr.f32.mxu0 0.0
  %789 = vmatmul.mubr.f32.gmra.mrb[0].mxu0 %v269
  %v790 = vpop.f32.mrb[0].mxu0
  %v791 = vadd.f32 %v163, %v790
  %v792 = vpop.f32.mrb[0].mxu0
  %793 = vmatprep.mubr.f32.mxu0 0.0
  %794 = vmatmul.mubr.f32.gmra.mrb[0].mxu0 %v272
  %v795 = vpop.f32.mrb[0].mxu0
  %v796 = vadd.f32 %v163, %v795
  %v797 = vpop.f32.mrb[0].mxu0
  %798 = vmatprep.mubr.f32.mxu0 0.0
  %799 = vmatmul.mubr.f32.gmra.mrb[0].mxu0 %v275
  %v800 = vpop.f32.mrb[0].mxu0
  %v801 = vadd.f32 %v163, %v800
  %v802 = vpop.f32.mrb[0].mxu0
  %803 = vmatprep.mubr.f32.mxu0 0.0
  %804 = vmatmul.mubr.f32.gmra.mrb[0].mxu0 %v278
  %v805 = vpop.f32.mrb[0].mxu0
  %v806 = vadd.f32 %v163, %v805
  %v807 = vpop.f32.mrb[0].mxu0
  %808 = vmatprep.mubr.f32.mxu0 0.0
  %809 = vmatmul.mubr.f32.gmra.mrb[0].mxu0 %v281
  %v810 = vpop.f32.mrb[0].mxu0
  %v811 = vadd.f32 %v163, %v810
  %v812 = vpop.f32.mrb[0].mxu0
  %813 = vmatprep.mubr.f32.mxu0 0.0
  %814 = vmatmul.mubr.f32.gmra.mrb[0].mxu0 %v284
  %v815 = vpop.f32.mrb[0].mxu0
  %v816 = vadd.f32 %v163, %v815
  %v817 = vpop.f32.mrb[0].mxu0
  %818 = vmatprep.mubr.f32.mxu0 0.0
  %819 = vmatmul.mubr.f32.gmra.mrb[0].mxu0 %v287
  %v820 = vpop.f32.mrb[0].mxu0
  %v821 = vadd.f32 %v163, %v820
  %v822 = vpop.f32.mrb[0].mxu0
  %823 = vmatprep.mubr.f32.mxu0 0.0
  %824 = vmatmul.mubr.f32.gmra.mrb[0].mxu0 %v290
  %v825 = vpop.f32.mrb[0].mxu0
  %v826 = vadd.f32 %v163, %v825
  %v827 = vpop.f32.mrb[0].mxu0
  %828 = vmatprep.mubr.f32.mxu0 0.0
  %829 = vmatmul.mubr.f32.gmra.mrb[0].mxu0 %v293
  %v830 = vpop.f32.mrb[0].mxu0
  %v831 = vadd.f32 %v163, %v830
  %v832 = vpop.f32.mrb[0].mxu0
  %833 = vmatprep.mubr.f32.mxu0 0.0
  %834 = vmatmul.mubr.f32.gmra.mrb[0].mxu0 %v296
  %v835 = vpop.f32.mrb[0].mxu0
  %v836 = vadd.f32 %v163, %v835
  %v837 = vpop.f32.mrb[0].mxu0
  %838 = vmatprep.mubr.f32.mxu0 0.0
  %839 = vmatmul.mubr.f32.gmra.mrb[0].mxu0 %v299
  %v840 = vpop.f32.mrb[0].mxu0
  %v841 = vadd.f32 %v163, %v840
  %v842 = vpop.f32.mrb[0].mxu0
  %843 = vmatprep.mubr.f32.mxu0 0.0
  %844 = vmatmul.mubr.f32.gmra.mrb[0].mxu0 %v302
  %v845 = vpop.f32.mrb[0].mxu0
  %v846 = vadd.f32 %v163, %v845
  %v847 = vpop.f32.mrb[0].mxu0
  %848 = vmatprep.mubr.f32.mxu0 0.0
  %849 = vmatmul.mubr.f32.gmra.mrb[0].mxu0 %v305
  %v850 = vpop.f32.mrb[0].mxu0
  %v851 = vadd.f32 %v163, %v850
  %v852 = vpop.f32.mrb[0].mxu0
  %853 = vmatprep.mubr.f32.mxu0 0.0
  %854 = vmatmul.mubr.f32.gmra.mrb[0].mxu0 %v308
  %v855 = vpop.f32.mrb[0].mxu0
  %v856 = vadd.f32 %v163, %v855
  %v857 = vpop.f32.mrb[0].mxu0
  %858 = vmatprep.mubr.f32.mxu0 0.0
  %859 = vmatmul.mubr.f32.gmra.mrb[0].mxu0 %v311
  %v860 = vpop.f32.mrb[0].mxu0
  %v861 = vadd.f32 %v163, %v860
  %v862 = vpop.f32.mrb[0].mxu0
  %863 = vmatprep.mubr.f32.mxu0 0.0
  %864 = vmatmul.mubr.f32.gmra.mrb[0].mxu0 %v314
  %v865 = vpop.f32.mrb[0].mxu0
  %v866 = vadd.f32 %v163, %v865
  %v867 = vpop.f32.mrb[0].mxu0
  %868 = vmatprep.mubr.f32.mxu0 0.0
  %869 = vmatmul.mubr.f32.gmra.mrb[0].mxu0 %v317
  %v870 = vpop.f32.mrb[0].mxu0
  %v871 = vadd.f32 %v163, %v870
  %v872 = vpop.f32.mrb[0].mxu0
  %873 = vmatprep.mubr.f32.mxu0 0.0
  %874 = vmatmul.mubr.f32.gmra.mrb[0].mxu0 %v320
  %v875 = vpop.f32.mrb[0].mxu0
  %v876 = vadd.f32 %v163, %v875
  %v877 = vpop.f32.mrb[0].mxu0
  %878 = vmatprep.mubr.f32.mxu0 0.0
  %879 = vmatmul.mubr.f32.gmra.mrb[0].mxu0 %v323
  %v880 = vpop.f32.mrb[0].mxu0
  %v881 = vadd.f32 %v163, %v880
  %v882 = vpop.f32.mrb[0].mxu0
  %883 = vmatprep.mubr.f32.mxu0 0.0
  %884 = vmatmul.mubr.f32.gmra.mrb[0].mxu0 %v326
  %v885 = vpop.f32.mrb[0].mxu0
  %v886 = vadd.f32 %v163, %v885
  %v887 = vpop.f32.mrb[0].mxu0
  %888 = vmatprep.mubr.f32.mxu0 0.0
  %889 = vmatmul.mubr.f32.gmra.mrb[0].mxu0 %v329
  %v890 = vpop.f32.mrb[0].mxu0
  %v891 = vadd.f32 %v163, %v890
  %v892 = vpop.f32.mrb[0].mxu0
  %893 = vmatprep.mubr.f32.mxu0 0.0
  %894 = vmatmul.mubr.f32.gmra.mrb[0].mxu0 %v332
  %v895 = vpop.f32.mrb[0].mxu0
  %v896 = vadd.f32 %v163, %v895
  %v897 = vpop.f32.mrb[0].mxu0
  %898 = vmatprep.mubr.f32.mxu0 0.0
  %899 = vmatmul.mubr.f32.gmra.mrb[0].mxu0 %v335
  %v900 = vpop.f32.mrb[0].mxu0
  %v901 = vadd.f32 %v163, %v900
  %v902 = vpop.f32.mrb[0].mxu0
  %903 = vmatprep.mubr.f32.mxu0 0.0
  %904 = vmatmul.mubr.f32.gmra.mrb[0].mxu0 %v338
  %v905 = vpop.f32.mrb[0].mxu0
  %v906 = vadd.f32 %v163, %v905
  %v907 = vpop.f32.mrb[0].mxu0
  %908 = vmatprep.mubr.f32.mxu0 0.0
  %909 = vmatmul.mubr.f32.gmra.mrb[0].mxu0 %v341
  %v910 = vpop.f32.mrb[0].mxu0
  %v911 = vadd.f32 %v163, %v910
  %v912 = vpop.f32.mrb[0].mxu0
  %913 = vmatprep.mubr.f32.mxu0 0.0
  %914 = vmatmul.mubr.f32.gmra.mrb[0].mxu0 %v344
  %v915 = vpop.f32.mrb[0].mxu0
  %v916 = vadd.f32 %v163, %v915
  %v917 = vpop.f32.mrb[0].mxu0
  %918 = vmatprep.mubr.f32.mxu0 0.0
  %919 = vmatmul.mubr.f32.gmra.mrb[0].mxu0 %v347
  %v920 = vpop.f32.mrb[0].mxu0
  %v921 = vadd.f32 %v163, %v920
  %v922 = vpop.f32.mrb[0].mxu0
  %923 = vmatprep.mubr.f32.mxu0 0.0
  %924 = vmatmul.mubr.f32.gmra.mrb[0].mxu0 %v350
  %v925 = vpop.f32.mrb[0].mxu0
  %v926 = vadd.f32 %v163, %v925
  %v927 = vpop.f32.mrb[0].mxu0
  %928 = vmatprep.mubr.f32.mxu0 0.0
  %929 = vmatmul.mubr.f32.gmra.mrb[0].mxu0 %v353
  %v930 = vpop.f32.mrb[0].mxu0
  %v931 = vadd.f32 %v163, %v930
  %v932 = vpop.f32.mrb[0].mxu0
  %933 = vmatprep.mubr.f32.mxu0 0.0
  %934 = vmatmul.mubr.f32.gmra.mrb[0].mxu0 %v356
  %v935 = vpop.f32.mrb[0].mxu0
  %v936 = vadd.f32 %v163, %v935
  %v937 = vpop.f32.mrb[0].mxu0
  %938 = vmatprep.mubr.f32.mxu0 0.0
  %939 = vmatmul.mubr.f32.gmra.mrb[0].mxu0 %v359
  %v940 = vpop.f32.mrb[0].mxu0
  %v941 = vadd.f32 %v163, %v940
  %v942 = vpop.f32.mrb[0].mxu0
  %943 = vmatprep.mubr.f32.mxu0 0.0
  %944 = vmatmul.mubr.f32.gmra.mrb[0].mxu0 %v362
  %v945 = vpop.f32.mrb[0].mxu0
  %v946 = vadd.f32 %v163, %v945
  %v947 = vpop.f32.mrb[0].mxu0
  %948 = vmatprep.mubr.f32.mxu0 0.0
  %949 = vmatmul.mubr.f32.gmra.mrb[0].mxu0 %v365
  %v950 = vpop.f32.mrb[0].mxu0
  %v951 = vadd.f32 %v163, %v950
  %v952 = vpop.f32.mrb[0].mxu0
  %953 = vmatprep.mubr.f32.mxu0 0.0
  %954 = vmatmul.mubr.f32.gmra.mrb[0].mxu0 %v368
  %v955 = vpop.f32.mrb[0].mxu0
  %v956 = vadd.f32 %v163, %v955
  %v957 = vpop.f32.mrb[0].mxu0
  %958 = vmatprep.mubr.f32.mxu0 0.0
  %959 = vmatmul.mubr.f32.gmra.mrb[0].mxu0 %v371
  %v960 = vpop.f32.mrb[0].mxu0
  %v961 = vadd.f32 %v163, %v960
  %v962 = vpop.f32.mrb[0].mxu0
  %963 = vmatprep.mubr.f32.mxu0 0.0
  %964 = vmatmul.mubr.f32.gmra.mrb[0].mxu0 %v374
  %v965 = vpop.f32.mrb[0].mxu0
  %v966 = vadd.f32 %v163, %v965
  %v967 = vpop.f32.mrb[0].mxu0
  %968 = vmatprep.mubr.f32.mxu0 0.0
  %969 = vmatmul.mubr.f32.gmra.mrb[0].mxu0 %v377
  %v970 = vpop.f32.mrb[0].mxu0
  %v971 = vadd.f32 %v163, %v970
  %v972 = vpop.f32.mrb[0].mxu0
  %973 = vmatprep.mubr.f32.mxu0 0.0
  %974 = vmatmul.mubr.f32.gmra.mrb[0].mxu0 %v380
  %v975 = vpop.f32.mrb[0].mxu0
  %v976 = vadd.f32 %v163, %v975
  %v977 = vpop.f32.mrb[0].mxu0
  %978 = vmatprep.mubr.f32.mxu0 0.0
  %979 = vmatmul.mubr.f32.gmra.mrb[0].mxu0 %v383
  %v980 = vpop.f32.mrb[0].mxu0
  %v981 = vadd.f32 %v163, %v980
  %v982 = vpop.f32.mrb[0].mxu0
  %983 = vmatprep.mubr.f32.mxu0 0.0
  %984 = vmatmul.mubr.f32.gmra.mrb[0].mxu0 %v386
  %v985 = vpop.f32.mrb[0].mxu0
  %v986 = vadd.f32 %v163, %v985
  %v987 = vpop.f32.mrb[0].mxu0
  %988 = vmatprep.mubr.f32.mxu0 0.0
  %989 = vmatmul.mubr.f32.gmra.mrb[0].mxu0 %v389
  %v990 = vpop.f32.mrb[0].mxu0
  %v991 = vadd.f32 %v163, %v990
  %v992 = vpop.f32.mrb[0].mxu0
  %993 = vmatprep.mubr.f32.mxu0 0.0
  %994 = vmatmul.mubr.f32.gmra.mrb[0].mxu0 %v392
  %v995 = vpop.f32.mrb[0].mxu0
  %v996 = vadd.f32 %v163, %v995
  %v997 = vpop.f32.mrb[0].mxu0
  %998 = vmatprep.mubr.f32.mxu0 0.0
  %999 = vmatmul.mubr.f32.gmra.mrb[0].mxu0 %v395
  %v1000 = vpop.f32.mrb[0].mxu0
  %v1001 = vadd.f32 %v163, %v1000
  %v1002 = vpop.f32.mrb[0].mxu0
  %1003 = vmatprep.mubr.f32.mxu0 0.0
  %1004 = vmatmul.mubr.f32.gmra.mrb[0].mxu0 %v398
  %v1005 = vpop.f32.mrb[0].mxu0
  %v1006 = vadd.f32 %v163, %v1005
  %v1007 = vpop.f32.mrb[0].mxu0
  %1008 = vmatprep.mubr.f32.mxu0 0.0
  %1009 = vmatmul.mubr.f32.gmra.mrb[0].mxu0 %v401
  %v1010 = vpop.f32.mrb[0].mxu0
  %v1011 = vadd.f32 %v163, %v1010
  %v1012 = vpop.f32.mrb[0].mxu0
  %1013 = vmatprep.mubr.f32.mxu0 0.0
  %1014 = vmatmul.mubr.f32.gmra.mrb[0].mxu0 %v404
  %v1015 = vpop.f32.mrb[0].mxu0
  %v1016 = vadd.f32 %v163, %v1015
  %v1017 = vpop.f32.mrb[0].mxu0
  %1018 = vmatprep.mubr.f32.mxu0 0.0
  %1019 = vmatmul.mubr.f32.gmra.mrb[0].mxu0 %v407
  %v1020 = vpop.f32.mrb[0].mxu0
  %v1021 = vadd.f32 %v163, %v1020
  %v1022 = vpop.f32.mrb[0].mxu0
  %1023 = vmatprep.mubr.f32.mxu0 0.0
  %1024 = vmatmul.mubr.f32.gmra.mrb[0].mxu0 %v410
  %v1025 = vpop.f32.mrb[0].mxu0
  %v1026 = vadd.f32 %v163, %v1025
  %v1027 = vpop.f32.mrb[0].mxu0
  %1028 = vmatprep.mubr.f32.mxu0 0.0
  %1029 = vmatmul.mubr.f32.gmra.mrb[0].mxu0 %v413
  %v1030 = vpop.f32.mrb[0].mxu0
  %v1031 = vadd.f32 %v163, %v1030
  %v1032 = vpop.f32.mrb[0].mxu0
  %1033 = vmatprep.mubr.f32.mxu0 0.0
  %1034 = vmatmul.mubr.f32.gmra.mrb[0].mxu0 %v416
  %v1035 = vpop.f32.mrb[0].mxu0
  %v1036 = vadd.f32 %v163, %v1035
  %v1037 = vpop.f32.mrb[0].mxu0
  %1038 = vmatprep.mubr.f32.mxu0 0.0
  %1039 = vmatmul.mubr.f32.gmra.mrb[0].mxu0 %v419
  %v1040 = vpop.f32.mrb[0].mxu0
  %v1041 = vadd.f32 %v163, %v1040
  %v1042 = vpop.f32.mrb[0].mxu0
  %1043 = vmatprep.mubr.f32.mxu0 0.0
  %1044 = vmatmul.mubr.f32.gmra.mrb[0].mxu0 %v422
  %v1045 = vpop.f32.mrb[0].mxu0
  %v1046 = vadd.f32 %v163, %v1045
  %v1047 = vpop.f32.mrb[0].mxu0
  %1048 = vmatprep.mubr.f32.mxu0 0.0
  %1049 = vmatmul.mubr.f32.gmra.mrb[0].mxu0 %v425
  %v1050 = vpop.f32.mrb[0].mxu0
  %v1051 = vadd.f32 %v163, %v1050
  %v1052 = vpop.f32.mrb[0].mxu0
  %1053 = vmatprep.mubr.f32.mxu0 0.0
  %1054 = vmatmul.mubr.f32.gmra.mrb[0].mxu0 %v428
  %v1055 = vpop.f32.mrb[0].mxu0
  %v1056 = vadd.f32 %v163, %v1055
  %v1057 = vpop.f32.mrb[0].mxu0
  %1058 = vmatprep.mubr.f32.mxu0 0.0
  %1059 = vmatmul.mubr.f32.gmra.mrb[0].mxu0 %v431
  %v1060 = vpop.f32.mrb[0].mxu0
  %v1061 = vadd.f32 %v163, %v1060
  %v1062 = vpop.f32.mrb[0].mxu0
  %1063 = vmatprep.mubr.f32.mxu0 0.0
  %1064 = vmatmul.mubr.f32.gmra.mrb[0].mxu0 %v434
  %v1065 = vpop.f32.mrb[0].mxu0
  %v1066 = vadd.f32 %v163, %v1065
  %v1067 = vpop.f32.mrb[0].mxu0
  %1068 = vmatprep.mubr.f32.mxu0 0.0
  %1069 = vmatmul.mubr.f32.gmra.mrb[0].mxu0 %v437
  %v1070 = vpop.f32.mrb[0].mxu0
  %v1071 = vadd.f32 %v163, %v1070
  %v1072 = vpop.f32.mrb[0].mxu0
  %1073 = vmatprep.mubr.f32.mxu0 0.0
  %1074 = vmatmul.mubr.f32.gmra.mrb[0].mxu0 %v440
  %v1075 = vpop.f32.mrb[0].mxu0
  %v1076 = vadd.f32 %v163, %v1075
  %v1077 = vpop.f32.mrb[0].mxu0
  %1078 = vmatprep.mubr.f32.mxu0 0.0
  %1079 = vmatmul.mubr.f32.gmra.mrb[0].mxu0 %v443
  %v1080 = vpop.f32.mrb[0].mxu0
  %v1081 = vadd.f32 %v163, %v1080
  %v1082 = vpop.f32.mrb[0].mxu0
  %1083 = vmatprep.mubr.f32.mxu0 0.0
  %1084 = vmatmul.mubr.f32.gmra.mrb[0].mxu0 %v446
  %v1085 = vpop.f32.mrb[0].mxu0
  %v1086 = vadd.f32 %v163, %v1085
  %v1087 = vpop.f32.mrb[0].mxu0
  %1088 = vmatprep.mubr.f32.mxu0 0.0
  %1089 = vmatmul.mubr.f32.gmra.mrb[0].mxu0 %v449
  %v1090 = vpop.f32.mrb[0].mxu0
  %v1091 = vadd.f32 %v163, %v1090
  %v1092 = vpop.f32.mrb[0].mxu0
  %1093 = vmatprep.mubr.f32.mxu0 0.0
  %1094 = vmatmul.mubr.f32.gmra.mrb[0].mxu0 %v452
  %v1095 = vpop.f32.mrb[0].mxu0
  %v1096 = vadd.f32 %v163, %v1095
  %v1097 = vpop.f32.mrb[0].mxu0
  %1098 = vmatprep.mubr.f32.mxu0 0.0
  %1099 = vmatmul.mubr.f32.gmra.mrb[0].mxu0 %v455
  %v1100 = vpop.f32.mrb[0].mxu0
  %v1101 = vadd.f32 %v163, %v1100
  %v1102 = vpop.f32.mrb[0].mxu0
  %1103 = vmatprep.mubr.f32.mxu0 0.0
  %1104 = vmatmul.mubr.f32.gmra.mrb[0].mxu0 %v458
  %v1105 = vpop.f32.mrb[0].mxu0
  %v1106 = vadd.f32 %v163, %v1105
  %v1107 = vpop.f32.mrb[0].mxu0
  %1108 = vmatprep.mubr.f32.mxu0 0.0
  %1109 = vmatmul.mubr.f32.gmra.mrb[0].mxu0 %v461
  %v1110 = vpop.f32.mrb[0].mxu0
  %v1111 = vadd.f32 %v163, %v1110
  %v1112 = vpop.f32.mrb[0].mxu0
  %1113 = vmatprep.mubr.f32.mxu0 0.0
  %1114 = vmatmul.mubr.f32.gmra.mrb[0].mxu0 %v464
  %v1115 = vpop.f32.mrb[0].mxu0
  %v1116 = vadd.f32 %v163, %v1115
  %v1117 = vpop.f32.mrb[0].mxu0
  %1118 = vmatprep.mubr.f32.mxu0 0.0
  %1119 = vmatmul.mubr.f32.gmra.mrb[0].mxu0 %v467
  %v1120 = vpop.f32.mrb[0].mxu0
  %v1121 = vadd.f32 %v163, %v1120
  %v1122 = vpop.f32.mrb[0].mxu0
  %1123 = vmatprep.mubr.f32.mxu0 0.0
  %1124 = vmatmul.mubr.f32.gmra.mrb[0].mxu0 %v470
  %v1125 = vpop.f32.mrb[0].mxu0
  %v1126 = vadd.f32 %v163, %v1125
  %v1127 = vpop.f32.mrb[0].mxu0
  %1128 = vmatprep.mubr.f32.mxu0 0.0
  %1129 = vmatmul.mubr.f32.gmra.mrb[0].mxu0 %v473
  %v1130 = vpop.f32.mrb[0].mxu0
  %v1131 = vadd.f32 %v163, %v1130
  %v1132 = vpop.f32.mrb[0].mxu0
  %1133 = vmatprep.mubr.f32.mxu0 0.0
  %1134 = vmatmul.mubr.f32.gmra.mrb[0].mxu0 %v476
  %v1135 = vpop.f32.mrb[0].mxu0
  %v1136 = vadd.f32 %v163, %v1135
  %v1137 = vpop.f32.mrb[0].mxu0
  %1138 = vmatprep.mubr.f32.mxu0 0.0
  %1139 = vmatmul.mubr.f32.gmra.mrb[0].mxu0 %v479
  %v1140 = vpop.f32.mrb[0].mxu0
  %v1141 = vadd.f32 %v163, %v1140
  %v1142 = vpop.f32.mrb[0].mxu0
  %1143 = vmatprep.mubr.f32.mxu0 0.0
  %1144 = vmatmul.mubr.f32.gmra.mrb[0].mxu0 %v482
  %v1145 = vpop.f32.mrb[0].mxu0
  %v1146 = vadd.f32 %v163, %v1145
  %v1147 = vpop.f32.mrb[0].mxu0
  %1148 = vmatprep.mubr.f32.mxu0 0.0
  %1149 = vmatmul.mubr.f32.gmra.mrb[0].mxu0 %v485
  %v1150 = vpop.f32.mrb[0].mxu0
  %v1151 = vadd.f32 %v163, %v1150
  %v1152 = vpop.f32.mrb[0].mxu0
  %1153 = vmatprep.mubr.f32.mxu0 0.0
  %1154 = vmatmul.mubr.f32.gmra.mrb[0].mxu0 %v488
  %v1155 = vpop.f32.mrb[0].mxu0
  %v1156 = vadd.f32 %v163, %v1155
  %v1157 = vpop.f32.mrb[0].mxu0
  %1158 = vmatprep.mubr.f32.mxu0 0.0
  %1159 = vmatmul.mubr.f32.gmra.mrb[0].mxu0 %v491
  %v1160 = vpop.f32.mrb[0].mxu0
  %v1161 = vadd.f32 %v163, %v1160
  %v1162 = vpop.f32.mrb[0].mxu0
  %1163 = vmatprep.mubr.f32.mxu0 0.0
  %1164 = vmatmul.mubr.f32.gmra.mrb[0].mxu0 %v494
  %v1165 = vpop.f32.mrb[0].mxu0
  %v1166 = vadd.f32 %v163, %v1165
  %v1167 = vpop.f32.mrb[0].mxu0
  %1168 = vmatprep.mubr.f32.mxu0 0.0
  %1169 = vmatmul.mubr.f32.gmra.mrb[0].mxu0 %v497
  %v1170 = vpop.f32.mrb[0].mxu0
  %v1171 = vadd.f32 %v163, %v1170
  %v1172 = vpop.f32.mrb[0].mxu0
  %1173 = vmatprep.mubr.f32.mxu0 0.0
  %1174 = vmatmul.mubr.f32.gmra.mrb[0].mxu0 %v500
  %v1175 = vpop.f32.mrb[0].mxu0
  %v1176 = vadd.f32 %v163, %v1175
  %v1177 = vpop.f32.mrb[0].mxu0
  %1178 = vmatprep.mubr.f32.mxu0 0.0
  %1179 = vmatmul.mubr.f32.gmra.mrb[0].mxu0 %v503
  %v1180 = vpop.f32.mrb[0].mxu0
  %v1181 = vadd.f32 %v163, %v1180
  %v1182 = vpop.f32.mrb[0].mxu0
  %1183 = vmatprep.mubr.f32.mxu0 0.0
  %1184 = vmatmul.mubr.f32.gmra.mrb[0].mxu0 %v506
  %v1185 = vpop.f32.mrb[0].mxu0
  %v1186 = vadd.f32 %v163, %v1185
  %v1187 = vpop.f32.mrb[0].mxu0
  %1188 = vmatprep.mubr.f32.mxu0 0.0
  %1189 = vmatmul.mubr.f32.gmra.mrb[0].mxu0 %v509
  %v1190 = vpop.f32.mrb[0].mxu0
  %v1191 = vadd.f32 %v163, %v1190
  %v1192 = vpop.f32.mrb[0].mxu0
  %1193 = vmatprep.mubr.f32.mxu0 0.0
  %1194 = vmatmul.mubr.f32.gmra.mrb[0].mxu0 %v512
  %v1195 = vpop.f32.mrb[0].mxu0
  %v1196 = vadd.f32 %v163, %v1195
  %v1197 = vpop.f32.mrb[0].mxu0
  %1198 = vmatprep.mubr.f32.mxu0 0.0
  %1199 = vmatmul.mubr.f32.gmra.mrb[0].mxu0 %v515
  %v1200 = vpop.f32.mrb[0].mxu0
  %v1201 = vadd.f32 %v163, %v1200
  %v1202 = vpop.f32.mrb[0].mxu0
  %1203 = vmatprep.mubr.f32.mxu0 0.0
  %1204 = vmatmul.mubr.f32.gmra.mrb[0].mxu0 %v518
  %v1205 = vpop.f32.mrb[0].mxu0
  %v1206 = vadd.f32 %v163, %v1205
  %v1207 = vpop.f32.mrb[0].mxu0
  %1208 = vmatprep.mubr.f32.mxu0 0.0
  %1209 = vmatmul.mubr.f32.gmra.mrb[0].mxu0 %v521
  %v1210 = vpop.f32.mrb[0].mxu0
  %v1211 = vadd.f32 %v163, %v1210
  %v1212 = vpop.f32.mrb[0].mxu0
  %1213 = vmatprep.mubr.f32.mxu0 0.0
  %1214 = vmatmul.mubr.f32.gmra.mrb[0].mxu0 %v524
  %v1215 = vpop.f32.mrb[0].mxu0
  %v1216 = vadd.f32 %v163, %v1215
  %v1217 = vpop.f32.mrb[0].mxu0
  %1218 = vmatprep.mubr.f32.mxu0 0.0
  %1219 = vmatmul.mubr.f32.gmra.mrb[0].mxu0 %v527
  %v1220 = vpop.f32.mrb[0].mxu0
  %v1221 = vadd.f32 %v163, %v1220
  %v1222 = vpop.f32.mrb[0].mxu0
  %1223 = vmatprep.mubr.f32.mxu0 0.0
  %1224 = vmatmul.mubr.f32.gmra.mrb[0].mxu0 %v530
  %v1225 = vpop.f32.mrb[0].mxu0
  %v1226 = vadd.f32 %v163, %v1225
  %v1227 = vpop.f32.mrb[0].mxu0
  %1228 = vmatprep.mubr.f32.mxu0 0.0
  %1229 = vmatmul.mubr.f32.gmra.mrb[0].mxu0 %v533
  %v1230 = vpop.f32.mrb[0].mxu0
  %v1231 = vadd.f32 %v163, %v1230
  %v1232 = vpop.f32.mrb[0].mxu0
  %1233 = vmatprep.mubr.f32.mxu0 0.0
  %1234 = vmatmul.mubr.f32.gmra.mrb[0].mxu0 %v536
  %v1235 = vpop.f32.mrb[0].mxu0
  %v1236 = vadd.f32 %v163, %v1235
  %v1237 = vpop.f32.mrb[0].mxu0
  %1238 = vmatprep.mubr.f32.mxu0 0.0
  %1239 = vmatmul.mubr.f32.gmra.mrb[0].mxu0 %v539
  %v1240 = vpop.f32.mrb[0].mxu0
  %v1241 = vadd.f32 %v163, %v1240
  %v1242 = vpop.f32.mrb[0].mxu0
  %1243 = vmatprep.mubr.f32.mxu0 0.0
  %1244 = vmatmul.mubr.f32.gmra.mrb[0].mxu0 %v542
  %v1245 = vpop.f32.mrb[0].mxu0
  %v1246 = vadd.f32 %v163, %v1245
  %v1247 = vpop.f32.mrb[0].mxu0
  %1248 = vmatprep.mubr.f32.mxu0 0.0
  %1249 = vmatmul.mubr.f32.gmra.mrb[0].mxu0 %v545
  %v1250 = vpop.f32.mrb[0].mxu0
  %v1251 = vadd.f32 %v163, %v1250
  %v1252 = vpop.f32.mrb[0].mxu0
  %1253 = vmatprep.mubr.f32.mxu0 0.0
  %1254 = vmatmul.mubr.f32.gmra.mrb[0].mxu0 %v548
  %v1255 = vpop.f32.mrb[0].mxu0
  %v1256 = vadd.f32 %v163, %v1255
  %v1257 = vpop.f32.mrb[0].mxu0
  %1258 = vdwg.mxu0
  %v1259 = vmax.f32 %v621, 0.0
  %v1260 = vmax.f32 %v626, 0.0
  %v1261 = vmax.f32 %v631, 0.0
  %v1262 = vmax.f32 %v636, 0.0
  %v1263 = vmax.f32 %v641, 0.0
  %v1264 = vmax.f32 %v646, 0.0
  %v1265 = vmax.f32 %v651, 0.0
  %v1266 = vmax.f32 %v656, 0.0
  %v1267 = vmax.f32 %v661, 0.0
  %v1268 = vmax.f32 %v666, 0.0
  %v1269 = vmax.f32 %v671, 0.0
  %v1270 = vmax.f32 %v676, 0.0
  %v1271 = vmax.f32 %v681, 0.0
  %v1272 = vmax.f32 %v686, 0.0
  %v1273 = vmax.f32 %v691, 0.0
  %v1274 = vmax.f32 %v696, 0.0
  %v1275 = vmax.f32 %v701, 0.0
  %v1276 = vmax.f32 %v706, 0.0
  %v1277 = vmax.f32 %v711, 0.0
  %v1278 = vmax.f32 %v716, 0.0
  %v1279 = vmax.f32 %v721, 0.0
  %v1280 = vmax.f32 %v726, 0.0
  %v1281 = vmax.f32 %v731, 0.0
  %v1282 = vmax.f32 %v736, 0.0
  %v1283 = vmax.f32 %v741, 0.0
  %v1284 = vmax.f32 %v746, 0.0
  %v1285 = vmax.f32 %v751, 0.0
  %v1286 = vmax.f32 %v756, 0.0
  %v1287 = vmax.f32 %v761, 0.0
  %v1288 = vmax.f32 %v766, 0.0
  %v1289 = vmax.f32 %v771, 0.0
  %v1290 = vmax.f32 %v776, 0.0
  %v1291 = vmax.f32 %v781, 0.0
  %v1292 = vmax.f32 %v786, 0.0
  %v1293 = vmax.f32 %v791, 0.0
  %v1294 = vmax.f32 %v796, 0.0
  %v1295 = vmax.f32 %v801, 0.0
  %v1296 = vmax.f32 %v806, 0.0
  %v1297 = vmax.f32 %v811, 0.0
  %v1298 = vmax.f32 %v816, 0.0
  %v1299 = vmax.f32 %v821, 0.0
  %v1300 = vmax.f32 %v826, 0.0
  %v1301 = vmax.f32 %v831, 0.0
  %v1302 = vmax.f32 %v836, 0.0
  %v1303 = vmax.f32 %v841, 0.0
  %v1304 = vmax.f32 %v846, 0.0
  %v1305 = vmax.f32 %v851, 0.0
  %v1306 = vmax.f32 %v856, 0.0
  %v1307 = vmax.f32 %v861, 0.0
  %v1308 = vmax.f32 %v866, 0.0
  %v1309 = vmax.f32 %v871, 0.0
  %v1310 = vmax.f32 %v876, 0.0
  %v1311 = vmax.f32 %v881, 0.0
  %v1312 = vmax.f32 %v886, 0.0
  %v1313 = vmax.f32 %v891, 0.0
  %v1314 = vmax.f32 %v896, 0.0
  %v1315 = vmax.f32 %v901, 0.0
  %v1316 = vmax.f32 %v906, 0.0
  %v1317 = vmax.f32 %v911, 0.0
  %v1318 = vmax.f32 %v916, 0.0
  %v1319 = vmax.f32 %v921, 0.0
  %v1320 = vmax.f32 %v926, 0.0
  %v1321 = vmax.f32 %v931, 0.0
  %v1322 = vmax.f32 %v936, 0.0
  %v1323 = vmax.f32 %v941, 0.0
  %v1324 = vmax.f32 %v946, 0.0
  %v1325 = vmax.f32 %v951, 0.0
  %v1326 = vmax.f32 %v956, 0.0
  %v1327 = vmax.f32 %v961, 0.0
  %v1328 = vmax.f32 %v966, 0.0
  %v1329 = vmax.f32 %v971, 0.0
  %v1330 = vmax.f32 %v976, 0.0
  %v1331 = vmax.f32 %v981, 0.0
  %v1332 = vmax.f32 %v986, 0.0
  %v1333 = vmax.f32 %v991, 0.0
  %v1334 = vmax.f32 %v996, 0.0
  %v1335 = vmax.f32 %v1001, 0.0
  %v1336 = vmax.f32 %v1006, 0.0
  %v1337 = vmax.f32 %v1011, 0.0
  %v1338 = vmax.f32 %v1016, 0.0
  %v1339 = vmax.f32 %v1021, 0.0
  %v1340 = vmax.f32 %v1026, 0.0
  %v1341 = vmax.f32 %v1031, 0.0
  %v1342 = vmax.f32 %v1036, 0.0
  %v1343 = vmax.f32 %v1041, 0.0
  %v1344 = vmax.f32 %v1046, 0.0
  %v1345 = vmax.f32 %v1051, 0.0
  %v1346 = vmax.f32 %v1056, 0.0
  %v1347 = vmax.f32 %v1061, 0.0
  %v1348 = vmax.f32 %v1066, 0.0
  %v1349 = vmax.f32 %v1071, 0.0
  %v1350 = vmax.f32 %v1076, 0.0
  %v1351 = vmax.f32 %v1081, 0.0
  %v1352 = vmax.f32 %v1086, 0.0
  %v1353 = vmax.f32 %v1091, 0.0
  %v1354 = vmax.f32 %v1096, 0.0
  %v1355 = vmax.f32 %v1101, 0.0
  %v1356 = vmax.f32 %v1106, 0.0
  %v1357 = vmax.f32 %v1111, 0.0
  %v1358 = vmax.f32 %v1116, 0.0
  %v1359 = vmax.f32 %v1121, 0.0
  %v1360 = vmax.f32 %v1126, 0.0
  %v1361 = vmax.f32 %v1131, 0.0
  %v1362 = vmax.f32 %v1136, 0.0
  %v1363 = vmax.f32 %v1141, 0.0
  %v1364 = vmax.f32 %v1146, 0.0
  %v1365 = vmax.f32 %v1151, 0.0
  %v1366 = vmax.f32 %v1156, 0.0
  %v1367 = vmax.f32 %v1161, 0.0
  %v1368 = vmax.f32 %v1166, 0.0
  %v1369 = vmax.f32 %v1171, 0.0
  %v1370 = vmax.f32 %v1176, 0.0
  %v1371 = vmax.f32 %v1181, 0.0
  %v1372 = vmax.f32 %v1186, 0.0
  %v1373 = vmax.f32 %v1191, 0.0
  %v1374 = vmax.f32 %v1196, 0.0
  %v1375 = vmax.f32 %v1201, 0.0
  %v1376 = vmax.f32 %v1206, 0.0
  %v1377 = vmax.f32 %v1211, 0.0
  %v1378 = vmax.f32 %v1216, 0.0
  %v1379 = vmax.f32 %v1221, 0.0
  %v1380 = vmax.f32 %v1226, 0.0
  %v1381 = vmax.f32 %v1231, 0.0
  %v1382 = vmax.f32 %v1236, 0.0
  %v1383 = vmax.f32 %v1241, 0.0
  %v1384 = vmax.f32 %v1246, 0.0
  %v1385 = vmax.f32 %v1251, 0.0
  %v1386 = vmax.f32 %v1256, 0.0
  %v1387 = vld [vmem:[%s3] sm:$0xff]
  %v1388 = vld [vmem:[%s3 + $0x8] sm:$0xff]
  %v1389 = vld [vmem:[%s3 + $0x10] sm:$0xff]
  %v1390 = vld [vmem:[%s3 + $0x18] sm:$0xff]
  %v1391 = vld [vmem:[%s3 + $0x20] sm:$0xff]
  %v1392 = vld [vmem:[%s3 + $0x28] sm:$0xff]
  %v1393 = vld [vmem:[%s3 + $0x30] sm:$0xff]
  %v1394 = vld [vmem:[%s3 + $0x38] sm:$0xff]
  %v1395 = vld [vmem:[%s4] sm:$0x1]
  %v1397 = vlaneseq
  %v1398 = vshrl.u32 %v1397, 7
  %v1399 = vsub.s32 0, %v1398
  %v1400 = vrot.slane %v1395, %v1399
  %vm1402 = vcmask 523264
  %v1404 = vsel %vm1402, %v1259, 0
  %v1407 = vsel %vm1402, %v1260, 0
  %v1410 = vsel %vm1402, %v1261, 0
  %v1413 = vsel %vm1402, %v1262, 0
  %v1416 = vsel %vm1402, %v1263, 0
  %v1419 = vsel %vm1402, %v1264, 0
  %v1422 = vsel %vm1402, %v1265, 0
  %v1425 = vsel %vm1402, %v1266, 0
  %v1428 = vsel %vm1402, %v1267, 0
  %v1431 = vsel %vm1402, %v1268, 0
  %v1434 = vsel %vm1402, %v1269, 0
  %v1437 = vsel %vm1402, %v1270, 0
  %v1440 = vsel %vm1402, %v1271, 0
  %v1443 = vsel %vm1402, %v1272, 0
  %v1446 = vsel %vm1402, %v1273, 0
  %v1449 = vsel %vm1402, %v1274, 0
  %v1452 = vsel %vm1402, %v1275, 0
  %v1455 = vsel %vm1402, %v1276, 0
  %v1458 = vsel %vm1402, %v1277, 0
  %v1461 = vsel %vm1402, %v1278, 0
  %v1464 = vsel %vm1402, %v1279, 0
  %v1467 = vsel %vm1402, %v1280, 0
  %v1470 = vsel %vm1402, %v1281, 0
  %v1473 = vsel %vm1402, %v1282, 0
  %v1476 = vsel %vm1402, %v1283, 0
  %v1479 = vsel %vm1402, %v1284, 0
  %v1482 = vsel %vm1402, %v1285, 0
  %v1485 = vsel %vm1402, %v1286, 0
  %v1488 = vsel %vm1402, %v1287, 0
  %v1491 = vsel %vm1402, %v1288, 0
  %v1494 = vsel %vm1402, %v1289, 0
  %v1497 = vsel %vm1402, %v1290, 0
  %v1500 = vsel %vm1402, %v1291, 0
  %v1503 = vsel %vm1402, %v1292, 0
  %v1506 = vsel %vm1402, %v1293, 0
  %v1509 = vsel %vm1402, %v1294, 0
  %v1512 = vsel %vm1402, %v1295, 0
  %v1515 = vsel %vm1402, %v1296, 0
  %v1518 = vsel %vm1402, %v1297, 0
  %v1521 = vsel %vm1402, %v1298, 0
  %v1524 = vsel %vm1402, %v1299, 0
  %v1527 = vsel %vm1402, %v1300, 0
  %v1530 = vsel %vm1402, %v1301, 0
  %v1533 = vsel %vm1402, %v1302, 0
  %v1536 = vsel %vm1402, %v1303, 0
  %v1539 = vsel %vm1402, %v1304, 0
  %v1542 = vsel %vm1402, %v1305, 0
  %v1545 = vsel %vm1402, %v1306, 0
  %v1548 = vsel %vm1402, %v1307, 0
  %v1551 = vsel %vm1402, %v1308, 0
  %v1554 = vsel %vm1402, %v1309, 0
  %v1557 = vsel %vm1402, %v1310, 0
  %v1560 = vsel %vm1402, %v1311, 0
  %v1563 = vsel %vm1402, %v1312, 0
  %v1566 = vsel %vm1402, %v1313, 0
  %v1569 = vsel %vm1402, %v1314, 0
  %v1572 = vsel %vm1402, %v1315, 0
  %v1575 = vsel %vm1402, %v1316, 0
  %v1578 = vsel %vm1402, %v1317, 0
  %v1581 = vsel %vm1402, %v1318, 0
  %v1584 = vsel %vm1402, %v1319, 0
  %v1587 = vsel %vm1402, %v1320, 0
  %v1590 = vsel %vm1402, %v1321, 0
  %v1593 = vsel %vm1402, %v1322, 0
  %v1596 = vsel %vm1402, %v1323, 0
  %v1599 = vsel %vm1402, %v1324, 0
  %v1602 = vsel %vm1402, %v1325, 0
  %v1605 = vsel %vm1402, %v1326, 0
  %v1608 = vsel %vm1402, %v1327, 0
  %v1611 = vsel %vm1402, %v1328, 0
  %v1614 = vsel %vm1402, %v1329, 0
  %v1617 = vsel %vm1402, %v1330, 0
  %v1620 = vsel %vm1402, %v1331, 0
  %v1623 = vsel %vm1402, %v1332, 0
  %v1626 = vsel %vm1402, %v1333, 0
  %v1629 = vsel %vm1402, %v1334, 0
  %v1632 = vsel %vm1402, %v1335, 0
  %v1635 = vsel %vm1402, %v1336, 0
  %v1638 = vsel %vm1402, %v1337, 0
  %v1641 = vsel %vm1402, %v1338, 0
  %v1644 = vsel %vm1402, %v1339, 0
  %v1647 = vsel %vm1402, %v1340, 0
  %v1650 = vsel %vm1402, %v1341, 0
  %v1653 = vsel %vm1402, %v1342, 0
  %v1656 = vsel %vm1402, %v1343, 0
  %v1659 = vsel %vm1402, %v1344, 0
  %v1662 = vsel %vm1402, %v1345, 0
  %v1665 = vsel %vm1402, %v1346, 0
  %v1668 = vsel %vm1402, %v1347, 0
  %v1671 = vsel %vm1402, %v1348, 0
  %v1674 = vsel %vm1402, %v1349, 0
  %v1677 = vsel %vm1402, %v1350, 0
  %v1680 = vsel %vm1402, %v1351, 0
  %v1683 = vsel %vm1402, %v1352, 0
  %v1686 = vsel %vm1402, %v1353, 0
  %v1689 = vsel %vm1402, %v1354, 0
  %v1692 = vsel %vm1402, %v1355, 0
  %v1695 = vsel %vm1402, %v1356, 0
  %v1698 = vsel %vm1402, %v1357, 0
  %v1701 = vsel %vm1402, %v1358, 0
  %v1704 = vsel %vm1402, %v1359, 0
  %v1707 = vsel %vm1402, %v1360, 0
  %v1710 = vsel %vm1402, %v1361, 0
  %v1713 = vsel %vm1402, %v1362, 0
  %v1716 = vsel %vm1402, %v1363, 0
  %v1719 = vsel %vm1402, %v1364, 0
  %v1722 = vsel %vm1402, %v1365, 0
  %v1725 = vsel %vm1402, %v1366, 0
  %v1728 = vsel %vm1402, %v1367, 0
  %v1731 = vsel %vm1402, %v1368, 0
  %v1734 = vsel %vm1402, %v1369, 0
  %v1737 = vsel %vm1402, %v1370, 0
  %v1740 = vsel %vm1402, %v1371, 0
  %v1743 = vsel %vm1402, %v1372, 0
  %v1746 = vsel %vm1402, %v1373, 0
  %v1749 = vsel %vm1402, %v1374, 0
  %v1752 = vsel %vm1402, %v1375, 0
  %v1755 = vsel %vm1402, %v1376, 0
  %v1758 = vsel %vm1402, %v1377, 0
  %v1761 = vsel %vm1402, %v1378, 0
  %v1764 = vsel %vm1402, %v1379, 0
  %v1767 = vsel %vm1402, %v1380, 0
  %v1770 = vsel %vm1402, %v1381, 0
  %v1773 = vsel %vm1402, %v1382, 0
  %v1776 = vsel %vm1402, %v1383, 0
  %v1779 = vsel %vm1402, %v1384, 0
  %v1782 = vsel %vm1402, %v1385, 0
  %v1785 = vsel %vm1402, %v1386, 0
  %1787 = vmatprep.subr.mxu0 0.0
  %1788 = vmatpush1.msra.mxu0 %v1387
  %1789 = vmatprep.subr.mxu0 0.0
  %1790 = vmatpush1.msra.mxu0 %v1388
  %1791 = vmatprep.subr.mxu0 0.0
  %1792 = vmatpush1.msra.mxu0 %v1389
  %1793 = vmatprep.subr.mxu0 0.0
  %1794 = vmatpush1.msra.mxu0 %v1390
  %1795 = vmatprep.subr.mxu0 0.0
  %1796 = vmatpush1.msra.mxu0 %v1391
  %1797 = vmatprep.subr.mxu0 0.0
  %1798 = vmatpush1.msra.mxu0 %v1392
  %1799 = vmatprep.subr.mxu0 0.0
  %1800 = vmatpush1.msra.mxu0 %v1393
  %1801 = vmatprep.subr.mxu0 0.0
  %1802 = vmatpush1.msra.mxu0 %v1394
  %1803 = vmatprep.subr.mxu0 0.0
  %1804 = vmatpush1.msra.mxu0 0.0
  %1805 = vmatprep.subr.mxu0 0.0
  %1806 = vmatpush1.msra.mxu0 0.0
  %1807 = vmatprep.subr.mxu0 0.0
  %1808 = vmatpush1.msra.mxu0 0.0
  %1809 = vmatprep.subr.mxu0 0.0
  %1810 = vmatpush1.msra.mxu0 0.0
  %1811 = vmatprep.subr.mxu0 0.0
  %1812 = vmatpush1.msra.mxu0 0.0
  %1813 = vmatprep.subr.mxu0 0.0
  %1814 = vmatpush1.msra.mxu0 0.0
  %1815 = vmatprep.subr.mxu0 0.0
  %1816 = vmatpush1.msra.mxu0 0.0
  %1817 = vmatprep.subr.mxu0 0.0
  %1818 = vmatpush1.msra.mxu0 0.0
  %1819 = vmatprep.subr.mxu0 0.0
  %1820 = vmatpush1.msra.mxu0 0.0
  %1821 = vmatprep.subr.mxu0 0.0
  %1822 = vmatpush1.msra.mxu0 0.0
  %1823 = vmatprep.subr.mxu0 0.0
  %1824 = vmatpush1.msra.mxu0 0.0
  %1825 = vmatprep.subr.mxu0 0.0
  %1826 = vmatpush1.msra.mxu0 0.0
  %1827 = vmatprep.subr.mxu0 0.0
  %1828 = vmatpush1.msra.mxu0 0.0
  %1829 = vmatprep.subr.mxu0 0.0
  %1830 = vmatpush1.msra.mxu0 0.0
  %1831 = vmatprep.subr.mxu0 0.0
  %1832 = vmatpush1.msra.mxu0 0.0
  %1833 = vmatprep.subr.mxu0 0.0
  %1834 = vmatpush1.msra.mxu0 0.0
  %1835 = vmatprep.subr.mxu0 0.0
  %1836 = vmatpush1.msra.mxu0 0.0
  %1837 = vmatprep.subr.mxu0 0.0
  %1838 = vmatpush1.msra.mxu0 0.0
  %1839 = vmatprep.subr.mxu0 0.0
  %1840 = vmatpush1.msra.mxu0 0.0
  %1841 = vmatprep.subr.mxu0 0.0
  %1842 = vmatpush1.msra.mxu0 0.0
  %1843 = vmatprep.subr.mxu0 0.0
  %1844 = vmatpush1.msra.mxu0 0.0
  %1845 = vmatprep.subr.mxu0 0.0
  %1846 = vmatpush1.msra.mxu0 0.0
  %1847 = vmatprep.subr.mxu0 0.0
  %1848 = vmatpush1.msra.mxu0 0.0
  %1849 = vmatprep.subr.mxu0 0.0
  %1850 = vmatpush1.msra.mxu0 0.0
  %1851 = vmatprep.mubr.f32.mxu0 0.0
  %1852 = vmatmul.mubr.f32.gmra.mrb[0].mxu0 %v1404
  %v1853 = vpop.f32.mrb[0].mxu0
  %v1854 = vadd.f32 %v1400, %v1853
  %v1855 = vpop.f32.mrb[0].mxu0
  %1856 = vmatprep.mubr.f32.mxu0 0.0
  %1857 = vmatmul.mubr.f32.gmra.mrb[0].mxu0 %v1407
  %v1858 = vpop.f32.mrb[0].mxu0
  %v1859 = vadd.f32 %v1400, %v1858
  %v1860 = vpop.f32.mrb[0].mxu0
  %1861 = vmatprep.mubr.f32.mxu0 0.0
  %1862 = vmatmul.mubr.f32.gmra.mrb[0].mxu0 %v1410
  %v1863 = vpop.f32.mrb[0].mxu0
  %v1864 = vadd.f32 %v1400, %v1863
  %v1865 = vpop.f32.mrb[0].mxu0
  %1866 = vmatprep.mubr.f32.mxu0 0.0
  %1867 = vmatmul.mubr.f32.gmra.mrb[0].mxu0 %v1413
  %v1868 = vpop.f32.mrb[0].mxu0
  %v1869 = vadd.f32 %v1400, %v1868
  %v1870 = vpop.f32.mrb[0].mxu0
  %1871 = vmatprep.mubr.f32.mxu0 0.0
  %1872 = vmatmul.mubr.f32.gmra.mrb[0].mxu0 %v1416
  %v1873 = vpop.f32.mrb[0].mxu0
  %v1874 = vadd.f32 %v1400, %v1873
  %v1875 = vpop.f32.mrb[0].mxu0
  %1876 = vmatprep.mubr.f32.mxu0 0.0
  %1877 = vmatmul.mubr.f32.gmra.mrb[0].mxu0 %v1419
  %v1878 = vpop.f32.mrb[0].mxu0
  %v1879 = vadd.f32 %v1400, %v1878
  %v1880 = vpop.f32.mrb[0].mxu0
  %1881 = vmatprep.mubr.f32.mxu0 0.0
  %1882 = vmatmul.mubr.f32.gmra.mrb[0].mxu0 %v1422
  %v1883 = vpop.f32.mrb[0].mxu0
  %v1884 = vadd.f32 %v1400, %v1883
  %v1885 = vpop.f32.mrb[0].mxu0
  %1886 = vmatprep.mubr.f32.mxu0 0.0
  %1887 = vmatmul.mubr.f32.gmra.mrb[0].mxu0 %v1425
  %v1888 = vpop.f32.mrb[0].mxu0
  %v1889 = vadd.f32 %v1400, %v1888
  %v1890 = vpop.f32.mrb[0].mxu0
  %1891 = vmatprep.mubr.f32.mxu0 0.0
  %1892 = vmatmul.mubr.f32.gmra.mrb[0].mxu0 %v1428
  %v1893 = vpop.f32.mrb[0].mxu0
  %v1894 = vadd.f32 %v1400, %v1893
  %v1895 = vpop.f32.mrb[0].mxu0
  %1896 = vmatprep.mubr.f32.mxu0 0.0
  %1897 = vmatmul.mubr.f32.gmra.mrb[0].mxu0 %v1431
  %v1898 = vpop.f32.mrb[0].mxu0
  %v1899 = vadd.f32 %v1400, %v1898
  %v1900 = vpop.f32.mrb[0].mxu0
  %1901 = vmatprep.mubr.f32.mxu0 0.0
  %1902 = vmatmul.mubr.f32.gmra.mrb[0].mxu0 %v1434
  %v1903 = vpop.f32.mrb[0].mxu0
  %v1904 = vadd.f32 %v1400, %v1903
  %v1905 = vpop.f32.mrb[0].mxu0
  %1906 = vmatprep.mubr.f32.mxu0 0.0
  %1907 = vmatmul.mubr.f32.gmra.mrb[0].mxu0 %v1437
  %v1908 = vpop.f32.mrb[0].mxu0
  %v1909 = vadd.f32 %v1400, %v1908
  %v1910 = vpop.f32.mrb[0].mxu0
  %1911 = vmatprep.mubr.f32.mxu0 0.0
  %1912 = vmatmul.mubr.f32.gmra.mrb[0].mxu0 %v1440
  %v1913 = vpop.f32.mrb[0].mxu0
  %v1914 = vadd.f32 %v1400, %v1913
  %v1915 = vpop.f32.mrb[0].mxu0
  %1916 = vmatprep.mubr.f32.mxu0 0.0
  %1917 = vmatmul.mubr.f32.gmra.mrb[0].mxu0 %v1443
  %v1918 = vpop.f32.mrb[0].mxu0
  %v1919 = vadd.f32 %v1400, %v1918
  %v1920 = vpop.f32.mrb[0].mxu0
  %1921 = vmatprep.mubr.f32.mxu0 0.0
  %1922 = vmatmul.mubr.f32.gmra.mrb[0].mxu0 %v1446
  %v1923 = vpop.f32.mrb[0].mxu0
  %v1924 = vadd.f32 %v1400, %v1923
  %v1925 = vpop.f32.mrb[0].mxu0
  %1926 = vmatprep.mubr.f32.mxu0 0.0
  %1927 = vmatmul.mubr.f32.gmra.mrb[0].mxu0 %v1449
  %v1928 = vpop.f32.mrb[0].mxu0
  %v1929 = vadd.f32 %v1400, %v1928
  %v1930 = vpop.f32.mrb[0].mxu0
  %1931 = vmatprep.mubr.f32.mxu0 0.0
  %1932 = vmatmul.mubr.f32.gmra.mrb[0].mxu0 %v1452
  %v1933 = vpop.f32.mrb[0].mxu0
  %v1934 = vadd.f32 %v1400, %v1933
  %v1935 = vpop.f32.mrb[0].mxu0
  %1936 = vmatprep.mubr.f32.mxu0 0.0
  %1937 = vmatmul.mubr.f32.gmra.mrb[0].mxu0 %v1455
  %v1938 = vpop.f32.mrb[0].mxu0
  %v1939 = vadd.f32 %v1400, %v1938
  %v1940 = vpop.f32.mrb[0].mxu0
  %1941 = vmatprep.mubr.f32.mxu0 0.0
  %1942 = vmatmul.mubr.f32.gmra.mrb[0].mxu0 %v1458
  %v1943 = vpop.f32.mrb[0].mxu0
  %v1944 = vadd.f32 %v1400, %v1943
  %v1945 = vpop.f32.mrb[0].mxu0
  %1946 = vmatprep.mubr.f32.mxu0 0.0
  %1947 = vmatmul.mubr.f32.gmra.mrb[0].mxu0 %v1461
  %v1948 = vpop.f32.mrb[0].mxu0
  %v1949 = vadd.f32 %v1400, %v1948
  %v1950 = vpop.f32.mrb[0].mxu0
  %1951 = vmatprep.mubr.f32.mxu0 0.0
  %1952 = vmatmul.mubr.f32.gmra.mrb[0].mxu0 %v1464
  %v1953 = vpop.f32.mrb[0].mxu0
  %v1954 = vadd.f32 %v1400, %v1953
  %v1955 = vpop.f32.mrb[0].mxu0
  %1956 = vmatprep.mubr.f32.mxu0 0.0
  %1957 = vmatmul.mubr.f32.gmra.mrb[0].mxu0 %v1467
  %v1958 = vpop.f32.mrb[0].mxu0
  %v1959 = vadd.f32 %v1400, %v1958
  %v1960 = vpop.f32.mrb[0].mxu0
  %1961 = vmatprep.mubr.f32.mxu0 0.0
  %1962 = vmatmul.mubr.f32.gmra.mrb[0].mxu0 %v1470
  %v1963 = vpop.f32.mrb[0].mxu0
  %v1964 = vadd.f32 %v1400, %v1963
  %v1965 = vpop.f32.mrb[0].mxu0
  %1966 = vmatprep.mubr.f32.mxu0 0.0
  %1967 = vmatmul.mubr.f32.gmra.mrb[0].mxu0 %v1473
  %v1968 = vpop.f32.mrb[0].mxu0
  %v1969 = vadd.f32 %v1400, %v1968
  %v1970 = vpop.f32.mrb[0].mxu0
  %1971 = vmatprep.mubr.f32.mxu0 0.0
  %1972 = vmatmul.mubr.f32.gmra.mrb[0].mxu0 %v1476
  %v1973 = vpop.f32.mrb[0].mxu0
  %v1974 = vadd.f32 %v1400, %v1973
  %v1975 = vpop.f32.mrb[0].mxu0
  %1976 = vmatprep.mubr.f32.mxu0 0.0
  %1977 = vmatmul.mubr.f32.gmra.mrb[0].mxu0 %v1479
  %v1978 = vpop.f32.mrb[0].mxu0
  %v1979 = vadd.f32 %v1400, %v1978
  %v1980 = vpop.f32.mrb[0].mxu0
  %1981 = vmatprep.mubr.f32.mxu0 0.0
  %1982 = vmatmul.mubr.f32.gmra.mrb[0].mxu0 %v1482
  %v1983 = vpop.f32.mrb[0].mxu0
  %v1984 = vadd.f32 %v1400, %v1983
  %v1985 = vpop.f32.mrb[0].mxu0
  %1986 = vmatprep.mubr.f32.mxu0 0.0
  %1987 = vmatmul.mubr.f32.gmra.mrb[0].mxu0 %v1485
  %v1988 = vpop.f32.mrb[0].mxu0
  %v1989 = vadd.f32 %v1400, %v1988
  %v1990 = vpop.f32.mrb[0].mxu0
  %1991 = vmatprep.mubr.f32.mxu0 0.0
  %1992 = vmatmul.mubr.f32.gmra.mrb[0].mxu0 %v1488
  %v1993 = vpop.f32.mrb[0].mxu0
  %v1994 = vadd.f32 %v1400, %v1993
  %v1995 = vpop.f32.mrb[0].mxu0
  %1996 = vmatprep.mubr.f32.mxu0 0.0
  %1997 = vmatmul.mubr.f32.gmra.mrb[0].mxu0 %v1491
  %v1998 = vpop.f32.mrb[0].mxu0
  %v1999 = vadd.f32 %v1400, %v1998
  %v2000 = vpop.f32.mrb[0].mxu0
  %2001 = vmatprep.mubr.f32.mxu0 0.0
  %2002 = vmatmul.mubr.f32.gmra.mrb[0].mxu0 %v1494
  %v2003 = vpop.f32.mrb[0].mxu0
  %v2004 = vadd.f32 %v1400, %v2003
  %v2005 = vpop.f32.mrb[0].mxu0
  %2006 = vmatprep.mubr.f32.mxu0 0.0
  %2007 = vmatmul.mubr.f32.gmra.mrb[0].mxu0 %v1497
  %v2008 = vpop.f32.mrb[0].mxu0
  %v2009 = vadd.f32 %v1400, %v2008
  %v2010 = vpop.f32.mrb[0].mxu0
  %2011 = vmatprep.mubr.f32.mxu0 0.0
  %2012 = vmatmul.mubr.f32.gmra.mrb[0].mxu0 %v1500
  %v2013 = vpop.f32.mrb[0].mxu0
  %v2014 = vadd.f32 %v1400, %v2013
  %v2015 = vpop.f32.mrb[0].mxu0
  %2016 = vmatprep.mubr.f32.mxu0 0.0
  %2017 = vmatmul.mubr.f32.gmra.mrb[0].mxu0 %v1503
  %v2018 = vpop.f32.mrb[0].mxu0
  %v2019 = vadd.f32 %v1400, %v2018
  %v2020 = vpop.f32.mrb[0].mxu0
  %2021 = vmatprep.mubr.f32.mxu0 0.0
  %2022 = vmatmul.mubr.f32.gmra.mrb[0].mxu0 %v1506
  %v2023 = vpop.f32.mrb[0].mxu0
  %v2024 = vadd.f32 %v1400, %v2023
  %v2025 = vpop.f32.mrb[0].mxu0
  %2026 = vmatprep.mubr.f32.mxu0 0.0
  %2027 = vmatmul.mubr.f32.gmra.mrb[0].mxu0 %v1509
  %v2028 = vpop.f32.mrb[0].mxu0
  %v2029 = vadd.f32 %v1400, %v2028
  %v2030 = vpop.f32.mrb[0].mxu0
  %2031 = vmatprep.mubr.f32.mxu0 0.0
  %2032 = vmatmul.mubr.f32.gmra.mrb[0].mxu0 %v1512
  %v2033 = vpop.f32.mrb[0].mxu0
  %v2034 = vadd.f32 %v1400, %v2033
  %v2035 = vpop.f32.mrb[0].mxu0
  %2036 = vmatprep.mubr.f32.mxu0 0.0
  %2037 = vmatmul.mubr.f32.gmra.mrb[0].mxu0 %v1515
  %v2038 = vpop.f32.mrb[0].mxu0
  %v2039 = vadd.f32 %v1400, %v2038
  %v2040 = vpop.f32.mrb[0].mxu0
  %2041 = vmatprep.mubr.f32.mxu0 0.0
  %2042 = vmatmul.mubr.f32.gmra.mrb[0].mxu0 %v1518
  %v2043 = vpop.f32.mrb[0].mxu0
  %v2044 = vadd.f32 %v1400, %v2043
  %v2045 = vpop.f32.mrb[0].mxu0
  %2046 = vmatprep.mubr.f32.mxu0 0.0
  %2047 = vmatmul.mubr.f32.gmra.mrb[0].mxu0 %v1521
  %v2048 = vpop.f32.mrb[0].mxu0
  %v2049 = vadd.f32 %v1400, %v2048
  %v2050 = vpop.f32.mrb[0].mxu0
  %2051 = vmatprep.mubr.f32.mxu0 0.0
  %2052 = vmatmul.mubr.f32.gmra.mrb[0].mxu0 %v1524
  %v2053 = vpop.f32.mrb[0].mxu0
  %v2054 = vadd.f32 %v1400, %v2053
  %v2055 = vpop.f32.mrb[0].mxu0
  %2056 = vmatprep.mubr.f32.mxu0 0.0
  %2057 = vmatmul.mubr.f32.gmra.mrb[0].mxu0 %v1527
  %v2058 = vpop.f32.mrb[0].mxu0
  %v2059 = vadd.f32 %v1400, %v2058
  %v2060 = vpop.f32.mrb[0].mxu0
  %2061 = vmatprep.mubr.f32.mxu0 0.0
  %2062 = vmatmul.mubr.f32.gmra.mrb[0].mxu0 %v1530
  %v2063 = vpop.f32.mrb[0].mxu0
  %v2064 = vadd.f32 %v1400, %v2063
  %v2065 = vpop.f32.mrb[0].mxu0
  %2066 = vmatprep.mubr.f32.mxu0 0.0
  %2067 = vmatmul.mubr.f32.gmra.mrb[0].mxu0 %v1533
  %v2068 = vpop.f32.mrb[0].mxu0
  %v2069 = vadd.f32 %v1400, %v2068
  %v2070 = vpop.f32.mrb[0].mxu0
  %2071 = vmatprep.mubr.f32.mxu0 0.0
  %2072 = vmatmul.mubr.f32.gmra.mrb[0].mxu0 %v1536
  %v2073 = vpop.f32.mrb[0].mxu0
  %v2074 = vadd.f32 %v1400, %v2073
  %v2075 = vpop.f32.mrb[0].mxu0
  %2076 = vmatprep.mubr.f32.mxu0 0.0
  %2077 = vmatmul.mubr.f32.gmra.mrb[0].mxu0 %v1539
  %v2078 = vpop.f32.mrb[0].mxu0
  %v2079 = vadd.f32 %v1400, %v2078
  %v2080 = vpop.f32.mrb[0].mxu0
  %2081 = vmatprep.mubr.f32.mxu0 0.0
  %2082 = vmatmul.mubr.f32.gmra.mrb[0].mxu0 %v1542
  %v2083 = vpop.f32.mrb[0].mxu0
  %v2084 = vadd.f32 %v1400, %v2083
  %v2085 = vpop.f32.mrb[0].mxu0
  %2086 = vmatprep.mubr.f32.mxu0 0.0
  %2087 = vmatmul.mubr.f32.gmra.mrb[0].mxu0 %v1545
  %v2088 = vpop.f32.mrb[0].mxu0
  %v2089 = vadd.f32 %v1400, %v2088
  %v2090 = vpop.f32.mrb[0].mxu0
  %2091 = vmatprep.mubr.f32.mxu0 0.0
  %2092 = vmatmul.mubr.f32.gmra.mrb[0].mxu0 %v1548
  %v2093 = vpop.f32.mrb[0].mxu0
  %v2094 = vadd.f32 %v1400, %v2093
  %v2095 = vpop.f32.mrb[0].mxu0
  %2096 = vmatprep.mubr.f32.mxu0 0.0
  %2097 = vmatmul.mubr.f32.gmra.mrb[0].mxu0 %v1551
  %v2098 = vpop.f32.mrb[0].mxu0
  %v2099 = vadd.f32 %v1400, %v2098
  %v2100 = vpop.f32.mrb[0].mxu0
  %2101 = vmatprep.mubr.f32.mxu0 0.0
  %2102 = vmatmul.mubr.f32.gmra.mrb[0].mxu0 %v1554
  %v2103 = vpop.f32.mrb[0].mxu0
  %v2104 = vadd.f32 %v1400, %v2103
  %v2105 = vpop.f32.mrb[0].mxu0
  %2106 = vmatprep.mubr.f32.mxu0 0.0
  %2107 = vmatmul.mubr.f32.gmra.mrb[0].mxu0 %v1557
  %v2108 = vpop.f32.mrb[0].mxu0
  %v2109 = vadd.f32 %v1400, %v2108
  %v2110 = vpop.f32.mrb[0].mxu0
  %2111 = vmatprep.mubr.f32.mxu0 0.0
  %2112 = vmatmul.mubr.f32.gmra.mrb[0].mxu0 %v1560
  %v2113 = vpop.f32.mrb[0].mxu0
  %v2114 = vadd.f32 %v1400, %v2113
  %v2115 = vpop.f32.mrb[0].mxu0
  %2116 = vmatprep.mubr.f32.mxu0 0.0
  %2117 = vmatmul.mubr.f32.gmra.mrb[0].mxu0 %v1563
  %v2118 = vpop.f32.mrb[0].mxu0
  %v2119 = vadd.f32 %v1400, %v2118
  %v2120 = vpop.f32.mrb[0].mxu0
  %2121 = vmatprep.mubr.f32.mxu0 0.0
  %2122 = vmatmul.mubr.f32.gmra.mrb[0].mxu0 %v1566
  %v2123 = vpop.f32.mrb[0].mxu0
  %v2124 = vadd.f32 %v1400, %v2123
  %v2125 = vpop.f32.mrb[0].mxu0
  %2126 = vmatprep.mubr.f32.mxu0 0.0
  %2127 = vmatmul.mubr.f32.gmra.mrb[0].mxu0 %v1569
  %v2128 = vpop.f32.mrb[0].mxu0
  %v2129 = vadd.f32 %v1400, %v2128
  %v2130 = vpop.f32.mrb[0].mxu0
  %2131 = vmatprep.mubr.f32.mxu0 0.0
  %2132 = vmatmul.mubr.f32.gmra.mrb[0].mxu0 %v1572
  %v2133 = vpop.f32.mrb[0].mxu0
  %v2134 = vadd.f32 %v1400, %v2133
  %v2135 = vpop.f32.mrb[0].mxu0
  %2136 = vmatprep.mubr.f32.mxu0 0.0
  %2137 = vmatmul.mubr.f32.gmra.mrb[0].mxu0 %v1575
  %v2138 = vpop.f32.mrb[0].mxu0
  %v2139 = vadd.f32 %v1400, %v2138
  %v2140 = vpop.f32.mrb[0].mxu0
  %2141 = vmatprep.mubr.f32.mxu0 0.0
  %2142 = vmatmul.mubr.f32.gmra.mrb[0].mxu0 %v1578
  %v2143 = vpop.f32.mrb[0].mxu0
  %v2144 = vadd.f32 %v1400, %v2143
  %v2145 = vpop.f32.mrb[0].mxu0
  %2146 = vmatprep.mubr.f32.mxu0 0.0
  %2147 = vmatmul.mubr.f32.gmra.mrb[0].mxu0 %v1581
  %v2148 = vpop.f32.mrb[0].mxu0
  %v2149 = vadd.f32 %v1400, %v2148
  %v2150 = vpop.f32.mrb[0].mxu0
  %2151 = vmatprep.mubr.f32.mxu0 0.0
  %2152 = vmatmul.mubr.f32.gmra.mrb[0].mxu0 %v1584
  %v2153 = vpop.f32.mrb[0].mxu0
  %v2154 = vadd.f32 %v1400, %v2153
  %v2155 = vpop.f32.mrb[0].mxu0
  %2156 = vmatprep.mubr.f32.mxu0 0.0
  %2157 = vmatmul.mubr.f32.gmra.mrb[0].mxu0 %v1587
  %v2158 = vpop.f32.mrb[0].mxu0
  %v2159 = vadd.f32 %v1400, %v2158
  %v2160 = vpop.f32.mrb[0].mxu0
  %2161 = vmatprep.mubr.f32.mxu0 0.0
  %2162 = vmatmul.mubr.f32.gmra.mrb[0].mxu0 %v1590
  %v2163 = vpop.f32.mrb[0].mxu0
  %v2164 = vadd.f32 %v1400, %v2163
  %v2165 = vpop.f32.mrb[0].mxu0
  %2166 = vmatprep.mubr.f32.mxu0 0.0
  %2167 = vmatmul.mubr.f32.gmra.mrb[0].mxu0 %v1593
  %v2168 = vpop.f32.mrb[0].mxu0
  %v2169 = vadd.f32 %v1400, %v2168
  %v2170 = vpop.f32.mrb[0].mxu0
  %2171 = vmatprep.mubr.f32.mxu0 0.0
  %2172 = vmatmul.mubr.f32.gmra.mrb[0].mxu0 %v1596
  %v2173 = vpop.f32.mrb[0].mxu0
  %v2174 = vadd.f32 %v1400, %v2173
  %v2175 = vpop.f32.mrb[0].mxu0
  %2176 = vmatprep.mubr.f32.mxu0 0.0
  %2177 = vmatmul.mubr.f32.gmra.mrb[0].mxu0 %v1599
  %v2178 = vpop.f32.mrb[0].mxu0
  %v2179 = vadd.f32 %v1400, %v2178
  %v2180 = vpop.f32.mrb[0].mxu0
  %2181 = vmatprep.mubr.f32.mxu0 0.0
  %2182 = vmatmul.mubr.f32.gmra.mrb[0].mxu0 %v1602
  %v2183 = vpop.f32.mrb[0].mxu0
  %v2184 = vadd.f32 %v1400, %v2183
  %v2185 = vpop.f32.mrb[0].mxu0
  %2186 = vmatprep.mubr.f32.mxu0 0.0
  %2187 = vmatmul.mubr.f32.gmra.mrb[0].mxu0 %v1605
  %v2188 = vpop.f32.mrb[0].mxu0
  %v2189 = vadd.f32 %v1400, %v2188
  %v2190 = vpop.f32.mrb[0].mxu0
  %2191 = vmatprep.mubr.f32.mxu0 0.0
  %2192 = vmatmul.mubr.f32.gmra.mrb[0].mxu0 %v1608
  %v2193 = vpop.f32.mrb[0].mxu0
  %v2194 = vadd.f32 %v1400, %v2193
  %v2195 = vpop.f32.mrb[0].mxu0
  %2196 = vmatprep.mubr.f32.mxu0 0.0
  %2197 = vmatmul.mubr.f32.gmra.mrb[0].mxu0 %v1611
  %v2198 = vpop.f32.mrb[0].mxu0
  %v2199 = vadd.f32 %v1400, %v2198
  %v2200 = vpop.f32.mrb[0].mxu0
  %2201 = vmatprep.mubr.f32.mxu0 0.0
  %2202 = vmatmul.mubr.f32.gmra.mrb[0].mxu0 %v1614
  %v2203 = vpop.f32.mrb[0].mxu0
  %v2204 = vadd.f32 %v1400, %v2203
  %v2205 = vpop.f32.mrb[0].mxu0
  %2206 = vmatprep.mubr.f32.mxu0 0.0
  %2207 = vmatmul.mubr.f32.gmra.mrb[0].mxu0 %v1617
  %v2208 = vpop.f32.mrb[0].mxu0
  %v2209 = vadd.f32 %v1400, %v2208
  %v2210 = vpop.f32.mrb[0].mxu0
  %2211 = vmatprep.mubr.f32.mxu0 0.0
  %2212 = vmatmul.mubr.f32.gmra.mrb[0].mxu0 %v1620
  %v2213 = vpop.f32.mrb[0].mxu0
  %v2214 = vadd.f32 %v1400, %v2213
  %v2215 = vpop.f32.mrb[0].mxu0
  %2216 = vmatprep.mubr.f32.mxu0 0.0
  %2217 = vmatmul.mubr.f32.gmra.mrb[0].mxu0 %v1623
  %v2218 = vpop.f32.mrb[0].mxu0
  %v2219 = vadd.f32 %v1400, %v2218
  %v2220 = vpop.f32.mrb[0].mxu0
  %2221 = vmatprep.mubr.f32.mxu0 0.0
  %2222 = vmatmul.mubr.f32.gmra.mrb[0].mxu0 %v1626
  %v2223 = vpop.f32.mrb[0].mxu0
  %v2224 = vadd.f32 %v1400, %v2223
  %v2225 = vpop.f32.mrb[0].mxu0
  %2226 = vmatprep.mubr.f32.mxu0 0.0
  %2227 = vmatmul.mubr.f32.gmra.mrb[0].mxu0 %v1629
  %v2228 = vpop.f32.mrb[0].mxu0
  %v2229 = vadd.f32 %v1400, %v2228
  %v2230 = vpop.f32.mrb[0].mxu0
  %2231 = vmatprep.mubr.f32.mxu0 0.0
  %2232 = vmatmul.mubr.f32.gmra.mrb[0].mxu0 %v1632
  %v2233 = vpop.f32.mrb[0].mxu0
  %v2234 = vadd.f32 %v1400, %v2233
  %v2235 = vpop.f32.mrb[0].mxu0
  %2236 = vmatprep.mubr.f32.mxu0 0.0
  %2237 = vmatmul.mubr.f32.gmra.mrb[0].mxu0 %v1635
  %v2238 = vpop.f32.mrb[0].mxu0
  %v2239 = vadd.f32 %v1400, %v2238
  %v2240 = vpop.f32.mrb[0].mxu0
  %2241 = vmatprep.mubr.f32.mxu0 0.0
  %2242 = vmatmul.mubr.f32.gmra.mrb[0].mxu0 %v1638
  %v2243 = vpop.f32.mrb[0].mxu0
  %v2244 = vadd.f32 %v1400, %v2243
  %v2245 = vpop.f32.mrb[0].mxu0
  %2246 = vmatprep.mubr.f32.mxu0 0.0
  %2247 = vmatmul.mubr.f32.gmra.mrb[0].mxu0 %v1641
  %v2248 = vpop.f32.mrb[0].mxu0
  %v2249 = vadd.f32 %v1400, %v2248
  %v2250 = vpop.f32.mrb[0].mxu0
  %2251 = vmatprep.mubr.f32.mxu0 0.0
  %2252 = vmatmul.mubr.f32.gmra.mrb[0].mxu0 %v1644
  %v2253 = vpop.f32.mrb[0].mxu0
  %v2254 = vadd.f32 %v1400, %v2253
  %v2255 = vpop.f32.mrb[0].mxu0
  %2256 = vmatprep.mubr.f32.mxu0 0.0
  %2257 = vmatmul.mubr.f32.gmra.mrb[0].mxu0 %v1647
  %v2258 = vpop.f32.mrb[0].mxu0
  %v2259 = vadd.f32 %v1400, %v2258
  %v2260 = vpop.f32.mrb[0].mxu0
  %2261 = vmatprep.mubr.f32.mxu0 0.0
  %2262 = vmatmul.mubr.f32.gmra.mrb[0].mxu0 %v1650
  %v2263 = vpop.f32.mrb[0].mxu0
  %v2264 = vadd.f32 %v1400, %v2263
  %v2265 = vpop.f32.mrb[0].mxu0
  %2266 = vmatprep.mubr.f32.mxu0 0.0
  %2267 = vmatmul.mubr.f32.gmra.mrb[0].mxu0 %v1653
  %v2268 = vpop.f32.mrb[0].mxu0
  %v2269 = vadd.f32 %v1400, %v2268
  %v2270 = vpop.f32.mrb[0].mxu0
  %2271 = vmatprep.mubr.f32.mxu0 0.0
  %2272 = vmatmul.mubr.f32.gmra.mrb[0].mxu0 %v1656
  %v2273 = vpop.f32.mrb[0].mxu0
  %v2274 = vadd.f32 %v1400, %v2273
  %v2275 = vpop.f32.mrb[0].mxu0
  %2276 = vmatprep.mubr.f32.mxu0 0.0
  %2277 = vmatmul.mubr.f32.gmra.mrb[0].mxu0 %v1659
  %v2278 = vpop.f32.mrb[0].mxu0
  %v2279 = vadd.f32 %v1400, %v2278
  %v2280 = vpop.f32.mrb[0].mxu0
  %2281 = vmatprep.mubr.f32.mxu0 0.0
  %2282 = vmatmul.mubr.f32.gmra.mrb[0].mxu0 %v1662
  %v2283 = vpop.f32.mrb[0].mxu0
  %v2284 = vadd.f32 %v1400, %v2283
  %v2285 = vpop.f32.mrb[0].mxu0
  %2286 = vmatprep.mubr.f32.mxu0 0.0
  %2287 = vmatmul.mubr.f32.gmra.mrb[0].mxu0 %v1665
  %v2288 = vpop.f32.mrb[0].mxu0
  %v2289 = vadd.f32 %v1400, %v2288
  %v2290 = vpop.f32.mrb[0].mxu0
  %2291 = vmatprep.mubr.f32.mxu0 0.0
  %2292 = vmatmul.mubr.f32.gmra.mrb[0].mxu0 %v1668
  %v2293 = vpop.f32.mrb[0].mxu0
  %v2294 = vadd.f32 %v1400, %v2293
  %v2295 = vpop.f32.mrb[0].mxu0
  %2296 = vmatprep.mubr.f32.mxu0 0.0
  %2297 = vmatmul.mubr.f32.gmra.mrb[0].mxu0 %v1671
  %v2298 = vpop.f32.mrb[0].mxu0
  %v2299 = vadd.f32 %v1400, %v2298
  %v2300 = vpop.f32.mrb[0].mxu0
  %2301 = vmatprep.mubr.f32.mxu0 0.0
  %2302 = vmatmul.mubr.f32.gmra.mrb[0].mxu0 %v1674
  %v2303 = vpop.f32.mrb[0].mxu0
  %v2304 = vadd.f32 %v1400, %v2303
  %v2305 = vpop.f32.mrb[0].mxu0
  %2306 = vmatprep.mubr.f32.mxu0 0.0
  %2307 = vmatmul.mubr.f32.gmra.mrb[0].mxu0 %v1677
  %v2308 = vpop.f32.mrb[0].mxu0
  %v2309 = vadd.f32 %v1400, %v2308
  %v2310 = vpop.f32.mrb[0].mxu0
  %2311 = vmatprep.mubr.f32.mxu0 0.0
  %2312 = vmatmul.mubr.f32.gmra.mrb[0].mxu0 %v1680
  %v2313 = vpop.f32.mrb[0].mxu0
  %v2314 = vadd.f32 %v1400, %v2313
  %v2315 = vpop.f32.mrb[0].mxu0
  %2316 = vmatprep.mubr.f32.mxu0 0.0
  %2317 = vmatmul.mubr.f32.gmra.mrb[0].mxu0 %v1683
  %v2318 = vpop.f32.mrb[0].mxu0
  %v2319 = vadd.f32 %v1400, %v2318
  %v2320 = vpop.f32.mrb[0].mxu0
  %2321 = vmatprep.mubr.f32.mxu0 0.0
  %2322 = vmatmul.mubr.f32.gmra.mrb[0].mxu0 %v1686
  %v2323 = vpop.f32.mrb[0].mxu0
  %v2324 = vadd.f32 %v1400, %v2323
  %v2325 = vpop.f32.mrb[0].mxu0
  %2326 = vmatprep.mubr.f32.mxu0 0.0
  %2327 = vmatmul.mubr.f32.gmra.mrb[0].mxu0 %v1689
  %v2328 = vpop.f32.mrb[0].mxu0
  %v2329 = vadd.f32 %v1400, %v2328
  %v2330 = vpop.f32.mrb[0].mxu0
  %2331 = vmatprep.mubr.f32.mxu0 0.0
  %2332 = vmatmul.mubr.f32.gmra.mrb[0].mxu0 %v1692
  %v2333 = vpop.f32.mrb[0].mxu0
  %v2334 = vadd.f32 %v1400, %v2333
  %v2335 = vpop.f32.mrb[0].mxu0
  %2336 = vmatprep.mubr.f32.mxu0 0.0
  %2337 = vmatmul.mubr.f32.gmra.mrb[0].mxu0 %v1695
  %v2338 = vpop.f32.mrb[0].mxu0
  %v2339 = vadd.f32 %v1400, %v2338
  %v2340 = vpop.f32.mrb[0].mxu0
  %2341 = vmatprep.mubr.f32.mxu0 0.0
  %2342 = vmatmul.mubr.f32.gmra.mrb[0].mxu0 %v1698
  %v2343 = vpop.f32.mrb[0].mxu0
  %v2344 = vadd.f32 %v1400, %v2343
  %v2345 = vpop.f32.mrb[0].mxu0
  %2346 = vmatprep.mubr.f32.mxu0 0.0
  %2347 = vmatmul.mubr.f32.gmra.mrb[0].mxu0 %v1701
  %v2348 = vpop.f32.mrb[0].mxu0
  %v2349 = vadd.f32 %v1400, %v2348
  %v2350 = vpop.f32.mrb[0].mxu0
  %2351 = vmatprep.mubr.f32.mxu0 0.0
  %2352 = vmatmul.mubr.f32.gmra.mrb[0].mxu0 %v1704
  %v2353 = vpop.f32.mrb[0].mxu0
  %v2354 = vadd.f32 %v1400, %v2353
  %v2355 = vpop.f32.mrb[0].mxu0
  %2356 = vmatprep.mubr.f32.mxu0 0.0
  %2357 = vmatmul.mubr.f32.gmra.mrb[0].mxu0 %v1707
  %v2358 = vpop.f32.mrb[0].mxu0
  %v2359 = vadd.f32 %v1400, %v2358
  %v2360 = vpop.f32.mrb[0].mxu0
  %2361 = vmatprep.mubr.f32.mxu0 0.0
  %2362 = vmatmul.mubr.f32.gmra.mrb[0].mxu0 %v1710
  %v2363 = vpop.f32.mrb[0].mxu0
  %v2364 = vadd.f32 %v1400, %v2363
  %v2365 = vpop.f32.mrb[0].mxu0
  %2366 = vmatprep.mubr.f32.mxu0 0.0
  %2367 = vmatmul.mubr.f32.gmra.mrb[0].mxu0 %v1713
  %v2368 = vpop.f32.mrb[0].mxu0
  %v2369 = vadd.f32 %v1400, %v2368
  %v2370 = vpop.f32.mrb[0].mxu0
  %2371 = vmatprep.mubr.f32.mxu0 0.0
  %2372 = vmatmul.mubr.f32.gmra.mrb[0].mxu0 %v1716
  %v2373 = vpop.f32.mrb[0].mxu0
  %v2374 = vadd.f32 %v1400, %v2373
  %v2375 = vpop.f32.mrb[0].mxu0
  %2376 = vmatprep.mubr.f32.mxu0 0.0
  %2377 = vmatmul.mubr.f32.gmra.mrb[0].mxu0 %v1719
  %v2378 = vpop.f32.mrb[0].mxu0
  %v2379 = vadd.f32 %v1400, %v2378
  %v2380 = vpop.f32.mrb[0].mxu0
  %2381 = vmatprep.mubr.f32.mxu0 0.0
  %2382 = vmatmul.mubr.f32.gmra.mrb[0].mxu0 %v1722
  %v2383 = vpop.f32.mrb[0].mxu0
  %v2384 = vadd.f32 %v1400, %v2383
  %v2385 = vpop.f32.mrb[0].mxu0
  %2386 = vmatprep.mubr.f32.mxu0 0.0
  %2387 = vmatmul.mubr.f32.gmra.mrb[0].mxu0 %v1725
  %v2388 = vpop.f32.mrb[0].mxu0
  %v2389 = vadd.f32 %v1400, %v2388
  %v2390 = vpop.f32.mrb[0].mxu0
  %2391 = vmatprep.mubr.f32.mxu0 0.0
  %2392 = vmatmul.mubr.f32.gmra.mrb[0].mxu0 %v1728
  %v2393 = vpop.f32.mrb[0].mxu0
  %v2394 = vadd.f32 %v1400, %v2393
  %v2395 = vpop.f32.mrb[0].mxu0
  %2396 = vmatprep.mubr.f32.mxu0 0.0
  %2397 = vmatmul.mubr.f32.gmra.mrb[0].mxu0 %v1731
  %v2398 = vpop.f32.mrb[0].mxu0
  %v2399 = vadd.f32 %v1400, %v2398
  %v2400 = vpop.f32.mrb[0].mxu0
  %2401 = vmatprep.mubr.f32.mxu0 0.0
  %2402 = vmatmul.mubr.f32.gmra.mrb[0].mxu0 %v1734
  %v2403 = vpop.f32.mrb[0].mxu0
  %v2404 = vadd.f32 %v1400, %v2403
  %v2405 = vpop.f32.mrb[0].mxu0
  %2406 = vmatprep.mubr.f32.mxu0 0.0
  %2407 = vmatmul.mubr.f32.gmra.mrb[0].mxu0 %v1737
  %v2408 = vpop.f32.mrb[0].mxu0
  %v2409 = vadd.f32 %v1400, %v2408
  %v2410 = vpop.f32.mrb[0].mxu0
  %2411 = vmatprep.mubr.f32.mxu0 0.0
  %2412 = vmatmul.mubr.f32.gmra.mrb[0].mxu0 %v1740
  %v2413 = vpop.f32.mrb[0].mxu0
  %v2414 = vadd.f32 %v1400, %v2413
  %v2415 = vpop.f32.mrb[0].mxu0
  %2416 = vmatprep.mubr.f32.mxu0 0.0
  %2417 = vmatmul.mubr.f32.gmra.mrb[0].mxu0 %v1743
  %v2418 = vpop.f32.mrb[0].mxu0
  %v2419 = vadd.f32 %v1400, %v2418
  %v2420 = vpop.f32.mrb[0].mxu0
  %2421 = vmatprep.mubr.f32.mxu0 0.0
  %2422 = vmatmul.mubr.f32.gmra.mrb[0].mxu0 %v1746
  %v2423 = vpop.f32.mrb[0].mxu0
  %v2424 = vadd.f32 %v1400, %v2423
  %v2425 = vpop.f32.mrb[0].mxu0
  %2426 = vmatprep.mubr.f32.mxu0 0.0
  %2427 = vmatmul.mubr.f32.gmra.mrb[0].mxu0 %v1749
  %v2428 = vpop.f32.mrb[0].mxu0
  %v2429 = vadd.f32 %v1400, %v2428
  %v2430 = vpop.f32.mrb[0].mxu0
  %2431 = vmatprep.mubr.f32.mxu0 0.0
  %2432 = vmatmul.mubr.f32.gmra.mrb[0].mxu0 %v1752
  %v2433 = vpop.f32.mrb[0].mxu0
  %v2434 = vadd.f32 %v1400, %v2433
  %v2435 = vpop.f32.mrb[0].mxu0
  %2436 = vmatprep.mubr.f32.mxu0 0.0
  %2437 = vmatmul.mubr.f32.gmra.mrb[0].mxu0 %v1755
  %v2438 = vpop.f32.mrb[0].mxu0
  %v2439 = vadd.f32 %v1400, %v2438
  %v2440 = vpop.f32.mrb[0].mxu0
  %2441 = vmatprep.mubr.f32.mxu0 0.0
  %2442 = vmatmul.mubr.f32.gmra.mrb[0].mxu0 %v1758
  %v2443 = vpop.f32.mrb[0].mxu0
  %v2444 = vadd.f32 %v1400, %v2443
  %v2445 = vpop.f32.mrb[0].mxu0
  %2446 = vmatprep.mubr.f32.mxu0 0.0
  %2447 = vmatmul.mubr.f32.gmra.mrb[0].mxu0 %v1761
  %v2448 = vpop.f32.mrb[0].mxu0
  %v2449 = vadd.f32 %v1400, %v2448
  %v2450 = vpop.f32.mrb[0].mxu0
  %2451 = vmatprep.mubr.f32.mxu0 0.0
  %2452 = vmatmul.mubr.f32.gmra.mrb[0].mxu0 %v1764
  %v2453 = vpop.f32.mrb[0].mxu0
  %v2454 = vadd.f32 %v1400, %v2453
  %v2455 = vpop.f32.mrb[0].mxu0
  %2456 = vmatprep.mubr.f32.mxu0 0.0
  %2457 = vmatmul.mubr.f32.gmra.mrb[0].mxu0 %v1767
  %v2458 = vpop.f32.mrb[0].mxu0
  %v2459 = vadd.f32 %v1400, %v2458
  %v2460 = vpop.f32.mrb[0].mxu0
  %2461 = vmatprep.mubr.f32.mxu0 0.0
  %2462 = vmatmul.mubr.f32.gmra.mrb[0].mxu0 %v1770
  %v2463 = vpop.f32.mrb[0].mxu0
  %v2464 = vadd.f32 %v1400, %v2463
  %v2465 = vpop.f32.mrb[0].mxu0
  %2466 = vmatprep.mubr.f32.mxu0 0.0
  %2467 = vmatmul.mubr.f32.gmra.mrb[0].mxu0 %v1773
  %v2468 = vpop.f32.mrb[0].mxu0
  %v2469 = vadd.f32 %v1400, %v2468
  %v2470 = vpop.f32.mrb[0].mxu0
  %2471 = vmatprep.mubr.f32.mxu0 0.0
  %2472 = vmatmul.mubr.f32.gmra.mrb[0].mxu0 %v1776
  %v2473 = vpop.f32.mrb[0].mxu0
  %v2474 = vadd.f32 %v1400, %v2473
  %v2475 = vpop.f32.mrb[0].mxu0
  %2476 = vmatprep.mubr.f32.mxu0 0.0
  %2477 = vmatmul.mubr.f32.gmra.mrb[0].mxu0 %v1779
  %v2478 = vpop.f32.mrb[0].mxu0
  %v2479 = vadd.f32 %v1400, %v2478
  %v2480 = vpop.f32.mrb[0].mxu0
  %2481 = vmatprep.mubr.f32.mxu0 0.0
  %2482 = vmatmul.mubr.f32.gmra.mrb[0].mxu0 %v1782
  %v2483 = vpop.f32.mrb[0].mxu0
  %v2484 = vadd.f32 %v1400, %v2483
  %v2485 = vpop.f32.mrb[0].mxu0
  %2486 = vmatprep.mubr.f32.mxu0 0.0
  %2487 = vmatmul.mubr.f32.gmra.mrb[0].mxu0 %v1785
  %v2488 = vpop.f32.mrb[0].mxu0
  %v2489 = vadd.f32 %v1400, %v2488
  %v2490 = vpop.f32.mrb[0].mxu0
  %2491 = vdwg.mxu0
  %v2492 = vmax.f32 %v1854, 0.0
  %v2493 = vmax.f32 %v1859, 0.0
  %v2494 = vmax.f32 %v1864, 0.0
  %v2495 = vmax.f32 %v1869, 0.0
  %v2496 = vmax.f32 %v1874, 0.0
  %v2497 = vmax.f32 %v1879, 0.0
  %v2498 = vmax.f32 %v1884, 0.0
  %v2499 = vmax.f32 %v1889, 0.0
  %v2500 = vmax.f32 %v1894, 0.0
  %v2501 = vmax.f32 %v1899, 0.0
  %v2502 = vmax.f32 %v1904, 0.0
  %v2503 = vmax.f32 %v1909, 0.0
  %v2504 = vmax.f32 %v1914, 0.0
  %v2505 = vmax.f32 %v1919, 0.0
  %v2506 = vmax.f32 %v1924, 0.0
  %v2507 = vmax.f32 %v1929, 0.0
  %v2508 = vmax.f32 %v1934, 0.0
  %v2509 = vmax.f32 %v1939, 0.0
  %v2510 = vmax.f32 %v1944, 0.0
  %v2511 = vmax.f32 %v1949, 0.0
  %v2512 = vmax.f32 %v1954, 0.0
  %v2513 = vmax.f32 %v1959, 0.0
  %v2514 = vmax.f32 %v1964, 0.0
  %v2515 = vmax.f32 %v1969, 0.0
  %v2516 = vmax.f32 %v1974, 0.0
  %v2517 = vmax.f32 %v1979, 0.0
  %v2518 = vmax.f32 %v1984, 0.0
  %v2519 = vmax.f32 %v1989, 0.0
  %v2520 = vmax.f32 %v1994, 0.0
  %v2521 = vmax.f32 %v1999, 0.0
  %v2522 = vmax.f32 %v2004, 0.0
  %v2523 = vmax.f32 %v2009, 0.0
  %v2524 = vmax.f32 %v2014, 0.0
  %v2525 = vmax.f32 %v2019, 0.0
  %v2526 = vmax.f32 %v2024, 0.0
  %v2527 = vmax.f32 %v2029, 0.0
  %v2528 = vmax.f32 %v2034, 0.0
  %v2529 = vmax.f32 %v2039, 0.0
  %v2530 = vmax.f32 %v2044, 0.0
  %v2531 = vmax.f32 %v2049, 0.0
  %v2532 = vmax.f32 %v2054, 0.0
  %v2533 = vmax.f32 %v2059, 0.0
  %v2534 = vmax.f32 %v2064, 0.0
  %v2535 = vmax.f32 %v2069, 0.0
  %v2536 = vmax.f32 %v2074, 0.0
  %v2537 = vmax.f32 %v2079, 0.0
  %v2538 = vmax.f32 %v2084, 0.0
  %v2539 = vmax.f32 %v2089, 0.0
  %v2540 = vmax.f32 %v2094, 0.0
  %v2541 = vmax.f32 %v2099, 0.0
  %v2542 = vmax.f32 %v2104, 0.0
  %v2543 = vmax.f32 %v2109, 0.0
  %v2544 = vmax.f32 %v2114, 0.0
  %v2545 = vmax.f32 %v2119, 0.0
  %v2546 = vmax.f32 %v2124, 0.0
  %v2547 = vmax.f32 %v2129, 0.0
  %v2548 = vmax.f32 %v2134, 0.0
  %v2549 = vmax.f32 %v2139, 0.0
  %v2550 = vmax.f32 %v2144, 0.0
  %v2551 = vmax.f32 %v2149, 0.0
  %v2552 = vmax.f32 %v2154, 0.0
  %v2553 = vmax.f32 %v2159, 0.0
  %v2554 = vmax.f32 %v2164, 0.0
  %v2555 = vmax.f32 %v2169, 0.0
  %v2556 = vmax.f32 %v2174, 0.0
  %v2557 = vmax.f32 %v2179, 0.0
  %v2558 = vmax.f32 %v2184, 0.0
  %v2559 = vmax.f32 %v2189, 0.0
  %v2560 = vmax.f32 %v2194, 0.0
  %v2561 = vmax.f32 %v2199, 0.0
  %v2562 = vmax.f32 %v2204, 0.0
  %v2563 = vmax.f32 %v2209, 0.0
  %v2564 = vmax.f32 %v2214, 0.0
  %v2565 = vmax.f32 %v2219, 0.0
  %v2566 = vmax.f32 %v2224, 0.0
  %v2567 = vmax.f32 %v2229, 0.0
  %v2568 = vmax.f32 %v2234, 0.0
  %v2569 = vmax.f32 %v2239, 0.0
  %v2570 = vmax.f32 %v2244, 0.0
  %v2571 = vmax.f32 %v2249, 0.0
  %v2572 = vmax.f32 %v2254, 0.0
  %v2573 = vmax.f32 %v2259, 0.0
  %v2574 = vmax.f32 %v2264, 0.0
  %v2575 = vmax.f32 %v2269, 0.0
  %v2576 = vmax.f32 %v2274, 0.0
  %v2577 = vmax.f32 %v2279, 0.0
  %v2578 = vmax.f32 %v2284, 0.0
  %v2579 = vmax.f32 %v2289, 0.0
  %v2580 = vmax.f32 %v2294, 0.0
  %v2581 = vmax.f32 %v2299, 0.0
  %v2582 = vmax.f32 %v2304, 0.0
  %v2583 = vmax.f32 %v2309, 0.0
  %v2584 = vmax.f32 %v2314, 0.0
  %v2585 = vmax.f32 %v2319, 0.0
  %v2586 = vmax.f32 %v2324, 0.0
  %v2587 = vmax.f32 %v2329, 0.0
  %v2588 = vmax.f32 %v2334, 0.0
  %v2589 = vmax.f32 %v2339, 0.0
  %v2590 = vmax.f32 %v2344, 0.0
  %v2591 = vmax.f32 %v2349, 0.0
  %v2592 = vmax.f32 %v2354, 0.0
  %v2593 = vmax.f32 %v2359, 0.0
  %v2594 = vmax.f32 %v2364, 0.0
  %v2595 = vmax.f32 %v2369, 0.0
  %v2596 = vmax.f32 %v2374, 0.0
  %v2597 = vmax.f32 %v2379, 0.0
  %v2598 = vmax.f32 %v2384, 0.0
  %v2599 = vmax.f32 %v2389, 0.0
  %v2600 = vmax.f32 %v2394, 0.0
  %v2601 = vmax.f32 %v2399, 0.0
  %v2602 = vmax.f32 %v2404, 0.0
  %v2603 = vmax.f32 %v2409, 0.0
  %v2604 = vmax.f32 %v2414, 0.0
  %v2605 = vmax.f32 %v2419, 0.0
  %v2606 = vmax.f32 %v2424, 0.0
  %v2607 = vmax.f32 %v2429, 0.0
  %v2608 = vmax.f32 %v2434, 0.0
  %v2609 = vmax.f32 %v2439, 0.0
  %v2610 = vmax.f32 %v2444, 0.0
  %v2611 = vmax.f32 %v2449, 0.0
  %v2612 = vmax.f32 %v2454, 0.0
  %v2613 = vmax.f32 %v2459, 0.0
  %v2614 = vmax.f32 %v2464, 0.0
  %v2615 = vmax.f32 %v2469, 0.0
  %v2616 = vmax.f32 %v2474, 0.0
  %v2617 = vmax.f32 %v2479, 0.0
  %v2618 = vmax.f32 %v2484, 0.0
  %v2619 = vmax.f32 %v2489, 0.0
  %v2620 = vld [vmem:[%s5] sm:$0x1]
  %v2622 = vlaneseq
  %v2623 = vshrl.u32 %v2622, 7
  %v2624 = vsub.s32 0, %v2623
  %v2625 = vrot.slane %v2620, %v2624
  %v2627 = vmul.f32 %v2492, %v2625
  %v2628 = vmul.f32 %v2493, %v2625
  %v2629 = vmul.f32 %v2494, %v2625
  %v2630 = vmul.f32 %v2495, %v2625
  %v2631 = vmul.f32 %v2496, %v2625
  %v2632 = vmul.f32 %v2497, %v2625
  %v2633 = vmul.f32 %v2498, %v2625
  %v2634 = vmul.f32 %v2499, %v2625
  %v2635 = vmul.f32 %v2500, %v2625
  %v2636 = vmul.f32 %v2501, %v2625
  %v2637 = vmul.f32 %v2502, %v2625
  %v2638 = vmul.f32 %v2503, %v2625
  %v2639 = vmul.f32 %v2504, %v2625
  %v2640 = vmul.f32 %v2505, %v2625
  %v2641 = vmul.f32 %v2506, %v2625
  %v2642 = vmul.f32 %v2507, %v2625
  %v2643 = vmul.f32 %v2508, %v2625
  %v2644 = vmul.f32 %v2509, %v2625
  %v2645 = vmul.f32 %v2510, %v2625
  %v2646 = vmul.f32 %v2511, %v2625
  %v2647 = vmul.f32 %v2512, %v2625
  %v2648 = vmul.f32 %v2513, %v2625
  %v2649 = vmul.f32 %v2514, %v2625
  %v2650 = vmul.f32 %v2515, %v2625
  %v2651 = vmul.f32 %v2516, %v2625
  %v2652 = vmul.f32 %v2517, %v2625
  %v2653 = vmul.f32 %v2518, %v2625
  %v2654 = vmul.f32 %v2519, %v2625
  %v2655 = vmul.f32 %v2520, %v2625
  %v2656 = vmul.f32 %v2521, %v2625
  %v2657 = vmul.f32 %v2522, %v2625
  %v2658 = vmul.f32 %v2523, %v2625
  %v2659 = vmul.f32 %v2524, %v2625
  %v2660 = vmul.f32 %v2525, %v2625
  %v2661 = vmul.f32 %v2526, %v2625
  %v2662 = vmul.f32 %v2527, %v2625
  %v2663 = vmul.f32 %v2528, %v2625
  %v2664 = vmul.f32 %v2529, %v2625
  %v2665 = vmul.f32 %v2530, %v2625
  %v2666 = vmul.f32 %v2531, %v2625
  %v2667 = vmul.f32 %v2532, %v2625
  %v2668 = vmul.f32 %v2533, %v2625
  %v2669 = vmul.f32 %v2534, %v2625
  %v2670 = vmul.f32 %v2535, %v2625
  %v2671 = vmul.f32 %v2536, %v2625
  %v2672 = vmul.f32 %v2537, %v2625
  %v2673 = vmul.f32 %v2538, %v2625
  %v2674 = vmul.f32 %v2539, %v2625
  %v2675 = vmul.f32 %v2540, %v2625
  %v2676 = vmul.f32 %v2541, %v2625
  %v2677 = vmul.f32 %v2542, %v2625
  %v2678 = vmul.f32 %v2543, %v2625
  %v2679 = vmul.f32 %v2544, %v2625
  %v2680 = vmul.f32 %v2545, %v2625
  %v2681 = vmul.f32 %v2546, %v2625
  %v2682 = vmul.f32 %v2547, %v2625
  %v2683 = vmul.f32 %v2548, %v2625
  %v2684 = vmul.f32 %v2549, %v2625
  %v2685 = vmul.f32 %v2550, %v2625
  %v2686 = vmul.f32 %v2551, %v2625
  %v2687 = vmul.f32 %v2552, %v2625
  %v2688 = vmul.f32 %v2553, %v2625
  %v2689 = vmul.f32 %v2554, %v2625
  %v2690 = vmul.f32 %v2555, %v2625
  %v2691 = vmul.f32 %v2556, %v2625
  %v2692 = vmul.f32 %v2557, %v2625
  %v2693 = vmul.f32 %v2558, %v2625
  %v2694 = vmul.f32 %v2559, %v2625
  %v2695 = vmul.f32 %v2560, %v2625
  %v2696 = vmul.f32 %v2561, %v2625
  %v2697 = vmul.f32 %v2562, %v2625
  %v2698 = vmul.f32 %v2563, %v2625
  %v2699 = vmul.f32 %v2564, %v2625
  %v2700 = vmul.f32 %v2565, %v2625
  %v2701 = vmul.f32 %v2566, %v2625
  %v2702 = vmul.f32 %v2567, %v2625
  %v2703 = vmul.f32 %v2568, %v2625
  %v2704 = vmul.f32 %v2569, %v2625
  %v2705 = vmul.f32 %v2570, %v2625
  %v2706 = vmul.f32 %v2571, %v2625
  %v2707 = vmul.f32 %v2572, %v2625
  %v2708 = vmul.f32 %v2573, %v2625
  %v2709 = vmul.f32 %v2574, %v2625
  %v2710 = vmul.f32 %v2575, %v2625
  %v2711 = vmul.f32 %v2576, %v2625
  %v2712 = vmul.f32 %v2577, %v2625
  %v2713 = vmul.f32 %v2578, %v2625
  %v2714 = vmul.f32 %v2579, %v2625
  %v2715 = vmul.f32 %v2580, %v2625
  %v2716 = vmul.f32 %v2581, %v2625
  %v2717 = vmul.f32 %v2582, %v2625
  %v2718 = vmul.f32 %v2583, %v2625
  %v2719 = vmul.f32 %v2584, %v2625
  %v2720 = vmul.f32 %v2585, %v2625
  %v2721 = vmul.f32 %v2586, %v2625
  %v2722 = vmul.f32 %v2587, %v2625
  %v2723 = vmul.f32 %v2588, %v2625
  %v2724 = vmul.f32 %v2589, %v2625
  %v2725 = vmul.f32 %v2590, %v2625
  %v2726 = vmul.f32 %v2591, %v2625
  %v2727 = vmul.f32 %v2592, %v2625
  %v2728 = vmul.f32 %v2593, %v2625
  %v2729 = vmul.f32 %v2594, %v2625
  %v2730 = vmul.f32 %v2595, %v2625
  %v2731 = vmul.f32 %v2596, %v2625
  %v2732 = vmul.f32 %v2597, %v2625
  %v2733 = vmul.f32 %v2598, %v2625
  %v2734 = vmul.f32 %v2599, %v2625
  %v2735 = vmul.f32 %v2600, %v2625
  %v2736 = vmul.f32 %v2601, %v2625
  %v2737 = vmul.f32 %v2602, %v2625
  %v2738 = vmul.f32 %v2603, %v2625
  %v2739 = vmul.f32 %v2604, %v2625
  %v2740 = vmul.f32 %v2605, %v2625
  %v2741 = vmul.f32 %v2606, %v2625
  %v2742 = vmul.f32 %v2607, %v2625
  %v2743 = vmul.f32 %v2608, %v2625
  %v2744 = vmul.f32 %v2609, %v2625
  %v2745 = vmul.f32 %v2610, %v2625
  %v2746 = vmul.f32 %v2611, %v2625
  %v2747 = vmul.f32 %v2612, %v2625
  %v2748 = vmul.f32 %v2613, %v2625
  %v2749 = vmul.f32 %v2614, %v2625
  %v2750 = vmul.f32 %v2615, %v2625
  %v2751 = vmul.f32 %v2616, %v2625
  %v2752 = vmul.f32 %v2617, %v2625
  %v2753 = vmul.f32 %v2618, %v2625
  %v2754 = vmul.f32 %v2619, %v2625
  %vm2755 = vcmask 261120
  %v2756 = vsel %vm2755, %v2627, 0.0
  %2757 = vadd.xlane.f32.xlu0 %v2756
  %v2758 = vpop.xlane.xlu0 %2757
  %v2759 = vsel %vm2755, %v2628, 0.0
  %2760 = vadd.xlane.f32.xlu0 %v2759
  %v2761 = vpop.xlane.xlu0 %2760
  %v2762 = vsel %vm2755, %v2629, 0.0
  %2763 = vadd.xlane.f32.xlu0 %v2762
  %v2764 = vpop.xlane.xlu0 %2763
  %v2765 = vsel %vm2755, %v2630, 0.0
  %2766 = vadd.xlane.f32.xlu0 %v2765
  %v2767 = vpop.xlane.xlu0 %2766
  %v2768 = vsel %vm2755, %v2631, 0.0
  %2769 = vadd.xlane.f32.xlu0 %v2768
  %v2770 = vpop.xlane.xlu0 %2769
  %v2771 = vsel %vm2755, %v2632, 0.0
  %2772 = vadd.xlane.f32.xlu0 %v2771
  %v2773 = vpop.xlane.xlu0 %2772
  %v2774 = vsel %vm2755, %v2633, 0.0
  %2775 = vadd.xlane.f32.xlu0 %v2774
  %v2776 = vpop.xlane.xlu0 %2775
  %v2777 = vsel %vm2755, %v2634, 0.0
  %2778 = vadd.xlane.f32.xlu0 %v2777
  %v2779 = vpop.xlane.xlu0 %2778
  %v2780 = vsel %vm2755, %v2635, 0.0
  %2781 = vadd.xlane.f32.xlu0 %v2780
  %v2782 = vpop.xlane.xlu0 %2781
  %v2783 = vsel %vm2755, %v2636, 0.0
  %2784 = vadd.xlane.f32.xlu0 %v2783
  %v2785 = vpop.xlane.xlu0 %2784
  %v2786 = vsel %vm2755, %v2637, 0.0
  %2787 = vadd.xlane.f32.xlu0 %v2786
  %v2788 = vpop.xlane.xlu0 %2787
  %v2789 = vsel %vm2755, %v2638, 0.0
  %2790 = vadd.xlane.f32.xlu0 %v2789
  %v2791 = vpop.xlane.xlu0 %2790
  %v2792 = vsel %vm2755, %v2639, 0.0
  %2793 = vadd.xlane.f32.xlu0 %v2792
  %v2794 = vpop.xlane.xlu0 %2793
  %v2795 = vsel %vm2755, %v2640, 0.0
  %2796 = vadd.xlane.f32.xlu0 %v2795
  %v2797 = vpop.xlane.xlu0 %2796
  %v2798 = vsel %vm2755, %v2641, 0.0
  %2799 = vadd.xlane.f32.xlu0 %v2798
  %v2800 = vpop.xlane.xlu0 %2799
  %v2801 = vsel %vm2755, %v2642, 0.0
  %2802 = vadd.xlane.f32.xlu0 %v2801
  %v2803 = vpop.xlane.xlu0 %2802
  %v2804 = vsel %vm2755, %v2643, 0.0
  %2805 = vadd.xlane.f32.xlu0 %v2804
  %v2806 = vpop.xlane.xlu0 %2805
  %v2807 = vsel %vm2755, %v2644, 0.0
  %2808 = vadd.xlane.f32.xlu0 %v2807
  %v2809 = vpop.xlane.xlu0 %2808
  %v2810 = vsel %vm2755, %v2645, 0.0
  %2811 = vadd.xlane.f32.xlu0 %v2810
  %v2812 = vpop.xlane.xlu0 %2811
  %v2813 = vsel %vm2755, %v2646, 0.0
  %2814 = vadd.xlane.f32.xlu0 %v2813
  %v2815 = vpop.xlane.xlu0 %2814
  %v2816 = vsel %vm2755, %v2647, 0.0
  %2817 = vadd.xlane.f32.xlu0 %v2816
  %v2818 = vpop.xlane.xlu0 %2817
  %v2819 = vsel %vm2755, %v2648, 0.0
  %2820 = vadd.xlane.f32.xlu0 %v2819
  %v2821 = vpop.xlane.xlu0 %2820
  %v2822 = vsel %vm2755, %v2649, 0.0
  %2823 = vadd.xlane.f32.xlu0 %v2822
  %v2824 = vpop.xlane.xlu0 %2823
  %v2825 = vsel %vm2755, %v2650, 0.0
  %2826 = vadd.xlane.f32.xlu0 %v2825
  %v2827 = vpop.xlane.xlu0 %2826
  %v2828 = vsel %vm2755, %v2651, 0.0
  %2829 = vadd.xlane.f32.xlu0 %v2828
  %v2830 = vpop.xlane.xlu0 %2829
  %v2831 = vsel %vm2755, %v2652, 0.0
  %2832 = vadd.xlane.f32.xlu0 %v2831
  %v2833 = vpop.xlane.xlu0 %2832
  %v2834 = vsel %vm2755, %v2653, 0.0
  %2835 = vadd.xlane.f32.xlu0 %v2834
  %v2836 = vpop.xlane.xlu0 %2835
  %v2837 = vsel %vm2755, %v2654, 0.0
  %2838 = vadd.xlane.f32.xlu0 %v2837
  %v2839 = vpop.xlane.xlu0 %2838
  %v2840 = vsel %vm2755, %v2655, 0.0
  %2841 = vadd.xlane.f32.xlu0 %v2840
  %v2842 = vpop.xlane.xlu0 %2841
  %v2843 = vsel %vm2755, %v2656, 0.0
  %2844 = vadd.xlane.f32.xlu0 %v2843
  %v2845 = vpop.xlane.xlu0 %2844
  %v2846 = vsel %vm2755, %v2657, 0.0
  %2847 = vadd.xlane.f32.xlu0 %v2846
  %v2848 = vpop.xlane.xlu0 %2847
  %v2849 = vsel %vm2755, %v2658, 0.0
  %2850 = vadd.xlane.f32.xlu0 %v2849
  %v2851 = vpop.xlane.xlu0 %2850
  %v2852 = vsel %vm2755, %v2659, 0.0
  %2853 = vadd.xlane.f32.xlu0 %v2852
  %v2854 = vpop.xlane.xlu0 %2853
  %v2855 = vsel %vm2755, %v2660, 0.0
  %2856 = vadd.xlane.f32.xlu0 %v2855
  %v2857 = vpop.xlane.xlu0 %2856
  %v2858 = vsel %vm2755, %v2661, 0.0
  %2859 = vadd.xlane.f32.xlu0 %v2858
  %v2860 = vpop.xlane.xlu0 %2859
  %v2861 = vsel %vm2755, %v2662, 0.0
  %2862 = vadd.xlane.f32.xlu0 %v2861
  %v2863 = vpop.xlane.xlu0 %2862
  %v2864 = vsel %vm2755, %v2663, 0.0
  %2865 = vadd.xlane.f32.xlu0 %v2864
  %v2866 = vpop.xlane.xlu0 %2865
  %v2867 = vsel %vm2755, %v2664, 0.0
  %2868 = vadd.xlane.f32.xlu0 %v2867
  %v2869 = vpop.xlane.xlu0 %2868
  %v2870 = vsel %vm2755, %v2665, 0.0
  %2871 = vadd.xlane.f32.xlu0 %v2870
  %v2872 = vpop.xlane.xlu0 %2871
  %v2873 = vsel %vm2755, %v2666, 0.0
  %2874 = vadd.xlane.f32.xlu0 %v2873
  %v2875 = vpop.xlane.xlu0 %2874
  %v2876 = vsel %vm2755, %v2667, 0.0
  %2877 = vadd.xlane.f32.xlu0 %v2876
  %v2878 = vpop.xlane.xlu0 %2877
  %v2879 = vsel %vm2755, %v2668, 0.0
  %2880 = vadd.xlane.f32.xlu0 %v2879
  %v2881 = vpop.xlane.xlu0 %2880
  %v2882 = vsel %vm2755, %v2669, 0.0
  %2883 = vadd.xlane.f32.xlu0 %v2882
  %v2884 = vpop.xlane.xlu0 %2883
  %v2885 = vsel %vm2755, %v2670, 0.0
  %2886 = vadd.xlane.f32.xlu0 %v2885
  %v2887 = vpop.xlane.xlu0 %2886
  %v2888 = vsel %vm2755, %v2671, 0.0
  %2889 = vadd.xlane.f32.xlu0 %v2888
  %v2890 = vpop.xlane.xlu0 %2889
  %v2891 = vsel %vm2755, %v2672, 0.0
  %2892 = vadd.xlane.f32.xlu0 %v2891
  %v2893 = vpop.xlane.xlu0 %2892
  %v2894 = vsel %vm2755, %v2673, 0.0
  %2895 = vadd.xlane.f32.xlu0 %v2894
  %v2896 = vpop.xlane.xlu0 %2895
  %v2897 = vsel %vm2755, %v2674, 0.0
  %2898 = vadd.xlane.f32.xlu0 %v2897
  %v2899 = vpop.xlane.xlu0 %2898
  %v2900 = vsel %vm2755, %v2675, 0.0
  %2901 = vadd.xlane.f32.xlu0 %v2900
  %v2902 = vpop.xlane.xlu0 %2901
  %v2903 = vsel %vm2755, %v2676, 0.0
  %2904 = vadd.xlane.f32.xlu0 %v2903
  %v2905 = vpop.xlane.xlu0 %2904
  %v2906 = vsel %vm2755, %v2677, 0.0
  %2907 = vadd.xlane.f32.xlu0 %v2906
  %v2908 = vpop.xlane.xlu0 %2907
  %v2909 = vsel %vm2755, %v2678, 0.0
  %2910 = vadd.xlane.f32.xlu0 %v2909
  %v2911 = vpop.xlane.xlu0 %2910
  %v2912 = vsel %vm2755, %v2679, 0.0
  %2913 = vadd.xlane.f32.xlu0 %v2912
  %v2914 = vpop.xlane.xlu0 %2913
  %v2915 = vsel %vm2755, %v2680, 0.0
  %2916 = vadd.xlane.f32.xlu0 %v2915
  %v2917 = vpop.xlane.xlu0 %2916
  %v2918 = vsel %vm2755, %v2681, 0.0
  %2919 = vadd.xlane.f32.xlu0 %v2918
  %v2920 = vpop.xlane.xlu0 %2919
  %v2921 = vsel %vm2755, %v2682, 0.0
  %2922 = vadd.xlane.f32.xlu0 %v2921
  %v2923 = vpop.xlane.xlu0 %2922
  %v2924 = vsel %vm2755, %v2683, 0.0
  %2925 = vadd.xlane.f32.xlu0 %v2924
  %v2926 = vpop.xlane.xlu0 %2925
  %v2927 = vsel %vm2755, %v2684, 0.0
  %2928 = vadd.xlane.f32.xlu0 %v2927
  %v2929 = vpop.xlane.xlu0 %2928
  %v2930 = vsel %vm2755, %v2685, 0.0
  %2931 = vadd.xlane.f32.xlu0 %v2930
  %v2932 = vpop.xlane.xlu0 %2931
  %v2933 = vsel %vm2755, %v2686, 0.0
  %2934 = vadd.xlane.f32.xlu0 %v2933
  %v2935 = vpop.xlane.xlu0 %2934
  %v2936 = vsel %vm2755, %v2687, 0.0
  %2937 = vadd.xlane.f32.xlu0 %v2936
  %v2938 = vpop.xlane.xlu0 %2937
  %v2939 = vsel %vm2755, %v2688, 0.0
  %2940 = vadd.xlane.f32.xlu0 %v2939
  %v2941 = vpop.xlane.xlu0 %2940
  %v2942 = vsel %vm2755, %v2689, 0.0
  %2943 = vadd.xlane.f32.xlu0 %v2942
  %v2944 = vpop.xlane.xlu0 %2943
  %v2945 = vsel %vm2755, %v2690, 0.0
  %2946 = vadd.xlane.f32.xlu0 %v2945
  %v2947 = vpop.xlane.xlu0 %2946
  %v2948 = vsel %vm2755, %v2691, 0.0
  %2949 = vadd.xlane.f32.xlu0 %v2948
  %v2950 = vpop.xlane.xlu0 %2949
  %v2951 = vsel %vm2755, %v2692, 0.0
  %2952 = vadd.xlane.f32.xlu0 %v2951
  %v2953 = vpop.xlane.xlu0 %2952
  %v2954 = vsel %vm2755, %v2693, 0.0
  %2955 = vadd.xlane.f32.xlu0 %v2954
  %v2956 = vpop.xlane.xlu0 %2955
  %v2957 = vsel %vm2755, %v2694, 0.0
  %2958 = vadd.xlane.f32.xlu0 %v2957
  %v2959 = vpop.xlane.xlu0 %2958
  %v2960 = vsel %vm2755, %v2695, 0.0
  %2961 = vadd.xlane.f32.xlu0 %v2960
  %v2962 = vpop.xlane.xlu0 %2961
  %v2963 = vsel %vm2755, %v2696, 0.0
  %2964 = vadd.xlane.f32.xlu0 %v2963
  %v2965 = vpop.xlane.xlu0 %2964
  %v2966 = vsel %vm2755, %v2697, 0.0
  %2967 = vadd.xlane.f32.xlu0 %v2966
  %v2968 = vpop.xlane.xlu0 %2967
  %v2969 = vsel %vm2755, %v2698, 0.0
  %2970 = vadd.xlane.f32.xlu0 %v2969
  %v2971 = vpop.xlane.xlu0 %2970
  %v2972 = vsel %vm2755, %v2699, 0.0
  %2973 = vadd.xlane.f32.xlu0 %v2972
  %v2974 = vpop.xlane.xlu0 %2973
  %v2975 = vsel %vm2755, %v2700, 0.0
  %2976 = vadd.xlane.f32.xlu0 %v2975
  %v2977 = vpop.xlane.xlu0 %2976
  %v2978 = vsel %vm2755, %v2701, 0.0
  %2979 = vadd.xlane.f32.xlu0 %v2978
  %v2980 = vpop.xlane.xlu0 %2979
  %v2981 = vsel %vm2755, %v2702, 0.0
  %2982 = vadd.xlane.f32.xlu0 %v2981
  %v2983 = vpop.xlane.xlu0 %2982
  %v2984 = vsel %vm2755, %v2703, 0.0
  %2985 = vadd.xlane.f32.xlu0 %v2984
  %v2986 = vpop.xlane.xlu0 %2985
  %v2987 = vsel %vm2755, %v2704, 0.0
  %2988 = vadd.xlane.f32.xlu0 %v2987
  %v2989 = vpop.xlane.xlu0 %2988
  %v2990 = vsel %vm2755, %v2705, 0.0
  %2991 = vadd.xlane.f32.xlu0 %v2990
  %v2992 = vpop.xlane.xlu0 %2991
  %v2993 = vsel %vm2755, %v2706, 0.0
  %2994 = vadd.xlane.f32.xlu0 %v2993
  %v2995 = vpop.xlane.xlu0 %2994
  %v2996 = vsel %vm2755, %v2707, 0.0
  %2997 = vadd.xlane.f32.xlu0 %v2996
  %v2998 = vpop.xlane.xlu0 %2997
  %v2999 = vsel %vm2755, %v2708, 0.0
  %3000 = vadd.xlane.f32.xlu0 %v2999
  %v3001 = vpop.xlane.xlu0 %3000
  %v3002 = vsel %vm2755, %v2709, 0.0
  %3003 = vadd.xlane.f32.xlu0 %v3002
  %v3004 = vpop.xlane.xlu0 %3003
  %v3005 = vsel %vm2755, %v2710, 0.0
  %3006 = vadd.xlane.f32.xlu0 %v3005
  %v3007 = vpop.xlane.xlu0 %3006
  %v3008 = vsel %vm2755, %v2711, 0.0
  %3009 = vadd.xlane.f32.xlu0 %v3008
  %v3010 = vpop.xlane.xlu0 %3009
  %v3011 = vsel %vm2755, %v2712, 0.0
  %3012 = vadd.xlane.f32.xlu0 %v3011
  %v3013 = vpop.xlane.xlu0 %3012
  %v3014 = vsel %vm2755, %v2713, 0.0
  %3015 = vadd.xlane.f32.xlu0 %v3014
  %v3016 = vpop.xlane.xlu0 %3015
  %v3017 = vsel %vm2755, %v2714, 0.0
  %3018 = vadd.xlane.f32.xlu0 %v3017
  %v3019 = vpop.xlane.xlu0 %3018
  %v3020 = vsel %vm2755, %v2715, 0.0
  %3021 = vadd.xlane.f32.xlu0 %v3020
  %v3022 = vpop.xlane.xlu0 %3021
  %v3023 = vsel %vm2755, %v2716, 0.0
  %3024 = vadd.xlane.f32.xlu0 %v3023
  %v3025 = vpop.xlane.xlu0 %3024
  %v3026 = vsel %vm2755, %v2717, 0.0
  %3027 = vadd.xlane.f32.xlu0 %v3026
  %v3028 = vpop.xlane.xlu0 %3027
  %v3029 = vsel %vm2755, %v2718, 0.0
  %3030 = vadd.xlane.f32.xlu0 %v3029
  %v3031 = vpop.xlane.xlu0 %3030
  %v3032 = vsel %vm2755, %v2719, 0.0
  %3033 = vadd.xlane.f32.xlu0 %v3032
  %v3034 = vpop.xlane.xlu0 %3033
  %v3035 = vsel %vm2755, %v2720, 0.0
  %3036 = vadd.xlane.f32.xlu0 %v3035
  %v3037 = vpop.xlane.xlu0 %3036
  %v3038 = vsel %vm2755, %v2721, 0.0
  %3039 = vadd.xlane.f32.xlu0 %v3038
  %v3040 = vpop.xlane.xlu0 %3039
  %v3041 = vsel %vm2755, %v2722, 0.0
  %3042 = vadd.xlane.f32.xlu0 %v3041
  %v3043 = vpop.xlane.xlu0 %3042
  %v3044 = vsel %vm2755, %v2723, 0.0
  %3045 = vadd.xlane.f32.xlu0 %v3044
  %v3046 = vpop.xlane.xlu0 %3045
  %v3047 = vsel %vm2755, %v2724, 0.0
  %3048 = vadd.xlane.f32.xlu0 %v3047
  %v3049 = vpop.xlane.xlu0 %3048
  %v3050 = vsel %vm2755, %v2725, 0.0
  %3051 = vadd.xlane.f32.xlu0 %v3050
  %v3052 = vpop.xlane.xlu0 %3051
  %v3053 = vsel %vm2755, %v2726, 0.0
  %3054 = vadd.xlane.f32.xlu0 %v3053
  %v3055 = vpop.xlane.xlu0 %3054
  %v3056 = vsel %vm2755, %v2727, 0.0
  %3057 = vadd.xlane.f32.xlu0 %v3056
  %v3058 = vpop.xlane.xlu0 %3057
  %v3059 = vsel %vm2755, %v2728, 0.0
  %3060 = vadd.xlane.f32.xlu0 %v3059
  %v3061 = vpop.xlane.xlu0 %3060
  %v3062 = vsel %vm2755, %v2729, 0.0
  %3063 = vadd.xlane.f32.xlu0 %v3062
  %v3064 = vpop.xlane.xlu0 %3063
  %v3065 = vsel %vm2755, %v2730, 0.0
  %3066 = vadd.xlane.f32.xlu0 %v3065
  %v3067 = vpop.xlane.xlu0 %3066
  %v3068 = vsel %vm2755, %v2731, 0.0
  %3069 = vadd.xlane.f32.xlu0 %v3068
  %v3070 = vpop.xlane.xlu0 %3069
  %v3071 = vsel %vm2755, %v2732, 0.0
  %3072 = vadd.xlane.f32.xlu0 %v3071
  %v3073 = vpop.xlane.xlu0 %3072
  %v3074 = vsel %vm2755, %v2733, 0.0
  %3075 = vadd.xlane.f32.xlu0 %v3074
  %v3076 = vpop.xlane.xlu0 %3075
  %v3077 = vsel %vm2755, %v2734, 0.0
  %3078 = vadd.xlane.f32.xlu0 %v3077
  %v3079 = vpop.xlane.xlu0 %3078
  %v3080 = vsel %vm2755, %v2735, 0.0
  %3081 = vadd.xlane.f32.xlu0 %v3080
  %v3082 = vpop.xlane.xlu0 %3081
  %v3083 = vsel %vm2755, %v2736, 0.0
  %3084 = vadd.xlane.f32.xlu0 %v3083
  %v3085 = vpop.xlane.xlu0 %3084
  %v3086 = vsel %vm2755, %v2737, 0.0
  %3087 = vadd.xlane.f32.xlu0 %v3086
  %v3088 = vpop.xlane.xlu0 %3087
  %v3089 = vsel %vm2755, %v2738, 0.0
  %3090 = vadd.xlane.f32.xlu0 %v3089
  %v3091 = vpop.xlane.xlu0 %3090
  %v3092 = vsel %vm2755, %v2739, 0.0
  %3093 = vadd.xlane.f32.xlu0 %v3092
  %v3094 = vpop.xlane.xlu0 %3093
  %v3095 = vsel %vm2755, %v2740, 0.0
  %3096 = vadd.xlane.f32.xlu0 %v3095
  %v3097 = vpop.xlane.xlu0 %3096
  %v3098 = vsel %vm2755, %v2741, 0.0
  %3099 = vadd.xlane.f32.xlu0 %v3098
  %v3100 = vpop.xlane.xlu0 %3099
  %v3101 = vsel %vm2755, %v2742, 0.0
  %3102 = vadd.xlane.f32.xlu0 %v3101
  %v3103 = vpop.xlane.xlu0 %3102
  %v3104 = vsel %vm2755, %v2743, 0.0
  %3105 = vadd.xlane.f32.xlu0 %v3104
  %v3106 = vpop.xlane.xlu0 %3105
  %v3107 = vsel %vm2755, %v2744, 0.0
  %3108 = vadd.xlane.f32.xlu0 %v3107
  %v3109 = vpop.xlane.xlu0 %3108
  %v3110 = vsel %vm2755, %v2745, 0.0
  %3111 = vadd.xlane.f32.xlu0 %v3110
  %v3112 = vpop.xlane.xlu0 %3111
  %v3113 = vsel %vm2755, %v2746, 0.0
  %3114 = vadd.xlane.f32.xlu0 %v3113
  %v3115 = vpop.xlane.xlu0 %3114
  %v3116 = vsel %vm2755, %v2747, 0.0
  %3117 = vadd.xlane.f32.xlu0 %v3116
  %v3118 = vpop.xlane.xlu0 %3117
  %v3119 = vsel %vm2755, %v2748, 0.0
  %3120 = vadd.xlane.f32.xlu0 %v3119
  %v3121 = vpop.xlane.xlu0 %3120
  %v3122 = vsel %vm2755, %v2749, 0.0
  %3123 = vadd.xlane.f32.xlu0 %v3122
  %v3124 = vpop.xlane.xlu0 %3123
  %v3125 = vsel %vm2755, %v2750, 0.0
  %3126 = vadd.xlane.f32.xlu0 %v3125
  %v3127 = vpop.xlane.xlu0 %3126
  %v3128 = vsel %vm2755, %v2751, 0.0
  %3129 = vadd.xlane.f32.xlu0 %v3128
  %v3130 = vpop.xlane.xlu0 %3129
  %v3131 = vsel %vm2755, %v2752, 0.0
  %3132 = vadd.xlane.f32.xlu0 %v3131
  %v3133 = vpop.xlane.xlu0 %3132
  %v3134 = vsel %vm2755, %v2753, 0.0
  %3135 = vadd.xlane.f32.xlu0 %v3134
  %v3136 = vpop.xlane.xlu0 %3135
  %v3137 = vsel %vm2755, %v2754, 0.0
  %3138 = vadd.xlane.f32.xlu0 %v3137
  %v3139 = vpop.xlane.xlu0 %3138
  %v3140 = vld [vmem:[#allocation2] sm:$0x1]
  %3142 = vset.pattern.permute.xlu0 0
  %3143 = vperm.xlu0 %3142, %v3140
  %v3144 = vpop.permute.xlu0 %3143
  %v3146 = vlaneseq
  %v3147 = vshrl.u32 %v3146, 7
  %v3148 = vsub.s32 0, %v3147
  %v3149 = vrot.slane %v3144, %v3148
  %v3150 = vadd.f32 %v2758, %v3149
  %v3151 = vadd.f32 %v2761, %v3149
  %v3152 = vadd.f32 %v2764, %v3149
  %v3153 = vadd.f32 %v2767, %v3149
  %v3154 = vadd.f32 %v2770, %v3149
  %v3155 = vadd.f32 %v2773, %v3149
  %v3156 = vadd.f32 %v2776, %v3149
  %v3157 = vadd.f32 %v2779, %v3149
  %v3158 = vadd.f32 %v2782, %v3149
  %v3159 = vadd.f32 %v2785, %v3149
  %v3160 = vadd.f32 %v2788, %v3149
  %v3161 = vadd.f32 %v2791, %v3149
  %v3162 = vadd.f32 %v2794, %v3149
  %v3163 = vadd.f32 %v2797, %v3149
  %v3164 = vadd.f32 %v2800, %v3149
  %v3165 = vadd.f32 %v2803, %v3149
  %v3166 = vadd.f32 %v2806, %v3149
  %v3167 = vadd.f32 %v2809, %v3149
  %v3168 = vadd.f32 %v2812, %v3149
  %v3169 = vadd.f32 %v2815, %v3149
  %v3170 = vadd.f32 %v2818, %v3149
  %v3171 = vadd.f32 %v2821, %v3149
  %v3172 = vadd.f32 %v2824, %v3149
  %v3173 = vadd.f32 %v2827, %v3149
  %v3174 = vadd.f32 %v2830, %v3149
  %v3175 = vadd.f32 %v2833, %v3149
  %v3176 = vadd.f32 %v2836, %v3149
  %v3177 = vadd.f32 %v2839, %v3149
  %v3178 = vadd.f32 %v2842, %v3149
  %v3179 = vadd.f32 %v2845, %v3149
  %v3180 = vadd.f32 %v2848, %v3149
  %v3181 = vadd.f32 %v2851, %v3149
  %v3182 = vadd.f32 %v2854, %v3149
  %v3183 = vadd.f32 %v2857, %v3149
  %v3184 = vadd.f32 %v2860, %v3149
  %v3185 = vadd.f32 %v2863, %v3149
  %v3186 = vadd.f32 %v2866, %v3149
  %v3187 = vadd.f32 %v2869, %v3149
  %v3188 = vadd.f32 %v2872, %v3149
  %v3189 = vadd.f32 %v2875, %v3149
  %v3190 = vadd.f32 %v2878, %v3149
  %v3191 = vadd.f32 %v2881, %v3149
  %v3192 = vadd.f32 %v2884, %v3149
  %v3193 = vadd.f32 %v2887, %v3149
  %v3194 = vadd.f32 %v2890, %v3149
  %v3195 = vadd.f32 %v2893, %v3149
  %v3196 = vadd.f32 %v2896, %v3149
  %v3197 = vadd.f32 %v2899, %v3149
  %v3198 = vadd.f32 %v2902, %v3149
  %v3199 = vadd.f32 %v2905, %v3149
  %v3200 = vadd.f32 %v2908, %v3149
  %v3201 = vadd.f32 %v2911, %v3149
  %v3202 = vadd.f32 %v2914, %v3149
  %v3203 = vadd.f32 %v2917, %v3149
  %v3204 = vadd.f32 %v2920, %v3149
  %v3205 = vadd.f32 %v2923, %v3149
  %v3206 = vadd.f32 %v2926, %v3149
  %v3207 = vadd.f32 %v2929, %v3149
  %v3208 = vadd.f32 %v2932, %v3149
  %v3209 = vadd.f32 %v2935, %v3149
  %v3210 = vadd.f32 %v2938, %v3149
  %v3211 = vadd.f32 %v2941, %v3149
  %v3212 = vadd.f32 %v2944, %v3149
  %v3213 = vadd.f32 %v2947, %v3149
  %v3214 = vadd.f32 %v2950, %v3149
  %v3215 = vadd.f32 %v2953, %v3149
  %v3216 = vadd.f32 %v2956, %v3149
  %v3217 = vadd.f32 %v2959, %v3149
  %v3218 = vadd.f32 %v2962, %v3149
  %v3219 = vadd.f32 %v2965, %v3149
  %v3220 = vadd.f32 %v2968, %v3149
  %v3221 = vadd.f32 %v2971, %v3149
  %v3222 = vadd.f32 %v2974, %v3149
  %v3223 = vadd.f32 %v2977, %v3149
  %v3224 = vadd.f32 %v2980, %v3149
  %v3225 = vadd.f32 %v2983, %v3149
  %v3226 = vadd.f32 %v2986, %v3149
  %v3227 = vadd.f32 %v2989, %v3149
  %v3228 = vadd.f32 %v2992, %v3149
  %v3229 = vadd.f32 %v2995, %v3149
  %v3230 = vadd.f32 %v2998, %v3149
  %v3231 = vadd.f32 %v3001, %v3149
  %v3232 = vadd.f32 %v3004, %v3149
  %v3233 = vadd.f32 %v3007, %v3149
  %v3234 = vadd.f32 %v3010, %v3149
  %v3235 = vadd.f32 %v3013, %v3149
  %v3236 = vadd.f32 %v3016, %v3149
  %v3237 = vadd.f32 %v3019, %v3149
  %v3238 = vadd.f32 %v3022, %v3149
  %v3239 = vadd.f32 %v3025, %v3149
  %v3240 = vadd.f32 %v3028, %v3149
  %v3241 = vadd.f32 %v3031, %v3149
  %v3242 = vadd.f32 %v3034, %v3149
  %v3243 = vadd.f32 %v3037, %v3149
  %v3244 = vadd.f32 %v3040, %v3149
  %v3245 = vadd.f32 %v3043, %v3149
  %v3246 = vadd.f32 %v3046, %v3149
  %v3247 = vadd.f32 %v3049, %v3149
  %v3248 = vadd.f32 %v3052, %v3149
  %v3249 = vadd.f32 %v3055, %v3149
  %v3250 = vadd.f32 %v3058, %v3149
  %v3251 = vadd.f32 %v3061, %v3149
  %v3252 = vadd.f32 %v3064, %v3149
  %v3253 = vadd.f32 %v3067, %v3149
  %v3254 = vadd.f32 %v3070, %v3149
  %v3255 = vadd.f32 %v3073, %v3149
  %v3256 = vadd.f32 %v3076, %v3149
  %v3257 = vadd.f32 %v3079, %v3149
  %v3258 = vadd.f32 %v3082, %v3149
  %v3259 = vadd.f32 %v3085, %v3149
  %v3260 = vadd.f32 %v3088, %v3149
  %v3261 = vadd.f32 %v3091, %v3149
  %v3262 = vadd.f32 %v3094, %v3149
  %v3263 = vadd.f32 %v3097, %v3149
  %v3264 = vadd.f32 %v3100, %v3149
  %v3265 = vadd.f32 %v3103, %v3149
  %v3266 = vadd.f32 %v3106, %v3149
  %v3267 = vadd.f32 %v3109, %v3149
  %v3268 = vadd.f32 %v3112, %v3149
  %v3269 = vadd.f32 %v3115, %v3149
  %v3270 = vadd.f32 %v3118, %v3149
  %v3271 = vadd.f32 %v3121, %v3149
  %v3272 = vadd.f32 %v3124, %v3149
  %v3273 = vadd.f32 %v3127, %v3149
  %v3274 = vadd.f32 %v3130, %v3149
  %v3275 = vadd.f32 %v3133, %v3149
  %v3276 = vadd.f32 %v3136, %v3149
  %v3277 = vadd.f32 %v3139, %v3149
  %v3406 = vlaneseq
  %v3407 = vshrl.u32 %v3406, 7
  %v3408 = vsub.s32 0, %v3407
  %v3409 = vrot.slane %v3150, %v3408
  %v3410 = vlaneseq
  %v3411 = vshrl.u32 %v3410, 7
  %v3412 = vsub.s32 1, %v3411
  %v3413 = vrot.slane %v3150, %v3412
  %v3414 = vlaneseq
  %v3415 = vshrl.u32 %v3414, 7
  %v3416 = vsub.s32 2, %v3415
  %v3417 = vrot.slane %v3150, %v3416
  %v3418 = vlaneseq
  %v3419 = vshrl.u32 %v3418, 7
  %v3420 = vsub.s32 3, %v3419
  %v3421 = vrot.slane %v3150, %v3420
  %v3422 = vlaneseq
  %v3423 = vshrl.u32 %v3422, 7
  %v3424 = vsub.s32 4, %v3423
  %v3425 = vrot.slane %v3150, %v3424
  %v3426 = vlaneseq
  %v3427 = vshrl.u32 %v3426, 7
  %v3428 = vsub.s32 5, %v3427
  %v3429 = vrot.slane %v3150, %v3428
  %v3430 = vlaneseq
  %v3431 = vshrl.u32 %v3430, 7
  %v3432 = vsub.s32 6, %v3431
  %v3433 = vrot.slane %v3150, %v3432
  %v3434 = vlaneseq
  %v3435 = vshrl.u32 %v3434, 7
  %v3436 = vsub.s32 7, %v3435
  %v3437 = vrot.slane %v3150, %v3436
  %v3438 = vlaneseq
  %v3439 = vshrl.u32 %v3438, 7
  %v3440 = vsub.s32 0, %v3439
  %v3441 = vrot.slane %v3151, %v3440
  %v3442 = vlaneseq
  %v3443 = vshrl.u32 %v3442, 7
  %v3444 = vsub.s32 1, %v3443
  %v3445 = vrot.slane %v3151, %v3444
  %v3446 = vlaneseq
  %v3447 = vshrl.u32 %v3446, 7
  %v3448 = vsub.s32 2, %v3447
  %v3449 = vrot.slane %v3151, %v3448
  %v3450 = vlaneseq
  %v3451 = vshrl.u32 %v3450, 7
  %v3452 = vsub.s32 3, %v3451
  %v3453 = vrot.slane %v3151, %v3452
  %v3454 = vlaneseq
  %v3455 = vshrl.u32 %v3454, 7
  %v3456 = vsub.s32 4, %v3455
  %v3457 = vrot.slane %v3151, %v3456
  %v3458 = vlaneseq
  %v3459 = vshrl.u32 %v3458, 7
  %v3460 = vsub.s32 5, %v3459
  %v3461 = vrot.slane %v3151, %v3460
  %v3462 = vlaneseq
  %v3463 = vshrl.u32 %v3462, 7
  %v3464 = vsub.s32 6, %v3463
  %v3465 = vrot.slane %v3151, %v3464
  %v3466 = vlaneseq
  %v3467 = vshrl.u32 %v3466, 7
  %v3468 = vsub.s32 7, %v3467
  %v3469 = vrot.slane %v3151, %v3468
  %v3470 = vlaneseq
  %v3471 = vshrl.u32 %v3470, 7
  %v3472 = vsub.s32 0, %v3471
  %v3473 = vrot.slane %v3152, %v3472
  %v3474 = vlaneseq
  %v3475 = vshrl.u32 %v3474, 7
  %v3476 = vsub.s32 1, %v3475
  %v3477 = vrot.slane %v3152, %v3476
  %v3478 = vlaneseq
  %v3479 = vshrl.u32 %v3478, 7
  %v3480 = vsub.s32 2, %v3479
  %v3481 = vrot.slane %v3152, %v3480
  %v3482 = vlaneseq
  %v3483 = vshrl.u32 %v3482, 7
  %v3484 = vsub.s32 3, %v3483
  %v3485 = vrot.slane %v3152, %v3484
  %v3486 = vlaneseq
  %v3487 = vshrl.u32 %v3486, 7
  %v3488 = vsub.s32 4, %v3487
  %v3489 = vrot.slane %v3152, %v3488
  %v3490 = vlaneseq
  %v3491 = vshrl.u32 %v3490, 7
  %v3492 = vsub.s32 5, %v3491
  %v3493 = vrot.slane %v3152, %v3492
  %v3494 = vlaneseq
  %v3495 = vshrl.u32 %v3494, 7
  %v3496 = vsub.s32 6, %v3495
  %v3497 = vrot.slane %v3152, %v3496
  %v3498 = vlaneseq
  %v3499 = vshrl.u32 %v3498, 7
  %v3500 = vsub.s32 7, %v3499
  %v3501 = vrot.slane %v3152, %v3500
  %v3502 = vlaneseq
  %v3503 = vshrl.u32 %v3502, 7
  %v3504 = vsub.s32 0, %v3503
  %v3505 = vrot.slane %v3153, %v3504
  %v3506 = vlaneseq
  %v3507 = vshrl.u32 %v3506, 7
  %v3508 = vsub.s32 1, %v3507
  %v3509 = vrot.slane %v3153, %v3508
  %v3510 = vlaneseq
  %v3511 = vshrl.u32 %v3510, 7
  %v3512 = vsub.s32 2, %v3511
  %v3513 = vrot.slane %v3153, %v3512
  %v3514 = vlaneseq
  %v3515 = vshrl.u32 %v3514, 7
  %v3516 = vsub.s32 3, %v3515
  %v3517 = vrot.slane %v3153, %v3516
  %v3518 = vlaneseq
  %v3519 = vshrl.u32 %v3518, 7
  %v3520 = vsub.s32 4, %v3519
  %v3521 = vrot.slane %v3153, %v3520
  %v3522 = vlaneseq
  %v3523 = vshrl.u32 %v3522, 7
  %v3524 = vsub.s32 5, %v3523
  %v3525 = vrot.slane %v3153, %v3524
  %v3526 = vlaneseq
  %v3527 = vshrl.u32 %v3526, 7
  %v3528 = vsub.s32 6, %v3527
  %v3529 = vrot.slane %v3153, %v3528
  %v3530 = vlaneseq
  %v3531 = vshrl.u32 %v3530, 7
  %v3532 = vsub.s32 7, %v3531
  %v3533 = vrot.slane %v3153, %v3532
  %v3534 = vlaneseq
  %v3535 = vshrl.u32 %v3534, 7
  %v3536 = vsub.s32 0, %v3535
  %v3537 = vrot.slane %v3154, %v3536
  %v3538 = vlaneseq
  %v3539 = vshrl.u32 %v3538, 7
  %v3540 = vsub.s32 1, %v3539
  %v3541 = vrot.slane %v3154, %v3540
  %v3542 = vlaneseq
  %v3543 = vshrl.u32 %v3542, 7
  %v3544 = vsub.s32 2, %v3543
  %v3545 = vrot.slane %v3154, %v3544
  %v3546 = vlaneseq
  %v3547 = vshrl.u32 %v3546, 7
  %v3548 = vsub.s32 3, %v3547
  %v3549 = vrot.slane %v3154, %v3548
  %v3550 = vlaneseq
  %v3551 = vshrl.u32 %v3550, 7
  %v3552 = vsub.s32 4, %v3551
  %v3553 = vrot.slane %v3154, %v3552
  %v3554 = vlaneseq
  %v3555 = vshrl.u32 %v3554, 7
  %v3556 = vsub.s32 5, %v3555
  %v3557 = vrot.slane %v3154, %v3556
  %v3558 = vlaneseq
  %v3559 = vshrl.u32 %v3558, 7
  %v3560 = vsub.s32 6, %v3559
  %v3561 = vrot.slane %v3154, %v3560
  %v3562 = vlaneseq
  %v3563 = vshrl.u32 %v3562, 7
  %v3564 = vsub.s32 7, %v3563
  %v3565 = vrot.slane %v3154, %v3564
  %v3566 = vlaneseq
  %v3567 = vshrl.u32 %v3566, 7
  %v3568 = vsub.s32 0, %v3567
  %v3569 = vrot.slane %v3155, %v3568
  %v3570 = vlaneseq
  %v3571 = vshrl.u32 %v3570, 7
  %v3572 = vsub.s32 1, %v3571
  %v3573 = vrot.slane %v3155, %v3572
  %v3574 = vlaneseq
  %v3575 = vshrl.u32 %v3574, 7
  %v3576 = vsub.s32 2, %v3575
  %v3577 = vrot.slane %v3155, %v3576
  %v3578 = vlaneseq
  %v3579 = vshrl.u32 %v3578, 7
  %v3580 = vsub.s32 3, %v3579
  %v3581 = vrot.slane %v3155, %v3580
  %v3582 = vlaneseq
  %v3583 = vshrl.u32 %v3582, 7
  %v3584 = vsub.s32 4, %v3583
  %v3585 = vrot.slane %v3155, %v3584
  %v3586 = vlaneseq
  %v3587 = vshrl.u32 %v3586, 7
  %v3588 = vsub.s32 5, %v3587
  %v3589 = vrot.slane %v3155, %v3588
  %v3590 = vlaneseq
  %v3591 = vshrl.u32 %v3590, 7
  %v3592 = vsub.s32 6, %v3591
  %v3593 = vrot.slane %v3155, %v3592
  %v3594 = vlaneseq
  %v3595 = vshrl.u32 %v3594, 7
  %v3596 = vsub.s32 7, %v3595
  %v3597 = vrot.slane %v3155, %v3596
  %v3598 = vlaneseq
  %v3599 = vshrl.u32 %v3598, 7
  %v3600 = vsub.s32 0, %v3599
  %v3601 = vrot.slane %v3156, %v3600
  %v3602 = vlaneseq
  %v3603 = vshrl.u32 %v3602, 7
  %v3604 = vsub.s32 1, %v3603
  %v3605 = vrot.slane %v3156, %v3604
  %v3606 = vlaneseq
  %v3607 = vshrl.u32 %v3606, 7
  %v3608 = vsub.s32 2, %v3607
  %v3609 = vrot.slane %v3156, %v3608
  %v3610 = vlaneseq
  %v3611 = vshrl.u32 %v3610, 7
  %v3612 = vsub.s32 3, %v3611
  %v3613 = vrot.slane %v3156, %v3612
  %v3614 = vlaneseq
  %v3615 = vshrl.u32 %v3614, 7
  %v3616 = vsub.s32 4, %v3615
  %v3617 = vrot.slane %v3156, %v3616
  %v3618 = vlaneseq
  %v3619 = vshrl.u32 %v3618, 7
  %v3620 = vsub.s32 5, %v3619
  %v3621 = vrot.slane %v3156, %v3620
  %v3622 = vlaneseq
  %v3623 = vshrl.u32 %v3622, 7
  %v3624 = vsub.s32 6, %v3623
  %v3625 = vrot.slane %v3156, %v3624
  %v3626 = vlaneseq
  %v3627 = vshrl.u32 %v3626, 7
  %v3628 = vsub.s32 7, %v3627
  %v3629 = vrot.slane %v3156, %v3628
  %v3630 = vlaneseq
  %v3631 = vshrl.u32 %v3630, 7
  %v3632 = vsub.s32 0, %v3631
  %v3633 = vrot.slane %v3157, %v3632
  %v3634 = vlaneseq
  %v3635 = vshrl.u32 %v3634, 7
  %v3636 = vsub.s32 1, %v3635
  %v3637 = vrot.slane %v3157, %v3636
  %v3638 = vlaneseq
  %v3639 = vshrl.u32 %v3638, 7
  %v3640 = vsub.s32 2, %v3639
  %v3641 = vrot.slane %v3157, %v3640
  %v3642 = vlaneseq
  %v3643 = vshrl.u32 %v3642, 7
  %v3644 = vsub.s32 3, %v3643
  %v3645 = vrot.slane %v3157, %v3644
  %v3646 = vlaneseq
  %v3647 = vshrl.u32 %v3646, 7
  %v3648 = vsub.s32 4, %v3647
  %v3649 = vrot.slane %v3157, %v3648
  %v3650 = vlaneseq
  %v3651 = vshrl.u32 %v3650, 7
  %v3652 = vsub.s32 5, %v3651
  %v3653 = vrot.slane %v3157, %v3652
  %v3654 = vlaneseq
  %v3655 = vshrl.u32 %v3654, 7
  %v3656 = vsub.s32 6, %v3655
  %v3657 = vrot.slane %v3157, %v3656
  %v3658 = vlaneseq
  %v3659 = vshrl.u32 %v3658, 7
  %v3660 = vsub.s32 7, %v3659
  %v3661 = vrot.slane %v3157, %v3660
  %v3662 = vlaneseq
  %v3663 = vshrl.u32 %v3662, 7
  %v3664 = vsub.s32 0, %v3663
  %v3665 = vrot.slane %v3158, %v3664
  %v3666 = vlaneseq
  %v3667 = vshrl.u32 %v3666, 7
  %v3668 = vsub.s32 1, %v3667
  %v3669 = vrot.slane %v3158, %v3668
  %v3670 = vlaneseq
  %v3671 = vshrl.u32 %v3670, 7
  %v3672 = vsub.s32 2, %v3671
  %v3673 = vrot.slane %v3158, %v3672
  %v3674 = vlaneseq
  %v3675 = vshrl.u32 %v3674, 7
  %v3676 = vsub.s32 3, %v3675
  %v3677 = vrot.slane %v3158, %v3676
  %v3678 = vlaneseq
  %v3679 = vshrl.u32 %v3678, 7
  %v3680 = vsub.s32 4, %v3679
  %v3681 = vrot.slane %v3158, %v3680
  %v3682 = vlaneseq
  %v3683 = vshrl.u32 %v3682, 7
  %v3684 = vsub.s32 5, %v3683
  %v3685 = vrot.slane %v3158, %v3684
  %v3686 = vlaneseq
  %v3687 = vshrl.u32 %v3686, 7
  %v3688 = vsub.s32 6, %v3687
  %v3689 = vrot.slane %v3158, %v3688
  %v3690 = vlaneseq
  %v3691 = vshrl.u32 %v3690, 7
  %v3692 = vsub.s32 7, %v3691
  %v3693 = vrot.slane %v3158, %v3692
  %v3694 = vlaneseq
  %v3695 = vshrl.u32 %v3694, 7
  %v3696 = vsub.s32 0, %v3695
  %v3697 = vrot.slane %v3159, %v3696
  %v3698 = vlaneseq
  %v3699 = vshrl.u32 %v3698, 7
  %v3700 = vsub.s32 1, %v3699
  %v3701 = vrot.slane %v3159, %v3700
  %v3702 = vlaneseq
  %v3703 = vshrl.u32 %v3702, 7
  %v3704 = vsub.s32 2, %v3703
  %v3705 = vrot.slane %v3159, %v3704
  %v3706 = vlaneseq
  %v3707 = vshrl.u32 %v3706, 7
  %v3708 = vsub.s32 3, %v3707
  %v3709 = vrot.slane %v3159, %v3708
  %v3710 = vlaneseq
  %v3711 = vshrl.u32 %v3710, 7
  %v3712 = vsub.s32 4, %v3711
  %v3713 = vrot.slane %v3159, %v3712
  %v3714 = vlaneseq
  %v3715 = vshrl.u32 %v3714, 7
  %v3716 = vsub.s32 5, %v3715
  %v3717 = vrot.slane %v3159, %v3716
  %v3718 = vlaneseq
  %v3719 = vshrl.u32 %v3718, 7
  %v3720 = vsub.s32 6, %v3719
  %v3721 = vrot.slane %v3159, %v3720
  %v3722 = vlaneseq
  %v3723 = vshrl.u32 %v3722, 7
  %v3724 = vsub.s32 7, %v3723
  %v3725 = vrot.slane %v3159, %v3724
  %v3726 = vlaneseq
  %v3727 = vshrl.u32 %v3726, 7
  %v3728 = vsub.s32 0, %v3727
  %v3729 = vrot.slane %v3160, %v3728
  %v3730 = vlaneseq
  %v3731 = vshrl.u32 %v3730, 7
  %v3732 = vsub.s32 1, %v3731
  %v3733 = vrot.slane %v3160, %v3732
  %v3734 = vlaneseq
  %v3735 = vshrl.u32 %v3734, 7
  %v3736 = vsub.s32 2, %v3735
  %v3737 = vrot.slane %v3160, %v3736
  %v3738 = vlaneseq
  %v3739 = vshrl.u32 %v3738, 7
  %v3740 = vsub.s32 3, %v3739
  %v3741 = vrot.slane %v3160, %v3740
  %v3742 = vlaneseq
  %v3743 = vshrl.u32 %v3742, 7
  %v3744 = vsub.s32 4, %v3743
  %v3745 = vrot.slane %v3160, %v3744
  %v3746 = vlaneseq
  %v3747 = vshrl.u32 %v3746, 7
  %v3748 = vsub.s32 5, %v3747
  %v3749 = vrot.slane %v3160, %v3748
  %v3750 = vlaneseq
  %v3751 = vshrl.u32 %v3750, 7
  %v3752 = vsub.s32 6, %v3751
  %v3753 = vrot.slane %v3160, %v3752
  %v3754 = vlaneseq
  %v3755 = vshrl.u32 %v3754, 7
  %v3756 = vsub.s32 7, %v3755
  %v3757 = vrot.slane %v3160, %v3756
  %v3758 = vlaneseq
  %v3759 = vshrl.u32 %v3758, 7
  %v3760 = vsub.s32 0, %v3759
  %v3761 = vrot.slane %v3161, %v3760
  %v3762 = vlaneseq
  %v3763 = vshrl.u32 %v3762, 7
  %v3764 = vsub.s32 1, %v3763
  %v3765 = vrot.slane %v3161, %v3764
  %v3766 = vlaneseq
  %v3767 = vshrl.u32 %v3766, 7
  %v3768 = vsub.s32 2, %v3767
  %v3769 = vrot.slane %v3161, %v3768
  %v3770 = vlaneseq
  %v3771 = vshrl.u32 %v3770, 7
  %v3772 = vsub.s32 3, %v3771
  %v3773 = vrot.slane %v3161, %v3772
  %v3774 = vlaneseq
  %v3775 = vshrl.u32 %v3774, 7
  %v3776 = vsub.s32 4, %v3775
  %v3777 = vrot.slane %v3161, %v3776
  %v3778 = vlaneseq
  %v3779 = vshrl.u32 %v3778, 7
  %v3780 = vsub.s32 5, %v3779
  %v3781 = vrot.slane %v3161, %v3780
  %v3782 = vlaneseq
  %v3783 = vshrl.u32 %v3782, 7
  %v3784 = vsub.s32 6, %v3783
  %v3785 = vrot.slane %v3161, %v3784
  %v3786 = vlaneseq
  %v3787 = vshrl.u32 %v3786, 7
  %v3788 = vsub.s32 7, %v3787
  %v3789 = vrot.slane %v3161, %v3788
  %v3790 = vlaneseq
  %v3791 = vshrl.u32 %v3790, 7
  %v3792 = vsub.s32 0, %v3791
  %v3793 = vrot.slane %v3162, %v3792
  %v3794 = vlaneseq
  %v3795 = vshrl.u32 %v3794, 7
  %v3796 = vsub.s32 1, %v3795
  %v3797 = vrot.slane %v3162, %v3796
  %v3798 = vlaneseq
  %v3799 = vshrl.u32 %v3798, 7
  %v3800 = vsub.s32 2, %v3799
  %v3801 = vrot.slane %v3162, %v3800
  %v3802 = vlaneseq
  %v3803 = vshrl.u32 %v3802, 7
  %v3804 = vsub.s32 3, %v3803
  %v3805 = vrot.slane %v3162, %v3804
  %v3806 = vlaneseq
  %v3807 = vshrl.u32 %v3806, 7
  %v3808 = vsub.s32 4, %v3807
  %v3809 = vrot.slane %v3162, %v3808
  %v3810 = vlaneseq
  %v3811 = vshrl.u32 %v3810, 7
  %v3812 = vsub.s32 5, %v3811
  %v3813 = vrot.slane %v3162, %v3812
  %v3814 = vlaneseq
  %v3815 = vshrl.u32 %v3814, 7
  %v3816 = vsub.s32 6, %v3815
  %v3817 = vrot.slane %v3162, %v3816
  %v3818 = vlaneseq
  %v3819 = vshrl.u32 %v3818, 7
  %v3820 = vsub.s32 7, %v3819
  %v3821 = vrot.slane %v3162, %v3820
  %v3822 = vlaneseq
  %v3823 = vshrl.u32 %v3822, 7
  %v3824 = vsub.s32 0, %v3823
  %v3825 = vrot.slane %v3163, %v3824
  %v3826 = vlaneseq
  %v3827 = vshrl.u32 %v3826, 7
  %v3828 = vsub.s32 1, %v3827
  %v3829 = vrot.slane %v3163, %v3828
  %v3830 = vlaneseq
  %v3831 = vshrl.u32 %v3830, 7
  %v3832 = vsub.s32 2, %v3831
  %v3833 = vrot.slane %v3163, %v3832
  %v3834 = vlaneseq
  %v3835 = vshrl.u32 %v3834, 7
  %v3836 = vsub.s32 3, %v3835
  %v3837 = vrot.slane %v3163, %v3836
  %v3838 = vlaneseq
  %v3839 = vshrl.u32 %v3838, 7
  %v3840 = vsub.s32 4, %v3839
  %v3841 = vrot.slane %v3163, %v3840
  %v3842 = vlaneseq
  %v3843 = vshrl.u32 %v3842, 7
  %v3844 = vsub.s32 5, %v3843
  %v3845 = vrot.slane %v3163, %v3844
  %v3846 = vlaneseq
  %v3847 = vshrl.u32 %v3846, 7
  %v3848 = vsub.s32 6, %v3847
  %v3849 = vrot.slane %v3163, %v3848
  %v3850 = vlaneseq
  %v3851 = vshrl.u32 %v3850, 7
  %v3852 = vsub.s32 7, %v3851
  %v3853 = vrot.slane %v3163, %v3852
  %v3854 = vlaneseq
  %v3855 = vshrl.u32 %v3854, 7
  %v3856 = vsub.s32 0, %v3855
  %v3857 = vrot.slane %v3164, %v3856
  %v3858 = vlaneseq
  %v3859 = vshrl.u32 %v3858, 7
  %v3860 = vsub.s32 1, %v3859
  %v3861 = vrot.slane %v3164, %v3860
  %v3862 = vlaneseq
  %v3863 = vshrl.u32 %v3862, 7
  %v3864 = vsub.s32 2, %v3863
  %v3865 = vrot.slane %v3164, %v3864
  %v3866 = vlaneseq
  %v3867 = vshrl.u32 %v3866, 7
  %v3868 = vsub.s32 3, %v3867
  %v3869 = vrot.slane %v3164, %v3868
  %v3870 = vlaneseq
  %v3871 = vshrl.u32 %v3870, 7
  %v3872 = vsub.s32 4, %v3871
  %v3873 = vrot.slane %v3164, %v3872
  %v3874 = vlaneseq
  %v3875 = vshrl.u32 %v3874, 7
  %v3876 = vsub.s32 5, %v3875
  %v3877 = vrot.slane %v3164, %v3876
  %v3878 = vlaneseq
  %v3879 = vshrl.u32 %v3878, 7
  %v3880 = vsub.s32 6, %v3879
  %v3881 = vrot.slane %v3164, %v3880
  %v3882 = vlaneseq
  %v3883 = vshrl.u32 %v3882, 7
  %v3884 = vsub.s32 7, %v3883
  %v3885 = vrot.slane %v3164, %v3884
  %v3886 = vlaneseq
  %v3887 = vshrl.u32 %v3886, 7
  %v3888 = vsub.s32 0, %v3887
  %v3889 = vrot.slane %v3165, %v3888
  %v3890 = vlaneseq
  %v3891 = vshrl.u32 %v3890, 7
  %v3892 = vsub.s32 1, %v3891
  %v3893 = vrot.slane %v3165, %v3892
  %v3894 = vlaneseq
  %v3895 = vshrl.u32 %v3894, 7
  %v3896 = vsub.s32 2, %v3895
  %v3897 = vrot.slane %v3165, %v3896
  %v3898 = vlaneseq
  %v3899 = vshrl.u32 %v3898, 7
  %v3900 = vsub.s32 3, %v3899
  %v3901 = vrot.slane %v3165, %v3900
  %v3902 = vlaneseq
  %v3903 = vshrl.u32 %v3902, 7
  %v3904 = vsub.s32 4, %v3903
  %v3905 = vrot.slane %v3165, %v3904
  %v3906 = vlaneseq
  %v3907 = vshrl.u32 %v3906, 7
  %v3908 = vsub.s32 5, %v3907
  %v3909 = vrot.slane %v3165, %v3908
  %v3910 = vlaneseq
  %v3911 = vshrl.u32 %v3910, 7
  %v3912 = vsub.s32 6, %v3911
  %v3913 = vrot.slane %v3165, %v3912
  %v3914 = vlaneseq
  %v3915 = vshrl.u32 %v3914, 7
  %v3916 = vsub.s32 7, %v3915
  %v3917 = vrot.slane %v3165, %v3916
  %v3918 = vlaneseq
  %v3919 = vshrl.u32 %v3918, 7
  %v3920 = vsub.s32 0, %v3919
  %v3921 = vrot.slane %v3166, %v3920
  %v3922 = vlaneseq
  %v3923 = vshrl.u32 %v3922, 7
  %v3924 = vsub.s32 1, %v3923
  %v3925 = vrot.slane %v3166, %v3924
  %v3926 = vlaneseq
  %v3927 = vshrl.u32 %v3926, 7
  %v3928 = vsub.s32 2, %v3927
  %v3929 = vrot.slane %v3166, %v3928
  %v3930 = vlaneseq
  %v3931 = vshrl.u32 %v3930, 7
  %v3932 = vsub.s32 3, %v3931
  %v3933 = vrot.slane %v3166, %v3932
  %v3934 = vlaneseq
  %v3935 = vshrl.u32 %v3934, 7
  %v3936 = vsub.s32 4, %v3935
  %v3937 = vrot.slane %v3166, %v3936
  %v3938 = vlaneseq
  %v3939 = vshrl.u32 %v3938, 7
  %v3940 = vsub.s32 5, %v3939
  %v3941 = vrot.slane %v3166, %v3940
  %v3942 = vlaneseq
  %v3943 = vshrl.u32 %v3942, 7
  %v3944 = vsub.s32 6, %v3943
  %v3945 = vrot.slane %v3166, %v3944
  %v3946 = vlaneseq
  %v3947 = vshrl.u32 %v3946, 7
  %v3948 = vsub.s32 7, %v3947
  %v3949 = vrot.slane %v3166, %v3948
  %v3950 = vlaneseq
  %v3951 = vshrl.u32 %v3950, 7
  %v3952 = vsub.s32 0, %v3951
  %v3953 = vrot.slane %v3167, %v3952
  %v3954 = vlaneseq
  %v3955 = vshrl.u32 %v3954, 7
  %v3956 = vsub.s32 1, %v3955
  %v3957 = vrot.slane %v3167, %v3956
  %v3958 = vlaneseq
  %v3959 = vshrl.u32 %v3958, 7
  %v3960 = vsub.s32 2, %v3959
  %v3961 = vrot.slane %v3167, %v3960
  %v3962 = vlaneseq
  %v3963 = vshrl.u32 %v3962, 7
  %v3964 = vsub.s32 3, %v3963
  %v3965 = vrot.slane %v3167, %v3964
  %v3966 = vlaneseq
  %v3967 = vshrl.u32 %v3966, 7
  %v3968 = vsub.s32 4, %v3967
  %v3969 = vrot.slane %v3167, %v3968
  %v3970 = vlaneseq
  %v3971 = vshrl.u32 %v3970, 7
  %v3972 = vsub.s32 5, %v3971
  %v3973 = vrot.slane %v3167, %v3972
  %v3974 = vlaneseq
  %v3975 = vshrl.u32 %v3974, 7
  %v3976 = vsub.s32 6, %v3975
  %v3977 = vrot.slane %v3167, %v3976
  %v3978 = vlaneseq
  %v3979 = vshrl.u32 %v3978, 7
  %v3980 = vsub.s32 7, %v3979
  %v3981 = vrot.slane %v3167, %v3980
  %v3982 = vlaneseq
  %v3983 = vshrl.u32 %v3982, 7
  %v3984 = vsub.s32 0, %v3983
  %v3985 = vrot.slane %v3168, %v3984
  %v3986 = vlaneseq
  %v3987 = vshrl.u32 %v3986, 7
  %v3988 = vsub.s32 1, %v3987
  %v3989 = vrot.slane %v3168, %v3988
  %v3990 = vlaneseq
  %v3991 = vshrl.u32 %v3990, 7
  %v3992 = vsub.s32 2, %v3991
  %v3993 = vrot.slane %v3168, %v3992
  %v3994 = vlaneseq
  %v3995 = vshrl.u32 %v3994, 7
  %v3996 = vsub.s32 3, %v3995
  %v3997 = vrot.slane %v3168, %v3996
  %v3998 = vlaneseq
  %v3999 = vshrl.u32 %v3998, 7
  %v4000 = vsub.s32 4, %v3999
  %v4001 = vrot.slane %v3168, %v4000
  %v4002 = vlaneseq
  %v4003 = vshrl.u32 %v4002, 7
  %v4004 = vsub.s32 5, %v4003
  %v4005 = vrot.slane %v3168, %v4004
  %v4006 = vlaneseq
  %v4007 = vshrl.u32 %v4006, 7
  %v4008 = vsub.s32 6, %v4007
  %v4009 = vrot.slane %v3168, %v4008
  %v4010 = vlaneseq
  %v4011 = vshrl.u32 %v4010, 7
  %v4012 = vsub.s32 7, %v4011
  %v4013 = vrot.slane %v3168, %v4012
  %v4014 = vlaneseq
  %v4015 = vshrl.u32 %v4014, 7
  %v4016 = vsub.s32 0, %v4015
  %v4017 = vrot.slane %v3169, %v4016
  %v4018 = vlaneseq
  %v4019 = vshrl.u32 %v4018, 7
  %v4020 = vsub.s32 1, %v4019
  %v4021 = vrot.slane %v3169, %v4020
  %v4022 = vlaneseq
  %v4023 = vshrl.u32 %v4022, 7
  %v4024 = vsub.s32 2, %v4023
  %v4025 = vrot.slane %v3169, %v4024
  %v4026 = vlaneseq
  %v4027 = vshrl.u32 %v4026, 7
  %v4028 = vsub.s32 3, %v4027
  %v4029 = vrot.slane %v3169, %v4028
  %v4030 = vlaneseq
  %v4031 = vshrl.u32 %v4030, 7
  %v4032 = vsub.s32 4, %v4031
  %v4033 = vrot.slane %v3169, %v4032
  %v4034 = vlaneseq
  %v4035 = vshrl.u32 %v4034, 7
  %v4036 = vsub.s32 5, %v4035
  %v4037 = vrot.slane %v3169, %v4036
  %v4038 = vlaneseq
  %v4039 = vshrl.u32 %v4038, 7
  %v4040 = vsub.s32 6, %v4039
  %v4041 = vrot.slane %v3169, %v4040
  %v4042 = vlaneseq
  %v4043 = vshrl.u32 %v4042, 7
  %v4044 = vsub.s32 7, %v4043
  %v4045 = vrot.slane %v3169, %v4044
  %v4046 = vlaneseq
  %v4047 = vshrl.u32 %v4046, 7
  %v4048 = vsub.s32 0, %v4047
  %v4049 = vrot.slane %v3170, %v4048
  %v4050 = vlaneseq
  %v4051 = vshrl.u32 %v4050, 7
  %v4052 = vsub.s32 1, %v4051
  %v4053 = vrot.slane %v3170, %v4052
  %v4054 = vlaneseq
  %v4055 = vshrl.u32 %v4054, 7
  %v4056 = vsub.s32 2, %v4055
  %v4057 = vrot.slane %v3170, %v4056
  %v4058 = vlaneseq
  %v4059 = vshrl.u32 %v4058, 7
  %v4060 = vsub.s32 3, %v4059
  %v4061 = vrot.slane %v3170, %v4060
  %v4062 = vlaneseq
  %v4063 = vshrl.u32 %v4062, 7
  %v4064 = vsub.s32 4, %v4063
  %v4065 = vrot.slane %v3170, %v4064
  %v4066 = vlaneseq
  %v4067 = vshrl.u32 %v4066, 7
  %v4068 = vsub.s32 5, %v4067
  %v4069 = vrot.slane %v3170, %v4068
  %v4070 = vlaneseq
  %v4071 = vshrl.u32 %v4070, 7
  %v4072 = vsub.s32 6, %v4071
  %v4073 = vrot.slane %v3170, %v4072
  %v4074 = vlaneseq
  %v4075 = vshrl.u32 %v4074, 7
  %v4076 = vsub.s32 7, %v4075
  %v4077 = vrot.slane %v3170, %v4076
  %v4078 = vlaneseq
  %v4079 = vshrl.u32 %v4078, 7
  %v4080 = vsub.s32 0, %v4079
  %v4081 = vrot.slane %v3171, %v4080
  %v4082 = vlaneseq
  %v4083 = vshrl.u32 %v4082, 7
  %v4084 = vsub.s32 1, %v4083
  %v4085 = vrot.slane %v3171, %v4084
  %v4086 = vlaneseq
  %v4087 = vshrl.u32 %v4086, 7
  %v4088 = vsub.s32 2, %v4087
  %v4089 = vrot.slane %v3171, %v4088
  %v4090 = vlaneseq
  %v4091 = vshrl.u32 %v4090, 7
  %v4092 = vsub.s32 3, %v4091
  %v4093 = vrot.slane %v3171, %v4092
  %v4094 = vlaneseq
  %v4095 = vshrl.u32 %v4094, 7
  %v4096 = vsub.s32 4, %v4095
  %v4097 = vrot.slane %v3171, %v4096
  %v4098 = vlaneseq
  %v4099 = vshrl.u32 %v4098, 7
  %v4100 = vsub.s32 5, %v4099
  %v4101 = vrot.slane %v3171, %v4100
  %v4102 = vlaneseq
  %v4103 = vshrl.u32 %v4102, 7
  %v4104 = vsub.s32 6, %v4103
  %v4105 = vrot.slane %v3171, %v4104
  %v4106 = vlaneseq
  %v4107 = vshrl.u32 %v4106, 7
  %v4108 = vsub.s32 7, %v4107
  %v4109 = vrot.slane %v3171, %v4108
  %v4110 = vlaneseq
  %v4111 = vshrl.u32 %v4110, 7
  %v4112 = vsub.s32 0, %v4111
  %v4113 = vrot.slane %v3172, %v4112
  %v4114 = vlaneseq
  %v4115 = vshrl.u32 %v4114, 7
  %v4116 = vsub.s32 1, %v4115
  %v4117 = vrot.slane %v3172, %v4116
  %v4118 = vlaneseq
  %v4119 = vshrl.u32 %v4118, 7
  %v4120 = vsub.s32 2, %v4119
  %v4121 = vrot.slane %v3172, %v4120
  %v4122 = vlaneseq
  %v4123 = vshrl.u32 %v4122, 7
  %v4124 = vsub.s32 3, %v4123
  %v4125 = vrot.slane %v3172, %v4124
  %v4126 = vlaneseq
  %v4127 = vshrl.u32 %v4126, 7
  %v4128 = vsub.s32 4, %v4127
  %v4129 = vrot.slane %v3172, %v4128
  %v4130 = vlaneseq
  %v4131 = vshrl.u32 %v4130, 7
  %v4132 = vsub.s32 5, %v4131
  %v4133 = vrot.slane %v3172, %v4132
  %v4134 = vlaneseq
  %v4135 = vshrl.u32 %v4134, 7
  %v4136 = vsub.s32 6, %v4135
  %v4137 = vrot.slane %v3172, %v4136
  %v4138 = vlaneseq
  %v4139 = vshrl.u32 %v4138, 7
  %v4140 = vsub.s32 7, %v4139
  %v4141 = vrot.slane %v3172, %v4140
  %v4142 = vlaneseq
  %v4143 = vshrl.u32 %v4142, 7
  %v4144 = vsub.s32 0, %v4143
  %v4145 = vrot.slane %v3173, %v4144
  %v4146 = vlaneseq
  %v4147 = vshrl.u32 %v4146, 7
  %v4148 = vsub.s32 1, %v4147
  %v4149 = vrot.slane %v3173, %v4148
  %v4150 = vlaneseq
  %v4151 = vshrl.u32 %v4150, 7
  %v4152 = vsub.s32 2, %v4151
  %v4153 = vrot.slane %v3173, %v4152
  %v4154 = vlaneseq
  %v4155 = vshrl.u32 %v4154, 7
  %v4156 = vsub.s32 3, %v4155
  %v4157 = vrot.slane %v3173, %v4156
  %v4158 = vlaneseq
  %v4159 = vshrl.u32 %v4158, 7
  %v4160 = vsub.s32 4, %v4159
  %v4161 = vrot.slane %v3173, %v4160
  %v4162 = vlaneseq
  %v4163 = vshrl.u32 %v4162, 7
  %v4164 = vsub.s32 5, %v4163
  %v4165 = vrot.slane %v3173, %v4164
  %v4166 = vlaneseq
  %v4167 = vshrl.u32 %v4166, 7
  %v4168 = vsub.s32 6, %v4167
  %v4169 = vrot.slane %v3173, %v4168
  %v4170 = vlaneseq
  %v4171 = vshrl.u32 %v4170, 7
  %v4172 = vsub.s32 7, %v4171
  %v4173 = vrot.slane %v3173, %v4172
  %v4174 = vlaneseq
  %v4175 = vshrl.u32 %v4174, 7
  %v4176 = vsub.s32 0, %v4175
  %v4177 = vrot.slane %v3174, %v4176
  %v4178 = vlaneseq
  %v4179 = vshrl.u32 %v4178, 7
  %v4180 = vsub.s32 1, %v4179
  %v4181 = vrot.slane %v3174, %v4180
  %v4182 = vlaneseq
  %v4183 = vshrl.u32 %v4182, 7
  %v4184 = vsub.s32 2, %v4183
  %v4185 = vrot.slane %v3174, %v4184
  %v4186 = vlaneseq
  %v4187 = vshrl.u32 %v4186, 7
  %v4188 = vsub.s32 3, %v4187
  %v4189 = vrot.slane %v3174, %v4188
  %v4190 = vlaneseq
  %v4191 = vshrl.u32 %v4190, 7
  %v4192 = vsub.s32 4, %v4191
  %v4193 = vrot.slane %v3174, %v4192
  %v4194 = vlaneseq
  %v4195 = vshrl.u32 %v4194, 7
  %v4196 = vsub.s32 5, %v4195
  %v4197 = vrot.slane %v3174, %v4196
  %v4198 = vlaneseq
  %v4199 = vshrl.u32 %v4198, 7
  %v4200 = vsub.s32 6, %v4199
  %v4201 = vrot.slane %v3174, %v4200
  %v4202 = vlaneseq
  %v4203 = vshrl.u32 %v4202, 7
  %v4204 = vsub.s32 7, %v4203
  %v4205 = vrot.slane %v3174, %v4204
  %v4206 = vlaneseq
  %v4207 = vshrl.u32 %v4206, 7
  %v4208 = vsub.s32 0, %v4207
  %v4209 = vrot.slane %v3175, %v4208
  %v4210 = vlaneseq
  %v4211 = vshrl.u32 %v4210, 7
  %v4212 = vsub.s32 1, %v4211
  %v4213 = vrot.slane %v3175, %v4212
  %v4214 = vlaneseq
  %v4215 = vshrl.u32 %v4214, 7
  %v4216 = vsub.s32 2, %v4215
  %v4217 = vrot.slane %v3175, %v4216
  %v4218 = vlaneseq
  %v4219 = vshrl.u32 %v4218, 7
  %v4220 = vsub.s32 3, %v4219
  %v4221 = vrot.slane %v3175, %v4220
  %v4222 = vlaneseq
  %v4223 = vshrl.u32 %v4222, 7
  %v4224 = vsub.s32 4, %v4223
  %v4225 = vrot.slane %v3175, %v4224
  %v4226 = vlaneseq
  %v4227 = vshrl.u32 %v4226, 7
  %v4228 = vsub.s32 5, %v4227
  %v4229 = vrot.slane %v3175, %v4228
  %v4230 = vlaneseq
  %v4231 = vshrl.u32 %v4230, 7
  %v4232 = vsub.s32 6, %v4231
  %v4233 = vrot.slane %v3175, %v4232
  %v4234 = vlaneseq
  %v4235 = vshrl.u32 %v4234, 7
  %v4236 = vsub.s32 7, %v4235
  %v4237 = vrot.slane %v3175, %v4236
  %v4238 = vlaneseq
  %v4239 = vshrl.u32 %v4238, 7
  %v4240 = vsub.s32 0, %v4239
  %v4241 = vrot.slane %v3176, %v4240
  %v4242 = vlaneseq
  %v4243 = vshrl.u32 %v4242, 7
  %v4244 = vsub.s32 1, %v4243
  %v4245 = vrot.slane %v3176, %v4244
  %v4246 = vlaneseq
  %v4247 = vshrl.u32 %v4246, 7
  %v4248 = vsub.s32 2, %v4247
  %v4249 = vrot.slane %v3176, %v4248
  %v4250 = vlaneseq
  %v4251 = vshrl.u32 %v4250, 7
  %v4252 = vsub.s32 3, %v4251
  %v4253 = vrot.slane %v3176, %v4252
  %v4254 = vlaneseq
  %v4255 = vshrl.u32 %v4254, 7
  %v4256 = vsub.s32 4, %v4255
  %v4257 = vrot.slane %v3176, %v4256
  %v4258 = vlaneseq
  %v4259 = vshrl.u32 %v4258, 7
  %v4260 = vsub.s32 5, %v4259
  %v4261 = vrot.slane %v3176, %v4260
  %v4262 = vlaneseq
  %v4263 = vshrl.u32 %v4262, 7
  %v4264 = vsub.s32 6, %v4263
  %v4265 = vrot.slane %v3176, %v4264
  %v4266 = vlaneseq
  %v4267 = vshrl.u32 %v4266, 7
  %v4268 = vsub.s32 7, %v4267
  %v4269 = vrot.slane %v3176, %v4268
  %v4270 = vlaneseq
  %v4271 = vshrl.u32 %v4270, 7
  %v4272 = vsub.s32 0, %v4271
  %v4273 = vrot.slane %v3177, %v4272
  %v4274 = vlaneseq
  %v4275 = vshrl.u32 %v4274, 7
  %v4276 = vsub.s32 1, %v4275
  %v4277 = vrot.slane %v3177, %v4276
  %v4278 = vlaneseq
  %v4279 = vshrl.u32 %v4278, 7
  %v4280 = vsub.s32 2, %v4279
  %v4281 = vrot.slane %v3177, %v4280
  %v4282 = vlaneseq
  %v4283 = vshrl.u32 %v4282, 7
  %v4284 = vsub.s32 3, %v4283
  %v4285 = vrot.slane %v3177, %v4284
  %v4286 = vlaneseq
  %v4287 = vshrl.u32 %v4286, 7
  %v4288 = vsub.s32 4, %v4287
  %v4289 = vrot.slane %v3177, %v4288
  %v4290 = vlaneseq
  %v4291 = vshrl.u32 %v4290, 7
  %v4292 = vsub.s32 5, %v4291
  %v4293 = vrot.slane %v3177, %v4292
  %v4294 = vlaneseq
  %v4295 = vshrl.u32 %v4294, 7
  %v4296 = vsub.s32 6, %v4295
  %v4297 = vrot.slane %v3177, %v4296
  %v4298 = vlaneseq
  %v4299 = vshrl.u32 %v4298, 7
  %v4300 = vsub.s32 7, %v4299
  %v4301 = vrot.slane %v3177, %v4300
  %v4302 = vlaneseq
  %v4303 = vshrl.u32 %v4302, 7
  %v4304 = vsub.s32 0, %v4303
  %v4305 = vrot.slane %v3178, %v4304
  %v4306 = vlaneseq
  %v4307 = vshrl.u32 %v4306, 7
  %v4308 = vsub.s32 1, %v4307
  %v4309 = vrot.slane %v3178, %v4308
  %v4310 = vlaneseq
  %v4311 = vshrl.u32 %v4310, 7
  %v4312 = vsub.s32 2, %v4311
  %v4313 = vrot.slane %v3178, %v4312
  %v4314 = vlaneseq
  %v4315 = vshrl.u32 %v4314, 7
  %v4316 = vsub.s32 3, %v4315
  %v4317 = vrot.slane %v3178, %v4316
  %v4318 = vlaneseq
  %v4319 = vshrl.u32 %v4318, 7
  %v4320 = vsub.s32 4, %v4319
  %v4321 = vrot.slane %v3178, %v4320
  %v4322 = vlaneseq
  %v4323 = vshrl.u32 %v4322, 7
  %v4324 = vsub.s32 5, %v4323
  %v4325 = vrot.slane %v3178, %v4324
  %v4326 = vlaneseq
  %v4327 = vshrl.u32 %v4326, 7
  %v4328 = vsub.s32 6, %v4327
  %v4329 = vrot.slane %v3178, %v4328
  %v4330 = vlaneseq
  %v4331 = vshrl.u32 %v4330, 7
  %v4332 = vsub.s32 7, %v4331
  %v4333 = vrot.slane %v3178, %v4332
  %v4334 = vlaneseq
  %v4335 = vshrl.u32 %v4334, 7
  %v4336 = vsub.s32 0, %v4335
  %v4337 = vrot.slane %v3179, %v4336
  %v4338 = vlaneseq
  %v4339 = vshrl.u32 %v4338, 7
  %v4340 = vsub.s32 1, %v4339
  %v4341 = vrot.slane %v3179, %v4340
  %v4342 = vlaneseq
  %v4343 = vshrl.u32 %v4342, 7
  %v4344 = vsub.s32 2, %v4343
  %v4345 = vrot.slane %v3179, %v4344
  %v4346 = vlaneseq
  %v4347 = vshrl.u32 %v4346, 7
  %v4348 = vsub.s32 3, %v4347
  %v4349 = vrot.slane %v3179, %v4348
  %v4350 = vlaneseq
  %v4351 = vshrl.u32 %v4350, 7
  %v4352 = vsub.s32 4, %v4351
  %v4353 = vrot.slane %v3179, %v4352
  %v4354 = vlaneseq
  %v4355 = vshrl.u32 %v4354, 7
  %v4356 = vsub.s32 5, %v4355
  %v4357 = vrot.slane %v3179, %v4356
  %v4358 = vlaneseq
  %v4359 = vshrl.u32 %v4358, 7
  %v4360 = vsub.s32 6, %v4359
  %v4361 = vrot.slane %v3179, %v4360
  %v4362 = vlaneseq
  %v4363 = vshrl.u32 %v4362, 7
  %v4364 = vsub.s32 7, %v4363
  %v4365 = vrot.slane %v3179, %v4364
  %v4366 = vlaneseq
  %v4367 = vshrl.u32 %v4366, 7
  %v4368 = vsub.s32 0, %v4367
  %v4369 = vrot.slane %v3180, %v4368
  %v4370 = vlaneseq
  %v4371 = vshrl.u32 %v4370, 7
  %v4372 = vsub.s32 1, %v4371
  %v4373 = vrot.slane %v3180, %v4372
  %v4374 = vlaneseq
  %v4375 = vshrl.u32 %v4374, 7
  %v4376 = vsub.s32 2, %v4375
  %v4377 = vrot.slane %v3180, %v4376
  %v4378 = vlaneseq
  %v4379 = vshrl.u32 %v4378, 7
  %v4380 = vsub.s32 3, %v4379
  %v4381 = vrot.slane %v3180, %v4380
  %v4382 = vlaneseq
  %v4383 = vshrl.u32 %v4382, 7
  %v4384 = vsub.s32 4, %v4383
  %v4385 = vrot.slane %v3180, %v4384
  %v4386 = vlaneseq
  %v4387 = vshrl.u32 %v4386, 7
  %v4388 = vsub.s32 5, %v4387
  %v4389 = vrot.slane %v3180, %v4388
  %v4390 = vlaneseq
  %v4391 = vshrl.u32 %v4390, 7
  %v4392 = vsub.s32 6, %v4391
  %v4393 = vrot.slane %v3180, %v4392
  %v4394 = vlaneseq
  %v4395 = vshrl.u32 %v4394, 7
  %v4396 = vsub.s32 7, %v4395
  %v4397 = vrot.slane %v3180, %v4396
  %v4398 = vlaneseq
  %v4399 = vshrl.u32 %v4398, 7
  %v4400 = vsub.s32 0, %v4399
  %v4401 = vrot.slane %v3181, %v4400
  %v4402 = vlaneseq
  %v4403 = vshrl.u32 %v4402, 7
  %v4404 = vsub.s32 1, %v4403
  %v4405 = vrot.slane %v3181, %v4404
  %v4406 = vlaneseq
  %v4407 = vshrl.u32 %v4406, 7
  %v4408 = vsub.s32 2, %v4407
  %v4409 = vrot.slane %v3181, %v4408
  %v4410 = vlaneseq
  %v4411 = vshrl.u32 %v4410, 7
  %v4412 = vsub.s32 3, %v4411
  %v4413 = vrot.slane %v3181, %v4412
  %v4414 = vlaneseq
  %v4415 = vshrl.u32 %v4414, 7
  %v4416 = vsub.s32 4, %v4415
  %v4417 = vrot.slane %v3181, %v4416
  %v4418 = vlaneseq
  %v4419 = vshrl.u32 %v4418, 7
  %v4420 = vsub.s32 5, %v4419
  %v4421 = vrot.slane %v3181, %v4420
  %v4422 = vlaneseq
  %v4423 = vshrl.u32 %v4422, 7
  %v4424 = vsub.s32 6, %v4423
  %v4425 = vrot.slane %v3181, %v4424
  %v4426 = vlaneseq
  %v4427 = vshrl.u32 %v4426, 7
  %v4428 = vsub.s32 7, %v4427
  %v4429 = vrot.slane %v3181, %v4428
  %v4430 = vlaneseq
  %v4431 = vshrl.u32 %v4430, 7
  %v4432 = vsub.s32 0, %v4431
  %v4433 = vrot.slane %v3182, %v4432
  %v4434 = vlaneseq
  %v4435 = vshrl.u32 %v4434, 7
  %v4436 = vsub.s32 1, %v4435
  %v4437 = vrot.slane %v3182, %v4436
  %v4438 = vlaneseq
  %v4439 = vshrl.u32 %v4438, 7
  %v4440 = vsub.s32 2, %v4439
  %v4441 = vrot.slane %v3182, %v4440
  %v4442 = vlaneseq
  %v4443 = vshrl.u32 %v4442, 7
  %v4444 = vsub.s32 3, %v4443
  %v4445 = vrot.slane %v3182, %v4444
  %v4446 = vlaneseq
  %v4447 = vshrl.u32 %v4446, 7
  %v4448 = vsub.s32 4, %v4447
  %v4449 = vrot.slane %v3182, %v4448
  %v4450 = vlaneseq
  %v4451 = vshrl.u32 %v4450, 7
  %v4452 = vsub.s32 5, %v4451
  %v4453 = vrot.slane %v3182, %v4452
  %v4454 = vlaneseq
  %v4455 = vshrl.u32 %v4454, 7
  %v4456 = vsub.s32 6, %v4455
  %v4457 = vrot.slane %v3182, %v4456
  %v4458 = vlaneseq
  %v4459 = vshrl.u32 %v4458, 7
  %v4460 = vsub.s32 7, %v4459
  %v4461 = vrot.slane %v3182, %v4460
  %v4462 = vlaneseq
  %v4463 = vshrl.u32 %v4462, 7
  %v4464 = vsub.s32 0, %v4463
  %v4465 = vrot.slane %v3183, %v4464
  %v4466 = vlaneseq
  %v4467 = vshrl.u32 %v4466, 7
  %v4468 = vsub.s32 1, %v4467
  %v4469 = vrot.slane %v3183, %v4468
  %v4470 = vlaneseq
  %v4471 = vshrl.u32 %v4470, 7
  %v4472 = vsub.s32 2, %v4471
  %v4473 = vrot.slane %v3183, %v4472
  %v4474 = vlaneseq
  %v4475 = vshrl.u32 %v4474, 7
  %v4476 = vsub.s32 3, %v4475
  %v4477 = vrot.slane %v3183, %v4476
  %v4478 = vlaneseq
  %v4479 = vshrl.u32 %v4478, 7
  %v4480 = vsub.s32 4, %v4479
  %v4481 = vrot.slane %v3183, %v4480
  %v4482 = vlaneseq
  %v4483 = vshrl.u32 %v4482, 7
  %v4484 = vsub.s32 5, %v4483
  %v4485 = vrot.slane %v3183, %v4484
  %v4486 = vlaneseq
  %v4487 = vshrl.u32 %v4486, 7
  %v4488 = vsub.s32 6, %v4487
  %v4489 = vrot.slane %v3183, %v4488
  %v4490 = vlaneseq
  %v4491 = vshrl.u32 %v4490, 7
  %v4492 = vsub.s32 7, %v4491
  %v4493 = vrot.slane %v3183, %v4492
  %v4494 = vlaneseq
  %v4495 = vshrl.u32 %v4494, 7
  %v4496 = vsub.s32 0, %v4495
  %v4497 = vrot.slane %v3184, %v4496
  %v4498 = vlaneseq
  %v4499 = vshrl.u32 %v4498, 7
  %v4500 = vsub.s32 1, %v4499
  %v4501 = vrot.slane %v3184, %v4500
  %v4502 = vlaneseq
  %v4503 = vshrl.u32 %v4502, 7
  %v4504 = vsub.s32 2, %v4503
  %v4505 = vrot.slane %v3184, %v4504
  %v4506 = vlaneseq
  %v4507 = vshrl.u32 %v4506, 7
  %v4508 = vsub.s32 3, %v4507
  %v4509 = vrot.slane %v3184, %v4508
  %v4510 = vlaneseq
  %v4511 = vshrl.u32 %v4510, 7
  %v4512 = vsub.s32 4, %v4511
  %v4513 = vrot.slane %v3184, %v4512
  %v4514 = vlaneseq
  %v4515 = vshrl.u32 %v4514, 7
  %v4516 = vsub.s32 5, %v4515
  %v4517 = vrot.slane %v3184, %v4516
  %v4518 = vlaneseq
  %v4519 = vshrl.u32 %v4518, 7
  %v4520 = vsub.s32 6, %v4519
  %v4521 = vrot.slane %v3184, %v4520
  %v4522 = vlaneseq
  %v4523 = vshrl.u32 %v4522, 7
  %v4524 = vsub.s32 7, %v4523
  %v4525 = vrot.slane %v3184, %v4524
  %v4526 = vlaneseq
  %v4527 = vshrl.u32 %v4526, 7
  %v4528 = vsub.s32 0, %v4527
  %v4529 = vrot.slane %v3185, %v4528
  %v4530 = vlaneseq
  %v4531 = vshrl.u32 %v4530, 7
  %v4532 = vsub.s32 1, %v4531
  %v4533 = vrot.slane %v3185, %v4532
  %v4534 = vlaneseq
  %v4535 = vshrl.u32 %v4534, 7
  %v4536 = vsub.s32 2, %v4535
  %v4537 = vrot.slane %v3185, %v4536
  %v4538 = vlaneseq
  %v4539 = vshrl.u32 %v4538, 7
  %v4540 = vsub.s32 3, %v4539
  %v4541 = vrot.slane %v3185, %v4540
  %v4542 = vlaneseq
  %v4543 = vshrl.u32 %v4542, 7
  %v4544 = vsub.s32 4, %v4543
  %v4545 = vrot.slane %v3185, %v4544
  %v4546 = vlaneseq
  %v4547 = vshrl.u32 %v4546, 7
  %v4548 = vsub.s32 5, %v4547
  %v4549 = vrot.slane %v3185, %v4548
  %v4550 = vlaneseq
  %v4551 = vshrl.u32 %v4550, 7
  %v4552 = vsub.s32 6, %v4551
  %v4553 = vrot.slane %v3185, %v4552
  %v4554 = vlaneseq
  %v4555 = vshrl.u32 %v4554, 7
  %v4556 = vsub.s32 7, %v4555
  %v4557 = vrot.slane %v3185, %v4556
  %v4558 = vlaneseq
  %v4559 = vshrl.u32 %v4558, 7
  %v4560 = vsub.s32 0, %v4559
  %v4561 = vrot.slane %v3186, %v4560
  %v4562 = vlaneseq
  %v4563 = vshrl.u32 %v4562, 7
  %v4564 = vsub.s32 1, %v4563
  %v4565 = vrot.slane %v3186, %v4564
  %v4566 = vlaneseq
  %v4567 = vshrl.u32 %v4566, 7
  %v4568 = vsub.s32 2, %v4567
  %v4569 = vrot.slane %v3186, %v4568
  %v4570 = vlaneseq
  %v4571 = vshrl.u32 %v4570, 7
  %v4572 = vsub.s32 3, %v4571
  %v4573 = vrot.slane %v3186, %v4572
  %v4574 = vlaneseq
  %v4575 = vshrl.u32 %v4574, 7
  %v4576 = vsub.s32 4, %v4575
  %v4577 = vrot.slane %v3186, %v4576
  %v4578 = vlaneseq
  %v4579 = vshrl.u32 %v4578, 7
  %v4580 = vsub.s32 5, %v4579
  %v4581 = vrot.slane %v3186, %v4580
  %v4582 = vlaneseq
  %v4583 = vshrl.u32 %v4582, 7
  %v4584 = vsub.s32 6, %v4583
  %v4585 = vrot.slane %v3186, %v4584
  %v4586 = vlaneseq
  %v4587 = vshrl.u32 %v4586, 7
  %v4588 = vsub.s32 7, %v4587
  %v4589 = vrot.slane %v3186, %v4588
  %v4590 = vlaneseq
  %v4591 = vshrl.u32 %v4590, 7
  %v4592 = vsub.s32 0, %v4591
  %v4593 = vrot.slane %v3187, %v4592
  %v4594 = vlaneseq
  %v4595 = vshrl.u32 %v4594, 7
  %v4596 = vsub.s32 1, %v4595
  %v4597 = vrot.slane %v3187, %v4596
  %v4598 = vlaneseq
  %v4599 = vshrl.u32 %v4598, 7
  %v4600 = vsub.s32 2, %v4599
  %v4601 = vrot.slane %v3187, %v4600
  %v4602 = vlaneseq
  %v4603 = vshrl.u32 %v4602, 7
  %v4604 = vsub.s32 3, %v4603
  %v4605 = vrot.slane %v3187, %v4604
  %v4606 = vlaneseq
  %v4607 = vshrl.u32 %v4606, 7
  %v4608 = vsub.s32 4, %v4607
  %v4609 = vrot.slane %v3187, %v4608
  %v4610 = vlaneseq
  %v4611 = vshrl.u32 %v4610, 7
  %v4612 = vsub.s32 5, %v4611
  %v4613 = vrot.slane %v3187, %v4612
  %v4614 = vlaneseq
  %v4615 = vshrl.u32 %v4614, 7
  %v4616 = vsub.s32 6, %v4615
  %v4617 = vrot.slane %v3187, %v4616
  %v4618 = vlaneseq
  %v4619 = vshrl.u32 %v4618, 7
  %v4620 = vsub.s32 7, %v4619
  %v4621 = vrot.slane %v3187, %v4620
  %v4622 = vlaneseq
  %v4623 = vshrl.u32 %v4622, 7
  %v4624 = vsub.s32 0, %v4623
  %v4625 = vrot.slane %v3188, %v4624
  %v4626 = vlaneseq
  %v4627 = vshrl.u32 %v4626, 7
  %v4628 = vsub.s32 1, %v4627
  %v4629 = vrot.slane %v3188, %v4628
  %v4630 = vlaneseq
  %v4631 = vshrl.u32 %v4630, 7
  %v4632 = vsub.s32 2, %v4631
  %v4633 = vrot.slane %v3188, %v4632
  %v4634 = vlaneseq
  %v4635 = vshrl.u32 %v4634, 7
  %v4636 = vsub.s32 3, %v4635
  %v4637 = vrot.slane %v3188, %v4636
  %v4638 = vlaneseq
  %v4639 = vshrl.u32 %v4638, 7
  %v4640 = vsub.s32 4, %v4639
  %v4641 = vrot.slane %v3188, %v4640
  %v4642 = vlaneseq
  %v4643 = vshrl.u32 %v4642, 7
  %v4644 = vsub.s32 5, %v4643
  %v4645 = vrot.slane %v3188, %v4644
  %v4646 = vlaneseq
  %v4647 = vshrl.u32 %v4646, 7
  %v4648 = vsub.s32 6, %v4647
  %v4649 = vrot.slane %v3188, %v4648
  %v4650 = vlaneseq
  %v4651 = vshrl.u32 %v4650, 7
  %v4652 = vsub.s32 7, %v4651
  %v4653 = vrot.slane %v3188, %v4652
  %v4654 = vlaneseq
  %v4655 = vshrl.u32 %v4654, 7
  %v4656 = vsub.s32 0, %v4655
  %v4657 = vrot.slane %v3189, %v4656
  %v4658 = vlaneseq
  %v4659 = vshrl.u32 %v4658, 7
  %v4660 = vsub.s32 1, %v4659
  %v4661 = vrot.slane %v3189, %v4660
  %v4662 = vlaneseq
  %v4663 = vshrl.u32 %v4662, 7
  %v4664 = vsub.s32 2, %v4663
  %v4665 = vrot.slane %v3189, %v4664
  %v4666 = vlaneseq
  %v4667 = vshrl.u32 %v4666, 7
  %v4668 = vsub.s32 3, %v4667
  %v4669 = vrot.slane %v3189, %v4668
  %v4670 = vlaneseq
  %v4671 = vshrl.u32 %v4670, 7
  %v4672 = vsub.s32 4, %v4671
  %v4673 = vrot.slane %v3189, %v4672
  %v4674 = vlaneseq
  %v4675 = vshrl.u32 %v4674, 7
  %v4676 = vsub.s32 5, %v4675
  %v4677 = vrot.slane %v3189, %v4676
  %v4678 = vlaneseq
  %v4679 = vshrl.u32 %v4678, 7
  %v4680 = vsub.s32 6, %v4679
  %v4681 = vrot.slane %v3189, %v4680
  %v4682 = vlaneseq
  %v4683 = vshrl.u32 %v4682, 7
  %v4684 = vsub.s32 7, %v4683
  %v4685 = vrot.slane %v3189, %v4684
  %v4686 = vlaneseq
  %v4687 = vshrl.u32 %v4686, 7
  %v4688 = vsub.s32 0, %v4687
  %v4689 = vrot.slane %v3190, %v4688
  %v4690 = vlaneseq
  %v4691 = vshrl.u32 %v4690, 7
  %v4692 = vsub.s32 1, %v4691
  %v4693 = vrot.slane %v3190, %v4692
  %v4694 = vlaneseq
  %v4695 = vshrl.u32 %v4694, 7
  %v4696 = vsub.s32 2, %v4695
  %v4697 = vrot.slane %v3190, %v4696
  %v4698 = vlaneseq
  %v4699 = vshrl.u32 %v4698, 7
  %v4700 = vsub.s32 3, %v4699
  %v4701 = vrot.slane %v3190, %v4700
  %v4702 = vlaneseq
  %v4703 = vshrl.u32 %v4702, 7
  %v4704 = vsub.s32 4, %v4703
  %v4705 = vrot.slane %v3190, %v4704
  %v4706 = vlaneseq
  %v4707 = vshrl.u32 %v4706, 7
  %v4708 = vsub.s32 5, %v4707
  %v4709 = vrot.slane %v3190, %v4708
  %v4710 = vlaneseq
  %v4711 = vshrl.u32 %v4710, 7
  %v4712 = vsub.s32 6, %v4711
  %v4713 = vrot.slane %v3190, %v4712
  %v4714 = vlaneseq
  %v4715 = vshrl.u32 %v4714, 7
  %v4716 = vsub.s32 7, %v4715
  %v4717 = vrot.slane %v3190, %v4716
  %v4718 = vlaneseq
  %v4719 = vshrl.u32 %v4718, 7
  %v4720 = vsub.s32 0, %v4719
  %v4721 = vrot.slane %v3191, %v4720
  %v4722 = vlaneseq
  %v4723 = vshrl.u32 %v4722, 7
  %v4724 = vsub.s32 1, %v4723
  %v4725 = vrot.slane %v3191, %v4724
  %v4726 = vlaneseq
  %v4727 = vshrl.u32 %v4726, 7
  %v4728 = vsub.s32 2, %v4727
  %v4729 = vrot.slane %v3191, %v4728
  %v4730 = vlaneseq
  %v4731 = vshrl.u32 %v4730, 7
  %v4732 = vsub.s32 3, %v4731
  %v4733 = vrot.slane %v3191, %v4732
  %v4734 = vlaneseq
  %v4735 = vshrl.u32 %v4734, 7
  %v4736 = vsub.s32 4, %v4735
  %v4737 = vrot.slane %v3191, %v4736
  %v4738 = vlaneseq
  %v4739 = vshrl.u32 %v4738, 7
  %v4740 = vsub.s32 5, %v4739
  %v4741 = vrot.slane %v3191, %v4740
  %v4742 = vlaneseq
  %v4743 = vshrl.u32 %v4742, 7
  %v4744 = vsub.s32 6, %v4743
  %v4745 = vrot.slane %v3191, %v4744
  %v4746 = vlaneseq
  %v4747 = vshrl.u32 %v4746, 7
  %v4748 = vsub.s32 7, %v4747
  %v4749 = vrot.slane %v3191, %v4748
  %v4750 = vlaneseq
  %v4751 = vshrl.u32 %v4750, 7
  %v4752 = vsub.s32 0, %v4751
  %v4753 = vrot.slane %v3192, %v4752
  %v4754 = vlaneseq
  %v4755 = vshrl.u32 %v4754, 7
  %v4756 = vsub.s32 1, %v4755
  %v4757 = vrot.slane %v3192, %v4756
  %v4758 = vlaneseq
  %v4759 = vshrl.u32 %v4758, 7
  %v4760 = vsub.s32 2, %v4759
  %v4761 = vrot.slane %v3192, %v4760
  %v4762 = vlaneseq
  %v4763 = vshrl.u32 %v4762, 7
  %v4764 = vsub.s32 3, %v4763
  %v4765 = vrot.slane %v3192, %v4764
  %v4766 = vlaneseq
  %v4767 = vshrl.u32 %v4766, 7
  %v4768 = vsub.s32 4, %v4767
  %v4769 = vrot.slane %v3192, %v4768
  %v4770 = vlaneseq
  %v4771 = vshrl.u32 %v4770, 7
  %v4772 = vsub.s32 5, %v4771
  %v4773 = vrot.slane %v3192, %v4772
  %v4774 = vlaneseq
  %v4775 = vshrl.u32 %v4774, 7
  %v4776 = vsub.s32 6, %v4775
  %v4777 = vrot.slane %v3192, %v4776
  %v4778 = vlaneseq
  %v4779 = vshrl.u32 %v4778, 7
  %v4780 = vsub.s32 7, %v4779
  %v4781 = vrot.slane %v3192, %v4780
  %v4782 = vlaneseq
  %v4783 = vshrl.u32 %v4782, 7
  %v4784 = vsub.s32 0, %v4783
  %v4785 = vrot.slane %v3193, %v4784
  %v4786 = vlaneseq
  %v4787 = vshrl.u32 %v4786, 7
  %v4788 = vsub.s32 1, %v4787
  %v4789 = vrot.slane %v3193, %v4788
  %v4790 = vlaneseq
  %v4791 = vshrl.u32 %v4790, 7
  %v4792 = vsub.s32 2, %v4791
  %v4793 = vrot.slane %v3193, %v4792
  %v4794 = vlaneseq
  %v4795 = vshrl.u32 %v4794, 7
  %v4796 = vsub.s32 3, %v4795
  %v4797 = vrot.slane %v3193, %v4796
  %v4798 = vlaneseq
  %v4799 = vshrl.u32 %v4798, 7
  %v4800 = vsub.s32 4, %v4799
  %v4801 = vrot.slane %v3193, %v4800
  %v4802 = vlaneseq
  %v4803 = vshrl.u32 %v4802, 7
  %v4804 = vsub.s32 5, %v4803
  %v4805 = vrot.slane %v3193, %v4804
  %v4806 = vlaneseq
  %v4807 = vshrl.u32 %v4806, 7
  %v4808 = vsub.s32 6, %v4807
  %v4809 = vrot.slane %v3193, %v4808
  %v4810 = vlaneseq
  %v4811 = vshrl.u32 %v4810, 7
  %v4812 = vsub.s32 7, %v4811
  %v4813 = vrot.slane %v3193, %v4812
  %v4814 = vlaneseq
  %v4815 = vshrl.u32 %v4814, 7
  %v4816 = vsub.s32 0, %v4815
  %v4817 = vrot.slane %v3194, %v4816
  %v4818 = vlaneseq
  %v4819 = vshrl.u32 %v4818, 7
  %v4820 = vsub.s32 1, %v4819
  %v4821 = vrot.slane %v3194, %v4820
  %v4822 = vlaneseq
  %v4823 = vshrl.u32 %v4822, 7
  %v4824 = vsub.s32 2, %v4823
  %v4825 = vrot.slane %v3194, %v4824
  %v4826 = vlaneseq
  %v4827 = vshrl.u32 %v4826, 7
  %v4828 = vsub.s32 3, %v4827
  %v4829 = vrot.slane %v3194, %v4828
  %v4830 = vlaneseq
  %v4831 = vshrl.u32 %v4830, 7
  %v4832 = vsub.s32 4, %v4831
  %v4833 = vrot.slane %v3194, %v4832
  %v4834 = vlaneseq
  %v4835 = vshrl.u32 %v4834, 7
  %v4836 = vsub.s32 5, %v4835
  %v4837 = vrot.slane %v3194, %v4836
  %v4838 = vlaneseq
  %v4839 = vshrl.u32 %v4838, 7
  %v4840 = vsub.s32 6, %v4839
  %v4841 = vrot.slane %v3194, %v4840
  %v4842 = vlaneseq
  %v4843 = vshrl.u32 %v4842, 7
  %v4844 = vsub.s32 7, %v4843
  %v4845 = vrot.slane %v3194, %v4844
  %v4846 = vlaneseq
  %v4847 = vshrl.u32 %v4846, 7
  %v4848 = vsub.s32 0, %v4847
  %v4849 = vrot.slane %v3195, %v4848
  %v4850 = vlaneseq
  %v4851 = vshrl.u32 %v4850, 7
  %v4852 = vsub.s32 1, %v4851
  %v4853 = vrot.slane %v3195, %v4852
  %v4854 = vlaneseq
  %v4855 = vshrl.u32 %v4854, 7
  %v4856 = vsub.s32 2, %v4855
  %v4857 = vrot.slane %v3195, %v4856
  %v4858 = vlaneseq
  %v4859 = vshrl.u32 %v4858, 7
  %v4860 = vsub.s32 3, %v4859
  %v4861 = vrot.slane %v3195, %v4860
  %v4862 = vlaneseq
  %v4863 = vshrl.u32 %v4862, 7
  %v4864 = vsub.s32 4, %v4863
  %v4865 = vrot.slane %v3195, %v4864
  %v4866 = vlaneseq
  %v4867 = vshrl.u32 %v4866, 7
  %v4868 = vsub.s32 5, %v4867
  %v4869 = vrot.slane %v3195, %v4868
  %v4870 = vlaneseq
  %v4871 = vshrl.u32 %v4870, 7
  %v4872 = vsub.s32 6, %v4871
  %v4873 = vrot.slane %v3195, %v4872
  %v4874 = vlaneseq
  %v4875 = vshrl.u32 %v4874, 7
  %v4876 = vsub.s32 7, %v4875
  %v4877 = vrot.slane %v3195, %v4876
  %v4878 = vlaneseq
  %v4879 = vshrl.u32 %v4878, 7
  %v4880 = vsub.s32 0, %v4879
  %v4881 = vrot.slane %v3196, %v4880
  %v4882 = vlaneseq
  %v4883 = vshrl.u32 %v4882, 7
  %v4884 = vsub.s32 1, %v4883
  %v4885 = vrot.slane %v3196, %v4884
  %v4886 = vlaneseq
  %v4887 = vshrl.u32 %v4886, 7
  %v4888 = vsub.s32 2, %v4887
  %v4889 = vrot.slane %v3196, %v4888
  %v4890 = vlaneseq
  %v4891 = vshrl.u32 %v4890, 7
  %v4892 = vsub.s32 3, %v4891
  %v4893 = vrot.slane %v3196, %v4892
  %v4894 = vlaneseq
  %v4895 = vshrl.u32 %v4894, 7
  %v4896 = vsub.s32 4, %v4895
  %v4897 = vrot.slane %v3196, %v4896
  %v4898 = vlaneseq
  %v4899 = vshrl.u32 %v4898, 7
  %v4900 = vsub.s32 5, %v4899
  %v4901 = vrot.slane %v3196, %v4900
  %v4902 = vlaneseq
  %v4903 = vshrl.u32 %v4902, 7
  %v4904 = vsub.s32 6, %v4903
  %v4905 = vrot.slane %v3196, %v4904
  %v4906 = vlaneseq
  %v4907 = vshrl.u32 %v4906, 7
  %v4908 = vsub.s32 7, %v4907
  %v4909 = vrot.slane %v3196, %v4908
  %v4910 = vlaneseq
  %v4911 = vshrl.u32 %v4910, 7
  %v4912 = vsub.s32 0, %v4911
  %v4913 = vrot.slane %v3197, %v4912
  %v4914 = vlaneseq
  %v4915 = vshrl.u32 %v4914, 7
  %v4916 = vsub.s32 1, %v4915
  %v4917 = vrot.slane %v3197, %v4916
  %v4918 = vlaneseq
  %v4919 = vshrl.u32 %v4918, 7
  %v4920 = vsub.s32 2, %v4919
  %v4921 = vrot.slane %v3197, %v4920
  %v4922 = vlaneseq
  %v4923 = vshrl.u32 %v4922, 7
  %v4924 = vsub.s32 3, %v4923
  %v4925 = vrot.slane %v3197, %v4924
  %v4926 = vlaneseq
  %v4927 = vshrl.u32 %v4926, 7
  %v4928 = vsub.s32 4, %v4927
  %v4929 = vrot.slane %v3197, %v4928
  %v4930 = vlaneseq
  %v4931 = vshrl.u32 %v4930, 7
  %v4932 = vsub.s32 5, %v4931
  %v4933 = vrot.slane %v3197, %v4932
  %v4934 = vlaneseq
  %v4935 = vshrl.u32 %v4934, 7
  %v4936 = vsub.s32 6, %v4935
  %v4937 = vrot.slane %v3197, %v4936
  %v4938 = vlaneseq
  %v4939 = vshrl.u32 %v4938, 7
  %v4940 = vsub.s32 7, %v4939
  %v4941 = vrot.slane %v3197, %v4940
  %v4942 = vlaneseq
  %v4943 = vshrl.u32 %v4942, 7
  %v4944 = vsub.s32 0, %v4943
  %v4945 = vrot.slane %v3198, %v4944
  %v4946 = vlaneseq
  %v4947 = vshrl.u32 %v4946, 7
  %v4948 = vsub.s32 1, %v4947
  %v4949 = vrot.slane %v3198, %v4948
  %v4950 = vlaneseq
  %v4951 = vshrl.u32 %v4950, 7
  %v4952 = vsub.s32 2, %v4951
  %v4953 = vrot.slane %v3198, %v4952
  %v4954 = vlaneseq
  %v4955 = vshrl.u32 %v4954, 7
  %v4956 = vsub.s32 3, %v4955
  %v4957 = vrot.slane %v3198, %v4956
  %v4958 = vlaneseq
  %v4959 = vshrl.u32 %v4958, 7
  %v4960 = vsub.s32 4, %v4959
  %v4961 = vrot.slane %v3198, %v4960
  %v4962 = vlaneseq
  %v4963 = vshrl.u32 %v4962, 7
  %v4964 = vsub.s32 5, %v4963
  %v4965 = vrot.slane %v3198, %v4964
  %v4966 = vlaneseq
  %v4967 = vshrl.u32 %v4966, 7
  %v4968 = vsub.s32 6, %v4967
  %v4969 = vrot.slane %v3198, %v4968
  %v4970 = vlaneseq
  %v4971 = vshrl.u32 %v4970, 7
  %v4972 = vsub.s32 7, %v4971
  %v4973 = vrot.slane %v3198, %v4972
  %v4974 = vlaneseq
  %v4975 = vshrl.u32 %v4974, 7
  %v4976 = vsub.s32 0, %v4975
  %v4977 = vrot.slane %v3199, %v4976
  %v4978 = vlaneseq
  %v4979 = vshrl.u32 %v4978, 7
  %v4980 = vsub.s32 1, %v4979
  %v4981 = vrot.slane %v3199, %v4980
  %v4982 = vlaneseq
  %v4983 = vshrl.u32 %v4982, 7
  %v4984 = vsub.s32 2, %v4983
  %v4985 = vrot.slane %v3199, %v4984
  %v4986 = vlaneseq
  %v4987 = vshrl.u32 %v4986, 7
  %v4988 = vsub.s32 3, %v4987
  %v4989 = vrot.slane %v3199, %v4988
  %v4990 = vlaneseq
  %v4991 = vshrl.u32 %v4990, 7
  %v4992 = vsub.s32 4, %v4991
  %v4993 = vrot.slane %v3199, %v4992
  %v4994 = vlaneseq
  %v4995 = vshrl.u32 %v4994, 7
  %v4996 = vsub.s32 5, %v4995
  %v4997 = vrot.slane %v3199, %v4996
  %v4998 = vlaneseq
  %v4999 = vshrl.u32 %v4998, 7
  %v5000 = vsub.s32 6, %v4999
  %v5001 = vrot.slane %v3199, %v5000
  %v5002 = vlaneseq
  %v5003 = vshrl.u32 %v5002, 7
  %v5004 = vsub.s32 7, %v5003
  %v5005 = vrot.slane %v3199, %v5004
  %v5006 = vlaneseq
  %v5007 = vshrl.u32 %v5006, 7
  %v5008 = vsub.s32 0, %v5007
  %v5009 = vrot.slane %v3200, %v5008
  %v5010 = vlaneseq
  %v5011 = vshrl.u32 %v5010, 7
  %v5012 = vsub.s32 1, %v5011
  %v5013 = vrot.slane %v3200, %v5012
  %v5014 = vlaneseq
  %v5015 = vshrl.u32 %v5014, 7
  %v5016 = vsub.s32 2, %v5015
  %v5017 = vrot.slane %v3200, %v5016
  %v5018 = vlaneseq
  %v5019 = vshrl.u32 %v5018, 7
  %v5020 = vsub.s32 3, %v5019
  %v5021 = vrot.slane %v3200, %v5020
  %v5022 = vlaneseq
  %v5023 = vshrl.u32 %v5022, 7
  %v5024 = vsub.s32 4, %v5023
  %v5025 = vrot.slane %v3200, %v5024
  %v5026 = vlaneseq
  %v5027 = vshrl.u32 %v5026, 7
  %v5028 = vsub.s32 5, %v5027
  %v5029 = vrot.slane %v3200, %v5028
  %v5030 = vlaneseq
  %v5031 = vshrl.u32 %v5030, 7
  %v5032 = vsub.s32 6, %v5031
  %v5033 = vrot.slane %v3200, %v5032
  %v5034 = vlaneseq
  %v5035 = vshrl.u32 %v5034, 7
  %v5036 = vsub.s32 7, %v5035
  %v5037 = vrot.slane %v3200, %v5036
  %v5038 = vlaneseq
  %v5039 = vshrl.u32 %v5038, 7
  %v5040 = vsub.s32 0, %v5039
  %v5041 = vrot.slane %v3201, %v5040
  %v5042 = vlaneseq
  %v5043 = vshrl.u32 %v5042, 7
  %v5044 = vsub.s32 1, %v5043
  %v5045 = vrot.slane %v3201, %v5044
  %v5046 = vlaneseq
  %v5047 = vshrl.u32 %v5046, 7
  %v5048 = vsub.s32 2, %v5047
  %v5049 = vrot.slane %v3201, %v5048
  %v5050 = vlaneseq
  %v5051 = vshrl.u32 %v5050, 7
  %v5052 = vsub.s32 3, %v5051
  %v5053 = vrot.slane %v3201, %v5052
  %v5054 = vlaneseq
  %v5055 = vshrl.u32 %v5054, 7
  %v5056 = vsub.s32 4, %v5055
  %v5057 = vrot.slane %v3201, %v5056
  %v5058 = vlaneseq
  %v5059 = vshrl.u32 %v5058, 7
  %v5060 = vsub.s32 5, %v5059
  %v5061 = vrot.slane %v3201, %v5060
  %v5062 = vlaneseq
  %v5063 = vshrl.u32 %v5062, 7
  %v5064 = vsub.s32 6, %v5063
  %v5065 = vrot.slane %v3201, %v5064
  %v5066 = vlaneseq
  %v5067 = vshrl.u32 %v5066, 7
  %v5068 = vsub.s32 7, %v5067
  %v5069 = vrot.slane %v3201, %v5068
  %v5070 = vlaneseq
  %v5071 = vshrl.u32 %v5070, 7
  %v5072 = vsub.s32 0, %v5071
  %v5073 = vrot.slane %v3202, %v5072
  %v5074 = vlaneseq
  %v5075 = vshrl.u32 %v5074, 7
  %v5076 = vsub.s32 1, %v5075
  %v5077 = vrot.slane %v3202, %v5076
  %v5078 = vlaneseq
  %v5079 = vshrl.u32 %v5078, 7
  %v5080 = vsub.s32 2, %v5079
  %v5081 = vrot.slane %v3202, %v5080
  %v5082 = vlaneseq
  %v5083 = vshrl.u32 %v5082, 7
  %v5084 = vsub.s32 3, %v5083
  %v5085 = vrot.slane %v3202, %v5084
  %v5086 = vlaneseq
  %v5087 = vshrl.u32 %v5086, 7
  %v5088 = vsub.s32 4, %v5087
  %v5089 = vrot.slane %v3202, %v5088
  %v5090 = vlaneseq
  %v5091 = vshrl.u32 %v5090, 7
  %v5092 = vsub.s32 5, %v5091
  %v5093 = vrot.slane %v3202, %v5092
  %v5094 = vlaneseq
  %v5095 = vshrl.u32 %v5094, 7
  %v5096 = vsub.s32 6, %v5095
  %v5097 = vrot.slane %v3202, %v5096
  %v5098 = vlaneseq
  %v5099 = vshrl.u32 %v5098, 7
  %v5100 = vsub.s32 7, %v5099
  %v5101 = vrot.slane %v3202, %v5100
  %v5102 = vlaneseq
  %v5103 = vshrl.u32 %v5102, 7
  %v5104 = vsub.s32 0, %v5103
  %v5105 = vrot.slane %v3203, %v5104
  %v5106 = vlaneseq
  %v5107 = vshrl.u32 %v5106, 7
  %v5108 = vsub.s32 1, %v5107
  %v5109 = vrot.slane %v3203, %v5108
  %v5110 = vlaneseq
  %v5111 = vshrl.u32 %v5110, 7
  %v5112 = vsub.s32 2, %v5111
  %v5113 = vrot.slane %v3203, %v5112
  %v5114 = vlaneseq
  %v5115 = vshrl.u32 %v5114, 7
  %v5116 = vsub.s32 3, %v5115
  %v5117 = vrot.slane %v3203, %v5116
  %v5118 = vlaneseq
  %v5119 = vshrl.u32 %v5118, 7
  %v5120 = vsub.s32 4, %v5119
  %v5121 = vrot.slane %v3203, %v5120
  %v5122 = vlaneseq
  %v5123 = vshrl.u32 %v5122, 7
  %v5124 = vsub.s32 5, %v5123
  %v5125 = vrot.slane %v3203, %v5124
  %v5126 = vlaneseq
  %v5127 = vshrl.u32 %v5126, 7
  %v5128 = vsub.s32 6, %v5127
  %v5129 = vrot.slane %v3203, %v5128
  %v5130 = vlaneseq
  %v5131 = vshrl.u32 %v5130, 7
  %v5132 = vsub.s32 7, %v5131
  %v5133 = vrot.slane %v3203, %v5132
  %v5134 = vlaneseq
  %v5135 = vshrl.u32 %v5134, 7
  %v5136 = vsub.s32 0, %v5135
  %v5137 = vrot.slane %v3204, %v5136
  %v5138 = vlaneseq
  %v5139 = vshrl.u32 %v5138, 7
  %v5140 = vsub.s32 1, %v5139
  %v5141 = vrot.slane %v3204, %v5140
  %v5142 = vlaneseq
  %v5143 = vshrl.u32 %v5142, 7
  %v5144 = vsub.s32 2, %v5143
  %v5145 = vrot.slane %v3204, %v5144
  %v5146 = vlaneseq
  %v5147 = vshrl.u32 %v5146, 7
  %v5148 = vsub.s32 3, %v5147
  %v5149 = vrot.slane %v3204, %v5148
  %v5150 = vlaneseq
  %v5151 = vshrl.u32 %v5150, 7
  %v5152 = vsub.s32 4, %v5151
  %v5153 = vrot.slane %v3204, %v5152
  %v5154 = vlaneseq
  %v5155 = vshrl.u32 %v5154, 7
  %v5156 = vsub.s32 5, %v5155
  %v5157 = vrot.slane %v3204, %v5156
  %v5158 = vlaneseq
  %v5159 = vshrl.u32 %v5158, 7
  %v5160 = vsub.s32 6, %v5159
  %v5161 = vrot.slane %v3204, %v5160
  %v5162 = vlaneseq
  %v5163 = vshrl.u32 %v5162, 7
  %v5164 = vsub.s32 7, %v5163
  %v5165 = vrot.slane %v3204, %v5164
  %v5166 = vlaneseq
  %v5167 = vshrl.u32 %v5166, 7
  %v5168 = vsub.s32 0, %v5167
  %v5169 = vrot.slane %v3205, %v5168
  %v5170 = vlaneseq
  %v5171 = vshrl.u32 %v5170, 7
  %v5172 = vsub.s32 1, %v5171
  %v5173 = vrot.slane %v3205, %v5172
  %v5174 = vlaneseq
  %v5175 = vshrl.u32 %v5174, 7
  %v5176 = vsub.s32 2, %v5175
  %v5177 = vrot.slane %v3205, %v5176
  %v5178 = vlaneseq
  %v5179 = vshrl.u32 %v5178, 7
  %v5180 = vsub.s32 3, %v5179
  %v5181 = vrot.slane %v3205, %v5180
  %v5182 = vlaneseq
  %v5183 = vshrl.u32 %v5182, 7
  %v5184 = vsub.s32 4, %v5183
  %v5185 = vrot.slane %v3205, %v5184
  %v5186 = vlaneseq
  %v5187 = vshrl.u32 %v5186, 7
  %v5188 = vsub.s32 5, %v5187
  %v5189 = vrot.slane %v3205, %v5188
  %v5190 = vlaneseq
  %v5191 = vshrl.u32 %v5190, 7
  %v5192 = vsub.s32 6, %v5191
  %v5193 = vrot.slane %v3205, %v5192
  %v5194 = vlaneseq
  %v5195 = vshrl.u32 %v5194, 7
  %v5196 = vsub.s32 7, %v5195
  %v5197 = vrot.slane %v3205, %v5196
  %v5198 = vlaneseq
  %v5199 = vshrl.u32 %v5198, 7
  %v5200 = vsub.s32 0, %v5199
  %v5201 = vrot.slane %v3206, %v5200
  %v5202 = vlaneseq
  %v5203 = vshrl.u32 %v5202, 7
  %v5204 = vsub.s32 1, %v5203
  %v5205 = vrot.slane %v3206, %v5204
  %v5206 = vlaneseq
  %v5207 = vshrl.u32 %v5206, 7
  %v5208 = vsub.s32 2, %v5207
  %v5209 = vrot.slane %v3206, %v5208
  %v5210 = vlaneseq
  %v5211 = vshrl.u32 %v5210, 7
  %v5212 = vsub.s32 3, %v5211
  %v5213 = vrot.slane %v3206, %v5212
  %v5214 = vlaneseq
  %v5215 = vshrl.u32 %v5214, 7
  %v5216 = vsub.s32 4, %v5215
  %v5217 = vrot.slane %v3206, %v5216
  %v5218 = vlaneseq
  %v5219 = vshrl.u32 %v5218, 7
  %v5220 = vsub.s32 5, %v5219
  %v5221 = vrot.slane %v3206, %v5220
  %v5222 = vlaneseq
  %v5223 = vshrl.u32 %v5222, 7
  %v5224 = vsub.s32 6, %v5223
  %v5225 = vrot.slane %v3206, %v5224
  %v5226 = vlaneseq
  %v5227 = vshrl.u32 %v5226, 7
  %v5228 = vsub.s32 7, %v5227
  %v5229 = vrot.slane %v3206, %v5228
  %v5230 = vlaneseq
  %v5231 = vshrl.u32 %v5230, 7
  %v5232 = vsub.s32 0, %v5231
  %v5233 = vrot.slane %v3207, %v5232
  %v5234 = vlaneseq
  %v5235 = vshrl.u32 %v5234, 7
  %v5236 = vsub.s32 1, %v5235
  %v5237 = vrot.slane %v3207, %v5236
  %v5238 = vlaneseq
  %v5239 = vshrl.u32 %v5238, 7
  %v5240 = vsub.s32 2, %v5239
  %v5241 = vrot.slane %v3207, %v5240
  %v5242 = vlaneseq
  %v5243 = vshrl.u32 %v5242, 7
  %v5244 = vsub.s32 3, %v5243
  %v5245 = vrot.slane %v3207, %v5244
  %v5246 = vlaneseq
  %v5247 = vshrl.u32 %v5246, 7
  %v5248 = vsub.s32 4, %v5247
  %v5249 = vrot.slane %v3207, %v5248
  %v5250 = vlaneseq
  %v5251 = vshrl.u32 %v5250, 7
  %v5252 = vsub.s32 5, %v5251
  %v5253 = vrot.slane %v3207, %v5252
  %v5254 = vlaneseq
  %v5255 = vshrl.u32 %v5254, 7
  %v5256 = vsub.s32 6, %v5255
  %v5257 = vrot.slane %v3207, %v5256
  %v5258 = vlaneseq
  %v5259 = vshrl.u32 %v5258, 7
  %v5260 = vsub.s32 7, %v5259
  %v5261 = vrot.slane %v3207, %v5260
  %v5262 = vlaneseq
  %v5263 = vshrl.u32 %v5262, 7
  %v5264 = vsub.s32 0, %v5263
  %v5265 = vrot.slane %v3208, %v5264
  %v5266 = vlaneseq
  %v5267 = vshrl.u32 %v5266, 7
  %v5268 = vsub.s32 1, %v5267
  %v5269 = vrot.slane %v3208, %v5268
  %v5270 = vlaneseq
  %v5271 = vshrl.u32 %v5270, 7
  %v5272 = vsub.s32 2, %v5271
  %v5273 = vrot.slane %v3208, %v5272
  %v5274 = vlaneseq
  %v5275 = vshrl.u32 %v5274, 7
  %v5276 = vsub.s32 3, %v5275
  %v5277 = vrot.slane %v3208, %v5276
  %v5278 = vlaneseq
  %v5279 = vshrl.u32 %v5278, 7
  %v5280 = vsub.s32 4, %v5279
  %v5281 = vrot.slane %v3208, %v5280
  %v5282 = vlaneseq
  %v5283 = vshrl.u32 %v5282, 7
  %v5284 = vsub.s32 5, %v5283
  %v5285 = vrot.slane %v3208, %v5284
  %v5286 = vlaneseq
  %v5287 = vshrl.u32 %v5286, 7
  %v5288 = vsub.s32 6, %v5287
  %v5289 = vrot.slane %v3208, %v5288
  %v5290 = vlaneseq
  %v5291 = vshrl.u32 %v5290, 7
  %v5292 = vsub.s32 7, %v5291
  %v5293 = vrot.slane %v3208, %v5292
  %v5294 = vlaneseq
  %v5295 = vshrl.u32 %v5294, 7
  %v5296 = vsub.s32 0, %v5295
  %v5297 = vrot.slane %v3209, %v5296
  %v5298 = vlaneseq
  %v5299 = vshrl.u32 %v5298, 7
  %v5300 = vsub.s32 1, %v5299
  %v5301 = vrot.slane %v3209, %v5300
  %v5302 = vlaneseq
  %v5303 = vshrl.u32 %v5302, 7
  %v5304 = vsub.s32 2, %v5303
  %v5305 = vrot.slane %v3209, %v5304
  %v5306 = vlaneseq
  %v5307 = vshrl.u32 %v5306, 7
  %v5308 = vsub.s32 3, %v5307
  %v5309 = vrot.slane %v3209, %v5308
  %v5310 = vlaneseq
  %v5311 = vshrl.u32 %v5310, 7
  %v5312 = vsub.s32 4, %v5311
  %v5313 = vrot.slane %v3209, %v5312
  %v5314 = vlaneseq
  %v5315 = vshrl.u32 %v5314, 7
  %v5316 = vsub.s32 5, %v5315
  %v5317 = vrot.slane %v3209, %v5316
  %v5318 = vlaneseq
  %v5319 = vshrl.u32 %v5318, 7
  %v5320 = vsub.s32 6, %v5319
  %v5321 = vrot.slane %v3209, %v5320
  %v5322 = vlaneseq
  %v5323 = vshrl.u32 %v5322, 7
  %v5324 = vsub.s32 7, %v5323
  %v5325 = vrot.slane %v3209, %v5324
  %v5326 = vlaneseq
  %v5327 = vshrl.u32 %v5326, 7
  %v5328 = vsub.s32 0, %v5327
  %v5329 = vrot.slane %v3210, %v5328
  %v5330 = vlaneseq
  %v5331 = vshrl.u32 %v5330, 7
  %v5332 = vsub.s32 1, %v5331
  %v5333 = vrot.slane %v3210, %v5332
  %v5334 = vlaneseq
  %v5335 = vshrl.u32 %v5334, 7
  %v5336 = vsub.s32 2, %v5335
  %v5337 = vrot.slane %v3210, %v5336
  %v5338 = vlaneseq
  %v5339 = vshrl.u32 %v5338, 7
  %v5340 = vsub.s32 3, %v5339
  %v5341 = vrot.slane %v3210, %v5340
  %v5342 = vlaneseq
  %v5343 = vshrl.u32 %v5342, 7
  %v5344 = vsub.s32 4, %v5343
  %v5345 = vrot.slane %v3210, %v5344
  %v5346 = vlaneseq
  %v5347 = vshrl.u32 %v5346, 7
  %v5348 = vsub.s32 5, %v5347
  %v5349 = vrot.slane %v3210, %v5348
  %v5350 = vlaneseq
  %v5351 = vshrl.u32 %v5350, 7
  %v5352 = vsub.s32 6, %v5351
  %v5353 = vrot.slane %v3210, %v5352
  %v5354 = vlaneseq
  %v5355 = vshrl.u32 %v5354, 7
  %v5356 = vsub.s32 7, %v5355
  %v5357 = vrot.slane %v3210, %v5356
  %v5358 = vlaneseq
  %v5359 = vshrl.u32 %v5358, 7
  %v5360 = vsub.s32 0, %v5359
  %v5361 = vrot.slane %v3211, %v5360
  %v5362 = vlaneseq
  %v5363 = vshrl.u32 %v5362, 7
  %v5364 = vsub.s32 1, %v5363
  %v5365 = vrot.slane %v3211, %v5364
  %v5366 = vlaneseq
  %v5367 = vshrl.u32 %v5366, 7
  %v5368 = vsub.s32 2, %v5367
  %v5369 = vrot.slane %v3211, %v5368
  %v5370 = vlaneseq
  %v5371 = vshrl.u32 %v5370, 7
  %v5372 = vsub.s32 3, %v5371
  %v5373 = vrot.slane %v3211, %v5372
  %v5374 = vlaneseq
  %v5375 = vshrl.u32 %v5374, 7
  %v5376 = vsub.s32 4, %v5375
  %v5377 = vrot.slane %v3211, %v5376
  %v5378 = vlaneseq
  %v5379 = vshrl.u32 %v5378, 7
  %v5380 = vsub.s32 5, %v5379
  %v5381 = vrot.slane %v3211, %v5380
  %v5382 = vlaneseq
  %v5383 = vshrl.u32 %v5382, 7
  %v5384 = vsub.s32 6, %v5383
  %v5385 = vrot.slane %v3211, %v5384
  %v5386 = vlaneseq
  %v5387 = vshrl.u32 %v5386, 7
  %v5388 = vsub.s32 7, %v5387
  %v5389 = vrot.slane %v3211, %v5388
  %v5390 = vlaneseq
  %v5391 = vshrl.u32 %v5390, 7
  %v5392 = vsub.s32 0, %v5391
  %v5393 = vrot.slane %v3212, %v5392
  %v5394 = vlaneseq
  %v5395 = vshrl.u32 %v5394, 7
  %v5396 = vsub.s32 1, %v5395
  %v5397 = vrot.slane %v3212, %v5396
  %v5398 = vlaneseq
  %v5399 = vshrl.u32 %v5398, 7
  %v5400 = vsub.s32 2, %v5399
  %v5401 = vrot.slane %v3212, %v5400
  %v5402 = vlaneseq
  %v5403 = vshrl.u32 %v5402, 7
  %v5404 = vsub.s32 3, %v5403
  %v5405 = vrot.slane %v3212, %v5404
  %v5406 = vlaneseq
  %v5407 = vshrl.u32 %v5406, 7
  %v5408 = vsub.s32 4, %v5407
  %v5409 = vrot.slane %v3212, %v5408
  %v5410 = vlaneseq
  %v5411 = vshrl.u32 %v5410, 7
  %v5412 = vsub.s32 5, %v5411
  %v5413 = vrot.slane %v3212, %v5412
  %v5414 = vlaneseq
  %v5415 = vshrl.u32 %v5414, 7
  %v5416 = vsub.s32 6, %v5415
  %v5417 = vrot.slane %v3212, %v5416
  %v5418 = vlaneseq
  %v5419 = vshrl.u32 %v5418, 7
  %v5420 = vsub.s32 7, %v5419
  %v5421 = vrot.slane %v3212, %v5420
  %v5422 = vlaneseq
  %v5423 = vshrl.u32 %v5422, 7
  %v5424 = vsub.s32 0, %v5423
  %v5425 = vrot.slane %v3213, %v5424
  %v5426 = vlaneseq
  %v5427 = vshrl.u32 %v5426, 7
  %v5428 = vsub.s32 1, %v5427
  %v5429 = vrot.slane %v3213, %v5428
  %v5430 = vlaneseq
  %v5431 = vshrl.u32 %v5430, 7
  %v5432 = vsub.s32 2, %v5431
  %v5433 = vrot.slane %v3213, %v5432
  %v5434 = vlaneseq
  %v5435 = vshrl.u32 %v5434, 7
  %v5436 = vsub.s32 3, %v5435
  %v5437 = vrot.slane %v3213, %v5436
  %v5438 = vlaneseq
  %v5439 = vshrl.u32 %v5438, 7
  %v5440 = vsub.s32 4, %v5439
  %v5441 = vrot.slane %v3213, %v5440
  %v5442 = vlaneseq
  %v5443 = vshrl.u32 %v5442, 7
  %v5444 = vsub.s32 5, %v5443
  %v5445 = vrot.slane %v3213, %v5444
  %v5446 = vlaneseq
  %v5447 = vshrl.u32 %v5446, 7
  %v5448 = vsub.s32 6, %v5447
  %v5449 = vrot.slane %v3213, %v5448
  %v5450 = vlaneseq
  %v5451 = vshrl.u32 %v5450, 7
  %v5452 = vsub.s32 7, %v5451
  %v5453 = vrot.slane %v3213, %v5452
  %v5454 = vlaneseq
  %v5455 = vshrl.u32 %v5454, 7
  %v5456 = vsub.s32 0, %v5455
  %v5457 = vrot.slane %v3214, %v5456
  %v5458 = vlaneseq
  %v5459 = vshrl.u32 %v5458, 7
  %v5460 = vsub.s32 1, %v5459
  %v5461 = vrot.slane %v3214, %v5460
  %v5462 = vlaneseq
  %v5463 = vshrl.u32 %v5462, 7
  %v5464 = vsub.s32 2, %v5463
  %v5465 = vrot.slane %v3214, %v5464
  %v5466 = vlaneseq
  %v5467 = vshrl.u32 %v5466, 7
  %v5468 = vsub.s32 3, %v5467
  %v5469 = vrot.slane %v3214, %v5468
  %v5470 = vlaneseq
  %v5471 = vshrl.u32 %v5470, 7
  %v5472 = vsub.s32 4, %v5471
  %v5473 = vrot.slane %v3214, %v5472
  %v5474 = vlaneseq
  %v5475 = vshrl.u32 %v5474, 7
  %v5476 = vsub.s32 5, %v5475
  %v5477 = vrot.slane %v3214, %v5476
  %v5478 = vlaneseq
  %v5479 = vshrl.u32 %v5478, 7
  %v5480 = vsub.s32 6, %v5479
  %v5481 = vrot.slane %v3214, %v5480
  %v5482 = vlaneseq
  %v5483 = vshrl.u32 %v5482, 7
  %v5484 = vsub.s32 7, %v5483
  %v5485 = vrot.slane %v3214, %v5484
  %v5486 = vlaneseq
  %v5487 = vshrl.u32 %v5486, 7
  %v5488 = vsub.s32 0, %v5487
  %v5489 = vrot.slane %v3215, %v5488
  %v5490 = vlaneseq
  %v5491 = vshrl.u32 %v5490, 7
  %v5492 = vsub.s32 1, %v5491
  %v5493 = vrot.slane %v3215, %v5492
  %v5494 = vlaneseq
  %v5495 = vshrl.u32 %v5494, 7
  %v5496 = vsub.s32 2, %v5495
  %v5497 = vrot.slane %v3215, %v5496
  %v5498 = vlaneseq
  %v5499 = vshrl.u32 %v5498, 7
  %v5500 = vsub.s32 3, %v5499
  %v5501 = vrot.slane %v3215, %v5500
  %v5502 = vlaneseq
  %v5503 = vshrl.u32 %v5502, 7
  %v5504 = vsub.s32 4, %v5503
  %v5505 = vrot.slane %v3215, %v5504
  %v5506 = vlaneseq
  %v5507 = vshrl.u32 %v5506, 7
  %v5508 = vsub.s32 5, %v5507
  %v5509 = vrot.slane %v3215, %v5508
  %v5510 = vlaneseq
  %v5511 = vshrl.u32 %v5510, 7
  %v5512 = vsub.s32 6, %v5511
  %v5513 = vrot.slane %v3215, %v5512
  %v5514 = vlaneseq
  %v5515 = vshrl.u32 %v5514, 7
  %v5516 = vsub.s32 7, %v5515
  %v5517 = vrot.slane %v3215, %v5516
  %v5518 = vlaneseq
  %v5519 = vshrl.u32 %v5518, 7
  %v5520 = vsub.s32 0, %v5519
  %v5521 = vrot.slane %v3216, %v5520
  %v5522 = vlaneseq
  %v5523 = vshrl.u32 %v5522, 7
  %v5524 = vsub.s32 1, %v5523
  %v5525 = vrot.slane %v3216, %v5524
  %v5526 = vlaneseq
  %v5527 = vshrl.u32 %v5526, 7
  %v5528 = vsub.s32 2, %v5527
  %v5529 = vrot.slane %v3216, %v5528
  %v5530 = vlaneseq
  %v5531 = vshrl.u32 %v5530, 7
  %v5532 = vsub.s32 3, %v5531
  %v5533 = vrot.slane %v3216, %v5532
  %v5534 = vlaneseq
  %v5535 = vshrl.u32 %v5534, 7
  %v5536 = vsub.s32 4, %v5535
  %v5537 = vrot.slane %v3216, %v5536
  %v5538 = vlaneseq
  %v5539 = vshrl.u32 %v5538, 7
  %v5540 = vsub.s32 5, %v5539
  %v5541 = vrot.slane %v3216, %v5540
  %v5542 = vlaneseq
  %v5543 = vshrl.u32 %v5542, 7
  %v5544 = vsub.s32 6, %v5543
  %v5545 = vrot.slane %v3216, %v5544
  %v5546 = vlaneseq
  %v5547 = vshrl.u32 %v5546, 7
  %v5548 = vsub.s32 7, %v5547
  %v5549 = vrot.slane %v3216, %v5548
  %v5550 = vlaneseq
  %v5551 = vshrl.u32 %v5550, 7
  %v5552 = vsub.s32 0, %v5551
  %v5553 = vrot.slane %v3217, %v5552
  %v5554 = vlaneseq
  %v5555 = vshrl.u32 %v5554, 7
  %v5556 = vsub.s32 1, %v5555
  %v5557 = vrot.slane %v3217, %v5556
  %v5558 = vlaneseq
  %v5559 = vshrl.u32 %v5558, 7
  %v5560 = vsub.s32 2, %v5559
  %v5561 = vrot.slane %v3217, %v5560
  %v5562 = vlaneseq
  %v5563 = vshrl.u32 %v5562, 7
  %v5564 = vsub.s32 3, %v5563
  %v5565 = vrot.slane %v3217, %v5564
  %v5566 = vlaneseq
  %v5567 = vshrl.u32 %v5566, 7
  %v5568 = vsub.s32 4, %v5567
  %v5569 = vrot.slane %v3217, %v5568
  %v5570 = vlaneseq
  %v5571 = vshrl.u32 %v5570, 7
  %v5572 = vsub.s32 5, %v5571
  %v5573 = vrot.slane %v3217, %v5572
  %v5574 = vlaneseq
  %v5575 = vshrl.u32 %v5574, 7
  %v5576 = vsub.s32 6, %v5575
  %v5577 = vrot.slane %v3217, %v5576
  %v5578 = vlaneseq
  %v5579 = vshrl.u32 %v5578, 7
  %v5580 = vsub.s32 7, %v5579
  %v5581 = vrot.slane %v3217, %v5580
  %v5582 = vlaneseq
  %v5583 = vshrl.u32 %v5582, 7
  %v5584 = vsub.s32 0, %v5583
  %v5585 = vrot.slane %v3218, %v5584
  %v5586 = vlaneseq
  %v5587 = vshrl.u32 %v5586, 7
  %v5588 = vsub.s32 1, %v5587
  %v5589 = vrot.slane %v3218, %v5588
  %v5590 = vlaneseq
  %v5591 = vshrl.u32 %v5590, 7
  %v5592 = vsub.s32 2, %v5591
  %v5593 = vrot.slane %v3218, %v5592
  %v5594 = vlaneseq
  %v5595 = vshrl.u32 %v5594, 7
  %v5596 = vsub.s32 3, %v5595
  %v5597 = vrot.slane %v3218, %v5596
  %v5598 = vlaneseq
  %v5599 = vshrl.u32 %v5598, 7
  %v5600 = vsub.s32 4, %v5599
  %v5601 = vrot.slane %v3218, %v5600
  %v5602 = vlaneseq
  %v5603 = vshrl.u32 %v5602, 7
  %v5604 = vsub.s32 5, %v5603
  %v5605 = vrot.slane %v3218, %v5604
  %v5606 = vlaneseq
  %v5607 = vshrl.u32 %v5606, 7
  %v5608 = vsub.s32 6, %v5607
  %v5609 = vrot.slane %v3218, %v5608
  %v5610 = vlaneseq
  %v5611 = vshrl.u32 %v5610, 7
  %v5612 = vsub.s32 7, %v5611
  %v5613 = vrot.slane %v3218, %v5612
  %v5614 = vlaneseq
  %v5615 = vshrl.u32 %v5614, 7
  %v5616 = vsub.s32 0, %v5615
  %v5617 = vrot.slane %v3219, %v5616
  %v5618 = vlaneseq
  %v5619 = vshrl.u32 %v5618, 7
  %v5620 = vsub.s32 1, %v5619
  %v5621 = vrot.slane %v3219, %v5620
  %v5622 = vlaneseq
  %v5623 = vshrl.u32 %v5622, 7
  %v5624 = vsub.s32 2, %v5623
  %v5625 = vrot.slane %v3219, %v5624
  %v5626 = vlaneseq
  %v5627 = vshrl.u32 %v5626, 7
  %v5628 = vsub.s32 3, %v5627
  %v5629 = vrot.slane %v3219, %v5628
  %v5630 = vlaneseq
  %v5631 = vshrl.u32 %v5630, 7
  %v5632 = vsub.s32 4, %v5631
  %v5633 = vrot.slane %v3219, %v5632
  %v5634 = vlaneseq
  %v5635 = vshrl.u32 %v5634, 7
  %v5636 = vsub.s32 5, %v5635
  %v5637 = vrot.slane %v3219, %v5636
  %v5638 = vlaneseq
  %v5639 = vshrl.u32 %v5638, 7
  %v5640 = vsub.s32 6, %v5639
  %v5641 = vrot.slane %v3219, %v5640
  %v5642 = vlaneseq
  %v5643 = vshrl.u32 %v5642, 7
  %v5644 = vsub.s32 7, %v5643
  %v5645 = vrot.slane %v3219, %v5644
  %v5646 = vlaneseq
  %v5647 = vshrl.u32 %v5646, 7
  %v5648 = vsub.s32 0, %v5647
  %v5649 = vrot.slane %v3220, %v5648
  %v5650 = vlaneseq
  %v5651 = vshrl.u32 %v5650, 7
  %v5652 = vsub.s32 1, %v5651
  %v5653 = vrot.slane %v3220, %v5652
  %v5654 = vlaneseq
  %v5655 = vshrl.u32 %v5654, 7
  %v5656 = vsub.s32 2, %v5655
  %v5657 = vrot.slane %v3220, %v5656
  %v5658 = vlaneseq
  %v5659 = vshrl.u32 %v5658, 7
  %v5660 = vsub.s32 3, %v5659
  %v5661 = vrot.slane %v3220, %v5660
  %v5662 = vlaneseq
  %v5663 = vshrl.u32 %v5662, 7
  %v5664 = vsub.s32 4, %v5663
  %v5665 = vrot.slane %v3220, %v5664
  %v5666 = vlaneseq
  %v5667 = vshrl.u32 %v5666, 7
  %v5668 = vsub.s32 5, %v5667
  %v5669 = vrot.slane %v3220, %v5668
  %v5670 = vlaneseq
  %v5671 = vshrl.u32 %v5670, 7
  %v5672 = vsub.s32 6, %v5671
  %v5673 = vrot.slane %v3220, %v5672
  %v5674 = vlaneseq
  %v5675 = vshrl.u32 %v5674, 7
  %v5676 = vsub.s32 7, %v5675
  %v5677 = vrot.slane %v3220, %v5676
  %v5678 = vlaneseq
  %v5679 = vshrl.u32 %v5678, 7
  %v5680 = vsub.s32 0, %v5679
  %v5681 = vrot.slane %v3221, %v5680
  %v5682 = vlaneseq
  %v5683 = vshrl.u32 %v5682, 7
  %v5684 = vsub.s32 1, %v5683
  %v5685 = vrot.slane %v3221, %v5684
  %v5686 = vlaneseq
  %v5687 = vshrl.u32 %v5686, 7
  %v5688 = vsub.s32 2, %v5687
  %v5689 = vrot.slane %v3221, %v5688
  %v5690 = vlaneseq
  %v5691 = vshrl.u32 %v5690, 7
  %v5692 = vsub.s32 3, %v5691
  %v5693 = vrot.slane %v3221, %v5692
  %v5694 = vlaneseq
  %v5695 = vshrl.u32 %v5694, 7
  %v5696 = vsub.s32 4, %v5695
  %v5697 = vrot.slane %v3221, %v5696
  %v5698 = vlaneseq
  %v5699 = vshrl.u32 %v5698, 7
  %v5700 = vsub.s32 5, %v5699
  %v5701 = vrot.slane %v3221, %v5700
  %v5702 = vlaneseq
  %v5703 = vshrl.u32 %v5702, 7
  %v5704 = vsub.s32 6, %v5703
  %v5705 = vrot.slane %v3221, %v5704
  %v5706 = vlaneseq
  %v5707 = vshrl.u32 %v5706, 7
  %v5708 = vsub.s32 7, %v5707
  %v5709 = vrot.slane %v3221, %v5708
  %v5710 = vlaneseq
  %v5711 = vshrl.u32 %v5710, 7
  %v5712 = vsub.s32 0, %v5711
  %v5713 = vrot.slane %v3222, %v5712
  %v5714 = vlaneseq
  %v5715 = vshrl.u32 %v5714, 7
  %v5716 = vsub.s32 1, %v5715
  %v5717 = vrot.slane %v3222, %v5716
  %v5718 = vlaneseq
  %v5719 = vshrl.u32 %v5718, 7
  %v5720 = vsub.s32 2, %v5719
  %v5721 = vrot.slane %v3222, %v5720
  %v5722 = vlaneseq
  %v5723 = vshrl.u32 %v5722, 7
  %v5724 = vsub.s32 3, %v5723
  %v5725 = vrot.slane %v3222, %v5724
  %v5726 = vlaneseq
  %v5727 = vshrl.u32 %v5726, 7
  %v5728 = vsub.s32 4, %v5727
  %v5729 = vrot.slane %v3222, %v5728
  %v5730 = vlaneseq
  %v5731 = vshrl.u32 %v5730, 7
  %v5732 = vsub.s32 5, %v5731
  %v5733 = vrot.slane %v3222, %v5732
  %v5734 = vlaneseq
  %v5735 = vshrl.u32 %v5734, 7
  %v5736 = vsub.s32 6, %v5735
  %v5737 = vrot.slane %v3222, %v5736
  %v5738 = vlaneseq
  %v5739 = vshrl.u32 %v5738, 7
  %v5740 = vsub.s32 7, %v5739
  %v5741 = vrot.slane %v3222, %v5740
  %v5742 = vlaneseq
  %v5743 = vshrl.u32 %v5742, 7
  %v5744 = vsub.s32 0, %v5743
  %v5745 = vrot.slane %v3223, %v5744
  %v5746 = vlaneseq
  %v5747 = vshrl.u32 %v5746, 7
  %v5748 = vsub.s32 1, %v5747
  %v5749 = vrot.slane %v3223, %v5748
  %v5750 = vlaneseq
  %v5751 = vshrl.u32 %v5750, 7
  %v5752 = vsub.s32 2, %v5751
  %v5753 = vrot.slane %v3223, %v5752
  %v5754 = vlaneseq
  %v5755 = vshrl.u32 %v5754, 7
  %v5756 = vsub.s32 3, %v5755
  %v5757 = vrot.slane %v3223, %v5756
  %v5758 = vlaneseq
  %v5759 = vshrl.u32 %v5758, 7
  %v5760 = vsub.s32 4, %v5759
  %v5761 = vrot.slane %v3223, %v5760
  %v5762 = vlaneseq
  %v5763 = vshrl.u32 %v5762, 7
  %v5764 = vsub.s32 5, %v5763
  %v5765 = vrot.slane %v3223, %v5764
  %v5766 = vlaneseq
  %v5767 = vshrl.u32 %v5766, 7
  %v5768 = vsub.s32 6, %v5767
  %v5769 = vrot.slane %v3223, %v5768
  %v5770 = vlaneseq
  %v5771 = vshrl.u32 %v5770, 7
  %v5772 = vsub.s32 7, %v5771
  %v5773 = vrot.slane %v3223, %v5772
  %v5774 = vlaneseq
  %v5775 = vshrl.u32 %v5774, 7
  %v5776 = vsub.s32 0, %v5775
  %v5777 = vrot.slane %v3224, %v5776
  %v5778 = vlaneseq
  %v5779 = vshrl.u32 %v5778, 7
  %v5780 = vsub.s32 1, %v5779
  %v5781 = vrot.slane %v3224, %v5780
  %v5782 = vlaneseq
  %v5783 = vshrl.u32 %v5782, 7
  %v5784 = vsub.s32 2, %v5783
  %v5785 = vrot.slane %v3224, %v5784
  %v5786 = vlaneseq
  %v5787 = vshrl.u32 %v5786, 7
  %v5788 = vsub.s32 3, %v5787
  %v5789 = vrot.slane %v3224, %v5788
  %v5790 = vlaneseq
  %v5791 = vshrl.u32 %v5790, 7
  %v5792 = vsub.s32 4, %v5791
  %v5793 = vrot.slane %v3224, %v5792
  %v5794 = vlaneseq
  %v5795 = vshrl.u32 %v5794, 7
  %v5796 = vsub.s32 5, %v5795
  %v5797 = vrot.slane %v3224, %v5796
  %v5798 = vlaneseq
  %v5799 = vshrl.u32 %v5798, 7
  %v5800 = vsub.s32 6, %v5799
  %v5801 = vrot.slane %v3224, %v5800
  %v5802 = vlaneseq
  %v5803 = vshrl.u32 %v5802, 7
  %v5804 = vsub.s32 7, %v5803
  %v5805 = vrot.slane %v3224, %v5804
  %v5806 = vlaneseq
  %v5807 = vshrl.u32 %v5806, 7
  %v5808 = vsub.s32 0, %v5807
  %v5809 = vrot.slane %v3225, %v5808
  %v5810 = vlaneseq
  %v5811 = vshrl.u32 %v5810, 7
  %v5812 = vsub.s32 1, %v5811
  %v5813 = vrot.slane %v3225, %v5812
  %v5814 = vlaneseq
  %v5815 = vshrl.u32 %v5814, 7
  %v5816 = vsub.s32 2, %v5815
  %v5817 = vrot.slane %v3225, %v5816
  %v5818 = vlaneseq
  %v5819 = vshrl.u32 %v5818, 7
  %v5820 = vsub.s32 3, %v5819
  %v5821 = vrot.slane %v3225, %v5820
  %v5822 = vlaneseq
  %v5823 = vshrl.u32 %v5822, 7
  %v5824 = vsub.s32 4, %v5823
  %v5825 = vrot.slane %v3225, %v5824
  %v5826 = vlaneseq
  %v5827 = vshrl.u32 %v5826, 7
  %v5828 = vsub.s32 5, %v5827
  %v5829 = vrot.slane %v3225, %v5828
  %v5830 = vlaneseq
  %v5831 = vshrl.u32 %v5830, 7
  %v5832 = vsub.s32 6, %v5831
  %v5833 = vrot.slane %v3225, %v5832
  %v5834 = vlaneseq
  %v5835 = vshrl.u32 %v5834, 7
  %v5836 = vsub.s32 7, %v5835
  %v5837 = vrot.slane %v3225, %v5836
  %v5838 = vlaneseq
  %v5839 = vshrl.u32 %v5838, 7
  %v5840 = vsub.s32 0, %v5839
  %v5841 = vrot.slane %v3226, %v5840
  %v5842 = vlaneseq
  %v5843 = vshrl.u32 %v5842, 7
  %v5844 = vsub.s32 1, %v5843
  %v5845 = vrot.slane %v3226, %v5844
  %v5846 = vlaneseq
  %v5847 = vshrl.u32 %v5846, 7
  %v5848 = vsub.s32 2, %v5847
  %v5849 = vrot.slane %v3226, %v5848
  %v5850 = vlaneseq
  %v5851 = vshrl.u32 %v5850, 7
  %v5852 = vsub.s32 3, %v5851
  %v5853 = vrot.slane %v3226, %v5852
  %v5854 = vlaneseq
  %v5855 = vshrl.u32 %v5854, 7
  %v5856 = vsub.s32 4, %v5855
  %v5857 = vrot.slane %v3226, %v5856
  %v5858 = vlaneseq
  %v5859 = vshrl.u32 %v5858, 7
  %v5860 = vsub.s32 5, %v5859
  %v5861 = vrot.slane %v3226, %v5860
  %v5862 = vlaneseq
  %v5863 = vshrl.u32 %v5862, 7
  %v5864 = vsub.s32 6, %v5863
  %v5865 = vrot.slane %v3226, %v5864
  %v5866 = vlaneseq
  %v5867 = vshrl.u32 %v5866, 7
  %v5868 = vsub.s32 7, %v5867
  %v5869 = vrot.slane %v3226, %v5868
  %v5870 = vlaneseq
  %v5871 = vshrl.u32 %v5870, 7
  %v5872 = vsub.s32 0, %v5871
  %v5873 = vrot.slane %v3227, %v5872
  %v5874 = vlaneseq
  %v5875 = vshrl.u32 %v5874, 7
  %v5876 = vsub.s32 1, %v5875
  %v5877 = vrot.slane %v3227, %v5876
  %v5878 = vlaneseq
  %v5879 = vshrl.u32 %v5878, 7
  %v5880 = vsub.s32 2, %v5879
  %v5881 = vrot.slane %v3227, %v5880
  %v5882 = vlaneseq
  %v5883 = vshrl.u32 %v5882, 7
  %v5884 = vsub.s32 3, %v5883
  %v5885 = vrot.slane %v3227, %v5884
  %v5886 = vlaneseq
  %v5887 = vshrl.u32 %v5886, 7
  %v5888 = vsub.s32 4, %v5887
  %v5889 = vrot.slane %v3227, %v5888
  %v5890 = vlaneseq
  %v5891 = vshrl.u32 %v5890, 7
  %v5892 = vsub.s32 5, %v5891
  %v5893 = vrot.slane %v3227, %v5892
  %v5894 = vlaneseq
  %v5895 = vshrl.u32 %v5894, 7
  %v5896 = vsub.s32 6, %v5895
  %v5897 = vrot.slane %v3227, %v5896
  %v5898 = vlaneseq
  %v5899 = vshrl.u32 %v5898, 7
  %v5900 = vsub.s32 7, %v5899
  %v5901 = vrot.slane %v3227, %v5900
  %v5902 = vlaneseq
  %v5903 = vshrl.u32 %v5902, 7
  %v5904 = vsub.s32 0, %v5903
  %v5905 = vrot.slane %v3228, %v5904
  %v5906 = vlaneseq
  %v5907 = vshrl.u32 %v5906, 7
  %v5908 = vsub.s32 1, %v5907
  %v5909 = vrot.slane %v3228, %v5908
  %v5910 = vlaneseq
  %v5911 = vshrl.u32 %v5910, 7
  %v5912 = vsub.s32 2, %v5911
  %v5913 = vrot.slane %v3228, %v5912
  %v5914 = vlaneseq
  %v5915 = vshrl.u32 %v5914, 7
  %v5916 = vsub.s32 3, %v5915
  %v5917 = vrot.slane %v3228, %v5916
  %v5918 = vlaneseq
  %v5919 = vshrl.u32 %v5918, 7
  %v5920 = vsub.s32 4, %v5919
  %v5921 = vrot.slane %v3228, %v5920
  %v5922 = vlaneseq
  %v5923 = vshrl.u32 %v5922, 7
  %v5924 = vsub.s32 5, %v5923
  %v5925 = vrot.slane %v3228, %v5924
  %v5926 = vlaneseq
  %v5927 = vshrl.u32 %v5926, 7
  %v5928 = vsub.s32 6, %v5927
  %v5929 = vrot.slane %v3228, %v5928
  %v5930 = vlaneseq
  %v5931 = vshrl.u32 %v5930, 7
  %v5932 = vsub.s32 7, %v5931
  %v5933 = vrot.slane %v3228, %v5932
  %v5934 = vlaneseq
  %v5935 = vshrl.u32 %v5934, 7
  %v5936 = vsub.s32 0, %v5935
  %v5937 = vrot.slane %v3229, %v5936
  %v5938 = vlaneseq
  %v5939 = vshrl.u32 %v5938, 7
  %v5940 = vsub.s32 1, %v5939
  %v5941 = vrot.slane %v3229, %v5940
  %v5942 = vlaneseq
  %v5943 = vshrl.u32 %v5942, 7
  %v5944 = vsub.s32 2, %v5943
  %v5945 = vrot.slane %v3229, %v5944
  %v5946 = vlaneseq
  %v5947 = vshrl.u32 %v5946, 7
  %v5948 = vsub.s32 3, %v5947
  %v5949 = vrot.slane %v3229, %v5948
  %v5950 = vlaneseq
  %v5951 = vshrl.u32 %v5950, 7
  %v5952 = vsub.s32 4, %v5951
  %v5953 = vrot.slane %v3229, %v5952
  %v5954 = vlaneseq
  %v5955 = vshrl.u32 %v5954, 7
  %v5956 = vsub.s32 5, %v5955
  %v5957 = vrot.slane %v3229, %v5956
  %v5958 = vlaneseq
  %v5959 = vshrl.u32 %v5958, 7
  %v5960 = vsub.s32 6, %v5959
  %v5961 = vrot.slane %v3229, %v5960
  %v5962 = vlaneseq
  %v5963 = vshrl.u32 %v5962, 7
  %v5964 = vsub.s32 7, %v5963
  %v5965 = vrot.slane %v3229, %v5964
  %v5966 = vlaneseq
  %v5967 = vshrl.u32 %v5966, 7
  %v5968 = vsub.s32 0, %v5967
  %v5969 = vrot.slane %v3230, %v5968
  %v5970 = vlaneseq
  %v5971 = vshrl.u32 %v5970, 7
  %v5972 = vsub.s32 1, %v5971
  %v5973 = vrot.slane %v3230, %v5972
  %v5974 = vlaneseq
  %v5975 = vshrl.u32 %v5974, 7
  %v5976 = vsub.s32 2, %v5975
  %v5977 = vrot.slane %v3230, %v5976
  %v5978 = vlaneseq
  %v5979 = vshrl.u32 %v5978, 7
  %v5980 = vsub.s32 3, %v5979
  %v5981 = vrot.slane %v3230, %v5980
  %v5982 = vlaneseq
  %v5983 = vshrl.u32 %v5982, 7
  %v5984 = vsub.s32 4, %v5983
  %v5985 = vrot.slane %v3230, %v5984
  %v5986 = vlaneseq
  %v5987 = vshrl.u32 %v5986, 7
  %v5988 = vsub.s32 5, %v5987
  %v5989 = vrot.slane %v3230, %v5988
  %v5990 = vlaneseq
  %v5991 = vshrl.u32 %v5990, 7
  %v5992 = vsub.s32 6, %v5991
  %v5993 = vrot.slane %v3230, %v5992
  %v5994 = vlaneseq
  %v5995 = vshrl.u32 %v5994, 7
  %v5996 = vsub.s32 7, %v5995
  %v5997 = vrot.slane %v3230, %v5996
  %v5998 = vlaneseq
  %v5999 = vshrl.u32 %v5998, 7
  %v6000 = vsub.s32 0, %v5999
  %v6001 = vrot.slane %v3231, %v6000
  %v6002 = vlaneseq
  %v6003 = vshrl.u32 %v6002, 7
  %v6004 = vsub.s32 1, %v6003
  %v6005 = vrot.slane %v3231, %v6004
  %v6006 = vlaneseq
  %v6007 = vshrl.u32 %v6006, 7
  %v6008 = vsub.s32 2, %v6007
  %v6009 = vrot.slane %v3231, %v6008
  %v6010 = vlaneseq
  %v6011 = vshrl.u32 %v6010, 7
  %v6012 = vsub.s32 3, %v6011
  %v6013 = vrot.slane %v3231, %v6012
  %v6014 = vlaneseq
  %v6015 = vshrl.u32 %v6014, 7
  %v6016 = vsub.s32 4, %v6015
  %v6017 = vrot.slane %v3231, %v6016
  %v6018 = vlaneseq
  %v6019 = vshrl.u32 %v6018, 7
  %v6020 = vsub.s32 5, %v6019
  %v6021 = vrot.slane %v3231, %v6020
  %v6022 = vlaneseq
  %v6023 = vshrl.u32 %v6022, 7
  %v6024 = vsub.s32 6, %v6023
  %v6025 = vrot.slane %v3231, %v6024
  %v6026 = vlaneseq
  %v6027 = vshrl.u32 %v6026, 7
  %v6028 = vsub.s32 7, %v6027
  %v6029 = vrot.slane %v3231, %v6028
  %v6030 = vlaneseq
  %v6031 = vshrl.u32 %v6030, 7
  %v6032 = vsub.s32 0, %v6031
  %v6033 = vrot.slane %v3232, %v6032
  %v6034 = vlaneseq
  %v6035 = vshrl.u32 %v6034, 7
  %v6036 = vsub.s32 1, %v6035
  %v6037 = vrot.slane %v3232, %v6036
  %v6038 = vlaneseq
  %v6039 = vshrl.u32 %v6038, 7
  %v6040 = vsub.s32 2, %v6039
  %v6041 = vrot.slane %v3232, %v6040
  %v6042 = vlaneseq
  %v6043 = vshrl.u32 %v6042, 7
  %v6044 = vsub.s32 3, %v6043
  %v6045 = vrot.slane %v3232, %v6044
  %v6046 = vlaneseq
  %v6047 = vshrl.u32 %v6046, 7
  %v6048 = vsub.s32 4, %v6047
  %v6049 = vrot.slane %v3232, %v6048
  %v6050 = vlaneseq
  %v6051 = vshrl.u32 %v6050, 7
  %v6052 = vsub.s32 5, %v6051
  %v6053 = vrot.slane %v3232, %v6052
  %v6054 = vlaneseq
  %v6055 = vshrl.u32 %v6054, 7
  %v6056 = vsub.s32 6, %v6055
  %v6057 = vrot.slane %v3232, %v6056
  %v6058 = vlaneseq
  %v6059 = vshrl.u32 %v6058, 7
  %v6060 = vsub.s32 7, %v6059
  %v6061 = vrot.slane %v3232, %v6060
  %v6062 = vlaneseq
  %v6063 = vshrl.u32 %v6062, 7
  %v6064 = vsub.s32 0, %v6063
  %v6065 = vrot.slane %v3233, %v6064
  %v6066 = vlaneseq
  %v6067 = vshrl.u32 %v6066, 7
  %v6068 = vsub.s32 1, %v6067
  %v6069 = vrot.slane %v3233, %v6068
  %v6070 = vlaneseq
  %v6071 = vshrl.u32 %v6070, 7
  %v6072 = vsub.s32 2, %v6071
  %v6073 = vrot.slane %v3233, %v6072
  %v6074 = vlaneseq
  %v6075 = vshrl.u32 %v6074, 7
  %v6076 = vsub.s32 3, %v6075
  %v6077 = vrot.slane %v3233, %v6076
  %v6078 = vlaneseq
  %v6079 = vshrl.u32 %v6078, 7
  %v6080 = vsub.s32 4, %v6079
  %v6081 = vrot.slane %v3233, %v6080
  %v6082 = vlaneseq
  %v6083 = vshrl.u32 %v6082, 7
  %v6084 = vsub.s32 5, %v6083
  %v6085 = vrot.slane %v3233, %v6084
  %v6086 = vlaneseq
  %v6087 = vshrl.u32 %v6086, 7
  %v6088 = vsub.s32 6, %v6087
  %v6089 = vrot.slane %v3233, %v6088
  %v6090 = vlaneseq
  %v6091 = vshrl.u32 %v6090, 7
  %v6092 = vsub.s32 7, %v6091
  %v6093 = vrot.slane %v3233, %v6092
  %v6094 = vlaneseq
  %v6095 = vshrl.u32 %v6094, 7
  %v6096 = vsub.s32 0, %v6095
  %v6097 = vrot.slane %v3234, %v6096
  %v6098 = vlaneseq
  %v6099 = vshrl.u32 %v6098, 7
  %v6100 = vsub.s32 1, %v6099
  %v6101 = vrot.slane %v3234, %v6100
  %v6102 = vlaneseq
  %v6103 = vshrl.u32 %v6102, 7
  %v6104 = vsub.s32 2, %v6103
  %v6105 = vrot.slane %v3234, %v6104
  %v6106 = vlaneseq
  %v6107 = vshrl.u32 %v6106, 7
  %v6108 = vsub.s32 3, %v6107
  %v6109 = vrot.slane %v3234, %v6108
  %v6110 = vlaneseq
  %v6111 = vshrl.u32 %v6110, 7
  %v6112 = vsub.s32 4, %v6111
  %v6113 = vrot.slane %v3234, %v6112
  %v6114 = vlaneseq
  %v6115 = vshrl.u32 %v6114, 7
  %v6116 = vsub.s32 5, %v6115
  %v6117 = vrot.slane %v3234, %v6116
  %v6118 = vlaneseq
  %v6119 = vshrl.u32 %v6118, 7
  %v6120 = vsub.s32 6, %v6119
  %v6121 = vrot.slane %v3234, %v6120
  %v6122 = vlaneseq
  %v6123 = vshrl.u32 %v6122, 7
  %v6124 = vsub.s32 7, %v6123
  %v6125 = vrot.slane %v3234, %v6124
  %v6126 = vlaneseq
  %v6127 = vshrl.u32 %v6126, 7
  %v6128 = vsub.s32 0, %v6127
  %v6129 = vrot.slane %v3235, %v6128
  %v6130 = vlaneseq
  %v6131 = vshrl.u32 %v6130, 7
  %v6132 = vsub.s32 1, %v6131
  %v6133 = vrot.slane %v3235, %v6132
  %v6134 = vlaneseq
  %v6135 = vshrl.u32 %v6134, 7
  %v6136 = vsub.s32 2, %v6135
  %v6137 = vrot.slane %v3235, %v6136
  %v6138 = vlaneseq
  %v6139 = vshrl.u32 %v6138, 7
  %v6140 = vsub.s32 3, %v6139
  %v6141 = vrot.slane %v3235, %v6140
  %v6142 = vlaneseq
  %v6143 = vshrl.u32 %v6142, 7
  %v6144 = vsub.s32 4, %v6143
  %v6145 = vrot.slane %v3235, %v6144
  %v6146 = vlaneseq
  %v6147 = vshrl.u32 %v6146, 7
  %v6148 = vsub.s32 5, %v6147
  %v6149 = vrot.slane %v3235, %v6148
  %v6150 = vlaneseq
  %v6151 = vshrl.u32 %v6150, 7
  %v6152 = vsub.s32 6, %v6151
  %v6153 = vrot.slane %v3235, %v6152
  %v6154 = vlaneseq
  %v6155 = vshrl.u32 %v6154, 7
  %v6156 = vsub.s32 7, %v6155
  %v6157 = vrot.slane %v3235, %v6156
  %v6158 = vlaneseq
  %v6159 = vshrl.u32 %v6158, 7
  %v6160 = vsub.s32 0, %v6159
  %v6161 = vrot.slane %v3236, %v6160
  %v6162 = vlaneseq
  %v6163 = vshrl.u32 %v6162, 7
  %v6164 = vsub.s32 1, %v6163
  %v6165 = vrot.slane %v3236, %v6164
  %v6166 = vlaneseq
  %v6167 = vshrl.u32 %v6166, 7
  %v6168 = vsub.s32 2, %v6167
  %v6169 = vrot.slane %v3236, %v6168
  %v6170 = vlaneseq
  %v6171 = vshrl.u32 %v6170, 7
  %v6172 = vsub.s32 3, %v6171
  %v6173 = vrot.slane %v3236, %v6172
  %v6174 = vlaneseq
  %v6175 = vshrl.u32 %v6174, 7
  %v6176 = vsub.s32 4, %v6175
  %v6177 = vrot.slane %v3236, %v6176
  %v6178 = vlaneseq
  %v6179 = vshrl.u32 %v6178, 7
  %v6180 = vsub.s32 5, %v6179
  %v6181 = vrot.slane %v3236, %v6180
  %v6182 = vlaneseq
  %v6183 = vshrl.u32 %v6182, 7
  %v6184 = vsub.s32 6, %v6183
  %v6185 = vrot.slane %v3236, %v6184
  %v6186 = vlaneseq
  %v6187 = vshrl.u32 %v6186, 7
  %v6188 = vsub.s32 7, %v6187
  %v6189 = vrot.slane %v3236, %v6188
  %v6190 = vlaneseq
  %v6191 = vshrl.u32 %v6190, 7
  %v6192 = vsub.s32 0, %v6191
  %v6193 = vrot.slane %v3237, %v6192
  %v6194 = vlaneseq
  %v6195 = vshrl.u32 %v6194, 7
  %v6196 = vsub.s32 1, %v6195
  %v6197 = vrot.slane %v3237, %v6196
  %v6198 = vlaneseq
  %v6199 = vshrl.u32 %v6198, 7
  %v6200 = vsub.s32 2, %v6199
  %v6201 = vrot.slane %v3237, %v6200
  %v6202 = vlaneseq
  %v6203 = vshrl.u32 %v6202, 7
  %v6204 = vsub.s32 3, %v6203
  %v6205 = vrot.slane %v3237, %v6204
  %v6206 = vlaneseq
  %v6207 = vshrl.u32 %v6206, 7
  %v6208 = vsub.s32 4, %v6207
  %v6209 = vrot.slane %v3237, %v6208
  %v6210 = vlaneseq
  %v6211 = vshrl.u32 %v6210, 7
  %v6212 = vsub.s32 5, %v6211
  %v6213 = vrot.slane %v3237, %v6212
  %v6214 = vlaneseq
  %v6215 = vshrl.u32 %v6214, 7
  %v6216 = vsub.s32 6, %v6215
  %v6217 = vrot.slane %v3237, %v6216
  %v6218 = vlaneseq
  %v6219 = vshrl.u32 %v6218, 7
  %v6220 = vsub.s32 7, %v6219
  %v6221 = vrot.slane %v3237, %v6220
  %v6222 = vlaneseq
  %v6223 = vshrl.u32 %v6222, 7
  %v6224 = vsub.s32 0, %v6223
  %v6225 = vrot.slane %v3238, %v6224
  %v6226 = vlaneseq
  %v6227 = vshrl.u32 %v6226, 7
  %v6228 = vsub.s32 1, %v6227
  %v6229 = vrot.slane %v3238, %v6228
  %v6230 = vlaneseq
  %v6231 = vshrl.u32 %v6230, 7
  %v6232 = vsub.s32 2, %v6231
  %v6233 = vrot.slane %v3238, %v6232
  %v6234 = vlaneseq
  %v6235 = vshrl.u32 %v6234, 7
  %v6236 = vsub.s32 3, %v6235
  %v6237 = vrot.slane %v3238, %v6236
  %v6238 = vlaneseq
  %v6239 = vshrl.u32 %v6238, 7
  %v6240 = vsub.s32 4, %v6239
  %v6241 = vrot.slane %v3238, %v6240
  %v6242 = vlaneseq
  %v6243 = vshrl.u32 %v6242, 7
  %v6244 = vsub.s32 5, %v6243
  %v6245 = vrot.slane %v3238, %v6244
  %v6246 = vlaneseq
  %v6247 = vshrl.u32 %v6246, 7
  %v6248 = vsub.s32 6, %v6247
  %v6249 = vrot.slane %v3238, %v6248
  %v6250 = vlaneseq
  %v6251 = vshrl.u32 %v6250, 7
  %v6252 = vsub.s32 7, %v6251
  %v6253 = vrot.slane %v3238, %v6252
  %v6254 = vlaneseq
  %v6255 = vshrl.u32 %v6254, 7
  %v6256 = vsub.s32 0, %v6255
  %v6257 = vrot.slane %v3239, %v6256
  %v6258 = vlaneseq
  %v6259 = vshrl.u32 %v6258, 7
  %v6260 = vsub.s32 1, %v6259
  %v6261 = vrot.slane %v3239, %v6260
  %v6262 = vlaneseq
  %v6263 = vshrl.u32 %v6262, 7
  %v6264 = vsub.s32 2, %v6263
  %v6265 = vrot.slane %v3239, %v6264
  %v6266 = vlaneseq
  %v6267 = vshrl.u32 %v6266, 7
  %v6268 = vsub.s32 3, %v6267
  %v6269 = vrot.slane %v3239, %v6268
  %v6270 = vlaneseq
  %v6271 = vshrl.u32 %v6270, 7
  %v6272 = vsub.s32 4, %v6271
  %v6273 = vrot.slane %v3239, %v6272
  %v6274 = vlaneseq
  %v6275 = vshrl.u32 %v6274, 7
  %v6276 = vsub.s32 5, %v6275
  %v6277 = vrot.slane %v3239, %v6276
  %v6278 = vlaneseq
  %v6279 = vshrl.u32 %v6278, 7
  %v6280 = vsub.s32 6, %v6279
  %v6281 = vrot.slane %v3239, %v6280
  %v6282 = vlaneseq
  %v6283 = vshrl.u32 %v6282, 7
  %v6284 = vsub.s32 7, %v6283
  %v6285 = vrot.slane %v3239, %v6284
  %v6286 = vlaneseq
  %v6287 = vshrl.u32 %v6286, 7
  %v6288 = vsub.s32 0, %v6287
  %v6289 = vrot.slane %v3240, %v6288
  %v6290 = vlaneseq
  %v6291 = vshrl.u32 %v6290, 7
  %v6292 = vsub.s32 1, %v6291
  %v6293 = vrot.slane %v3240, %v6292
  %v6294 = vlaneseq
  %v6295 = vshrl.u32 %v6294, 7
  %v6296 = vsub.s32 2, %v6295
  %v6297 = vrot.slane %v3240, %v6296
  %v6298 = vlaneseq
  %v6299 = vshrl.u32 %v6298, 7
  %v6300 = vsub.s32 3, %v6299
  %v6301 = vrot.slane %v3240, %v6300
  %v6302 = vlaneseq
  %v6303 = vshrl.u32 %v6302, 7
  %v6304 = vsub.s32 4, %v6303
  %v6305 = vrot.slane %v3240, %v6304
  %v6306 = vlaneseq
  %v6307 = vshrl.u32 %v6306, 7
  %v6308 = vsub.s32 5, %v6307
  %v6309 = vrot.slane %v3240, %v6308
  %v6310 = vlaneseq
  %v6311 = vshrl.u32 %v6310, 7
  %v6312 = vsub.s32 6, %v6311
  %v6313 = vrot.slane %v3240, %v6312
  %v6314 = vlaneseq
  %v6315 = vshrl.u32 %v6314, 7
  %v6316 = vsub.s32 7, %v6315
  %v6317 = vrot.slane %v3240, %v6316
  %v6318 = vlaneseq
  %v6319 = vshrl.u32 %v6318, 7
  %v6320 = vsub.s32 0, %v6319
  %v6321 = vrot.slane %v3241, %v6320
  %v6322 = vlaneseq
  %v6323 = vshrl.u32 %v6322, 7
  %v6324 = vsub.s32 1, %v6323
  %v6325 = vrot.slane %v3241, %v6324
  %v6326 = vlaneseq
  %v6327 = vshrl.u32 %v6326, 7
  %v6328 = vsub.s32 2, %v6327
  %v6329 = vrot.slane %v3241, %v6328
  %v6330 = vlaneseq
  %v6331 = vshrl.u32 %v6330, 7
  %v6332 = vsub.s32 3, %v6331
  %v6333 = vrot.slane %v3241, %v6332
  %v6334 = vlaneseq
  %v6335 = vshrl.u32 %v6334, 7
  %v6336 = vsub.s32 4, %v6335
  %v6337 = vrot.slane %v3241, %v6336
  %v6338 = vlaneseq
  %v6339 = vshrl.u32 %v6338, 7
  %v6340 = vsub.s32 5, %v6339
  %v6341 = vrot.slane %v3241, %v6340
  %v6342 = vlaneseq
  %v6343 = vshrl.u32 %v6342, 7
  %v6344 = vsub.s32 6, %v6343
  %v6345 = vrot.slane %v3241, %v6344
  %v6346 = vlaneseq
  %v6347 = vshrl.u32 %v6346, 7
  %v6348 = vsub.s32 7, %v6347
  %v6349 = vrot.slane %v3241, %v6348
  %v6350 = vlaneseq
  %v6351 = vshrl.u32 %v6350, 7
  %v6352 = vsub.s32 0, %v6351
  %v6353 = vrot.slane %v3242, %v6352
  %v6354 = vlaneseq
  %v6355 = vshrl.u32 %v6354, 7
  %v6356 = vsub.s32 1, %v6355
  %v6357 = vrot.slane %v3242, %v6356
  %v6358 = vlaneseq
  %v6359 = vshrl.u32 %v6358, 7
  %v6360 = vsub.s32 2, %v6359
  %v6361 = vrot.slane %v3242, %v6360
  %v6362 = vlaneseq
  %v6363 = vshrl.u32 %v6362, 7
  %v6364 = vsub.s32 3, %v6363
  %v6365 = vrot.slane %v3242, %v6364
  %v6366 = vlaneseq
  %v6367 = vshrl.u32 %v6366, 7
  %v6368 = vsub.s32 4, %v6367
  %v6369 = vrot.slane %v3242, %v6368
  %v6370 = vlaneseq
  %v6371 = vshrl.u32 %v6370, 7
  %v6372 = vsub.s32 5, %v6371
  %v6373 = vrot.slane %v3242, %v6372
  %v6374 = vlaneseq
  %v6375 = vshrl.u32 %v6374, 7
  %v6376 = vsub.s32 6, %v6375
  %v6377 = vrot.slane %v3242, %v6376
  %v6378 = vlaneseq
  %v6379 = vshrl.u32 %v6378, 7
  %v6380 = vsub.s32 7, %v6379
  %v6381 = vrot.slane %v3242, %v6380
  %v6382 = vlaneseq
  %v6383 = vshrl.u32 %v6382, 7
  %v6384 = vsub.s32 0, %v6383
  %v6385 = vrot.slane %v3243, %v6384
  %v6386 = vlaneseq
  %v6387 = vshrl.u32 %v6386, 7
  %v6388 = vsub.s32 1, %v6387
  %v6389 = vrot.slane %v3243, %v6388
  %v6390 = vlaneseq
  %v6391 = vshrl.u32 %v6390, 7
  %v6392 = vsub.s32 2, %v6391
  %v6393 = vrot.slane %v3243, %v6392
  %v6394 = vlaneseq
  %v6395 = vshrl.u32 %v6394, 7
  %v6396 = vsub.s32 3, %v6395
  %v6397 = vrot.slane %v3243, %v6396
  %v6398 = vlaneseq
  %v6399 = vshrl.u32 %v6398, 7
  %v6400 = vsub.s32 4, %v6399
  %v6401 = vrot.slane %v3243, %v6400
  %v6402 = vlaneseq
  %v6403 = vshrl.u32 %v6402, 7
  %v6404 = vsub.s32 5, %v6403
  %v6405 = vrot.slane %v3243, %v6404
  %v6406 = vlaneseq
  %v6407 = vshrl.u32 %v6406, 7
  %v6408 = vsub.s32 6, %v6407
  %v6409 = vrot.slane %v3243, %v6408
  %v6410 = vlaneseq
  %v6411 = vshrl.u32 %v6410, 7
  %v6412 = vsub.s32 7, %v6411
  %v6413 = vrot.slane %v3243, %v6412
  %v6414 = vlaneseq
  %v6415 = vshrl.u32 %v6414, 7
  %v6416 = vsub.s32 0, %v6415
  %v6417 = vrot.slane %v3244, %v6416
  %v6418 = vlaneseq
  %v6419 = vshrl.u32 %v6418, 7
  %v6420 = vsub.s32 1, %v6419
  %v6421 = vrot.slane %v3244, %v6420
  %v6422 = vlaneseq
  %v6423 = vshrl.u32 %v6422, 7
  %v6424 = vsub.s32 2, %v6423
  %v6425 = vrot.slane %v3244, %v6424
  %v6426 = vlaneseq
  %v6427 = vshrl.u32 %v6426, 7
  %v6428 = vsub.s32 3, %v6427
  %v6429 = vrot.slane %v3244, %v6428
  %v6430 = vlaneseq
  %v6431 = vshrl.u32 %v6430, 7
  %v6432 = vsub.s32 4, %v6431
  %v6433 = vrot.slane %v3244, %v6432
  %v6434 = vlaneseq
  %v6435 = vshrl.u32 %v6434, 7
  %v6436 = vsub.s32 5, %v6435
  %v6437 = vrot.slane %v3244, %v6436
  %v6438 = vlaneseq
  %v6439 = vshrl.u32 %v6438, 7
  %v6440 = vsub.s32 6, %v6439
  %v6441 = vrot.slane %v3244, %v6440
  %v6442 = vlaneseq
  %v6443 = vshrl.u32 %v6442, 7
  %v6444 = vsub.s32 7, %v6443
  %v6445 = vrot.slane %v3244, %v6444
  %v6446 = vlaneseq
  %v6447 = vshrl.u32 %v6446, 7
  %v6448 = vsub.s32 0, %v6447
  %v6449 = vrot.slane %v3245, %v6448
  %v6450 = vlaneseq
  %v6451 = vshrl.u32 %v6450, 7
  %v6452 = vsub.s32 1, %v6451
  %v6453 = vrot.slane %v3245, %v6452
  %v6454 = vlaneseq
  %v6455 = vshrl.u32 %v6454, 7
  %v6456 = vsub.s32 2, %v6455
  %v6457 = vrot.slane %v3245, %v6456
  %v6458 = vlaneseq
  %v6459 = vshrl.u32 %v6458, 7
  %v6460 = vsub.s32 3, %v6459
  %v6461 = vrot.slane %v3245, %v6460
  %v6462 = vlaneseq
  %v6463 = vshrl.u32 %v6462, 7
  %v6464 = vsub.s32 4, %v6463
  %v6465 = vrot.slane %v3245, %v6464
  %v6466 = vlaneseq
  %v6467 = vshrl.u32 %v6466, 7
  %v6468 = vsub.s32 5, %v6467
  %v6469 = vrot.slane %v3245, %v6468
  %v6470 = vlaneseq
  %v6471 = vshrl.u32 %v6470, 7
  %v6472 = vsub.s32 6, %v6471
  %v6473 = vrot.slane %v3245, %v6472
  %v6474 = vlaneseq
  %v6475 = vshrl.u32 %v6474, 7
  %v6476 = vsub.s32 7, %v6475
  %v6477 = vrot.slane %v3245, %v6476
  %v6478 = vlaneseq
  %v6479 = vshrl.u32 %v6478, 7
  %v6480 = vsub.s32 0, %v6479
  %v6481 = vrot.slane %v3246, %v6480
  %v6482 = vlaneseq
  %v6483 = vshrl.u32 %v6482, 7
  %v6484 = vsub.s32 1, %v6483
  %v6485 = vrot.slane %v3246, %v6484
  %v6486 = vlaneseq
  %v6487 = vshrl.u32 %v6486, 7
  %v6488 = vsub.s32 2, %v6487
  %v6489 = vrot.slane %v3246, %v6488
  %v6490 = vlaneseq
  %v6491 = vshrl.u32 %v6490, 7
  %v6492 = vsub.s32 3, %v6491
  %v6493 = vrot.slane %v3246, %v6492
  %v6494 = vlaneseq
  %v6495 = vshrl.u32 %v6494, 7
  %v6496 = vsub.s32 4, %v6495
  %v6497 = vrot.slane %v3246, %v6496
  %v6498 = vlaneseq
  %v6499 = vshrl.u32 %v6498, 7
  %v6500 = vsub.s32 5, %v6499
  %v6501 = vrot.slane %v3246, %v6500
  %v6502 = vlaneseq
  %v6503 = vshrl.u32 %v6502, 7
  %v6504 = vsub.s32 6, %v6503
  %v6505 = vrot.slane %v3246, %v6504
  %v6506 = vlaneseq
  %v6507 = vshrl.u32 %v6506, 7
  %v6508 = vsub.s32 7, %v6507
  %v6509 = vrot.slane %v3246, %v6508
  %v6510 = vlaneseq
  %v6511 = vshrl.u32 %v6510, 7
  %v6512 = vsub.s32 0, %v6511
  %v6513 = vrot.slane %v3247, %v6512
  %v6514 = vlaneseq
  %v6515 = vshrl.u32 %v6514, 7
  %v6516 = vsub.s32 1, %v6515
  %v6517 = vrot.slane %v3247, %v6516
  %v6518 = vlaneseq
  %v6519 = vshrl.u32 %v6518, 7
  %v6520 = vsub.s32 2, %v6519
  %v6521 = vrot.slane %v3247, %v6520
  %v6522 = vlaneseq
  %v6523 = vshrl.u32 %v6522, 7
  %v6524 = vsub.s32 3, %v6523
  %v6525 = vrot.slane %v3247, %v6524
  %v6526 = vlaneseq
  %v6527 = vshrl.u32 %v6526, 7
  %v6528 = vsub.s32 4, %v6527
  %v6529 = vrot.slane %v3247, %v6528
  %v6530 = vlaneseq
  %v6531 = vshrl.u32 %v6530, 7
  %v6532 = vsub.s32 5, %v6531
  %v6533 = vrot.slane %v3247, %v6532
  %v6534 = vlaneseq
  %v6535 = vshrl.u32 %v6534, 7
  %v6536 = vsub.s32 6, %v6535
  %v6537 = vrot.slane %v3247, %v6536
  %v6538 = vlaneseq
  %v6539 = vshrl.u32 %v6538, 7
  %v6540 = vsub.s32 7, %v6539
  %v6541 = vrot.slane %v3247, %v6540
  %v6542 = vlaneseq
  %v6543 = vshrl.u32 %v6542, 7
  %v6544 = vsub.s32 0, %v6543
  %v6545 = vrot.slane %v3248, %v6544
  %v6546 = vlaneseq
  %v6547 = vshrl.u32 %v6546, 7
  %v6548 = vsub.s32 1, %v6547
  %v6549 = vrot.slane %v3248, %v6548
  %v6550 = vlaneseq
  %v6551 = vshrl.u32 %v6550, 7
  %v6552 = vsub.s32 2, %v6551
  %v6553 = vrot.slane %v3248, %v6552
  %v6554 = vlaneseq
  %v6555 = vshrl.u32 %v6554, 7
  %v6556 = vsub.s32 3, %v6555
  %v6557 = vrot.slane %v3248, %v6556
  %v6558 = vlaneseq
  %v6559 = vshrl.u32 %v6558, 7
  %v6560 = vsub.s32 4, %v6559
  %v6561 = vrot.slane %v3248, %v6560
  %v6562 = vlaneseq
  %v6563 = vshrl.u32 %v6562, 7
  %v6564 = vsub.s32 5, %v6563
  %v6565 = vrot.slane %v3248, %v6564
  %v6566 = vlaneseq
  %v6567 = vshrl.u32 %v6566, 7
  %v6568 = vsub.s32 6, %v6567
  %v6569 = vrot.slane %v3248, %v6568
  %v6570 = vlaneseq
  %v6571 = vshrl.u32 %v6570, 7
  %v6572 = vsub.s32 7, %v6571
  %v6573 = vrot.slane %v3248, %v6572
  %v6574 = vlaneseq
  %v6575 = vshrl.u32 %v6574, 7
  %v6576 = vsub.s32 0, %v6575
  %v6577 = vrot.slane %v3249, %v6576
  %v6578 = vlaneseq
  %v6579 = vshrl.u32 %v6578, 7
  %v6580 = vsub.s32 1, %v6579
  %v6581 = vrot.slane %v3249, %v6580
  %v6582 = vlaneseq
  %v6583 = vshrl.u32 %v6582, 7
  %v6584 = vsub.s32 2, %v6583
  %v6585 = vrot.slane %v3249, %v6584
  %v6586 = vlaneseq
  %v6587 = vshrl.u32 %v6586, 7
  %v6588 = vsub.s32 3, %v6587
  %v6589 = vrot.slane %v3249, %v6588
  %v6590 = vlaneseq
  %v6591 = vshrl.u32 %v6590, 7
  %v6592 = vsub.s32 4, %v6591
  %v6593 = vrot.slane %v3249, %v6592
  %v6594 = vlaneseq
  %v6595 = vshrl.u32 %v6594, 7
  %v6596 = vsub.s32 5, %v6595
  %v6597 = vrot.slane %v3249, %v6596
  %v6598 = vlaneseq
  %v6599 = vshrl.u32 %v6598, 7
  %v6600 = vsub.s32 6, %v6599
  %v6601 = vrot.slane %v3249, %v6600
  %v6602 = vlaneseq
  %v6603 = vshrl.u32 %v6602, 7
  %v6604 = vsub.s32 7, %v6603
  %v6605 = vrot.slane %v3249, %v6604
  %v6606 = vlaneseq
  %v6607 = vshrl.u32 %v6606, 7
  %v6608 = vsub.s32 0, %v6607
  %v6609 = vrot.slane %v3250, %v6608
  %v6610 = vlaneseq
  %v6611 = vshrl.u32 %v6610, 7
  %v6612 = vsub.s32 1, %v6611
  %v6613 = vrot.slane %v3250, %v6612
  %v6614 = vlaneseq
  %v6615 = vshrl.u32 %v6614, 7
  %v6616 = vsub.s32 2, %v6615
  %v6617 = vrot.slane %v3250, %v6616
  %v6618 = vlaneseq
  %v6619 = vshrl.u32 %v6618, 7
  %v6620 = vsub.s32 3, %v6619
  %v6621 = vrot.slane %v3250, %v6620
  %v6622 = vlaneseq
  %v6623 = vshrl.u32 %v6622, 7
  %v6624 = vsub.s32 4, %v6623
  %v6625 = vrot.slane %v3250, %v6624
  %v6626 = vlaneseq
  %v6627 = vshrl.u32 %v6626, 7
  %v6628 = vsub.s32 5, %v6627
  %v6629 = vrot.slane %v3250, %v6628
  %v6630 = vlaneseq
  %v6631 = vshrl.u32 %v6630, 7
  %v6632 = vsub.s32 6, %v6631
  %v6633 = vrot.slane %v3250, %v6632
  %v6634 = vlaneseq
  %v6635 = vshrl.u32 %v6634, 7
  %v6636 = vsub.s32 7, %v6635
  %v6637 = vrot.slane %v3250, %v6636
  %v6638 = vlaneseq
  %v6639 = vshrl.u32 %v6638, 7
  %v6640 = vsub.s32 0, %v6639
  %v6641 = vrot.slane %v3251, %v6640
  %v6642 = vlaneseq
  %v6643 = vshrl.u32 %v6642, 7
  %v6644 = vsub.s32 1, %v6643
  %v6645 = vrot.slane %v3251, %v6644
  %v6646 = vlaneseq
  %v6647 = vshrl.u32 %v6646, 7
  %v6648 = vsub.s32 2, %v6647
  %v6649 = vrot.slane %v3251, %v6648
  %v6650 = vlaneseq
  %v6651 = vshrl.u32 %v6650, 7
  %v6652 = vsub.s32 3, %v6651
  %v6653 = vrot.slane %v3251, %v6652
  %v6654 = vlaneseq
  %v6655 = vshrl.u32 %v6654, 7
  %v6656 = vsub.s32 4, %v6655
  %v6657 = vrot.slane %v3251, %v6656
  %v6658 = vlaneseq
  %v6659 = vshrl.u32 %v6658, 7
  %v6660 = vsub.s32 5, %v6659
  %v6661 = vrot.slane %v3251, %v6660
  %v6662 = vlaneseq
  %v6663 = vshrl.u32 %v6662, 7
  %v6664 = vsub.s32 6, %v6663
  %v6665 = vrot.slane %v3251, %v6664
  %v6666 = vlaneseq
  %v6667 = vshrl.u32 %v6666, 7
  %v6668 = vsub.s32 7, %v6667
  %v6669 = vrot.slane %v3251, %v6668
  %v6670 = vlaneseq
  %v6671 = vshrl.u32 %v6670, 7
  %v6672 = vsub.s32 0, %v6671
  %v6673 = vrot.slane %v3252, %v6672
  %v6674 = vlaneseq
  %v6675 = vshrl.u32 %v6674, 7
  %v6676 = vsub.s32 1, %v6675
  %v6677 = vrot.slane %v3252, %v6676
  %v6678 = vlaneseq
  %v6679 = vshrl.u32 %v6678, 7
  %v6680 = vsub.s32 2, %v6679
  %v6681 = vrot.slane %v3252, %v6680
  %v6682 = vlaneseq
  %v6683 = vshrl.u32 %v6682, 7
  %v6684 = vsub.s32 3, %v6683
  %v6685 = vrot.slane %v3252, %v6684
  %v6686 = vlaneseq
  %v6687 = vshrl.u32 %v6686, 7
  %v6688 = vsub.s32 4, %v6687
  %v6689 = vrot.slane %v3252, %v6688
  %v6690 = vlaneseq
  %v6691 = vshrl.u32 %v6690, 7
  %v6692 = vsub.s32 5, %v6691
  %v6693 = vrot.slane %v3252, %v6692
  %v6694 = vlaneseq
  %v6695 = vshrl.u32 %v6694, 7
  %v6696 = vsub.s32 6, %v6695
  %v6697 = vrot.slane %v3252, %v6696
  %v6698 = vlaneseq
  %v6699 = vshrl.u32 %v6698, 7
  %v6700 = vsub.s32 7, %v6699
  %v6701 = vrot.slane %v3252, %v6700
  %v6702 = vlaneseq
  %v6703 = vshrl.u32 %v6702, 7
  %v6704 = vsub.s32 0, %v6703
  %v6705 = vrot.slane %v3253, %v6704
  %v6706 = vlaneseq
  %v6707 = vshrl.u32 %v6706, 7
  %v6708 = vsub.s32 1, %v6707
  %v6709 = vrot.slane %v3253, %v6708
  %v6710 = vlaneseq
  %v6711 = vshrl.u32 %v6710, 7
  %v6712 = vsub.s32 2, %v6711
  %v6713 = vrot.slane %v3253, %v6712
  %v6714 = vlaneseq
  %v6715 = vshrl.u32 %v6714, 7
  %v6716 = vsub.s32 3, %v6715
  %v6717 = vrot.slane %v3253, %v6716
  %v6718 = vlaneseq
  %v6719 = vshrl.u32 %v6718, 7
  %v6720 = vsub.s32 4, %v6719
  %v6721 = vrot.slane %v3253, %v6720
  %v6722 = vlaneseq
  %v6723 = vshrl.u32 %v6722, 7
  %v6724 = vsub.s32 5, %v6723
  %v6725 = vrot.slane %v3253, %v6724
  %v6726 = vlaneseq
  %v6727 = vshrl.u32 %v6726, 7
  %v6728 = vsub.s32 6, %v6727
  %v6729 = vrot.slane %v3253, %v6728
  %v6730 = vlaneseq
  %v6731 = vshrl.u32 %v6730, 7
  %v6732 = vsub.s32 7, %v6731
  %v6733 = vrot.slane %v3253, %v6732
  %v6734 = vlaneseq
  %v6735 = vshrl.u32 %v6734, 7
  %v6736 = vsub.s32 0, %v6735
  %v6737 = vrot.slane %v3254, %v6736
  %v6738 = vlaneseq
  %v6739 = vshrl.u32 %v6738, 7
  %v6740 = vsub.s32 1, %v6739
  %v6741 = vrot.slane %v3254, %v6740
  %v6742 = vlaneseq
  %v6743 = vshrl.u32 %v6742, 7
  %v6744 = vsub.s32 2, %v6743
  %v6745 = vrot.slane %v3254, %v6744
  %v6746 = vlaneseq
  %v6747 = vshrl.u32 %v6746, 7
  %v6748 = vsub.s32 3, %v6747
  %v6749 = vrot.slane %v3254, %v6748
  %v6750 = vlaneseq
  %v6751 = vshrl.u32 %v6750, 7
  %v6752 = vsub.s32 4, %v6751
  %v6753 = vrot.slane %v3254, %v6752
  %v6754 = vlaneseq
  %v6755 = vshrl.u32 %v6754, 7
  %v6756 = vsub.s32 5, %v6755
  %v6757 = vrot.slane %v3254, %v6756
  %v6758 = vlaneseq
  %v6759 = vshrl.u32 %v6758, 7
  %v6760 = vsub.s32 6, %v6759
  %v6761 = vrot.slane %v3254, %v6760
  %v6762 = vlaneseq
  %v6763 = vshrl.u32 %v6762, 7
  %v6764 = vsub.s32 7, %v6763
  %v6765 = vrot.slane %v3254, %v6764
  %v6766 = vlaneseq
  %v6767 = vshrl.u32 %v6766, 7
  %v6768 = vsub.s32 0, %v6767
  %v6769 = vrot.slane %v3255, %v6768
  %v6770 = vlaneseq
  %v6771 = vshrl.u32 %v6770, 7
  %v6772 = vsub.s32 1, %v6771
  %v6773 = vrot.slane %v3255, %v6772
  %v6774 = vlaneseq
  %v6775 = vshrl.u32 %v6774, 7
  %v6776 = vsub.s32 2, %v6775
  %v6777 = vrot.slane %v3255, %v6776
  %v6778 = vlaneseq
  %v6779 = vshrl.u32 %v6778, 7
  %v6780 = vsub.s32 3, %v6779
  %v6781 = vrot.slane %v3255, %v6780
  %v6782 = vlaneseq
  %v6783 = vshrl.u32 %v6782, 7
  %v6784 = vsub.s32 4, %v6783
  %v6785 = vrot.slane %v3255, %v6784
  %v6786 = vlaneseq
  %v6787 = vshrl.u32 %v6786, 7
  %v6788 = vsub.s32 5, %v6787
  %v6789 = vrot.slane %v3255, %v6788
  %v6790 = vlaneseq
  %v6791 = vshrl.u32 %v6790, 7
  %v6792 = vsub.s32 6, %v6791
  %v6793 = vrot.slane %v3255, %v6792
  %v6794 = vlaneseq
  %v6795 = vshrl.u32 %v6794, 7
  %v6796 = vsub.s32 7, %v6795
  %v6797 = vrot.slane %v3255, %v6796
  %v6798 = vlaneseq
  %v6799 = vshrl.u32 %v6798, 7
  %v6800 = vsub.s32 0, %v6799
  %v6801 = vrot.slane %v3256, %v6800
  %v6802 = vlaneseq
  %v6803 = vshrl.u32 %v6802, 7
  %v6804 = vsub.s32 1, %v6803
  %v6805 = vrot.slane %v3256, %v6804
  %v6806 = vlaneseq
  %v6807 = vshrl.u32 %v6806, 7
  %v6808 = vsub.s32 2, %v6807
  %v6809 = vrot.slane %v3256, %v6808
  %v6810 = vlaneseq
  %v6811 = vshrl.u32 %v6810, 7
  %v6812 = vsub.s32 3, %v6811
  %v6813 = vrot.slane %v3256, %v6812
  %v6814 = vlaneseq
  %v6815 = vshrl.u32 %v6814, 7
  %v6816 = vsub.s32 4, %v6815
  %v6817 = vrot.slane %v3256, %v6816
  %v6818 = vlaneseq
  %v6819 = vshrl.u32 %v6818, 7
  %v6820 = vsub.s32 5, %v6819
  %v6821 = vrot.slane %v3256, %v6820
  %v6822 = vlaneseq
  %v6823 = vshrl.u32 %v6822, 7
  %v6824 = vsub.s32 6, %v6823
  %v6825 = vrot.slane %v3256, %v6824
  %v6826 = vlaneseq
  %v6827 = vshrl.u32 %v6826, 7
  %v6828 = vsub.s32 7, %v6827
  %v6829 = vrot.slane %v3256, %v6828
  %v6830 = vlaneseq
  %v6831 = vshrl.u32 %v6830, 7
  %v6832 = vsub.s32 0, %v6831
  %v6833 = vrot.slane %v3257, %v6832
  %v6834 = vlaneseq
  %v6835 = vshrl.u32 %v6834, 7
  %v6836 = vsub.s32 1, %v6835
  %v6837 = vrot.slane %v3257, %v6836
  %v6838 = vlaneseq
  %v6839 = vshrl.u32 %v6838, 7
  %v6840 = vsub.s32 2, %v6839
  %v6841 = vrot.slane %v3257, %v6840
  %v6842 = vlaneseq
  %v6843 = vshrl.u32 %v6842, 7
  %v6844 = vsub.s32 3, %v6843
  %v6845 = vrot.slane %v3257, %v6844
  %v6846 = vlaneseq
  %v6847 = vshrl.u32 %v6846, 7
  %v6848 = vsub.s32 4, %v6847
  %v6849 = vrot.slane %v3257, %v6848
  %v6850 = vlaneseq
  %v6851 = vshrl.u32 %v6850, 7
  %v6852 = vsub.s32 5, %v6851
  %v6853 = vrot.slane %v3257, %v6852
  %v6854 = vlaneseq
  %v6855 = vshrl.u32 %v6854, 7
  %v6856 = vsub.s32 6, %v6855
  %v6857 = vrot.slane %v3257, %v6856
  %v6858 = vlaneseq
  %v6859 = vshrl.u32 %v6858, 7
  %v6860 = vsub.s32 7, %v6859
  %v6861 = vrot.slane %v3257, %v6860
  %v6862 = vlaneseq
  %v6863 = vshrl.u32 %v6862, 7
  %v6864 = vsub.s32 0, %v6863
  %v6865 = vrot.slane %v3258, %v6864
  %v6866 = vlaneseq
  %v6867 = vshrl.u32 %v6866, 7
  %v6868 = vsub.s32 1, %v6867
  %v6869 = vrot.slane %v3258, %v6868
  %v6870 = vlaneseq
  %v6871 = vshrl.u32 %v6870, 7
  %v6872 = vsub.s32 2, %v6871
  %v6873 = vrot.slane %v3258, %v6872
  %v6874 = vlaneseq
  %v6875 = vshrl.u32 %v6874, 7
  %v6876 = vsub.s32 3, %v6875
  %v6877 = vrot.slane %v3258, %v6876
  %v6878 = vlaneseq
  %v6879 = vshrl.u32 %v6878, 7
  %v6880 = vsub.s32 4, %v6879
  %v6881 = vrot.slane %v3258, %v6880
  %v6882 = vlaneseq
  %v6883 = vshrl.u32 %v6882, 7
  %v6884 = vsub.s32 5, %v6883
  %v6885 = vrot.slane %v3258, %v6884
  %v6886 = vlaneseq
  %v6887 = vshrl.u32 %v6886, 7
  %v6888 = vsub.s32 6, %v6887
  %v6889 = vrot.slane %v3258, %v6888
  %v6890 = vlaneseq
  %v6891 = vshrl.u32 %v6890, 7
  %v6892 = vsub.s32 7, %v6891
  %v6893 = vrot.slane %v3258, %v6892
  %v6894 = vlaneseq
  %v6895 = vshrl.u32 %v6894, 7
  %v6896 = vsub.s32 0, %v6895
  %v6897 = vrot.slane %v3259, %v6896
  %v6898 = vlaneseq
  %v6899 = vshrl.u32 %v6898, 7
  %v6900 = vsub.s32 1, %v6899
  %v6901 = vrot.slane %v3259, %v6900
  %v6902 = vlaneseq
  %v6903 = vshrl.u32 %v6902, 7
  %v6904 = vsub.s32 2, %v6903
  %v6905 = vrot.slane %v3259, %v6904
  %v6906 = vlaneseq
  %v6907 = vshrl.u32 %v6906, 7
  %v6908 = vsub.s32 3, %v6907
  %v6909 = vrot.slane %v3259, %v6908
  %v6910 = vlaneseq
  %v6911 = vshrl.u32 %v6910, 7
  %v6912 = vsub.s32 4, %v6911
  %v6913 = vrot.slane %v3259, %v6912
  %v6914 = vlaneseq
  %v6915 = vshrl.u32 %v6914, 7
  %v6916 = vsub.s32 5, %v6915
  %v6917 = vrot.slane %v3259, %v6916
  %v6918 = vlaneseq
  %v6919 = vshrl.u32 %v6918, 7
  %v6920 = vsub.s32 6, %v6919
  %v6921 = vrot.slane %v3259, %v6920
  %v6922 = vlaneseq
  %v6923 = vshrl.u32 %v6922, 7
  %v6924 = vsub.s32 7, %v6923
  %v6925 = vrot.slane %v3259, %v6924
  %v6926 = vlaneseq
  %v6927 = vshrl.u32 %v6926, 7
  %v6928 = vsub.s32 0, %v6927
  %v6929 = vrot.slane %v3260, %v6928
  %v6930 = vlaneseq
  %v6931 = vshrl.u32 %v6930, 7
  %v6932 = vsub.s32 1, %v6931
  %v6933 = vrot.slane %v3260, %v6932
  %v6934 = vlaneseq
  %v6935 = vshrl.u32 %v6934, 7
  %v6936 = vsub.s32 2, %v6935
  %v6937 = vrot.slane %v3260, %v6936
  %v6938 = vlaneseq
  %v6939 = vshrl.u32 %v6938, 7
  %v6940 = vsub.s32 3, %v6939
  %v6941 = vrot.slane %v3260, %v6940
  %v6942 = vlaneseq
  %v6943 = vshrl.u32 %v6942, 7
  %v6944 = vsub.s32 4, %v6943
  %v6945 = vrot.slane %v3260, %v6944
  %v6946 = vlaneseq
  %v6947 = vshrl.u32 %v6946, 7
  %v6948 = vsub.s32 5, %v6947
  %v6949 = vrot.slane %v3260, %v6948
  %v6950 = vlaneseq
  %v6951 = vshrl.u32 %v6950, 7
  %v6952 = vsub.s32 6, %v6951
  %v6953 = vrot.slane %v3260, %v6952
  %v6954 = vlaneseq
  %v6955 = vshrl.u32 %v6954, 7
  %v6956 = vsub.s32 7, %v6955
  %v6957 = vrot.slane %v3260, %v6956
  %v6958 = vlaneseq
  %v6959 = vshrl.u32 %v6958, 7
  %v6960 = vsub.s32 0, %v6959
  %v6961 = vrot.slane %v3261, %v6960
  %v6962 = vlaneseq
  %v6963 = vshrl.u32 %v6962, 7
  %v6964 = vsub.s32 1, %v6963
  %v6965 = vrot.slane %v3261, %v6964
  %v6966 = vlaneseq
  %v6967 = vshrl.u32 %v6966, 7
  %v6968 = vsub.s32 2, %v6967
  %v6969 = vrot.slane %v3261, %v6968
  %v6970 = vlaneseq
  %v6971 = vshrl.u32 %v6970, 7
  %v6972 = vsub.s32 3, %v6971
  %v6973 = vrot.slane %v3261, %v6972
  %v6974 = vlaneseq
  %v6975 = vshrl.u32 %v6974, 7
  %v6976 = vsub.s32 4, %v6975
  %v6977 = vrot.slane %v3261, %v6976
  %v6978 = vlaneseq
  %v6979 = vshrl.u32 %v6978, 7
  %v6980 = vsub.s32 5, %v6979
  %v6981 = vrot.slane %v3261, %v6980
  %v6982 = vlaneseq
  %v6983 = vshrl.u32 %v6982, 7
  %v6984 = vsub.s32 6, %v6983
  %v6985 = vrot.slane %v3261, %v6984
  %v6986 = vlaneseq
  %v6987 = vshrl.u32 %v6986, 7
  %v6988 = vsub.s32 7, %v6987
  %v6989 = vrot.slane %v3261, %v6988
  %v6990 = vlaneseq
  %v6991 = vshrl.u32 %v6990, 7
  %v6992 = vsub.s32 0, %v6991
  %v6993 = vrot.slane %v3262, %v6992
  %v6994 = vlaneseq
  %v6995 = vshrl.u32 %v6994, 7
  %v6996 = vsub.s32 1, %v6995
  %v6997 = vrot.slane %v3262, %v6996
  %v6998 = vlaneseq
  %v6999 = vshrl.u32 %v6998, 7
  %v7000 = vsub.s32 2, %v6999
  %v7001 = vrot.slane %v3262, %v7000
  %v7002 = vlaneseq
  %v7003 = vshrl.u32 %v7002, 7
  %v7004 = vsub.s32 3, %v7003
  %v7005 = vrot.slane %v3262, %v7004
  %v7006 = vlaneseq
  %v7007 = vshrl.u32 %v7006, 7
  %v7008 = vsub.s32 4, %v7007
  %v7009 = vrot.slane %v3262, %v7008
  %v7010 = vlaneseq
  %v7011 = vshrl.u32 %v7010, 7
  %v7012 = vsub.s32 5, %v7011
  %v7013 = vrot.slane %v3262, %v7012
  %v7014 = vlaneseq
  %v7015 = vshrl.u32 %v7014, 7
  %v7016 = vsub.s32 6, %v7015
  %v7017 = vrot.slane %v3262, %v7016
  %v7018 = vlaneseq
  %v7019 = vshrl.u32 %v7018, 7
  %v7020 = vsub.s32 7, %v7019
  %v7021 = vrot.slane %v3262, %v7020
  %v7022 = vlaneseq
  %v7023 = vshrl.u32 %v7022, 7
  %v7024 = vsub.s32 0, %v7023
  %v7025 = vrot.slane %v3263, %v7024
  %v7026 = vlaneseq
  %v7027 = vshrl.u32 %v7026, 7
  %v7028 = vsub.s32 1, %v7027
  %v7029 = vrot.slane %v3263, %v7028
  %v7030 = vlaneseq
  %v7031 = vshrl.u32 %v7030, 7
  %v7032 = vsub.s32 2, %v7031
  %v7033 = vrot.slane %v3263, %v7032
  %v7034 = vlaneseq
  %v7035 = vshrl.u32 %v7034, 7
  %v7036 = vsub.s32 3, %v7035
  %v7037 = vrot.slane %v3263, %v7036
  %v7038 = vlaneseq
  %v7039 = vshrl.u32 %v7038, 7
  %v7040 = vsub.s32 4, %v7039
  %v7041 = vrot.slane %v3263, %v7040
  %v7042 = vlaneseq
  %v7043 = vshrl.u32 %v7042, 7
  %v7044 = vsub.s32 5, %v7043
  %v7045 = vrot.slane %v3263, %v7044
  %v7046 = vlaneseq
  %v7047 = vshrl.u32 %v7046, 7
  %v7048 = vsub.s32 6, %v7047
  %v7049 = vrot.slane %v3263, %v7048
  %v7050 = vlaneseq
  %v7051 = vshrl.u32 %v7050, 7
  %v7052 = vsub.s32 7, %v7051
  %v7053 = vrot.slane %v3263, %v7052
  %v7054 = vlaneseq
  %v7055 = vshrl.u32 %v7054, 7
  %v7056 = vsub.s32 0, %v7055
  %v7057 = vrot.slane %v3264, %v7056
  %v7058 = vlaneseq
  %v7059 = vshrl.u32 %v7058, 7
  %v7060 = vsub.s32 1, %v7059
  %v7061 = vrot.slane %v3264, %v7060
  %v7062 = vlaneseq
  %v7063 = vshrl.u32 %v7062, 7
  %v7064 = vsub.s32 2, %v7063
  %v7065 = vrot.slane %v3264, %v7064
  %v7066 = vlaneseq
  %v7067 = vshrl.u32 %v7066, 7
  %v7068 = vsub.s32 3, %v7067
  %v7069 = vrot.slane %v3264, %v7068
  %v7070 = vlaneseq
  %v7071 = vshrl.u32 %v7070, 7
  %v7072 = vsub.s32 4, %v7071
  %v7073 = vrot.slane %v3264, %v7072
  %v7074 = vlaneseq
  %v7075 = vshrl.u32 %v7074, 7
  %v7076 = vsub.s32 5, %v7075
  %v7077 = vrot.slane %v3264, %v7076
  %v7078 = vlaneseq
  %v7079 = vshrl.u32 %v7078, 7
  %v7080 = vsub.s32 6, %v7079
  %v7081 = vrot.slane %v3264, %v7080
  %v7082 = vlaneseq
  %v7083 = vshrl.u32 %v7082, 7
  %v7084 = vsub.s32 7, %v7083
  %v7085 = vrot.slane %v3264, %v7084
  %v7086 = vlaneseq
  %v7087 = vshrl.u32 %v7086, 7
  %v7088 = vsub.s32 0, %v7087
  %v7089 = vrot.slane %v3265, %v7088
  %v7090 = vlaneseq
  %v7091 = vshrl.u32 %v7090, 7
  %v7092 = vsub.s32 1, %v7091
  %v7093 = vrot.slane %v3265, %v7092
  %v7094 = vlaneseq
  %v7095 = vshrl.u32 %v7094, 7
  %v7096 = vsub.s32 2, %v7095
  %v7097 = vrot.slane %v3265, %v7096
  %v7098 = vlaneseq
  %v7099 = vshrl.u32 %v7098, 7
  %v7100 = vsub.s32 3, %v7099
  %v7101 = vrot.slane %v3265, %v7100
  %v7102 = vlaneseq
  %v7103 = vshrl.u32 %v7102, 7
  %v7104 = vsub.s32 4, %v7103
  %v7105 = vrot.slane %v3265, %v7104
  %v7106 = vlaneseq
  %v7107 = vshrl.u32 %v7106, 7
  %v7108 = vsub.s32 5, %v7107
  %v7109 = vrot.slane %v3265, %v7108
  %v7110 = vlaneseq
  %v7111 = vshrl.u32 %v7110, 7
  %v7112 = vsub.s32 6, %v7111
  %v7113 = vrot.slane %v3265, %v7112
  %v7114 = vlaneseq
  %v7115 = vshrl.u32 %v7114, 7
  %v7116 = vsub.s32 7, %v7115
  %v7117 = vrot.slane %v3265, %v7116
  %v7118 = vlaneseq
  %v7119 = vshrl.u32 %v7118, 7
  %v7120 = vsub.s32 0, %v7119
  %v7121 = vrot.slane %v3266, %v7120
  %v7122 = vlaneseq
  %v7123 = vshrl.u32 %v7122, 7
  %v7124 = vsub.s32 1, %v7123
  %v7125 = vrot.slane %v3266, %v7124
  %v7126 = vlaneseq
  %v7127 = vshrl.u32 %v7126, 7
  %v7128 = vsub.s32 2, %v7127
  %v7129 = vrot.slane %v3266, %v7128
  %v7130 = vlaneseq
  %v7131 = vshrl.u32 %v7130, 7
  %v7132 = vsub.s32 3, %v7131
  %v7133 = vrot.slane %v3266, %v7132
  %v7134 = vlaneseq
  %v7135 = vshrl.u32 %v7134, 7
  %v7136 = vsub.s32 4, %v7135
  %v7137 = vrot.slane %v3266, %v7136
  %v7138 = vlaneseq
  %v7139 = vshrl.u32 %v7138, 7
  %v7140 = vsub.s32 5, %v7139
  %v7141 = vrot.slane %v3266, %v7140
  %v7142 = vlaneseq
  %v7143 = vshrl.u32 %v7142, 7
  %v7144 = vsub.s32 6, %v7143
  %v7145 = vrot.slane %v3266, %v7144
  %v7146 = vlaneseq
  %v7147 = vshrl.u32 %v7146, 7
  %v7148 = vsub.s32 7, %v7147
  %v7149 = vrot.slane %v3266, %v7148
  %v7150 = vlaneseq
  %v7151 = vshrl.u32 %v7150, 7
  %v7152 = vsub.s32 0, %v7151
  %v7153 = vrot.slane %v3267, %v7152
  %v7154 = vlaneseq
  %v7155 = vshrl.u32 %v7154, 7
  %v7156 = vsub.s32 1, %v7155
  %v7157 = vrot.slane %v3267, %v7156
  %v7158 = vlaneseq
  %v7159 = vshrl.u32 %v7158, 7
  %v7160 = vsub.s32 2, %v7159
  %v7161 = vrot.slane %v3267, %v7160
  %v7162 = vlaneseq
  %v7163 = vshrl.u32 %v7162, 7
  %v7164 = vsub.s32 3, %v7163
  %v7165 = vrot.slane %v3267, %v7164
  %v7166 = vlaneseq
  %v7167 = vshrl.u32 %v7166, 7
  %v7168 = vsub.s32 4, %v7167
  %v7169 = vrot.slane %v3267, %v7168
  %v7170 = vlaneseq
  %v7171 = vshrl.u32 %v7170, 7
  %v7172 = vsub.s32 5, %v7171
  %v7173 = vrot.slane %v3267, %v7172
  %v7174 = vlaneseq
  %v7175 = vshrl.u32 %v7174, 7
  %v7176 = vsub.s32 6, %v7175
  %v7177 = vrot.slane %v3267, %v7176
  %v7178 = vlaneseq
  %v7179 = vshrl.u32 %v7178, 7
  %v7180 = vsub.s32 7, %v7179
  %v7181 = vrot.slane %v3267, %v7180
  %v7182 = vlaneseq
  %v7183 = vshrl.u32 %v7182, 7
  %v7184 = vsub.s32 0, %v7183
  %v7185 = vrot.slane %v3268, %v7184
  %v7186 = vlaneseq
  %v7187 = vshrl.u32 %v7186, 7
  %v7188 = vsub.s32 1, %v7187
  %v7189 = vrot.slane %v3268, %v7188
  %v7190 = vlaneseq
  %v7191 = vshrl.u32 %v7190, 7
  %v7192 = vsub.s32 2, %v7191
  %v7193 = vrot.slane %v3268, %v7192
  %v7194 = vlaneseq
  %v7195 = vshrl.u32 %v7194, 7
  %v7196 = vsub.s32 3, %v7195
  %v7197 = vrot.slane %v3268, %v7196
  %v7198 = vlaneseq
  %v7199 = vshrl.u32 %v7198, 7
  %v7200 = vsub.s32 4, %v7199
  %v7201 = vrot.slane %v3268, %v7200
  %v7202 = vlaneseq
  %v7203 = vshrl.u32 %v7202, 7
  %v7204 = vsub.s32 5, %v7203
  %v7205 = vrot.slane %v3268, %v7204
  %v7206 = vlaneseq
  %v7207 = vshrl.u32 %v7206, 7
  %v7208 = vsub.s32 6, %v7207
  %v7209 = vrot.slane %v3268, %v7208
  %v7210 = vlaneseq
  %v7211 = vshrl.u32 %v7210, 7
  %v7212 = vsub.s32 7, %v7211
  %v7213 = vrot.slane %v3268, %v7212
  %v7214 = vlaneseq
  %v7215 = vshrl.u32 %v7214, 7
  %v7216 = vsub.s32 0, %v7215
  %v7217 = vrot.slane %v3269, %v7216
  %v7218 = vlaneseq
  %v7219 = vshrl.u32 %v7218, 7
  %v7220 = vsub.s32 1, %v7219
  %v7221 = vrot.slane %v3269, %v7220
  %v7222 = vlaneseq
  %v7223 = vshrl.u32 %v7222, 7
  %v7224 = vsub.s32 2, %v7223
  %v7225 = vrot.slane %v3269, %v7224
  %v7226 = vlaneseq
  %v7227 = vshrl.u32 %v7226, 7
  %v7228 = vsub.s32 3, %v7227
  %v7229 = vrot.slane %v3269, %v7228
  %v7230 = vlaneseq
  %v7231 = vshrl.u32 %v7230, 7
  %v7232 = vsub.s32 4, %v7231
  %v7233 = vrot.slane %v3269, %v7232
  %v7234 = vlaneseq
  %v7235 = vshrl.u32 %v7234, 7
  %v7236 = vsub.s32 5, %v7235
  %v7237 = vrot.slane %v3269, %v7236
  %v7238 = vlaneseq
  %v7239 = vshrl.u32 %v7238, 7
  %v7240 = vsub.s32 6, %v7239
  %v7241 = vrot.slane %v3269, %v7240
  %v7242 = vlaneseq
  %v7243 = vshrl.u32 %v7242, 7
  %v7244 = vsub.s32 7, %v7243
  %v7245 = vrot.slane %v3269, %v7244
  %v7246 = vlaneseq
  %v7247 = vshrl.u32 %v7246, 7
  %v7248 = vsub.s32 0, %v7247
  %v7249 = vrot.slane %v3270, %v7248
  %v7250 = vlaneseq
  %v7251 = vshrl.u32 %v7250, 7
  %v7252 = vsub.s32 1, %v7251
  %v7253 = vrot.slane %v3270, %v7252
  %v7254 = vlaneseq
  %v7255 = vshrl.u32 %v7254, 7
  %v7256 = vsub.s32 2, %v7255
  %v7257 = vrot.slane %v3270, %v7256
  %v7258 = vlaneseq
  %v7259 = vshrl.u32 %v7258, 7
  %v7260 = vsub.s32 3, %v7259
  %v7261 = vrot.slane %v3270, %v7260
  %v7262 = vlaneseq
  %v7263 = vshrl.u32 %v7262, 7
  %v7264 = vsub.s32 4, %v7263
  %v7265 = vrot.slane %v3270, %v7264
  %v7266 = vlaneseq
  %v7267 = vshrl.u32 %v7266, 7
  %v7268 = vsub.s32 5, %v7267
  %v7269 = vrot.slane %v3270, %v7268
  %v7270 = vlaneseq
  %v7271 = vshrl.u32 %v7270, 7
  %v7272 = vsub.s32 6, %v7271
  %v7273 = vrot.slane %v3270, %v7272
  %v7274 = vlaneseq
  %v7275 = vshrl.u32 %v7274, 7
  %v7276 = vsub.s32 7, %v7275
  %v7277 = vrot.slane %v3270, %v7276
  %v7278 = vlaneseq
  %v7279 = vshrl.u32 %v7278, 7
  %v7280 = vsub.s32 0, %v7279
  %v7281 = vrot.slane %v3271, %v7280
  %v7282 = vlaneseq
  %v7283 = vshrl.u32 %v7282, 7
  %v7284 = vsub.s32 1, %v7283
  %v7285 = vrot.slane %v3271, %v7284
  %v7286 = vlaneseq
  %v7287 = vshrl.u32 %v7286, 7
  %v7288 = vsub.s32 2, %v7287
  %v7289 = vrot.slane %v3271, %v7288
  %v7290 = vlaneseq
  %v7291 = vshrl.u32 %v7290, 7
  %v7292 = vsub.s32 3, %v7291
  %v7293 = vrot.slane %v3271, %v7292
  %v7294 = vlaneseq
  %v7295 = vshrl.u32 %v7294, 7
  %v7296 = vsub.s32 4, %v7295
  %v7297 = vrot.slane %v3271, %v7296
  %v7298 = vlaneseq
  %v7299 = vshrl.u32 %v7298, 7
  %v7300 = vsub.s32 5, %v7299
  %v7301 = vrot.slane %v3271, %v7300
  %v7302 = vlaneseq
  %v7303 = vshrl.u32 %v7302, 7
  %v7304 = vsub.s32 6, %v7303
  %v7305 = vrot.slane %v3271, %v7304
  %v7306 = vlaneseq
  %v7307 = vshrl.u32 %v7306, 7
  %v7308 = vsub.s32 7, %v7307
  %v7309 = vrot.slane %v3271, %v7308
  %v7310 = vlaneseq
  %v7311 = vshrl.u32 %v7310, 7
  %v7312 = vsub.s32 0, %v7311
  %v7313 = vrot.slane %v3272, %v7312
  %v7314 = vlaneseq
  %v7315 = vshrl.u32 %v7314, 7
  %v7316 = vsub.s32 1, %v7315
  %v7317 = vrot.slane %v3272, %v7316
  %v7318 = vlaneseq
  %v7319 = vshrl.u32 %v7318, 7
  %v7320 = vsub.s32 2, %v7319
  %v7321 = vrot.slane %v3272, %v7320
  %v7322 = vlaneseq
  %v7323 = vshrl.u32 %v7322, 7
  %v7324 = vsub.s32 3, %v7323
  %v7325 = vrot.slane %v3272, %v7324
  %v7326 = vlaneseq
  %v7327 = vshrl.u32 %v7326, 7
  %v7328 = vsub.s32 4, %v7327
  %v7329 = vrot.slane %v3272, %v7328
  %v7330 = vlaneseq
  %v7331 = vshrl.u32 %v7330, 7
  %v7332 = vsub.s32 5, %v7331
  %v7333 = vrot.slane %v3272, %v7332
  %v7334 = vlaneseq
  %v7335 = vshrl.u32 %v7334, 7
  %v7336 = vsub.s32 6, %v7335
  %v7337 = vrot.slane %v3272, %v7336
  %v7338 = vlaneseq
  %v7339 = vshrl.u32 %v7338, 7
  %v7340 = vsub.s32 7, %v7339
  %v7341 = vrot.slane %v3272, %v7340
  %v7342 = vlaneseq
  %v7343 = vshrl.u32 %v7342, 7
  %v7344 = vsub.s32 0, %v7343
  %v7345 = vrot.slane %v3273, %v7344
  %v7346 = vlaneseq
  %v7347 = vshrl.u32 %v7346, 7
  %v7348 = vsub.s32 1, %v7347
  %v7349 = vrot.slane %v3273, %v7348
  %v7350 = vlaneseq
  %v7351 = vshrl.u32 %v7350, 7
  %v7352 = vsub.s32 2, %v7351
  %v7353 = vrot.slane %v3273, %v7352
  %v7354 = vlaneseq
  %v7355 = vshrl.u32 %v7354, 7
  %v7356 = vsub.s32 3, %v7355
  %v7357 = vrot.slane %v3273, %v7356
  %v7358 = vlaneseq
  %v7359 = vshrl.u32 %v7358, 7
  %v7360 = vsub.s32 4, %v7359
  %v7361 = vrot.slane %v3273, %v7360
  %v7362 = vlaneseq
  %v7363 = vshrl.u32 %v7362, 7
  %v7364 = vsub.s32 5, %v7363
  %v7365 = vrot.slane %v3273, %v7364
  %v7366 = vlaneseq
  %v7367 = vshrl.u32 %v7366, 7
  %v7368 = vsub.s32 6, %v7367
  %v7369 = vrot.slane %v3273, %v7368
  %v7370 = vlaneseq
  %v7371 = vshrl.u32 %v7370, 7
  %v7372 = vsub.s32 7, %v7371
  %v7373 = vrot.slane %v3273, %v7372
  %v7374 = vlaneseq
  %v7375 = vshrl.u32 %v7374, 7
  %v7376 = vsub.s32 0, %v7375
  %v7377 = vrot.slane %v3274, %v7376
  %v7378 = vlaneseq
  %v7379 = vshrl.u32 %v7378, 7
  %v7380 = vsub.s32 1, %v7379
  %v7381 = vrot.slane %v3274, %v7380
  %v7382 = vlaneseq
  %v7383 = vshrl.u32 %v7382, 7
  %v7384 = vsub.s32 2, %v7383
  %v7385 = vrot.slane %v3274, %v7384
  %v7386 = vlaneseq
  %v7387 = vshrl.u32 %v7386, 7
  %v7388 = vsub.s32 3, %v7387
  %v7389 = vrot.slane %v3274, %v7388
  %v7390 = vlaneseq
  %v7391 = vshrl.u32 %v7390, 7
  %v7392 = vsub.s32 4, %v7391
  %v7393 = vrot.slane %v3274, %v7392
  %v7394 = vlaneseq
  %v7395 = vshrl.u32 %v7394, 7
  %v7396 = vsub.s32 5, %v7395
  %v7397 = vrot.slane %v3274, %v7396
  %v7398 = vlaneseq
  %v7399 = vshrl.u32 %v7398, 7
  %v7400 = vsub.s32 6, %v7399
  %v7401 = vrot.slane %v3274, %v7400
  %v7402 = vlaneseq
  %v7403 = vshrl.u32 %v7402, 7
  %v7404 = vsub.s32 7, %v7403
  %v7405 = vrot.slane %v3274, %v7404
  %v7406 = vlaneseq
  %v7407 = vshrl.u32 %v7406, 7
  %v7408 = vsub.s32 0, %v7407
  %v7409 = vrot.slane %v3275, %v7408
  %v7410 = vlaneseq
  %v7411 = vshrl.u32 %v7410, 7
  %v7412 = vsub.s32 1, %v7411
  %v7413 = vrot.slane %v3275, %v7412
  %v7414 = vlaneseq
  %v7415 = vshrl.u32 %v7414, 7
  %v7416 = vsub.s32 2, %v7415
  %v7417 = vrot.slane %v3275, %v7416
  %v7418 = vlaneseq
  %v7419 = vshrl.u32 %v7418, 7
  %v7420 = vsub.s32 3, %v7419
  %v7421 = vrot.slane %v3275, %v7420
  %v7422 = vlaneseq
  %v7423 = vshrl.u32 %v7422, 7
  %v7424 = vsub.s32 4, %v7423
  %v7425 = vrot.slane %v3275, %v7424
  %v7426 = vlaneseq
  %v7427 = vshrl.u32 %v7426, 7
  %v7428 = vsub.s32 5, %v7427
  %v7429 = vrot.slane %v3275, %v7428
  %v7430 = vlaneseq
  %v7431 = vshrl.u32 %v7430, 7
  %v7432 = vsub.s32 6, %v7431
  %v7433 = vrot.slane %v3275, %v7432
  %v7434 = vlaneseq
  %v7435 = vshrl.u32 %v7434, 7
  %v7436 = vsub.s32 7, %v7435
  %v7437 = vrot.slane %v3275, %v7436
  %v7438 = vlaneseq
  %v7439 = vshrl.u32 %v7438, 7
  %v7440 = vsub.s32 0, %v7439
  %v7441 = vrot.slane %v3276, %v7440
  %v7442 = vlaneseq
  %v7443 = vshrl.u32 %v7442, 7
  %v7444 = vsub.s32 1, %v7443
  %v7445 = vrot.slane %v3276, %v7444
  %v7446 = vlaneseq
  %v7447 = vshrl.u32 %v7446, 7
  %v7448 = vsub.s32 2, %v7447
  %v7449 = vrot.slane %v3276, %v7448
  %v7450 = vlaneseq
  %v7451 = vshrl.u32 %v7450, 7
  %v7452 = vsub.s32 3, %v7451
  %v7453 = vrot.slane %v3276, %v7452
  %v7454 = vlaneseq
  %v7455 = vshrl.u32 %v7454, 7
  %v7456 = vsub.s32 4, %v7455
  %v7457 = vrot.slane %v3276, %v7456
  %v7458 = vlaneseq
  %v7459 = vshrl.u32 %v7458, 7
  %v7460 = vsub.s32 5, %v7459
  %v7461 = vrot.slane %v3276, %v7460
  %v7462 = vlaneseq
  %v7463 = vshrl.u32 %v7462, 7
  %v7464 = vsub.s32 6, %v7463
  %v7465 = vrot.slane %v3276, %v7464
  %v7466 = vlaneseq
  %v7467 = vshrl.u32 %v7466, 7
  %v7468 = vsub.s32 7, %v7467
  %v7469 = vrot.slane %v3276, %v7468
  %v7470 = vlaneseq
  %v7471 = vshrl.u32 %v7470, 7
  %v7472 = vsub.s32 0, %v7471
  %v7473 = vrot.slane %v3277, %v7472
  %v7474 = vlaneseq
  %v7475 = vshrl.u32 %v7474, 7
  %v7476 = vsub.s32 1, %v7475
  %v7477 = vrot.slane %v3277, %v7476
  %v7478 = vlaneseq
  %v7479 = vshrl.u32 %v7478, 7
  %v7480 = vsub.s32 2, %v7479
  %v7481 = vrot.slane %v3277, %v7480
  %v7482 = vlaneseq
  %v7483 = vshrl.u32 %v7482, 7
  %v7484 = vsub.s32 3, %v7483
  %v7485 = vrot.slane %v3277, %v7484
  %v7486 = vlaneseq
  %v7487 = vshrl.u32 %v7486, 7
  %v7488 = vsub.s32 4, %v7487
  %v7489 = vrot.slane %v3277, %v7488
  %v7490 = vlaneseq
  %v7491 = vshrl.u32 %v7490, 7
  %v7492 = vsub.s32 5, %v7491
  %v7493 = vrot.slane %v3277, %v7492
  %v7494 = vlaneseq
  %v7495 = vshrl.u32 %v7494, 7
  %v7496 = vsub.s32 6, %v7495
  %v7497 = vrot.slane %v3277, %v7496
  %v7498 = vlaneseq
  %v7499 = vshrl.u32 %v7498, 7
  %v7500 = vsub.s32 7, %v7499
  %v7501 = vrot.slane %v3277, %v7500
  %v7502 = vcombine.low %v3409, %v3413
  %v7503 = vcombine.low %v3417, %v3421
  %v7504 = vcombine.low %v3425, %v3429
  %v7505 = vcombine.low %v3433, %v3437
  %v7507 = vunpack.c.l.s4 1966171168
  %v7508 = vunpack.c.0.s8 %v7507
  %v7509 = vlaneseq
  %v7510 = vshrl.u32 %v7509, 7
  %v7511 = vsub.s32 %v7508, %v7510
  %v7512 = vrot.slane %v7502, %v7511
  %v7514 = vunpack.c.l.s4 1966171168
  %v7515 = vunpack.c.0.s8 %v7514
  %v7516 = vlaneseq
  %v7517 = vshrl.u32 %v7516, 7
  %v7518 = vsub.s32 %v7515, %v7517
  %v7519 = vrot.slane %v7503, %v7518
  %v7521 = vunpack.c.l.s4 1966171168
  %v7522 = vunpack.c.0.s8 %v7521
  %v7523 = vlaneseq
  %v7524 = vshrl.u32 %v7523, 7
  %v7525 = vsub.s32 %v7522, %v7524
  %v7526 = vrot.slane %v7504, %v7525
  %v7528 = vunpack.c.l.s4 1966171168
  %v7529 = vunpack.c.0.s8 %v7528
  %v7530 = vlaneseq
  %v7531 = vshrl.u32 %v7530, 7
  %v7532 = vsub.s32 %v7529, %v7531
  %v7533 = vrot.slane %v7505, %v7532
  %v7534 = vcombine.low %v7512, %v7519
  %v7535 = vcombine.low %v7526, %v7533
  %v7537 = vunpack.c.l.s4 1966171168
  %v7538 = vunpack.c.0.s8 %v7537
  %v7539 = vlaneseq
  %v7540 = vshrl.u32 %v7539, 7
  %v7541 = vsub.s32 %v7538, %v7540
  %v7542 = vrot.slane %v7534, %v7541
  %v7544 = vunpack.c.l.s4 1966171168
  %v7545 = vunpack.c.0.s8 %v7544
  %v7546 = vlaneseq
  %v7547 = vshrl.u32 %v7546, 7
  %v7548 = vsub.s32 %v7545, %v7547
  %v7549 = vrot.slane %v7535, %v7548
  %v7550 = vcombine.low %v7542, %v7549
  %v7551 = vcombine.low %v3441, %v3445
  %v7552 = vcombine.low %v3449, %v3453
  %v7553 = vcombine.low %v3457, %v3461
  %v7554 = vcombine.low %v3465, %v3469
  %v7556 = vunpack.c.l.s4 1966171168
  %v7557 = vunpack.c.0.s8 %v7556
  %v7558 = vlaneseq
  %v7559 = vshrl.u32 %v7558, 7
  %v7560 = vsub.s32 %v7557, %v7559
  %v7561 = vrot.slane %v7551, %v7560
  %v7563 = vunpack.c.l.s4 1966171168
  %v7564 = vunpack.c.0.s8 %v7563
  %v7565 = vlaneseq
  %v7566 = vshrl.u32 %v7565, 7
  %v7567 = vsub.s32 %v7564, %v7566
  %v7568 = vrot.slane %v7552, %v7567
  %v7570 = vunpack.c.l.s4 1966171168
  %v7571 = vunpack.c.0.s8 %v7570
  %v7572 = vlaneseq
  %v7573 = vshrl.u32 %v7572, 7
  %v7574 = vsub.s32 %v7571, %v7573
  %v7575 = vrot.slane %v7553, %v7574
  %v7577 = vunpack.c.l.s4 1966171168
  %v7578 = vunpack.c.0.s8 %v7577
  %v7579 = vlaneseq
  %v7580 = vshrl.u32 %v7579, 7
  %v7581 = vsub.s32 %v7578, %v7580
  %v7582 = vrot.slane %v7554, %v7581
  %v7583 = vcombine.low %v7561, %v7568
  %v7584 = vcombine.low %v7575, %v7582
  %v7586 = vunpack.c.l.s4 1966171168
  %v7587 = vunpack.c.0.s8 %v7586
  %v7588 = vlaneseq
  %v7589 = vshrl.u32 %v7588, 7
  %v7590 = vsub.s32 %v7587, %v7589
  %v7591 = vrot.slane %v7583, %v7590
  %v7593 = vunpack.c.l.s4 1966171168
  %v7594 = vunpack.c.0.s8 %v7593
  %v7595 = vlaneseq
  %v7596 = vshrl.u32 %v7595, 7
  %v7597 = vsub.s32 %v7594, %v7596
  %v7598 = vrot.slane %v7584, %v7597
  %v7599 = vcombine.low %v7591, %v7598
  %v7600 = vcombine.low %v3473, %v3477
  %v7601 = vcombine.low %v3481, %v3485
  %v7602 = vcombine.low %v3489, %v3493
  %v7603 = vcombine.low %v3497, %v3501
  %v7605 = vunpack.c.l.s4 1966171168
  %v7606 = vunpack.c.0.s8 %v7605
  %v7607 = vlaneseq
  %v7608 = vshrl.u32 %v7607, 7
  %v7609 = vsub.s32 %v7606, %v7608
  %v7610 = vrot.slane %v7600, %v7609
  %v7612 = vunpack.c.l.s4 1966171168
  %v7613 = vunpack.c.0.s8 %v7612
  %v7614 = vlaneseq
  %v7615 = vshrl.u32 %v7614, 7
  %v7616 = vsub.s32 %v7613, %v7615
  %v7617 = vrot.slane %v7601, %v7616
  %v7619 = vunpack.c.l.s4 1966171168
  %v7620 = vunpack.c.0.s8 %v7619
  %v7621 = vlaneseq
  %v7622 = vshrl.u32 %v7621, 7
  %v7623 = vsub.s32 %v7620, %v7622
  %v7624 = vrot.slane %v7602, %v7623
  %v7626 = vunpack.c.l.s4 1966171168
  %v7627 = vunpack.c.0.s8 %v7626
  %v7628 = vlaneseq
  %v7629 = vshrl.u32 %v7628, 7
  %v7630 = vsub.s32 %v7627, %v7629
  %v7631 = vrot.slane %v7603, %v7630
  %v7632 = vcombine.low %v7610, %v7617
  %v7633 = vcombine.low %v7624, %v7631
  %v7635 = vunpack.c.l.s4 1966171168
  %v7636 = vunpack.c.0.s8 %v7635
  %v7637 = vlaneseq
  %v7638 = vshrl.u32 %v7637, 7
  %v7639 = vsub.s32 %v7636, %v7638
  %v7640 = vrot.slane %v7632, %v7639
  %v7642 = vunpack.c.l.s4 1966171168
  %v7643 = vunpack.c.0.s8 %v7642
  %v7644 = vlaneseq
  %v7645 = vshrl.u32 %v7644, 7
  %v7646 = vsub.s32 %v7643, %v7645
  %v7647 = vrot.slane %v7633, %v7646
  %v7648 = vcombine.low %v7640, %v7647
  %v7649 = vcombine.low %v3505, %v3509
  %v7650 = vcombine.low %v3513, %v3517
  %v7651 = vcombine.low %v3521, %v3525
  %v7652 = vcombine.low %v3529, %v3533
  %v7654 = vunpack.c.l.s4 1966171168
  %v7655 = vunpack.c.0.s8 %v7654
  %v7656 = vlaneseq
  %v7657 = vshrl.u32 %v7656, 7
  %v7658 = vsub.s32 %v7655, %v7657
  %v7659 = vrot.slane %v7649, %v7658
  %v7661 = vunpack.c.l.s4 1966171168
  %v7662 = vunpack.c.0.s8 %v7661
  %v7663 = vlaneseq
  %v7664 = vshrl.u32 %v7663, 7
  %v7665 = vsub.s32 %v7662, %v7664
  %v7666 = vrot.slane %v7650, %v7665
  %v7668 = vunpack.c.l.s4 1966171168
  %v7669 = vunpack.c.0.s8 %v7668
  %v7670 = vlaneseq
  %v7671 = vshrl.u32 %v7670, 7
  %v7672 = vsub.s32 %v7669, %v7671
  %v7673 = vrot.slane %v7651, %v7672
  %v7675 = vunpack.c.l.s4 1966171168
  %v7676 = vunpack.c.0.s8 %v7675
  %v7677 = vlaneseq
  %v7678 = vshrl.u32 %v7677, 7
  %v7679 = vsub.s32 %v7676, %v7678
  %v7680 = vrot.slane %v7652, %v7679
  %v7681 = vcombine.low %v7659, %v7666
  %v7682 = vcombine.low %v7673, %v7680
  %v7684 = vunpack.c.l.s4 1966171168
  %v7685 = vunpack.c.0.s8 %v7684
  %v7686 = vlaneseq
  %v7687 = vshrl.u32 %v7686, 7
  %v7688 = vsub.s32 %v7685, %v7687
  %v7689 = vrot.slane %v7681, %v7688
  %v7691 = vunpack.c.l.s4 1966171168
  %v7692 = vunpack.c.0.s8 %v7691
  %v7693 = vlaneseq
  %v7694 = vshrl.u32 %v7693, 7
  %v7695 = vsub.s32 %v7692, %v7694
  %v7696 = vrot.slane %v7682, %v7695
  %v7697 = vcombine.low %v7689, %v7696
  %v7698 = vcombine.low %v3537, %v3541
  %v7699 = vcombine.low %v3545, %v3549
  %v7700 = vcombine.low %v3553, %v3557
  %v7701 = vcombine.low %v3561, %v3565
  %v7703 = vunpack.c.l.s4 1966171168
  %v7704 = vunpack.c.0.s8 %v7703
  %v7705 = vlaneseq
  %v7706 = vshrl.u32 %v7705, 7
  %v7707 = vsub.s32 %v7704, %v7706
  %v7708 = vrot.slane %v7698, %v7707
  %v7710 = vunpack.c.l.s4 1966171168
  %v7711 = vunpack.c.0.s8 %v7710
  %v7712 = vlaneseq
  %v7713 = vshrl.u32 %v7712, 7
  %v7714 = vsub.s32 %v7711, %v7713
  %v7715 = vrot.slane %v7699, %v7714
  %v7717 = vunpack.c.l.s4 1966171168
  %v7718 = vunpack.c.0.s8 %v7717
  %v7719 = vlaneseq
  %v7720 = vshrl.u32 %v7719, 7
  %v7721 = vsub.s32 %v7718, %v7720
  %v7722 = vrot.slane %v7700, %v7721
  %v7724 = vunpack.c.l.s4 1966171168
  %v7725 = vunpack.c.0.s8 %v7724
  %v7726 = vlaneseq
  %v7727 = vshrl.u32 %v7726, 7
  %v7728 = vsub.s32 %v7725, %v7727
  %v7729 = vrot.slane %v7701, %v7728
  %v7730 = vcombine.low %v7708, %v7715
  %v7731 = vcombine.low %v7722, %v7729
  %v7733 = vunpack.c.l.s4 1966171168
  %v7734 = vunpack.c.0.s8 %v7733
  %v7735 = vlaneseq
  %v7736 = vshrl.u32 %v7735, 7
  %v7737 = vsub.s32 %v7734, %v7736
  %v7738 = vrot.slane %v7730, %v7737
  %v7740 = vunpack.c.l.s4 1966171168
  %v7741 = vunpack.c.0.s8 %v7740
  %v7742 = vlaneseq
  %v7743 = vshrl.u32 %v7742, 7
  %v7744 = vsub.s32 %v7741, %v7743
  %v7745 = vrot.slane %v7731, %v7744
  %v7746 = vcombine.low %v7738, %v7745
  %v7747 = vcombine.low %v3569, %v3573
  %v7748 = vcombine.low %v3577, %v3581
  %v7749 = vcombine.low %v3585, %v3589
  %v7750 = vcombine.low %v3593, %v3597
  %v7752 = vunpack.c.l.s4 1966171168
  %v7753 = vunpack.c.0.s8 %v7752
  %v7754 = vlaneseq
  %v7755 = vshrl.u32 %v7754, 7
  %v7756 = vsub.s32 %v7753, %v7755
  %v7757 = vrot.slane %v7747, %v7756
  %v7759 = vunpack.c.l.s4 1966171168
  %v7760 = vunpack.c.0.s8 %v7759
  %v7761 = vlaneseq
  %v7762 = vshrl.u32 %v7761, 7
  %v7763 = vsub.s32 %v7760, %v7762
  %v7764 = vrot.slane %v7748, %v7763
  %v7766 = vunpack.c.l.s4 1966171168
  %v7767 = vunpack.c.0.s8 %v7766
  %v7768 = vlaneseq
  %v7769 = vshrl.u32 %v7768, 7
  %v7770 = vsub.s32 %v7767, %v7769
  %v7771 = vrot.slane %v7749, %v7770
  %v7773 = vunpack.c.l.s4 1966171168
  %v7774 = vunpack.c.0.s8 %v7773
  %v7775 = vlaneseq
  %v7776 = vshrl.u32 %v7775, 7
  %v7777 = vsub.s32 %v7774, %v7776
  %v7778 = vrot.slane %v7750, %v7777
  %v7779 = vcombine.low %v7757, %v7764
  %v7780 = vcombine.low %v7771, %v7778
  %v7782 = vunpack.c.l.s4 1966171168
  %v7783 = vunpack.c.0.s8 %v7782
  %v7784 = vlaneseq
  %v7785 = vshrl.u32 %v7784, 7
  %v7786 = vsub.s32 %v7783, %v7785
  %v7787 = vrot.slane %v7779, %v7786
  %v7789 = vunpack.c.l.s4 1966171168
  %v7790 = vunpack.c.0.s8 %v7789
  %v7791 = vlaneseq
  %v7792 = vshrl.u32 %v7791, 7
  %v7793 = vsub.s32 %v7790, %v7792
  %v7794 = vrot.slane %v7780, %v7793
  %v7795 = vcombine.low %v7787, %v7794
  %v7796 = vcombine.low %v3601, %v3605
  %v7797 = vcombine.low %v3609, %v3613
  %v7798 = vcombine.low %v3617, %v3621
  %v7799 = vcombine.low %v3625, %v3629
  %v7801 = vunpack.c.l.s4 1966171168
  %v7802 = vunpack.c.0.s8 %v7801
  %v7803 = vlaneseq
  %v7804 = vshrl.u32 %v7803, 7
  %v7805 = vsub.s32 %v7802, %v7804
  %v7806 = vrot.slane %v7796, %v7805
  %v7808 = vunpack.c.l.s4 1966171168
  %v7809 = vunpack.c.0.s8 %v7808
  %v7810 = vlaneseq
  %v7811 = vshrl.u32 %v7810, 7
  %v7812 = vsub.s32 %v7809, %v7811
  %v7813 = vrot.slane %v7797, %v7812
  %v7815 = vunpack.c.l.s4 1966171168
  %v7816 = vunpack.c.0.s8 %v7815
  %v7817 = vlaneseq
  %v7818 = vshrl.u32 %v7817, 7
  %v7819 = vsub.s32 %v7816, %v7818
  %v7820 = vrot.slane %v7798, %v7819
  %v7822 = vunpack.c.l.s4 1966171168
  %v7823 = vunpack.c.0.s8 %v7822
  %v7824 = vlaneseq
  %v7825 = vshrl.u32 %v7824, 7
  %v7826 = vsub.s32 %v7823, %v7825
  %v7827 = vrot.slane %v7799, %v7826
  %v7828 = vcombine.low %v7806, %v7813
  %v7829 = vcombine.low %v7820, %v7827
  %v7831 = vunpack.c.l.s4 1966171168
  %v7832 = vunpack.c.0.s8 %v7831
  %v7833 = vlaneseq
  %v7834 = vshrl.u32 %v7833, 7
  %v7835 = vsub.s32 %v7832, %v7834
  %v7836 = vrot.slane %v7828, %v7835
  %v7838 = vunpack.c.l.s4 1966171168
  %v7839 = vunpack.c.0.s8 %v7838
  %v7840 = vlaneseq
  %v7841 = vshrl.u32 %v7840, 7
  %v7842 = vsub.s32 %v7839, %v7841
  %v7843 = vrot.slane %v7829, %v7842
  %v7844 = vcombine.low %v7836, %v7843
  %v7845 = vcombine.low %v3633, %v3637
  %v7846 = vcombine.low %v3641, %v3645
  %v7847 = vcombine.low %v3649, %v3653
  %v7848 = vcombine.low %v3657, %v3661
  %v7850 = vunpack.c.l.s4 1966171168
  %v7851 = vunpack.c.0.s8 %v7850
  %v7852 = vlaneseq
  %v7853 = vshrl.u32 %v7852, 7
  %v7854 = vsub.s32 %v7851, %v7853
  %v7855 = vrot.slane %v7845, %v7854
  %v7857 = vunpack.c.l.s4 1966171168
  %v7858 = vunpack.c.0.s8 %v7857
  %v7859 = vlaneseq
  %v7860 = vshrl.u32 %v7859, 7
  %v7861 = vsub.s32 %v7858, %v7860
  %v7862 = vrot.slane %v7846, %v7861
  %v7864 = vunpack.c.l.s4 1966171168
  %v7865 = vunpack.c.0.s8 %v7864
  %v7866 = vlaneseq
  %v7867 = vshrl.u32 %v7866, 7
  %v7868 = vsub.s32 %v7865, %v7867
  %v7869 = vrot.slane %v7847, %v7868
  %v7871 = vunpack.c.l.s4 1966171168
  %v7872 = vunpack.c.0.s8 %v7871
  %v7873 = vlaneseq
  %v7874 = vshrl.u32 %v7873, 7
  %v7875 = vsub.s32 %v7872, %v7874
  %v7876 = vrot.slane %v7848, %v7875
  %v7877 = vcombine.low %v7855, %v7862
  %v7878 = vcombine.low %v7869, %v7876
  %v7880 = vunpack.c.l.s4 1966171168
  %v7881 = vunpack.c.0.s8 %v7880
  %v7882 = vlaneseq
  %v7883 = vshrl.u32 %v7882, 7
  %v7884 = vsub.s32 %v7881, %v7883
  %v7885 = vrot.slane %v7877, %v7884
  %v7887 = vunpack.c.l.s4 1966171168
  %v7888 = vunpack.c.0.s8 %v7887
  %v7889 = vlaneseq
  %v7890 = vshrl.u32 %v7889, 7
  %v7891 = vsub.s32 %v7888, %v7890
  %v7892 = vrot.slane %v7878, %v7891
  %v7893 = vcombine.low %v7885, %v7892
  %v7894 = vcombine.low %v3665, %v3669
  %v7895 = vcombine.low %v3673, %v3677
  %v7896 = vcombine.low %v3681, %v3685
  %v7897 = vcombine.low %v3689, %v3693
  %v7899 = vunpack.c.l.s4 1966171168
  %v7900 = vunpack.c.0.s8 %v7899
  %v7901 = vlaneseq
  %v7902 = vshrl.u32 %v7901, 7
  %v7903 = vsub.s32 %v7900, %v7902
  %v7904 = vrot.slane %v7894, %v7903
  %v7906 = vunpack.c.l.s4 1966171168
  %v7907 = vunpack.c.0.s8 %v7906
  %v7908 = vlaneseq
  %v7909 = vshrl.u32 %v7908, 7
  %v7910 = vsub.s32 %v7907, %v7909
  %v7911 = vrot.slane %v7895, %v7910
  %v7913 = vunpack.c.l.s4 1966171168
  %v7914 = vunpack.c.0.s8 %v7913
  %v7915 = vlaneseq
  %v7916 = vshrl.u32 %v7915, 7
  %v7917 = vsub.s32 %v7914, %v7916
  %v7918 = vrot.slane %v7896, %v7917
  %v7920 = vunpack.c.l.s4 1966171168
  %v7921 = vunpack.c.0.s8 %v7920
  %v7922 = vlaneseq
  %v7923 = vshrl.u32 %v7922, 7
  %v7924 = vsub.s32 %v7921, %v7923
  %v7925 = vrot.slane %v7897, %v7924
  %v7926 = vcombine.low %v7904, %v7911
  %v7927 = vcombine.low %v7918, %v7925
  %v7929 = vunpack.c.l.s4 1966171168
  %v7930 = vunpack.c.0.s8 %v7929
  %v7931 = vlaneseq
  %v7932 = vshrl.u32 %v7931, 7
  %v7933 = vsub.s32 %v7930, %v7932
  %v7934 = vrot.slane %v7926, %v7933
  %v7936 = vunpack.c.l.s4 1966171168
  %v7937 = vunpack.c.0.s8 %v7936
  %v7938 = vlaneseq
  %v7939 = vshrl.u32 %v7938, 7
  %v7940 = vsub.s32 %v7937, %v7939
  %v7941 = vrot.slane %v7927, %v7940
  %v7942 = vcombine.low %v7934, %v7941
  %v7943 = vcombine.low %v3697, %v3701
  %v7944 = vcombine.low %v3705, %v3709
  %v7945 = vcombine.low %v3713, %v3717
  %v7946 = vcombine.low %v3721, %v3725
  %v7948 = vunpack.c.l.s4 1966171168
  %v7949 = vunpack.c.0.s8 %v7948
  %v7950 = vlaneseq
  %v7951 = vshrl.u32 %v7950, 7
  %v7952 = vsub.s32 %v7949, %v7951
  %v7953 = vrot.slane %v7943, %v7952
  %v7955 = vunpack.c.l.s4 1966171168
  %v7956 = vunpack.c.0.s8 %v7955
  %v7957 = vlaneseq
  %v7958 = vshrl.u32 %v7957, 7
  %v7959 = vsub.s32 %v7956, %v7958
  %v7960 = vrot.slane %v7944, %v7959
  %v7962 = vunpack.c.l.s4 1966171168
  %v7963 = vunpack.c.0.s8 %v7962
  %v7964 = vlaneseq
  %v7965 = vshrl.u32 %v7964, 7
  %v7966 = vsub.s32 %v7963, %v7965
  %v7967 = vrot.slane %v7945, %v7966
  %v7969 = vunpack.c.l.s4 1966171168
  %v7970 = vunpack.c.0.s8 %v7969
  %v7971 = vlaneseq
  %v7972 = vshrl.u32 %v7971, 7
  %v7973 = vsub.s32 %v7970, %v7972
  %v7974 = vrot.slane %v7946, %v7973
  %v7975 = vcombine.low %v7953, %v7960
  %v7976 = vcombine.low %v7967, %v7974
  %v7978 = vunpack.c.l.s4 1966171168
  %v7979 = vunpack.c.0.s8 %v7978
  %v7980 = vlaneseq
  %v7981 = vshrl.u32 %v7980, 7
  %v7982 = vsub.s32 %v7979, %v7981
  %v7983 = vrot.slane %v7975, %v7982
  %v7985 = vunpack.c.l.s4 1966171168
  %v7986 = vunpack.c.0.s8 %v7985
  %v7987 = vlaneseq
  %v7988 = vshrl.u32 %v7987, 7
  %v7989 = vsub.s32 %v7986, %v7988
  %v7990 = vrot.slane %v7976, %v7989
  %v7991 = vcombine.low %v7983, %v7990
  %v7992 = vcombine.low %v3729, %v3733
  %v7993 = vcombine.low %v3737, %v3741
  %v7994 = vcombine.low %v3745, %v3749
  %v7995 = vcombine.low %v3753, %v3757
  %v7997 = vunpack.c.l.s4 1966171168
  %v7998 = vunpack.c.0.s8 %v7997
  %v7999 = vlaneseq
  %v8000 = vshrl.u32 %v7999, 7
  %v8001 = vsub.s32 %v7998, %v8000
  %v8002 = vrot.slane %v7992, %v8001
  %v8004 = vunpack.c.l.s4 1966171168
  %v8005 = vunpack.c.0.s8 %v8004
  %v8006 = vlaneseq
  %v8007 = vshrl.u32 %v8006, 7
  %v8008 = vsub.s32 %v8005, %v8007
  %v8009 = vrot.slane %v7993, %v8008
  %v8011 = vunpack.c.l.s4 1966171168
  %v8012 = vunpack.c.0.s8 %v8011
  %v8013 = vlaneseq
  %v8014 = vshrl.u32 %v8013, 7
  %v8015 = vsub.s32 %v8012, %v8014
  %v8016 = vrot.slane %v7994, %v8015
  %v8018 = vunpack.c.l.s4 1966171168
  %v8019 = vunpack.c.0.s8 %v8018
  %v8020 = vlaneseq
  %v8021 = vshrl.u32 %v8020, 7
  %v8022 = vsub.s32 %v8019, %v8021
  %v8023 = vrot.slane %v7995, %v8022
  %v8024 = vcombine.low %v8002, %v8009
  %v8025 = vcombine.low %v8016, %v8023
  %v8027 = vunpack.c.l.s4 1966171168
  %v8028 = vunpack.c.0.s8 %v8027
  %v8029 = vlaneseq
  %v8030 = vshrl.u32 %v8029, 7
  %v8031 = vsub.s32 %v8028, %v8030
  %v8032 = vrot.slane %v8024, %v8031
  %v8034 = vunpack.c.l.s4 1966171168
  %v8035 = vunpack.c.0.s8 %v8034
  %v8036 = vlaneseq
  %v8037 = vshrl.u32 %v8036, 7
  %v8038 = vsub.s32 %v8035, %v8037
  %v8039 = vrot.slane %v8025, %v8038
  %v8040 = vcombine.low %v8032, %v8039
  %v8041 = vcombine.low %v3761, %v3765
  %v8042 = vcombine.low %v3769, %v3773
  %v8043 = vcombine.low %v3777, %v3781
  %v8044 = vcombine.low %v3785, %v3789
  %v8046 = vunpack.c.l.s4 1966171168
  %v8047 = vunpack.c.0.s8 %v8046
  %v8048 = vlaneseq
  %v8049 = vshrl.u32 %v8048, 7
  %v8050 = vsub.s32 %v8047, %v8049
  %v8051 = vrot.slane %v8041, %v8050
  %v8053 = vunpack.c.l.s4 1966171168
  %v8054 = vunpack.c.0.s8 %v8053
  %v8055 = vlaneseq
  %v8056 = vshrl.u32 %v8055, 7
  %v8057 = vsub.s32 %v8054, %v8056
  %v8058 = vrot.slane %v8042, %v8057
  %v8060 = vunpack.c.l.s4 1966171168
  %v8061 = vunpack.c.0.s8 %v8060
  %v8062 = vlaneseq
  %v8063 = vshrl.u32 %v8062, 7
  %v8064 = vsub.s32 %v8061, %v8063
  %v8065 = vrot.slane %v8043, %v8064
  %v8067 = vunpack.c.l.s4 1966171168
  %v8068 = vunpack.c.0.s8 %v8067
  %v8069 = vlaneseq
  %v8070 = vshrl.u32 %v8069, 7
  %v8071 = vsub.s32 %v8068, %v8070
  %v8072 = vrot.slane %v8044, %v8071
  %v8073 = vcombine.low %v8051, %v8058
  %v8074 = vcombine.low %v8065, %v8072
  %v8076 = vunpack.c.l.s4 1966171168
  %v8077 = vunpack.c.0.s8 %v8076
  %v8078 = vlaneseq
  %v8079 = vshrl.u32 %v8078, 7
  %v8080 = vsub.s32 %v8077, %v8079
  %v8081 = vrot.slane %v8073, %v8080
  %v8083 = vunpack.c.l.s4 1966171168
  %v8084 = vunpack.c.0.s8 %v8083
  %v8085 = vlaneseq
  %v8086 = vshrl.u32 %v8085, 7
  %v8087 = vsub.s32 %v8084, %v8086
  %v8088 = vrot.slane %v8074, %v8087
  %v8089 = vcombine.low %v8081, %v8088
  %v8090 = vcombine.low %v3793, %v3797
  %v8091 = vcombine.low %v3801, %v3805
  %v8092 = vcombine.low %v3809, %v3813
  %v8093 = vcombine.low %v3817, %v3821
  %v8095 = vunpack.c.l.s4 1966171168
  %v8096 = vunpack.c.0.s8 %v8095
  %v8097 = vlaneseq
  %v8098 = vshrl.u32 %v8097, 7
  %v8099 = vsub.s32 %v8096, %v8098
  %v8100 = vrot.slane %v8090, %v8099
  %v8102 = vunpack.c.l.s4 1966171168
  %v8103 = vunpack.c.0.s8 %v8102
  %v8104 = vlaneseq
  %v8105 = vshrl.u32 %v8104, 7
  %v8106 = vsub.s32 %v8103, %v8105
  %v8107 = vrot.slane %v8091, %v8106
  %v8109 = vunpack.c.l.s4 1966171168
  %v8110 = vunpack.c.0.s8 %v8109
  %v8111 = vlaneseq
  %v8112 = vshrl.u32 %v8111, 7
  %v8113 = vsub.s32 %v8110, %v8112
  %v8114 = vrot.slane %v8092, %v8113
  %v8116 = vunpack.c.l.s4 1966171168
  %v8117 = vunpack.c.0.s8 %v8116
  %v8118 = vlaneseq
  %v8119 = vshrl.u32 %v8118, 7
  %v8120 = vsub.s32 %v8117, %v8119
  %v8121 = vrot.slane %v8093, %v8120
  %v8122 = vcombine.low %v8100, %v8107
  %v8123 = vcombine.low %v8114, %v8121
  %v8125 = vunpack.c.l.s4 1966171168
  %v8126 = vunpack.c.0.s8 %v8125
  %v8127 = vlaneseq
  %v8128 = vshrl.u32 %v8127, 7
  %v8129 = vsub.s32 %v8126, %v8128
  %v8130 = vrot.slane %v8122, %v8129
  %v8132 = vunpack.c.l.s4 1966171168
  %v8133 = vunpack.c.0.s8 %v8132
  %v8134 = vlaneseq
  %v8135 = vshrl.u32 %v8134, 7
  %v8136 = vsub.s32 %v8133, %v8135
  %v8137 = vrot.slane %v8123, %v8136
  %v8138 = vcombine.low %v8130, %v8137
  %v8139 = vcombine.low %v3825, %v3829
  %v8140 = vcombine.low %v3833, %v3837
  %v8141 = vcombine.low %v3841, %v3845
  %v8142 = vcombine.low %v3849, %v3853
  %v8144 = vunpack.c.l.s4 1966171168
  %v8145 = vunpack.c.0.s8 %v8144
  %v8146 = vlaneseq
  %v8147 = vshrl.u32 %v8146, 7
  %v8148 = vsub.s32 %v8145, %v8147
  %v8149 = vrot.slane %v8139, %v8148
  %v8151 = vunpack.c.l.s4 1966171168
  %v8152 = vunpack.c.0.s8 %v8151
  %v8153 = vlaneseq
  %v8154 = vshrl.u32 %v8153, 7
  %v8155 = vsub.s32 %v8152, %v8154
  %v8156 = vrot.slane %v8140, %v8155
  %v8158 = vunpack.c.l.s4 1966171168
  %v8159 = vunpack.c.0.s8 %v8158
  %v8160 = vlaneseq
  %v8161 = vshrl.u32 %v8160, 7
  %v8162 = vsub.s32 %v8159, %v8161
  %v8163 = vrot.slane %v8141, %v8162
  %v8165 = vunpack.c.l.s4 1966171168
  %v8166 = vunpack.c.0.s8 %v8165
  %v8167 = vlaneseq
  %v8168 = vshrl.u32 %v8167, 7
  %v8169 = vsub.s32 %v8166, %v8168
  %v8170 = vrot.slane %v8142, %v8169
  %v8171 = vcombine.low %v8149, %v8156
  %v8172 = vcombine.low %v8163, %v8170
  %v8174 = vunpack.c.l.s4 1966171168
  %v8175 = vunpack.c.0.s8 %v8174
  %v8176 = vlaneseq
  %v8177 = vshrl.u32 %v8176, 7
  %v8178 = vsub.s32 %v8175, %v8177
  %v8179 = vrot.slane %v8171, %v8178
  %v8181 = vunpack.c.l.s4 1966171168
  %v8182 = vunpack.c.0.s8 %v8181
  %v8183 = vlaneseq
  %v8184 = vshrl.u32 %v8183, 7
  %v8185 = vsub.s32 %v8182, %v8184
  %v8186 = vrot.slane %v8172, %v8185
  %v8187 = vcombine.low %v8179, %v8186
  %v8188 = vcombine.low %v3857, %v3861
  %v8189 = vcombine.low %v3865, %v3869
  %v8190 = vcombine.low %v3873, %v3877
  %v8191 = vcombine.low %v3881, %v3885
  %v8193 = vunpack.c.l.s4 1966171168
  %v8194 = vunpack.c.0.s8 %v8193
  %v8195 = vlaneseq
  %v8196 = vshrl.u32 %v8195, 7
  %v8197 = vsub.s32 %v8194, %v8196
  %v8198 = vrot.slane %v8188, %v8197
  %v8200 = vunpack.c.l.s4 1966171168
  %v8201 = vunpack.c.0.s8 %v8200
  %v8202 = vlaneseq
  %v8203 = vshrl.u32 %v8202, 7
  %v8204 = vsub.s32 %v8201, %v8203
  %v8205 = vrot.slane %v8189, %v8204
  %v8207 = vunpack.c.l.s4 1966171168
  %v8208 = vunpack.c.0.s8 %v8207
  %v8209 = vlaneseq
  %v8210 = vshrl.u32 %v8209, 7
  %v8211 = vsub.s32 %v8208, %v8210
  %v8212 = vrot.slane %v8190, %v8211
  %v8214 = vunpack.c.l.s4 1966171168
  %v8215 = vunpack.c.0.s8 %v8214
  %v8216 = vlaneseq
  %v8217 = vshrl.u32 %v8216, 7
  %v8218 = vsub.s32 %v8215, %v8217
  %v8219 = vrot.slane %v8191, %v8218
  %v8220 = vcombine.low %v8198, %v8205
  %v8221 = vcombine.low %v8212, %v8219
  %v8223 = vunpack.c.l.s4 1966171168
  %v8224 = vunpack.c.0.s8 %v8223
  %v8225 = vlaneseq
  %v8226 = vshrl.u32 %v8225, 7
  %v8227 = vsub.s32 %v8224, %v8226
  %v8228 = vrot.slane %v8220, %v8227
  %v8230 = vunpack.c.l.s4 1966171168
  %v8231 = vunpack.c.0.s8 %v8230
  %v8232 = vlaneseq
  %v8233 = vshrl.u32 %v8232, 7
  %v8234 = vsub.s32 %v8231, %v8233
  %v8235 = vrot.slane %v8221, %v8234
  %v8236 = vcombine.low %v8228, %v8235
  %v8237 = vcombine.low %v3889, %v3893
  %v8238 = vcombine.low %v3897, %v3901
  %v8239 = vcombine.low %v3905, %v3909
  %v8240 = vcombine.low %v3913, %v3917
  %v8242 = vunpack.c.l.s4 1966171168
  %v8243 = vunpack.c.0.s8 %v8242
  %v8244 = vlaneseq
  %v8245 = vshrl.u32 %v8244, 7
  %v8246 = vsub.s32 %v8243, %v8245
  %v8247 = vrot.slane %v8237, %v8246
  %v8249 = vunpack.c.l.s4 1966171168
  %v8250 = vunpack.c.0.s8 %v8249
  %v8251 = vlaneseq
  %v8252 = vshrl.u32 %v8251, 7
  %v8253 = vsub.s32 %v8250, %v8252
  %v8254 = vrot.slane %v8238, %v8253
  %v8256 = vunpack.c.l.s4 1966171168
  %v8257 = vunpack.c.0.s8 %v8256
  %v8258 = vlaneseq
  %v8259 = vshrl.u32 %v8258, 7
  %v8260 = vsub.s32 %v8257, %v8259
  %v8261 = vrot.slane %v8239, %v8260
  %v8263 = vunpack.c.l.s4 1966171168
  %v8264 = vunpack.c.0.s8 %v8263
  %v8265 = vlaneseq
  %v8266 = vshrl.u32 %v8265, 7
  %v8267 = vsub.s32 %v8264, %v8266
  %v8268 = vrot.slane %v8240, %v8267
  %v8269 = vcombine.low %v8247, %v8254
  %v8270 = vcombine.low %v8261, %v8268
  %v8272 = vunpack.c.l.s4 1966171168
  %v8273 = vunpack.c.0.s8 %v8272
  %v8274 = vlaneseq
  %v8275 = vshrl.u32 %v8274, 7
  %v8276 = vsub.s32 %v8273, %v8275
  %v8277 = vrot.slane %v8269, %v8276
  %v8279 = vunpack.c.l.s4 1966171168
  %v8280 = vunpack.c.0.s8 %v8279
  %v8281 = vlaneseq
  %v8282 = vshrl.u32 %v8281, 7
  %v8283 = vsub.s32 %v8280, %v8282
  %v8284 = vrot.slane %v8270, %v8283
  %v8285 = vcombine.low %v8277, %v8284
  %v8286 = vcombine.low %v3921, %v3925
  %v8287 = vcombine.low %v3929, %v3933
  %v8288 = vcombine.low %v3937, %v3941
  %v8289 = vcombine.low %v3945, %v3949
  %v8291 = vunpack.c.l.s4 1966171168
  %v8292 = vunpack.c.0.s8 %v8291
  %v8293 = vlaneseq
  %v8294 = vshrl.u32 %v8293, 7
  %v8295 = vsub.s32 %v8292, %v8294
  %v8296 = vrot.slane %v8286, %v8295
  %v8298 = vunpack.c.l.s4 1966171168
  %v8299 = vunpack.c.0.s8 %v8298
  %v8300 = vlaneseq
  %v8301 = vshrl.u32 %v8300, 7
  %v8302 = vsub.s32 %v8299, %v8301
  %v8303 = vrot.slane %v8287, %v8302
  %v8305 = vunpack.c.l.s4 1966171168
  %v8306 = vunpack.c.0.s8 %v8305
  %v8307 = vlaneseq
  %v8308 = vshrl.u32 %v8307, 7
  %v8309 = vsub.s32 %v8306, %v8308
  %v8310 = vrot.slane %v8288, %v8309
  %v8312 = vunpack.c.l.s4 1966171168
  %v8313 = vunpack.c.0.s8 %v8312
  %v8314 = vlaneseq
  %v8315 = vshrl.u32 %v8314, 7
  %v8316 = vsub.s32 %v8313, %v8315
  %v8317 = vrot.slane %v8289, %v8316
  %v8318 = vcombine.low %v8296, %v8303
  %v8319 = vcombine.low %v8310, %v8317
  %v8321 = vunpack.c.l.s4 1966171168
  %v8322 = vunpack.c.0.s8 %v8321
  %v8323 = vlaneseq
  %v8324 = vshrl.u32 %v8323, 7
  %v8325 = vsub.s32 %v8322, %v8324
  %v8326 = vrot.slane %v8318, %v8325
  %v8328 = vunpack.c.l.s4 1966171168
  %v8329 = vunpack.c.0.s8 %v8328
  %v8330 = vlaneseq
  %v8331 = vshrl.u32 %v8330, 7
  %v8332 = vsub.s32 %v8329, %v8331
  %v8333 = vrot.slane %v8319, %v8332
  %v8334 = vcombine.low %v8326, %v8333
  %v8335 = vcombine.low %v3953, %v3957
  %v8336 = vcombine.low %v3961, %v3965
  %v8337 = vcombine.low %v3969, %v3973
  %v8338 = vcombine.low %v3977, %v3981
  %v8340 = vunpack.c.l.s4 1966171168
  %v8341 = vunpack.c.0.s8 %v8340
  %v8342 = vlaneseq
  %v8343 = vshrl.u32 %v8342, 7
  %v8344 = vsub.s32 %v8341, %v8343
  %v8345 = vrot.slane %v8335, %v8344
  %v8347 = vunpack.c.l.s4 1966171168
  %v8348 = vunpack.c.0.s8 %v8347
  %v8349 = vlaneseq
  %v8350 = vshrl.u32 %v8349, 7
  %v8351 = vsub.s32 %v8348, %v8350
  %v8352 = vrot.slane %v8336, %v8351
  %v8354 = vunpack.c.l.s4 1966171168
  %v8355 = vunpack.c.0.s8 %v8354
  %v8356 = vlaneseq
  %v8357 = vshrl.u32 %v8356, 7
  %v8358 = vsub.s32 %v8355, %v8357
  %v8359 = vrot.slane %v8337, %v8358
  %v8361 = vunpack.c.l.s4 1966171168
  %v8362 = vunpack.c.0.s8 %v8361
  %v8363 = vlaneseq
  %v8364 = vshrl.u32 %v8363, 7
  %v8365 = vsub.s32 %v8362, %v8364
  %v8366 = vrot.slane %v8338, %v8365
  %v8367 = vcombine.low %v8345, %v8352
  %v8368 = vcombine.low %v8359, %v8366
  %v8370 = vunpack.c.l.s4 1966171168
  %v8371 = vunpack.c.0.s8 %v8370
  %v8372 = vlaneseq
  %v8373 = vshrl.u32 %v8372, 7
  %v8374 = vsub.s32 %v8371, %v8373
  %v8375 = vrot.slane %v8367, %v8374
  %v8377 = vunpack.c.l.s4 1966171168
  %v8378 = vunpack.c.0.s8 %v8377
  %v8379 = vlaneseq
  %v8380 = vshrl.u32 %v8379, 7
  %v8381 = vsub.s32 %v8378, %v8380
  %v8382 = vrot.slane %v8368, %v8381
  %v8383 = vcombine.low %v8375, %v8382
  %v8384 = vcombine.low %v3985, %v3989
  %v8385 = vcombine.low %v3993, %v3997
  %v8386 = vcombine.low %v4001, %v4005
  %v8387 = vcombine.low %v4009, %v4013
  %v8389 = vunpack.c.l.s4 1966171168
  %v8390 = vunpack.c.0.s8 %v8389
  %v8391 = vlaneseq
  %v8392 = vshrl.u32 %v8391, 7
  %v8393 = vsub.s32 %v8390, %v8392
  %v8394 = vrot.slane %v8384, %v8393
  %v8396 = vunpack.c.l.s4 1966171168
  %v8397 = vunpack.c.0.s8 %v8396
  %v8398 = vlaneseq
  %v8399 = vshrl.u32 %v8398, 7
  %v8400 = vsub.s32 %v8397, %v8399
  %v8401 = vrot.slane %v8385, %v8400
  %v8403 = vunpack.c.l.s4 1966171168
  %v8404 = vunpack.c.0.s8 %v8403
  %v8405 = vlaneseq
  %v8406 = vshrl.u32 %v8405, 7
  %v8407 = vsub.s32 %v8404, %v8406
  %v8408 = vrot.slane %v8386, %v8407
  %v8410 = vunpack.c.l.s4 1966171168
  %v8411 = vunpack.c.0.s8 %v8410
  %v8412 = vlaneseq
  %v8413 = vshrl.u32 %v8412, 7
  %v8414 = vsub.s32 %v8411, %v8413
  %v8415 = vrot.slane %v8387, %v8414
  %v8416 = vcombine.low %v8394, %v8401
  %v8417 = vcombine.low %v8408, %v8415
  %v8419 = vunpack.c.l.s4 1966171168
  %v8420 = vunpack.c.0.s8 %v8419
  %v8421 = vlaneseq
  %v8422 = vshrl.u32 %v8421, 7
  %v8423 = vsub.s32 %v8420, %v8422
  %v8424 = vrot.slane %v8416, %v8423
  %v8426 = vunpack.c.l.s4 1966171168
  %v8427 = vunpack.c.0.s8 %v8426
  %v8428 = vlaneseq
  %v8429 = vshrl.u32 %v8428, 7
  %v8430 = vsub.s32 %v8427, %v8429
  %v8431 = vrot.slane %v8417, %v8430
  %v8432 = vcombine.low %v8424, %v8431
  %v8433 = vcombine.low %v4017, %v4021
  %v8434 = vcombine.low %v4025, %v4029
  %v8435 = vcombine.low %v4033, %v4037
  %v8436 = vcombine.low %v4041, %v4045
  %v8438 = vunpack.c.l.s4 1966171168
  %v8439 = vunpack.c.0.s8 %v8438
  %v8440 = vlaneseq
  %v8441 = vshrl.u32 %v8440, 7
  %v8442 = vsub.s32 %v8439, %v8441
  %v8443 = vrot.slane %v8433, %v8442
  %v8445 = vunpack.c.l.s4 1966171168
  %v8446 = vunpack.c.0.s8 %v8445
  %v8447 = vlaneseq
  %v8448 = vshrl.u32 %v8447, 7
  %v8449 = vsub.s32 %v8446, %v8448
  %v8450 = vrot.slane %v8434, %v8449
  %v8452 = vunpack.c.l.s4 1966171168
  %v8453 = vunpack.c.0.s8 %v8452
  %v8454 = vlaneseq
  %v8455 = vshrl.u32 %v8454, 7
  %v8456 = vsub.s32 %v8453, %v8455
  %v8457 = vrot.slane %v8435, %v8456
  %v8459 = vunpack.c.l.s4 1966171168
  %v8460 = vunpack.c.0.s8 %v8459
  %v8461 = vlaneseq
  %v8462 = vshrl.u32 %v8461, 7
  %v8463 = vsub.s32 %v8460, %v8462
  %v8464 = vrot.slane %v8436, %v8463
  %v8465 = vcombine.low %v8443, %v8450
  %v8466 = vcombine.low %v8457, %v8464
  %v8468 = vunpack.c.l.s4 1966171168
  %v8469 = vunpack.c.0.s8 %v8468
  %v8470 = vlaneseq
  %v8471 = vshrl.u32 %v8470, 7
  %v8472 = vsub.s32 %v8469, %v8471
  %v8473 = vrot.slane %v8465, %v8472
  %v8475 = vunpack.c.l.s4 1966171168
  %v8476 = vunpack.c.0.s8 %v8475
  %v8477 = vlaneseq
  %v8478 = vshrl.u32 %v8477, 7
  %v8479 = vsub.s32 %v8476, %v8478
  %v8480 = vrot.slane %v8466, %v8479
  %v8481 = vcombine.low %v8473, %v8480
  %v8482 = vcombine.low %v4049, %v4053
  %v8483 = vcombine.low %v4057, %v4061
  %v8484 = vcombine.low %v4065, %v4069
  %v8485 = vcombine.low %v4073, %v4077
  %v8487 = vunpack.c.l.s4 1966171168
  %v8488 = vunpack.c.0.s8 %v8487
  %v8489 = vlaneseq
  %v8490 = vshrl.u32 %v8489, 7
  %v8491 = vsub.s32 %v8488, %v8490
  %v8492 = vrot.slane %v8482, %v8491
  %v8494 = vunpack.c.l.s4 1966171168
  %v8495 = vunpack.c.0.s8 %v8494
  %v8496 = vlaneseq
  %v8497 = vshrl.u32 %v8496, 7
  %v8498 = vsub.s32 %v8495, %v8497
  %v8499 = vrot.slane %v8483, %v8498
  %v8501 = vunpack.c.l.s4 1966171168
  %v8502 = vunpack.c.0.s8 %v8501
  %v8503 = vlaneseq
  %v8504 = vshrl.u32 %v8503, 7
  %v8505 = vsub.s32 %v8502, %v8504
  %v8506 = vrot.slane %v8484, %v8505
  %v8508 = vunpack.c.l.s4 1966171168
  %v8509 = vunpack.c.0.s8 %v8508
  %v8510 = vlaneseq
  %v8511 = vshrl.u32 %v8510, 7
  %v8512 = vsub.s32 %v8509, %v8511
  %v8513 = vrot.slane %v8485, %v8512
  %v8514 = vcombine.low %v8492, %v8499
  %v8515 = vcombine.low %v8506, %v8513
  %v8517 = vunpack.c.l.s4 1966171168
  %v8518 = vunpack.c.0.s8 %v8517
  %v8519 = vlaneseq
  %v8520 = vshrl.u32 %v8519, 7
  %v8521 = vsub.s32 %v8518, %v8520
  %v8522 = vrot.slane %v8514, %v8521
  %v8524 = vunpack.c.l.s4 1966171168
  %v8525 = vunpack.c.0.s8 %v8524
  %v8526 = vlaneseq
  %v8527 = vshrl.u32 %v8526, 7
  %v8528 = vsub.s32 %v8525, %v8527
  %v8529 = vrot.slane %v8515, %v8528
  %v8530 = vcombine.low %v8522, %v8529
  %v8531 = vcombine.low %v4081, %v4085
  %v8532 = vcombine.low %v4089, %v4093
  %v8533 = vcombine.low %v4097, %v4101
  %v8534 = vcombine.low %v4105, %v4109
  %v8536 = vunpack.c.l.s4 1966171168
  %v8537 = vunpack.c.0.s8 %v8536
  %v8538 = vlaneseq
  %v8539 = vshrl.u32 %v8538, 7
  %v8540 = vsub.s32 %v8537, %v8539
  %v8541 = vrot.slane %v8531, %v8540
  %v8543 = vunpack.c.l.s4 1966171168
  %v8544 = vunpack.c.0.s8 %v8543
  %v8545 = vlaneseq
  %v8546 = vshrl.u32 %v8545, 7
  %v8547 = vsub.s32 %v8544, %v8546
  %v8548 = vrot.slane %v8532, %v8547
  %v8550 = vunpack.c.l.s4 1966171168
  %v8551 = vunpack.c.0.s8 %v8550
  %v8552 = vlaneseq
  %v8553 = vshrl.u32 %v8552, 7
  %v8554 = vsub.s32 %v8551, %v8553
  %v8555 = vrot.slane %v8533, %v8554
  %v8557 = vunpack.c.l.s4 1966171168
  %v8558 = vunpack.c.0.s8 %v8557
  %v8559 = vlaneseq
  %v8560 = vshrl.u32 %v8559, 7
  %v8561 = vsub.s32 %v8558, %v8560
  %v8562 = vrot.slane %v8534, %v8561
  %v8563 = vcombine.low %v8541, %v8548
  %v8564 = vcombine.low %v8555, %v8562
  %v8566 = vunpack.c.l.s4 1966171168
  %v8567 = vunpack.c.0.s8 %v8566
  %v8568 = vlaneseq
  %v8569 = vshrl.u32 %v8568, 7
  %v8570 = vsub.s32 %v8567, %v8569
  %v8571 = vrot.slane %v8563, %v8570
  %v8573 = vunpack.c.l.s4 1966171168
  %v8574 = vunpack.c.0.s8 %v8573
  %v8575 = vlaneseq
  %v8576 = vshrl.u32 %v8575, 7
  %v8577 = vsub.s32 %v8574, %v8576
  %v8578 = vrot.slane %v8564, %v8577
  %v8579 = vcombine.low %v8571, %v8578
  %v8580 = vcombine.low %v4113, %v4117
  %v8581 = vcombine.low %v4121, %v4125
  %v8582 = vcombine.low %v4129, %v4133
  %v8583 = vcombine.low %v4137, %v4141
  %v8585 = vunpack.c.l.s4 1966171168
  %v8586 = vunpack.c.0.s8 %v8585
  %v8587 = vlaneseq
  %v8588 = vshrl.u32 %v8587, 7
  %v8589 = vsub.s32 %v8586, %v8588
  %v8590 = vrot.slane %v8580, %v8589
  %v8592 = vunpack.c.l.s4 1966171168
  %v8593 = vunpack.c.0.s8 %v8592
  %v8594 = vlaneseq
  %v8595 = vshrl.u32 %v8594, 7
  %v8596 = vsub.s32 %v8593, %v8595
  %v8597 = vrot.slane %v8581, %v8596
  %v8599 = vunpack.c.l.s4 1966171168
  %v8600 = vunpack.c.0.s8 %v8599
  %v8601 = vlaneseq
  %v8602 = vshrl.u32 %v8601, 7
  %v8603 = vsub.s32 %v8600, %v8602
  %v8604 = vrot.slane %v8582, %v8603
  %v8606 = vunpack.c.l.s4 1966171168
  %v8607 = vunpack.c.0.s8 %v8606
  %v8608 = vlaneseq
  %v8609 = vshrl.u32 %v8608, 7
  %v8610 = vsub.s32 %v8607, %v8609
  %v8611 = vrot.slane %v8583, %v8610
  %v8612 = vcombine.low %v8590, %v8597
  %v8613 = vcombine.low %v8604, %v8611
  %v8615 = vunpack.c.l.s4 1966171168
  %v8616 = vunpack.c.0.s8 %v8615
  %v8617 = vlaneseq
  %v8618 = vshrl.u32 %v8617, 7
  %v8619 = vsub.s32 %v8616, %v8618
  %v8620 = vrot.slane %v8612, %v8619
  %v8622 = vunpack.c.l.s4 1966171168
  %v8623 = vunpack.c.0.s8 %v8622
  %v8624 = vlaneseq
  %v8625 = vshrl.u32 %v8624, 7
  %v8626 = vsub.s32 %v8623, %v8625
  %v8627 = vrot.slane %v8613, %v8626
  %v8628 = vcombine.low %v8620, %v8627
  %v8629 = vcombine.low %v4145, %v4149
  %v8630 = vcombine.low %v4153, %v4157
  %v8631 = vcombine.low %v4161, %v4165
  %v8632 = vcombine.low %v4169, %v4173
  %v8634 = vunpack.c.l.s4 1966171168
  %v8635 = vunpack.c.0.s8 %v8634
  %v8636 = vlaneseq
  %v8637 = vshrl.u32 %v8636, 7
  %v8638 = vsub.s32 %v8635, %v8637
  %v8639 = vrot.slane %v8629, %v8638
  %v8641 = vunpack.c.l.s4 1966171168
  %v8642 = vunpack.c.0.s8 %v8641
  %v8643 = vlaneseq
  %v8644 = vshrl.u32 %v8643, 7
  %v8645 = vsub.s32 %v8642, %v8644
  %v8646 = vrot.slane %v8630, %v8645
  %v8648 = vunpack.c.l.s4 1966171168
  %v8649 = vunpack.c.0.s8 %v8648
  %v8650 = vlaneseq
  %v8651 = vshrl.u32 %v8650, 7
  %v8652 = vsub.s32 %v8649, %v8651
  %v8653 = vrot.slane %v8631, %v8652
  %v8655 = vunpack.c.l.s4 1966171168
  %v8656 = vunpack.c.0.s8 %v8655
  %v8657 = vlaneseq
  %v8658 = vshrl.u32 %v8657, 7
  %v8659 = vsub.s32 %v8656, %v8658
  %v8660 = vrot.slane %v8632, %v8659
  %v8661 = vcombine.low %v8639, %v8646
  %v8662 = vcombine.low %v8653, %v8660
  %v8664 = vunpack.c.l.s4 1966171168
  %v8665 = vunpack.c.0.s8 %v8664
  %v8666 = vlaneseq
  %v8667 = vshrl.u32 %v8666, 7
  %v8668 = vsub.s32 %v8665, %v8667
  %v8669 = vrot.slane %v8661, %v8668
  %v8671 = vunpack.c.l.s4 1966171168
  %v8672 = vunpack.c.0.s8 %v8671
  %v8673 = vlaneseq
  %v8674 = vshrl.u32 %v8673, 7
  %v8675 = vsub.s32 %v8672, %v8674
  %v8676 = vrot.slane %v8662, %v8675
  %v8677 = vcombine.low %v8669, %v8676
  %v8678 = vcombine.low %v4177, %v4181
  %v8679 = vcombine.low %v4185, %v4189
  %v8680 = vcombine.low %v4193, %v4197
  %v8681 = vcombine.low %v4201, %v4205
  %v8683 = vunpack.c.l.s4 1966171168
  %v8684 = vunpack.c.0.s8 %v8683
  %v8685 = vlaneseq
  %v8686 = vshrl.u32 %v8685, 7
  %v8687 = vsub.s32 %v8684, %v8686
  %v8688 = vrot.slane %v8678, %v8687
  %v8690 = vunpack.c.l.s4 1966171168
  %v8691 = vunpack.c.0.s8 %v8690
  %v8692 = vlaneseq
  %v8693 = vshrl.u32 %v8692, 7
  %v8694 = vsub.s32 %v8691, %v8693
  %v8695 = vrot.slane %v8679, %v8694
  %v8697 = vunpack.c.l.s4 1966171168
  %v8698 = vunpack.c.0.s8 %v8697
  %v8699 = vlaneseq
  %v8700 = vshrl.u32 %v8699, 7
  %v8701 = vsub.s32 %v8698, %v8700
  %v8702 = vrot.slane %v8680, %v8701
  %v8704 = vunpack.c.l.s4 1966171168
  %v8705 = vunpack.c.0.s8 %v8704
  %v8706 = vlaneseq
  %v8707 = vshrl.u32 %v8706, 7
  %v8708 = vsub.s32 %v8705, %v8707
  %v8709 = vrot.slane %v8681, %v8708
  %v8710 = vcombine.low %v8688, %v8695
  %v8711 = vcombine.low %v8702, %v8709
  %v8713 = vunpack.c.l.s4 1966171168
  %v8714 = vunpack.c.0.s8 %v8713
  %v8715 = vlaneseq
  %v8716 = vshrl.u32 %v8715, 7
  %v8717 = vsub.s32 %v8714, %v8716
  %v8718 = vrot.slane %v8710, %v8717
  %v8720 = vunpack.c.l.s4 1966171168
  %v8721 = vunpack.c.0.s8 %v8720
  %v8722 = vlaneseq
  %v8723 = vshrl.u32 %v8722, 7
  %v8724 = vsub.s32 %v8721, %v8723
  %v8725 = vrot.slane %v8711, %v8724
  %v8726 = vcombine.low %v8718, %v8725
  %v8727 = vcombine.low %v4209, %v4213
  %v8728 = vcombine.low %v4217, %v4221
  %v8729 = vcombine.low %v4225, %v4229
  %v8730 = vcombine.low %v4233, %v4237
  %v8732 = vunpack.c.l.s4 1966171168
  %v8733 = vunpack.c.0.s8 %v8732
  %v8734 = vlaneseq
  %v8735 = vshrl.u32 %v8734, 7
  %v8736 = vsub.s32 %v8733, %v8735
  %v8737 = vrot.slane %v8727, %v8736
  %v8739 = vunpack.c.l.s4 1966171168
  %v8740 = vunpack.c.0.s8 %v8739
  %v8741 = vlaneseq
  %v8742 = vshrl.u32 %v8741, 7
  %v8743 = vsub.s32 %v8740, %v8742
  %v8744 = vrot.slane %v8728, %v8743
  %v8746 = vunpack.c.l.s4 1966171168
  %v8747 = vunpack.c.0.s8 %v8746
  %v8748 = vlaneseq
  %v8749 = vshrl.u32 %v8748, 7
  %v8750 = vsub.s32 %v8747, %v8749
  %v8751 = vrot.slane %v8729, %v8750
  %v8753 = vunpack.c.l.s4 1966171168
  %v8754 = vunpack.c.0.s8 %v8753
  %v8755 = vlaneseq
  %v8756 = vshrl.u32 %v8755, 7
  %v8757 = vsub.s32 %v8754, %v8756
  %v8758 = vrot.slane %v8730, %v8757
  %v8759 = vcombine.low %v8737, %v8744
  %v8760 = vcombine.low %v8751, %v8758
  %v8762 = vunpack.c.l.s4 1966171168
  %v8763 = vunpack.c.0.s8 %v8762
  %v8764 = vlaneseq
  %v8765 = vshrl.u32 %v8764, 7
  %v8766 = vsub.s32 %v8763, %v8765
  %v8767 = vrot.slane %v8759, %v8766
  %v8769 = vunpack.c.l.s4 1966171168
  %v8770 = vunpack.c.0.s8 %v8769
  %v8771 = vlaneseq
  %v8772 = vshrl.u32 %v8771, 7
  %v8773 = vsub.s32 %v8770, %v8772
  %v8774 = vrot.slane %v8760, %v8773
  %v8775 = vcombine.low %v8767, %v8774
  %v8776 = vcombine.low %v4241, %v4245
  %v8777 = vcombine.low %v4249, %v4253
  %v8778 = vcombine.low %v4257, %v4261
  %v8779 = vcombine.low %v4265, %v4269
  %v8781 = vunpack.c.l.s4 1966171168
  %v8782 = vunpack.c.0.s8 %v8781
  %v8783 = vlaneseq
  %v8784 = vshrl.u32 %v8783, 7
  %v8785 = vsub.s32 %v8782, %v8784
  %v8786 = vrot.slane %v8776, %v8785
  %v8788 = vunpack.c.l.s4 1966171168
  %v8789 = vunpack.c.0.s8 %v8788
  %v8790 = vlaneseq
  %v8791 = vshrl.u32 %v8790, 7
  %v8792 = vsub.s32 %v8789, %v8791
  %v8793 = vrot.slane %v8777, %v8792
  %v8795 = vunpack.c.l.s4 1966171168
  %v8796 = vunpack.c.0.s8 %v8795
  %v8797 = vlaneseq
  %v8798 = vshrl.u32 %v8797, 7
  %v8799 = vsub.s32 %v8796, %v8798
  %v8800 = vrot.slane %v8778, %v8799
  %v8802 = vunpack.c.l.s4 1966171168
  %v8803 = vunpack.c.0.s8 %v8802
  %v8804 = vlaneseq
  %v8805 = vshrl.u32 %v8804, 7
  %v8806 = vsub.s32 %v8803, %v8805
  %v8807 = vrot.slane %v8779, %v8806
  %v8808 = vcombine.low %v8786, %v8793
  %v8809 = vcombine.low %v8800, %v8807
  %v8811 = vunpack.c.l.s4 1966171168
  %v8812 = vunpack.c.0.s8 %v8811
  %v8813 = vlaneseq
  %v8814 = vshrl.u32 %v8813, 7
  %v8815 = vsub.s32 %v8812, %v8814
  %v8816 = vrot.slane %v8808, %v8815
  %v8818 = vunpack.c.l.s4 1966171168
  %v8819 = vunpack.c.0.s8 %v8818
  %v8820 = vlaneseq
  %v8821 = vshrl.u32 %v8820, 7
  %v8822 = vsub.s32 %v8819, %v8821
  %v8823 = vrot.slane %v8809, %v8822
  %v8824 = vcombine.low %v8816, %v8823
  %v8825 = vcombine.low %v4273, %v4277
  %v8826 = vcombine.low %v4281, %v4285
  %v8827 = vcombine.low %v4289, %v4293
  %v8828 = vcombine.low %v4297, %v4301
  %v8830 = vunpack.c.l.s4 1966171168
  %v8831 = vunpack.c.0.s8 %v8830
  %v8832 = vlaneseq
  %v8833 = vshrl.u32 %v8832, 7
  %v8834 = vsub.s32 %v8831, %v8833
  %v8835 = vrot.slane %v8825, %v8834
  %v8837 = vunpack.c.l.s4 1966171168
  %v8838 = vunpack.c.0.s8 %v8837
  %v8839 = vlaneseq
  %v8840 = vshrl.u32 %v8839, 7
  %v8841 = vsub.s32 %v8838, %v8840
  %v8842 = vrot.slane %v8826, %v8841
  %v8844 = vunpack.c.l.s4 1966171168
  %v8845 = vunpack.c.0.s8 %v8844
  %v8846 = vlaneseq
  %v8847 = vshrl.u32 %v8846, 7
  %v8848 = vsub.s32 %v8845, %v8847
  %v8849 = vrot.slane %v8827, %v8848
  %v8851 = vunpack.c.l.s4 1966171168
  %v8852 = vunpack.c.0.s8 %v8851
  %v8853 = vlaneseq
  %v8854 = vshrl.u32 %v8853, 7
  %v8855 = vsub.s32 %v8852, %v8854
  %v8856 = vrot.slane %v8828, %v8855
  %v8857 = vcombine.low %v8835, %v8842
  %v8858 = vcombine.low %v8849, %v8856
  %v8860 = vunpack.c.l.s4 1966171168
  %v8861 = vunpack.c.0.s8 %v8860
  %v8862 = vlaneseq
  %v8863 = vshrl.u32 %v8862, 7
  %v8864 = vsub.s32 %v8861, %v8863
  %v8865 = vrot.slane %v8857, %v8864
  %v8867 = vunpack.c.l.s4 1966171168
  %v8868 = vunpack.c.0.s8 %v8867
  %v8869 = vlaneseq
  %v8870 = vshrl.u32 %v8869, 7
  %v8871 = vsub.s32 %v8868, %v8870
  %v8872 = vrot.slane %v8858, %v8871
  %v8873 = vcombine.low %v8865, %v8872
  %v8874 = vcombine.low %v4305, %v4309
  %v8875 = vcombine.low %v4313, %v4317
  %v8876 = vcombine.low %v4321, %v4325
  %v8877 = vcombine.low %v4329, %v4333
  %v8879 = vunpack.c.l.s4 1966171168
  %v8880 = vunpack.c.0.s8 %v8879
  %v8881 = vlaneseq
  %v8882 = vshrl.u32 %v8881, 7
  %v8883 = vsub.s32 %v8880, %v8882
  %v8884 = vrot.slane %v8874, %v8883
  %v8886 = vunpack.c.l.s4 1966171168
  %v8887 = vunpack.c.0.s8 %v8886
  %v8888 = vlaneseq
  %v8889 = vshrl.u32 %v8888, 7
  %v8890 = vsub.s32 %v8887, %v8889
  %v8891 = vrot.slane %v8875, %v8890
  %v8893 = vunpack.c.l.s4 1966171168
  %v8894 = vunpack.c.0.s8 %v8893
  %v8895 = vlaneseq
  %v8896 = vshrl.u32 %v8895, 7
  %v8897 = vsub.s32 %v8894, %v8896
  %v8898 = vrot.slane %v8876, %v8897
  %v8900 = vunpack.c.l.s4 1966171168
  %v8901 = vunpack.c.0.s8 %v8900
  %v8902 = vlaneseq
  %v8903 = vshrl.u32 %v8902, 7
  %v8904 = vsub.s32 %v8901, %v8903
  %v8905 = vrot.slane %v8877, %v8904
  %v8906 = vcombine.low %v8884, %v8891
  %v8907 = vcombine.low %v8898, %v8905
  %v8909 = vunpack.c.l.s4 1966171168
  %v8910 = vunpack.c.0.s8 %v8909
  %v8911 = vlaneseq
  %v8912 = vshrl.u32 %v8911, 7
  %v8913 = vsub.s32 %v8910, %v8912
  %v8914 = vrot.slane %v8906, %v8913
  %v8916 = vunpack.c.l.s4 1966171168
  %v8917 = vunpack.c.0.s8 %v8916
  %v8918 = vlaneseq
  %v8919 = vshrl.u32 %v8918, 7
  %v8920 = vsub.s32 %v8917, %v8919
  %v8921 = vrot.slane %v8907, %v8920
  %v8922 = vcombine.low %v8914, %v8921
  %v8923 = vcombine.low %v4337, %v4341
  %v8924 = vcombine.low %v4345, %v4349
  %v8925 = vcombine.low %v4353, %v4357
  %v8926 = vcombine.low %v4361, %v4365
  %v8928 = vunpack.c.l.s4 1966171168
  %v8929 = vunpack.c.0.s8 %v8928
  %v8930 = vlaneseq
  %v8931 = vshrl.u32 %v8930, 7
  %v8932 = vsub.s32 %v8929, %v8931
  %v8933 = vrot.slane %v8923, %v8932
  %v8935 = vunpack.c.l.s4 1966171168
  %v8936 = vunpack.c.0.s8 %v8935
  %v8937 = vlaneseq
  %v8938 = vshrl.u32 %v8937, 7
  %v8939 = vsub.s32 %v8936, %v8938
  %v8940 = vrot.slane %v8924, %v8939
  %v8942 = vunpack.c.l.s4 1966171168
  %v8943 = vunpack.c.0.s8 %v8942
  %v8944 = vlaneseq
  %v8945 = vshrl.u32 %v8944, 7
  %v8946 = vsub.s32 %v8943, %v8945
  %v8947 = vrot.slane %v8925, %v8946
  %v8949 = vunpack.c.l.s4 1966171168
  %v8950 = vunpack.c.0.s8 %v8949
  %v8951 = vlaneseq
  %v8952 = vshrl.u32 %v8951, 7
  %v8953 = vsub.s32 %v8950, %v8952
  %v8954 = vrot.slane %v8926, %v8953
  %v8955 = vcombine.low %v8933, %v8940
  %v8956 = vcombine.low %v8947, %v8954
  %v8958 = vunpack.c.l.s4 1966171168
  %v8959 = vunpack.c.0.s8 %v8958
  %v8960 = vlaneseq
  %v8961 = vshrl.u32 %v8960, 7
  %v8962 = vsub.s32 %v8959, %v8961
  %v8963 = vrot.slane %v8955, %v8962
  %v8965 = vunpack.c.l.s4 1966171168
  %v8966 = vunpack.c.0.s8 %v8965
  %v8967 = vlaneseq
  %v8968 = vshrl.u32 %v8967, 7
  %v8969 = vsub.s32 %v8966, %v8968
  %v8970 = vrot.slane %v8956, %v8969
  %v8971 = vcombine.low %v8963, %v8970
  %v8972 = vcombine.low %v4369, %v4373
  %v8973 = vcombine.low %v4377, %v4381
  %v8974 = vcombine.low %v4385, %v4389
  %v8975 = vcombine.low %v4393, %v4397
  %v8977 = vunpack.c.l.s4 1966171168
  %v8978 = vunpack.c.0.s8 %v8977
  %v8979 = vlaneseq
  %v8980 = vshrl.u32 %v8979, 7
  %v8981 = vsub.s32 %v8978, %v8980
  %v8982 = vrot.slane %v8972, %v8981
  %v8984 = vunpack.c.l.s4 1966171168
  %v8985 = vunpack.c.0.s8 %v8984
  %v8986 = vlaneseq
  %v8987 = vshrl.u32 %v8986, 7
  %v8988 = vsub.s32 %v8985, %v8987
  %v8989 = vrot.slane %v8973, %v8988
  %v8991 = vunpack.c.l.s4 1966171168
  %v8992 = vunpack.c.0.s8 %v8991
  %v8993 = vlaneseq
  %v8994 = vshrl.u32 %v8993, 7
  %v8995 = vsub.s32 %v8992, %v8994
  %v8996 = vrot.slane %v8974, %v8995
  %v8998 = vunpack.c.l.s4 1966171168
  %v8999 = vunpack.c.0.s8 %v8998
  %v9000 = vlaneseq
  %v9001 = vshrl.u32 %v9000, 7
  %v9002 = vsub.s32 %v8999, %v9001
  %v9003 = vrot.slane %v8975, %v9002
  %v9004 = vcombine.low %v8982, %v8989
  %v9005 = vcombine.low %v8996, %v9003
  %v9007 = vunpack.c.l.s4 1966171168
  %v9008 = vunpack.c.0.s8 %v9007
  %v9009 = vlaneseq
  %v9010 = vshrl.u32 %v9009, 7
  %v9011 = vsub.s32 %v9008, %v9010
  %v9012 = vrot.slane %v9004, %v9011
  %v9014 = vunpack.c.l.s4 1966171168
  %v9015 = vunpack.c.0.s8 %v9014
  %v9016 = vlaneseq
  %v9017 = vshrl.u32 %v9016, 7
  %v9018 = vsub.s32 %v9015, %v9017
  %v9019 = vrot.slane %v9005, %v9018
  %v9020 = vcombine.low %v9012, %v9019
  %v9021 = vcombine.low %v4401, %v4405
  %v9022 = vcombine.low %v4409, %v4413
  %v9023 = vcombine.low %v4417, %v4421
  %v9024 = vcombine.low %v4425, %v4429
  %v9026 = vunpack.c.l.s4 1966171168
  %v9027 = vunpack.c.0.s8 %v9026
  %v9028 = vlaneseq
  %v9029 = vshrl.u32 %v9028, 7
  %v9030 = vsub.s32 %v9027, %v9029
  %v9031 = vrot.slane %v9021, %v9030
  %v9033 = vunpack.c.l.s4 1966171168
  %v9034 = vunpack.c.0.s8 %v9033
  %v9035 = vlaneseq
  %v9036 = vshrl.u32 %v9035, 7
  %v9037 = vsub.s32 %v9034, %v9036
  %v9038 = vrot.slane %v9022, %v9037
  %v9040 = vunpack.c.l.s4 1966171168
  %v9041 = vunpack.c.0.s8 %v9040
  %v9042 = vlaneseq
  %v9043 = vshrl.u32 %v9042, 7
  %v9044 = vsub.s32 %v9041, %v9043
  %v9045 = vrot.slane %v9023, %v9044
  %v9047 = vunpack.c.l.s4 1966171168
  %v9048 = vunpack.c.0.s8 %v9047
  %v9049 = vlaneseq
  %v9050 = vshrl.u32 %v9049, 7
  %v9051 = vsub.s32 %v9048, %v9050
  %v9052 = vrot.slane %v9024, %v9051
  %v9053 = vcombine.low %v9031, %v9038
  %v9054 = vcombine.low %v9045, %v9052
  %v9056 = vunpack.c.l.s4 1966171168
  %v9057 = vunpack.c.0.s8 %v9056
  %v9058 = vlaneseq
  %v9059 = vshrl.u32 %v9058, 7
  %v9060 = vsub.s32 %v9057, %v9059
  %v9061 = vrot.slane %v9053, %v9060
  %v9063 = vunpack.c.l.s4 1966171168
  %v9064 = vunpack.c.0.s8 %v9063
  %v9065 = vlaneseq
  %v9066 = vshrl.u32 %v9065, 7
  %v9067 = vsub.s32 %v9064, %v9066
  %v9068 = vrot.slane %v9054, %v9067
  %v9069 = vcombine.low %v9061, %v9068
  %v9070 = vcombine.low %v4433, %v4437
  %v9071 = vcombine.low %v4441, %v4445
  %v9072 = vcombine.low %v4449, %v4453
  %v9073 = vcombine.low %v4457, %v4461
  %v9075 = vunpack.c.l.s4 1966171168
  %v9076 = vunpack.c.0.s8 %v9075
  %v9077 = vlaneseq
  %v9078 = vshrl.u32 %v9077, 7
  %v9079 = vsub.s32 %v9076, %v9078
  %v9080 = vrot.slane %v9070, %v9079
  %v9082 = vunpack.c.l.s4 1966171168
  %v9083 = vunpack.c.0.s8 %v9082
  %v9084 = vlaneseq
  %v9085 = vshrl.u32 %v9084, 7
  %v9086 = vsub.s32 %v9083, %v9085
  %v9087 = vrot.slane %v9071, %v9086
  %v9089 = vunpack.c.l.s4 1966171168
  %v9090 = vunpack.c.0.s8 %v9089
  %v9091 = vlaneseq
  %v9092 = vshrl.u32 %v9091, 7
  %v9093 = vsub.s32 %v9090, %v9092
  %v9094 = vrot.slane %v9072, %v9093
  %v9096 = vunpack.c.l.s4 1966171168
  %v9097 = vunpack.c.0.s8 %v9096
  %v9098 = vlaneseq
  %v9099 = vshrl.u32 %v9098, 7
  %v9100 = vsub.s32 %v9097, %v9099
  %v9101 = vrot.slane %v9073, %v9100
  %v9102 = vcombine.low %v9080, %v9087
  %v9103 = vcombine.low %v9094, %v9101
  %v9105 = vunpack.c.l.s4 1966171168
  %v9106 = vunpack.c.0.s8 %v9105
  %v9107 = vlaneseq
  %v9108 = vshrl.u32 %v9107, 7
  %v9109 = vsub.s32 %v9106, %v9108
  %v9110 = vrot.slane %v9102, %v9109
  %v9112 = vunpack.c.l.s4 1966171168
  %v9113 = vunpack.c.0.s8 %v9112
  %v9114 = vlaneseq
  %v9115 = vshrl.u32 %v9114, 7
  %v9116 = vsub.s32 %v9113, %v9115
  %v9117 = vrot.slane %v9103, %v9116
  %v9118 = vcombine.low %v9110, %v9117
  %v9119 = vcombine.low %v4465, %v4469
  %v9120 = vcombine.low %v4473, %v4477
  %v9121 = vcombine.low %v4481, %v4485
  %v9122 = vcombine.low %v4489, %v4493
  %v9124 = vunpack.c.l.s4 1966171168
  %v9125 = vunpack.c.0.s8 %v9124
  %v9126 = vlaneseq
  %v9127 = vshrl.u32 %v9126, 7
  %v9128 = vsub.s32 %v9125, %v9127
  %v9129 = vrot.slane %v9119, %v9128
  %v9131 = vunpack.c.l.s4 1966171168
  %v9132 = vunpack.c.0.s8 %v9131
  %v9133 = vlaneseq
  %v9134 = vshrl.u32 %v9133, 7
  %v9135 = vsub.s32 %v9132, %v9134
  %v9136 = vrot.slane %v9120, %v9135
  %v9138 = vunpack.c.l.s4 1966171168
  %v9139 = vunpack.c.0.s8 %v9138
  %v9140 = vlaneseq
  %v9141 = vshrl.u32 %v9140, 7
  %v9142 = vsub.s32 %v9139, %v9141
  %v9143 = vrot.slane %v9121, %v9142
  %v9145 = vunpack.c.l.s4 1966171168
  %v9146 = vunpack.c.0.s8 %v9145
  %v9147 = vlaneseq
  %v9148 = vshrl.u32 %v9147, 7
  %v9149 = vsub.s32 %v9146, %v9148
  %v9150 = vrot.slane %v9122, %v9149
  %v9151 = vcombine.low %v9129, %v9136
  %v9152 = vcombine.low %v9143, %v9150
  %v9154 = vunpack.c.l.s4 1966171168
  %v9155 = vunpack.c.0.s8 %v9154
  %v9156 = vlaneseq
  %v9157 = vshrl.u32 %v9156, 7
  %v9158 = vsub.s32 %v9155, %v9157
  %v9159 = vrot.slane %v9151, %v9158
  %v9161 = vunpack.c.l.s4 1966171168
  %v9162 = vunpack.c.0.s8 %v9161
  %v9163 = vlaneseq
  %v9164 = vshrl.u32 %v9163, 7
  %v9165 = vsub.s32 %v9162, %v9164
  %v9166 = vrot.slane %v9152, %v9165
  %v9167 = vcombine.low %v9159, %v9166
  %v9168 = vcombine.low %v4497, %v4501
  %v9169 = vcombine.low %v4505, %v4509
  %v9170 = vcombine.low %v4513, %v4517
  %v9171 = vcombine.low %v4521, %v4525
  %v9173 = vunpack.c.l.s4 1966171168
  %v9174 = vunpack.c.0.s8 %v9173
  %v9175 = vlaneseq
  %v9176 = vshrl.u32 %v9175, 7
  %v9177 = vsub.s32 %v9174, %v9176
  %v9178 = vrot.slane %v9168, %v9177
  %v9180 = vunpack.c.l.s4 1966171168
  %v9181 = vunpack.c.0.s8 %v9180
  %v9182 = vlaneseq
  %v9183 = vshrl.u32 %v9182, 7
  %v9184 = vsub.s32 %v9181, %v9183
  %v9185 = vrot.slane %v9169, %v9184
  %v9187 = vunpack.c.l.s4 1966171168
  %v9188 = vunpack.c.0.s8 %v9187
  %v9189 = vlaneseq
  %v9190 = vshrl.u32 %v9189, 7
  %v9191 = vsub.s32 %v9188, %v9190
  %v9192 = vrot.slane %v9170, %v9191
  %v9194 = vunpack.c.l.s4 1966171168
  %v9195 = vunpack.c.0.s8 %v9194
  %v9196 = vlaneseq
  %v9197 = vshrl.u32 %v9196, 7
  %v9198 = vsub.s32 %v9195, %v9197
  %v9199 = vrot.slane %v9171, %v9198
  %v9200 = vcombine.low %v9178, %v9185
  %v9201 = vcombine.low %v9192, %v9199
  %v9203 = vunpack.c.l.s4 1966171168
  %v9204 = vunpack.c.0.s8 %v9203
  %v9205 = vlaneseq
  %v9206 = vshrl.u32 %v9205, 7
  %v9207 = vsub.s32 %v9204, %v9206
  %v9208 = vrot.slane %v9200, %v9207
  %v9210 = vunpack.c.l.s4 1966171168
  %v9211 = vunpack.c.0.s8 %v9210
  %v9212 = vlaneseq
  %v9213 = vshrl.u32 %v9212, 7
  %v9214 = vsub.s32 %v9211, %v9213
  %v9215 = vrot.slane %v9201, %v9214
  %v9216 = vcombine.low %v9208, %v9215
  %v9217 = vcombine.low %v4529, %v4533
  %v9218 = vcombine.low %v4537, %v4541
  %v9219 = vcombine.low %v4545, %v4549
  %v9220 = vcombine.low %v4553, %v4557
  %v9222 = vunpack.c.l.s4 1966171168
  %v9223 = vunpack.c.0.s8 %v9222
  %v9224 = vlaneseq
  %v9225 = vshrl.u32 %v9224, 7
  %v9226 = vsub.s32 %v9223, %v9225
  %v9227 = vrot.slane %v9217, %v9226
  %v9229 = vunpack.c.l.s4 1966171168
  %v9230 = vunpack.c.0.s8 %v9229
  %v9231 = vlaneseq
  %v9232 = vshrl.u32 %v9231, 7
  %v9233 = vsub.s32 %v9230, %v9232
  %v9234 = vrot.slane %v9218, %v9233
  %v9236 = vunpack.c.l.s4 1966171168
  %v9237 = vunpack.c.0.s8 %v9236
  %v9238 = vlaneseq
  %v9239 = vshrl.u32 %v9238, 7
  %v9240 = vsub.s32 %v9237, %v9239
  %v9241 = vrot.slane %v9219, %v9240
  %v9243 = vunpack.c.l.s4 1966171168
  %v9244 = vunpack.c.0.s8 %v9243
  %v9245 = vlaneseq
  %v9246 = vshrl.u32 %v9245, 7
  %v9247 = vsub.s32 %v9244, %v9246
  %v9248 = vrot.slane %v9220, %v9247
  %v9249 = vcombine.low %v9227, %v9234
  %v9250 = vcombine.low %v9241, %v9248
  %v9252 = vunpack.c.l.s4 1966171168
  %v9253 = vunpack.c.0.s8 %v9252
  %v9254 = vlaneseq
  %v9255 = vshrl.u32 %v9254, 7
  %v9256 = vsub.s32 %v9253, %v9255
  %v9257 = vrot.slane %v9249, %v9256
  %v9259 = vunpack.c.l.s4 1966171168
  %v9260 = vunpack.c.0.s8 %v9259
  %v9261 = vlaneseq
  %v9262 = vshrl.u32 %v9261, 7
  %v9263 = vsub.s32 %v9260, %v9262
  %v9264 = vrot.slane %v9250, %v9263
  %v9265 = vcombine.low %v9257, %v9264
  %v9266 = vcombine.low %v4561, %v4565
  %v9267 = vcombine.low %v4569, %v4573
  %v9268 = vcombine.low %v4577, %v4581
  %v9269 = vcombine.low %v4585, %v4589
  %v9271 = vunpack.c.l.s4 1966171168
  %v9272 = vunpack.c.0.s8 %v9271
  %v9273 = vlaneseq
  %v9274 = vshrl.u32 %v9273, 7
  %v9275 = vsub.s32 %v9272, %v9274
  %v9276 = vrot.slane %v9266, %v9275
  %v9278 = vunpack.c.l.s4 1966171168
  %v9279 = vunpack.c.0.s8 %v9278
  %v9280 = vlaneseq
  %v9281 = vshrl.u32 %v9280, 7
  %v9282 = vsub.s32 %v9279, %v9281
  %v9283 = vrot.slane %v9267, %v9282
  %v9285 = vunpack.c.l.s4 1966171168
  %v9286 = vunpack.c.0.s8 %v9285
  %v9287 = vlaneseq
  %v9288 = vshrl.u32 %v9287, 7
  %v9289 = vsub.s32 %v9286, %v9288
  %v9290 = vrot.slane %v9268, %v9289
  %v9292 = vunpack.c.l.s4 1966171168
  %v9293 = vunpack.c.0.s8 %v9292
  %v9294 = vlaneseq
  %v9295 = vshrl.u32 %v9294, 7
  %v9296 = vsub.s32 %v9293, %v9295
  %v9297 = vrot.slane %v9269, %v9296
  %v9298 = vcombine.low %v9276, %v9283
  %v9299 = vcombine.low %v9290, %v9297
  %v9301 = vunpack.c.l.s4 1966171168
  %v9302 = vunpack.c.0.s8 %v9301
  %v9303 = vlaneseq
  %v9304 = vshrl.u32 %v9303, 7
  %v9305 = vsub.s32 %v9302, %v9304
  %v9306 = vrot.slane %v9298, %v9305
  %v9308 = vunpack.c.l.s4 1966171168
  %v9309 = vunpack.c.0.s8 %v9308
  %v9310 = vlaneseq
  %v9311 = vshrl.u32 %v9310, 7
  %v9312 = vsub.s32 %v9309, %v9311
  %v9313 = vrot.slane %v9299, %v9312
  %v9314 = vcombine.low %v9306, %v9313
  %v9315 = vcombine.low %v4593, %v4597
  %v9316 = vcombine.low %v4601, %v4605
  %v9317 = vcombine.low %v4609, %v4613
  %v9318 = vcombine.low %v4617, %v4621
  %v9320 = vunpack.c.l.s4 1966171168
  %v9321 = vunpack.c.0.s8 %v9320
  %v9322 = vlaneseq
  %v9323 = vshrl.u32 %v9322, 7
  %v9324 = vsub.s32 %v9321, %v9323
  %v9325 = vrot.slane %v9315, %v9324
  %v9327 = vunpack.c.l.s4 1966171168
  %v9328 = vunpack.c.0.s8 %v9327
  %v9329 = vlaneseq
  %v9330 = vshrl.u32 %v9329, 7
  %v9331 = vsub.s32 %v9328, %v9330
  %v9332 = vrot.slane %v9316, %v9331
  %v9334 = vunpack.c.l.s4 1966171168
  %v9335 = vunpack.c.0.s8 %v9334
  %v9336 = vlaneseq
  %v9337 = vshrl.u32 %v9336, 7
  %v9338 = vsub.s32 %v9335, %v9337
  %v9339 = vrot.slane %v9317, %v9338
  %v9341 = vunpack.c.l.s4 1966171168
  %v9342 = vunpack.c.0.s8 %v9341
  %v9343 = vlaneseq
  %v9344 = vshrl.u32 %v9343, 7
  %v9345 = vsub.s32 %v9342, %v9344
  %v9346 = vrot.slane %v9318, %v9345
  %v9347 = vcombine.low %v9325, %v9332
  %v9348 = vcombine.low %v9339, %v9346
  %v9350 = vunpack.c.l.s4 1966171168
  %v9351 = vunpack.c.0.s8 %v9350
  %v9352 = vlaneseq
  %v9353 = vshrl.u32 %v9352, 7
  %v9354 = vsub.s32 %v9351, %v9353
  %v9355 = vrot.slane %v9347, %v9354
  %v9357 = vunpack.c.l.s4 1966171168
  %v9358 = vunpack.c.0.s8 %v9357
  %v9359 = vlaneseq
  %v9360 = vshrl.u32 %v9359, 7
  %v9361 = vsub.s32 %v9358, %v9360
  %v9362 = vrot.slane %v9348, %v9361
  %v9363 = vcombine.low %v9355, %v9362
  %v9364 = vcombine.low %v4625, %v4629
  %v9365 = vcombine.low %v4633, %v4637
  %v9366 = vcombine.low %v4641, %v4645
  %v9367 = vcombine.low %v4649, %v4653
  %v9369 = vunpack.c.l.s4 1966171168
  %v9370 = vunpack.c.0.s8 %v9369
  %v9371 = vlaneseq
  %v9372 = vshrl.u32 %v9371, 7
  %v9373 = vsub.s32 %v9370, %v9372
  %v9374 = vrot.slane %v9364, %v9373
  %v9376 = vunpack.c.l.s4 1966171168
  %v9377 = vunpack.c.0.s8 %v9376
  %v9378 = vlaneseq
  %v9379 = vshrl.u32 %v9378, 7
  %v9380 = vsub.s32 %v9377, %v9379
  %v9381 = vrot.slane %v9365, %v9380
  %v9383 = vunpack.c.l.s4 1966171168
  %v9384 = vunpack.c.0.s8 %v9383
  %v9385 = vlaneseq
  %v9386 = vshrl.u32 %v9385, 7
  %v9387 = vsub.s32 %v9384, %v9386
  %v9388 = vrot.slane %v9366, %v9387
  %v9390 = vunpack.c.l.s4 1966171168
  %v9391 = vunpack.c.0.s8 %v9390
  %v9392 = vlaneseq
  %v9393 = vshrl.u32 %v9392, 7
  %v9394 = vsub.s32 %v9391, %v9393
  %v9395 = vrot.slane %v9367, %v9394
  %v9396 = vcombine.low %v9374, %v9381
  %v9397 = vcombine.low %v9388, %v9395
  %v9399 = vunpack.c.l.s4 1966171168
  %v9400 = vunpack.c.0.s8 %v9399
  %v9401 = vlaneseq
  %v9402 = vshrl.u32 %v9401, 7
  %v9403 = vsub.s32 %v9400, %v9402
  %v9404 = vrot.slane %v9396, %v9403
  %v9406 = vunpack.c.l.s4 1966171168
  %v9407 = vunpack.c.0.s8 %v9406
  %v9408 = vlaneseq
  %v9409 = vshrl.u32 %v9408, 7
  %v9410 = vsub.s32 %v9407, %v9409
  %v9411 = vrot.slane %v9397, %v9410
  %v9412 = vcombine.low %v9404, %v9411
  %v9413 = vcombine.low %v4657, %v4661
  %v9414 = vcombine.low %v4665, %v4669
  %v9415 = vcombine.low %v4673, %v4677
  %v9416 = vcombine.low %v4681, %v4685
  %v9418 = vunpack.c.l.s4 1966171168
  %v9419 = vunpack.c.0.s8 %v9418
  %v9420 = vlaneseq
  %v9421 = vshrl.u32 %v9420, 7
  %v9422 = vsub.s32 %v9419, %v9421
  %v9423 = vrot.slane %v9413, %v9422
  %v9425 = vunpack.c.l.s4 1966171168
  %v9426 = vunpack.c.0.s8 %v9425
  %v9427 = vlaneseq
  %v9428 = vshrl.u32 %v9427, 7
  %v9429 = vsub.s32 %v9426, %v9428
  %v9430 = vrot.slane %v9414, %v9429
  %v9432 = vunpack.c.l.s4 1966171168
  %v9433 = vunpack.c.0.s8 %v9432
  %v9434 = vlaneseq
  %v9435 = vshrl.u32 %v9434, 7
  %v9436 = vsub.s32 %v9433, %v9435
  %v9437 = vrot.slane %v9415, %v9436
  %v9439 = vunpack.c.l.s4 1966171168
  %v9440 = vunpack.c.0.s8 %v9439
  %v9441 = vlaneseq
  %v9442 = vshrl.u32 %v9441, 7
  %v9443 = vsub.s32 %v9440, %v9442
  %v9444 = vrot.slane %v9416, %v9443
  %v9445 = vcombine.low %v9423, %v9430
  %v9446 = vcombine.low %v9437, %v9444
  %v9448 = vunpack.c.l.s4 1966171168
  %v9449 = vunpack.c.0.s8 %v9448
  %v9450 = vlaneseq
  %v9451 = vshrl.u32 %v9450, 7
  %v9452 = vsub.s32 %v9449, %v9451
  %v9453 = vrot.slane %v9445, %v9452
  %v9455 = vunpack.c.l.s4 1966171168
  %v9456 = vunpack.c.0.s8 %v9455
  %v9457 = vlaneseq
  %v9458 = vshrl.u32 %v9457, 7
  %v9459 = vsub.s32 %v9456, %v9458
  %v9460 = vrot.slane %v9446, %v9459
  %v9461 = vcombine.low %v9453, %v9460
  %v9462 = vcombine.low %v4689, %v4693
  %v9463 = vcombine.low %v4697, %v4701
  %v9464 = vcombine.low %v4705, %v4709
  %v9465 = vcombine.low %v4713, %v4717
  %v9467 = vunpack.c.l.s4 1966171168
  %v9468 = vunpack.c.0.s8 %v9467
  %v9469 = vlaneseq
  %v9470 = vshrl.u32 %v9469, 7
  %v9471 = vsub.s32 %v9468, %v9470
  %v9472 = vrot.slane %v9462, %v9471
  %v9474 = vunpack.c.l.s4 1966171168
  %v9475 = vunpack.c.0.s8 %v9474
  %v9476 = vlaneseq
  %v9477 = vshrl.u32 %v9476, 7
  %v9478 = vsub.s32 %v9475, %v9477
  %v9479 = vrot.slane %v9463, %v9478
  %v9481 = vunpack.c.l.s4 1966171168
  %v9482 = vunpack.c.0.s8 %v9481
  %v9483 = vlaneseq
  %v9484 = vshrl.u32 %v9483, 7
  %v9485 = vsub.s32 %v9482, %v9484
  %v9486 = vrot.slane %v9464, %v9485
  %v9488 = vunpack.c.l.s4 1966171168
  %v9489 = vunpack.c.0.s8 %v9488
  %v9490 = vlaneseq
  %v9491 = vshrl.u32 %v9490, 7
  %v9492 = vsub.s32 %v9489, %v9491
  %v9493 = vrot.slane %v9465, %v9492
  %v9494 = vcombine.low %v9472, %v9479
  %v9495 = vcombine.low %v9486, %v9493
  %v9497 = vunpack.c.l.s4 1966171168
  %v9498 = vunpack.c.0.s8 %v9497
  %v9499 = vlaneseq
  %v9500 = vshrl.u32 %v9499, 7
  %v9501 = vsub.s32 %v9498, %v9500
  %v9502 = vrot.slane %v9494, %v9501
  %v9504 = vunpack.c.l.s4 1966171168
  %v9505 = vunpack.c.0.s8 %v9504
  %v9506 = vlaneseq
  %v9507 = vshrl.u32 %v9506, 7
  %v9508 = vsub.s32 %v9505, %v9507
  %v9509 = vrot.slane %v9495, %v9508
  %v9510 = vcombine.low %v9502, %v9509
  %v9511 = vcombine.low %v4721, %v4725
  %v9512 = vcombine.low %v4729, %v4733
  %v9513 = vcombine.low %v4737, %v4741
  %v9514 = vcombine.low %v4745, %v4749
  %v9516 = vunpack.c.l.s4 1966171168
  %v9517 = vunpack.c.0.s8 %v9516
  %v9518 = vlaneseq
  %v9519 = vshrl.u32 %v9518, 7
  %v9520 = vsub.s32 %v9517, %v9519
  %v9521 = vrot.slane %v9511, %v9520
  %v9523 = vunpack.c.l.s4 1966171168
  %v9524 = vunpack.c.0.s8 %v9523
  %v9525 = vlaneseq
  %v9526 = vshrl.u32 %v9525, 7
  %v9527 = vsub.s32 %v9524, %v9526
  %v9528 = vrot.slane %v9512, %v9527
  %v9530 = vunpack.c.l.s4 1966171168
  %v9531 = vunpack.c.0.s8 %v9530
  %v9532 = vlaneseq
  %v9533 = vshrl.u32 %v9532, 7
  %v9534 = vsub.s32 %v9531, %v9533
  %v9535 = vrot.slane %v9513, %v9534
  %v9537 = vunpack.c.l.s4 1966171168
  %v9538 = vunpack.c.0.s8 %v9537
  %v9539 = vlaneseq
  %v9540 = vshrl.u32 %v9539, 7
  %v9541 = vsub.s32 %v9538, %v9540
  %v9542 = vrot.slane %v9514, %v9541
  %v9543 = vcombine.low %v9521, %v9528
  %v9544 = vcombine.low %v9535, %v9542
  %v9546 = vunpack.c.l.s4 1966171168
  %v9547 = vunpack.c.0.s8 %v9546
  %v9548 = vlaneseq
  %v9549 = vshrl.u32 %v9548, 7
  %v9550 = vsub.s32 %v9547, %v9549
  %v9551 = vrot.slane %v9543, %v9550
  %v9553 = vunpack.c.l.s4 1966171168
  %v9554 = vunpack.c.0.s8 %v9553
  %v9555 = vlaneseq
  %v9556 = vshrl.u32 %v9555, 7
  %v9557 = vsub.s32 %v9554, %v9556
  %v9558 = vrot.slane %v9544, %v9557
  %v9559 = vcombine.low %v9551, %v9558
  %v9560 = vcombine.low %v4753, %v4757
  %v9561 = vcombine.low %v4761, %v4765
  %v9562 = vcombine.low %v4769, %v4773
  %v9563 = vcombine.low %v4777, %v4781
  %v9565 = vunpack.c.l.s4 1966171168
  %v9566 = vunpack.c.0.s8 %v9565
  %v9567 = vlaneseq
  %v9568 = vshrl.u32 %v9567, 7
  %v9569 = vsub.s32 %v9566, %v9568
  %v9570 = vrot.slane %v9560, %v9569
  %v9572 = vunpack.c.l.s4 1966171168
  %v9573 = vunpack.c.0.s8 %v9572
  %v9574 = vlaneseq
  %v9575 = vshrl.u32 %v9574, 7
  %v9576 = vsub.s32 %v9573, %v9575
  %v9577 = vrot.slane %v9561, %v9576
  %v9579 = vunpack.c.l.s4 1966171168
  %v9580 = vunpack.c.0.s8 %v9579
  %v9581 = vlaneseq
  %v9582 = vshrl.u32 %v9581, 7
  %v9583 = vsub.s32 %v9580, %v9582
  %v9584 = vrot.slane %v9562, %v9583
  %v9586 = vunpack.c.l.s4 1966171168
  %v9587 = vunpack.c.0.s8 %v9586
  %v9588 = vlaneseq
  %v9589 = vshrl.u32 %v9588, 7
  %v9590 = vsub.s32 %v9587, %v9589
  %v9591 = vrot.slane %v9563, %v9590
  %v9592 = vcombine.low %v9570, %v9577
  %v9593 = vcombine.low %v9584, %v9591
  %v9595 = vunpack.c.l.s4 1966171168
  %v9596 = vunpack.c.0.s8 %v9595
  %v9597 = vlaneseq
  %v9598 = vshrl.u32 %v9597, 7
  %v9599 = vsub.s32 %v9596, %v9598
  %v9600 = vrot.slane %v9592, %v9599
  %v9602 = vunpack.c.l.s4 1966171168
  %v9603 = vunpack.c.0.s8 %v9602
  %v9604 = vlaneseq
  %v9605 = vshrl.u32 %v9604, 7
  %v9606 = vsub.s32 %v9603, %v9605
  %v9607 = vrot.slane %v9593, %v9606
  %v9608 = vcombine.low %v9600, %v9607
  %v9609 = vcombine.low %v4785, %v4789
  %v9610 = vcombine.low %v4793, %v4797
  %v9611 = vcombine.low %v4801, %v4805
  %v9612 = vcombine.low %v4809, %v4813
  %v9614 = vunpack.c.l.s4 1966171168
  %v9615 = vunpack.c.0.s8 %v9614
  %v9616 = vlaneseq
  %v9617 = vshrl.u32 %v9616, 7
  %v9618 = vsub.s32 %v9615, %v9617
  %v9619 = vrot.slane %v9609, %v9618
  %v9621 = vunpack.c.l.s4 1966171168
  %v9622 = vunpack.c.0.s8 %v9621
  %v9623 = vlaneseq
  %v9624 = vshrl.u32 %v9623, 7
  %v9625 = vsub.s32 %v9622, %v9624
  %v9626 = vrot.slane %v9610, %v9625
  %v9628 = vunpack.c.l.s4 1966171168
  %v9629 = vunpack.c.0.s8 %v9628
  %v9630 = vlaneseq
  %v9631 = vshrl.u32 %v9630, 7
  %v9632 = vsub.s32 %v9629, %v9631
  %v9633 = vrot.slane %v9611, %v9632
  %v9635 = vunpack.c.l.s4 1966171168
  %v9636 = vunpack.c.0.s8 %v9635
  %v9637 = vlaneseq
  %v9638 = vshrl.u32 %v9637, 7
  %v9639 = vsub.s32 %v9636, %v9638
  %v9640 = vrot.slane %v9612, %v9639
  %v9641 = vcombine.low %v9619, %v9626
  %v9642 = vcombine.low %v9633, %v9640
  %v9644 = vunpack.c.l.s4 1966171168
  %v9645 = vunpack.c.0.s8 %v9644
  %v9646 = vlaneseq
  %v9647 = vshrl.u32 %v9646, 7
  %v9648 = vsub.s32 %v9645, %v9647
  %v9649 = vrot.slane %v9641, %v9648
  %v9651 = vunpack.c.l.s4 1966171168
  %v9652 = vunpack.c.0.s8 %v9651
  %v9653 = vlaneseq
  %v9654 = vshrl.u32 %v9653, 7
  %v9655 = vsub.s32 %v9652, %v9654
  %v9656 = vrot.slane %v9642, %v9655
  %v9657 = vcombine.low %v9649, %v9656
  %v9658 = vcombine.low %v4817, %v4821
  %v9659 = vcombine.low %v4825, %v4829
  %v9660 = vcombine.low %v4833, %v4837
  %v9661 = vcombine.low %v4841, %v4845
  %v9663 = vunpack.c.l.s4 1966171168
  %v9664 = vunpack.c.0.s8 %v9663
  %v9665 = vlaneseq
  %v9666 = vshrl.u32 %v9665, 7
  %v9667 = vsub.s32 %v9664, %v9666
  %v9668 = vrot.slane %v9658, %v9667
  %v9670 = vunpack.c.l.s4 1966171168
  %v9671 = vunpack.c.0.s8 %v9670
  %v9672 = vlaneseq
  %v9673 = vshrl.u32 %v9672, 7
  %v9674 = vsub.s32 %v9671, %v9673
  %v9675 = vrot.slane %v9659, %v9674
  %v9677 = vunpack.c.l.s4 1966171168
  %v9678 = vunpack.c.0.s8 %v9677
  %v9679 = vlaneseq
  %v9680 = vshrl.u32 %v9679, 7
  %v9681 = vsub.s32 %v9678, %v9680
  %v9682 = vrot.slane %v9660, %v9681
  %v9684 = vunpack.c.l.s4 1966171168
  %v9685 = vunpack.c.0.s8 %v9684
  %v9686 = vlaneseq
  %v9687 = vshrl.u32 %v9686, 7
  %v9688 = vsub.s32 %v9685, %v9687
  %v9689 = vrot.slane %v9661, %v9688
  %v9690 = vcombine.low %v9668, %v9675
  %v9691 = vcombine.low %v9682, %v9689
  %v9693 = vunpack.c.l.s4 1966171168
  %v9694 = vunpack.c.0.s8 %v9693
  %v9695 = vlaneseq
  %v9696 = vshrl.u32 %v9695, 7
  %v9697 = vsub.s32 %v9694, %v9696
  %v9698 = vrot.slane %v9690, %v9697
  %v9700 = vunpack.c.l.s4 1966171168
  %v9701 = vunpack.c.0.s8 %v9700
  %v9702 = vlaneseq
  %v9703 = vshrl.u32 %v9702, 7
  %v9704 = vsub.s32 %v9701, %v9703
  %v9705 = vrot.slane %v9691, %v9704
  %v9706 = vcombine.low %v9698, %v9705
  %v9707 = vcombine.low %v4849, %v4853
  %v9708 = vcombine.low %v4857, %v4861
  %v9709 = vcombine.low %v4865, %v4869
  %v9710 = vcombine.low %v4873, %v4877
  %v9712 = vunpack.c.l.s4 1966171168
  %v9713 = vunpack.c.0.s8 %v9712
  %v9714 = vlaneseq
  %v9715 = vshrl.u32 %v9714, 7
  %v9716 = vsub.s32 %v9713, %v9715
  %v9717 = vrot.slane %v9707, %v9716
  %v9719 = vunpack.c.l.s4 1966171168
  %v9720 = vunpack.c.0.s8 %v9719
  %v9721 = vlaneseq
  %v9722 = vshrl.u32 %v9721, 7
  %v9723 = vsub.s32 %v9720, %v9722
  %v9724 = vrot.slane %v9708, %v9723
  %v9726 = vunpack.c.l.s4 1966171168
  %v9727 = vunpack.c.0.s8 %v9726
  %v9728 = vlaneseq
  %v9729 = vshrl.u32 %v9728, 7
  %v9730 = vsub.s32 %v9727, %v9729
  %v9731 = vrot.slane %v9709, %v9730
  %v9733 = vunpack.c.l.s4 1966171168
  %v9734 = vunpack.c.0.s8 %v9733
  %v9735 = vlaneseq
  %v9736 = vshrl.u32 %v9735, 7
  %v9737 = vsub.s32 %v9734, %v9736
  %v9738 = vrot.slane %v9710, %v9737
  %v9739 = vcombine.low %v9717, %v9724
  %v9740 = vcombine.low %v9731, %v9738
  %v9742 = vunpack.c.l.s4 1966171168
  %v9743 = vunpack.c.0.s8 %v9742
  %v9744 = vlaneseq
  %v9745 = vshrl.u32 %v9744, 7
  %v9746 = vsub.s32 %v9743, %v9745
  %v9747 = vrot.slane %v9739, %v9746
  %v9749 = vunpack.c.l.s4 1966171168
  %v9750 = vunpack.c.0.s8 %v9749
  %v9751 = vlaneseq
  %v9752 = vshrl.u32 %v9751, 7
  %v9753 = vsub.s32 %v9750, %v9752
  %v9754 = vrot.slane %v9740, %v9753
  %v9755 = vcombine.low %v9747, %v9754
  %v9756 = vcombine.low %v4881, %v4885
  %v9757 = vcombine.low %v4889, %v4893
  %v9758 = vcombine.low %v4897, %v4901
  %v9759 = vcombine.low %v4905, %v4909
  %v9761 = vunpack.c.l.s4 1966171168
  %v9762 = vunpack.c.0.s8 %v9761
  %v9763 = vlaneseq
  %v9764 = vshrl.u32 %v9763, 7
  %v9765 = vsub.s32 %v9762, %v9764
  %v9766 = vrot.slane %v9756, %v9765
  %v9768 = vunpack.c.l.s4 1966171168
  %v9769 = vunpack.c.0.s8 %v9768
  %v9770 = vlaneseq
  %v9771 = vshrl.u32 %v9770, 7
  %v9772 = vsub.s32 %v9769, %v9771
  %v9773 = vrot.slane %v9757, %v9772
  %v9775 = vunpack.c.l.s4 1966171168
  %v9776 = vunpack.c.0.s8 %v9775
  %v9777 = vlaneseq
  %v9778 = vshrl.u32 %v9777, 7
  %v9779 = vsub.s32 %v9776, %v9778
  %v9780 = vrot.slane %v9758, %v9779
  %v9782 = vunpack.c.l.s4 1966171168
  %v9783 = vunpack.c.0.s8 %v9782
  %v9784 = vlaneseq
  %v9785 = vshrl.u32 %v9784, 7
  %v9786 = vsub.s32 %v9783, %v9785
  %v9787 = vrot.slane %v9759, %v9786
  %v9788 = vcombine.low %v9766, %v9773
  %v9789 = vcombine.low %v9780, %v9787
  %v9791 = vunpack.c.l.s4 1966171168
  %v9792 = vunpack.c.0.s8 %v9791
  %v9793 = vlaneseq
  %v9794 = vshrl.u32 %v9793, 7
  %v9795 = vsub.s32 %v9792, %v9794
  %v9796 = vrot.slane %v9788, %v9795
  %v9798 = vunpack.c.l.s4 1966171168
  %v9799 = vunpack.c.0.s8 %v9798
  %v9800 = vlaneseq
  %v9801 = vshrl.u32 %v9800, 7
  %v9802 = vsub.s32 %v9799, %v9801
  %v9803 = vrot.slane %v9789, %v9802
  %v9804 = vcombine.low %v9796, %v9803
  %v9805 = vcombine.low %v4913, %v4917
  %v9806 = vcombine.low %v4921, %v4925
  %v9807 = vcombine.low %v4929, %v4933
  %v9808 = vcombine.low %v4937, %v4941
  %v9810 = vunpack.c.l.s4 1966171168
  %v9811 = vunpack.c.0.s8 %v9810
  %v9812 = vlaneseq
  %v9813 = vshrl.u32 %v9812, 7
  %v9814 = vsub.s32 %v9811, %v9813
  %v9815 = vrot.slane %v9805, %v9814
  %v9817 = vunpack.c.l.s4 1966171168
  %v9818 = vunpack.c.0.s8 %v9817
  %v9819 = vlaneseq
  %v9820 = vshrl.u32 %v9819, 7
  %v9821 = vsub.s32 %v9818, %v9820
  %v9822 = vrot.slane %v9806, %v9821
  %v9824 = vunpack.c.l.s4 1966171168
  %v9825 = vunpack.c.0.s8 %v9824
  %v9826 = vlaneseq
  %v9827 = vshrl.u32 %v9826, 7
  %v9828 = vsub.s32 %v9825, %v9827
  %v9829 = vrot.slane %v9807, %v9828
  %v9831 = vunpack.c.l.s4 1966171168
  %v9832 = vunpack.c.0.s8 %v9831
  %v9833 = vlaneseq
  %v9834 = vshrl.u32 %v9833, 7
  %v9835 = vsub.s32 %v9832, %v9834
  %v9836 = vrot.slane %v9808, %v9835
  %v9837 = vcombine.low %v9815, %v9822
  %v9838 = vcombine.low %v9829, %v9836
  %v9840 = vunpack.c.l.s4 1966171168
  %v9841 = vunpack.c.0.s8 %v9840
  %v9842 = vlaneseq
  %v9843 = vshrl.u32 %v9842, 7
  %v9844 = vsub.s32 %v9841, %v9843
  %v9845 = vrot.slane %v9837, %v9844
  %v9847 = vunpack.c.l.s4 1966171168
  %v9848 = vunpack.c.0.s8 %v9847
  %v9849 = vlaneseq
  %v9850 = vshrl.u32 %v9849, 7
  %v9851 = vsub.s32 %v9848, %v9850
  %v9852 = vrot.slane %v9838, %v9851
  %v9853 = vcombine.low %v9845, %v9852
  %v9854 = vcombine.low %v4945, %v4949
  %v9855 = vcombine.low %v4953, %v4957
  %v9856 = vcombine.low %v4961, %v4965
  %v9857 = vcombine.low %v4969, %v4973
  %v9859 = vunpack.c.l.s4 1966171168
  %v9860 = vunpack.c.0.s8 %v9859
  %v9861 = vlaneseq
  %v9862 = vshrl.u32 %v9861, 7
  %v9863 = vsub.s32 %v9860, %v9862
  %v9864 = vrot.slane %v9854, %v9863
  %v9866 = vunpack.c.l.s4 1966171168
  %v9867 = vunpack.c.0.s8 %v9866
  %v9868 = vlaneseq
  %v9869 = vshrl.u32 %v9868, 7
  %v9870 = vsub.s32 %v9867, %v9869
  %v9871 = vrot.slane %v9855, %v9870
  %v9873 = vunpack.c.l.s4 1966171168
  %v9874 = vunpack.c.0.s8 %v9873
  %v9875 = vlaneseq
  %v9876 = vshrl.u32 %v9875, 7
  %v9877 = vsub.s32 %v9874, %v9876
  %v9878 = vrot.slane %v9856, %v9877
  %v9880 = vunpack.c.l.s4 1966171168
  %v9881 = vunpack.c.0.s8 %v9880
  %v9882 = vlaneseq
  %v9883 = vshrl.u32 %v9882, 7
  %v9884 = vsub.s32 %v9881, %v9883
  %v9885 = vrot.slane %v9857, %v9884
  %v9886 = vcombine.low %v9864, %v9871
  %v9887 = vcombine.low %v9878, %v9885
  %v9889 = vunpack.c.l.s4 1966171168
  %v9890 = vunpack.c.0.s8 %v9889
  %v9891 = vlaneseq
  %v9892 = vshrl.u32 %v9891, 7
  %v9893 = vsub.s32 %v9890, %v9892
  %v9894 = vrot.slane %v9886, %v9893
  %v9896 = vunpack.c.l.s4 1966171168
  %v9897 = vunpack.c.0.s8 %v9896
  %v9898 = vlaneseq
  %v9899 = vshrl.u32 %v9898, 7
  %v9900 = vsub.s32 %v9897, %v9899
  %v9901 = vrot.slane %v9887, %v9900
  %v9902 = vcombine.low %v9894, %v9901
  %v9903 = vcombine.low %v4977, %v4981
  %v9904 = vcombine.low %v4985, %v4989
  %v9905 = vcombine.low %v4993, %v4997
  %v9906 = vcombine.low %v5001, %v5005
  %v9908 = vunpack.c.l.s4 1966171168
  %v9909 = vunpack.c.0.s8 %v9908
  %v9910 = vlaneseq
  %v9911 = vshrl.u32 %v9910, 7
  %v9912 = vsub.s32 %v9909, %v9911
  %v9913 = vrot.slane %v9903, %v9912
  %v9915 = vunpack.c.l.s4 1966171168
  %v9916 = vunpack.c.0.s8 %v9915
  %v9917 = vlaneseq
  %v9918 = vshrl.u32 %v9917, 7
  %v9919 = vsub.s32 %v9916, %v9918
  %v9920 = vrot.slane %v9904, %v9919
  %v9922 = vunpack.c.l.s4 1966171168
  %v9923 = vunpack.c.0.s8 %v9922
  %v9924 = vlaneseq
  %v9925 = vshrl.u32 %v9924, 7
  %v9926 = vsub.s32 %v9923, %v9925
  %v9927 = vrot.slane %v9905, %v9926
  %v9929 = vunpack.c.l.s4 1966171168
  %v9930 = vunpack.c.0.s8 %v9929
  %v9931 = vlaneseq
  %v9932 = vshrl.u32 %v9931, 7
  %v9933 = vsub.s32 %v9930, %v9932
  %v9934 = vrot.slane %v9906, %v9933
  %v9935 = vcombine.low %v9913, %v9920
  %v9936 = vcombine.low %v9927, %v9934
  %v9938 = vunpack.c.l.s4 1966171168
  %v9939 = vunpack.c.0.s8 %v9938
  %v9940 = vlaneseq
  %v9941 = vshrl.u32 %v9940, 7
  %v9942 = vsub.s32 %v9939, %v9941
  %v9943 = vrot.slane %v9935, %v9942
  %v9945 = vunpack.c.l.s4 1966171168
  %v9946 = vunpack.c.0.s8 %v9945
  %v9947 = vlaneseq
  %v9948 = vshrl.u32 %v9947, 7
  %v9949 = vsub.s32 %v9946, %v9948
  %v9950 = vrot.slane %v9936, %v9949
  %v9951 = vcombine.low %v9943, %v9950
  %v9952 = vcombine.low %v5009, %v5013
  %v9953 = vcombine.low %v5017, %v5021
  %v9954 = vcombine.low %v5025, %v5029
  %v9955 = vcombine.low %v5033, %v5037
  %v9957 = vunpack.c.l.s4 1966171168
  %v9958 = vunpack.c.0.s8 %v9957
  %v9959 = vlaneseq
  %v9960 = vshrl.u32 %v9959, 7
  %v9961 = vsub.s32 %v9958, %v9960
  %v9962 = vrot.slane %v9952, %v9961
  %v9964 = vunpack.c.l.s4 1966171168
  %v9965 = vunpack.c.0.s8 %v9964
  %v9966 = vlaneseq
  %v9967 = vshrl.u32 %v9966, 7
  %v9968 = vsub.s32 %v9965, %v9967
  %v9969 = vrot.slane %v9953, %v9968
  %v9971 = vunpack.c.l.s4 1966171168
  %v9972 = vunpack.c.0.s8 %v9971
  %v9973 = vlaneseq
  %v9974 = vshrl.u32 %v9973, 7
  %v9975 = vsub.s32 %v9972, %v9974
  %v9976 = vrot.slane %v9954, %v9975
  %v9978 = vunpack.c.l.s4 1966171168
  %v9979 = vunpack.c.0.s8 %v9978
  %v9980 = vlaneseq
  %v9981 = vshrl.u32 %v9980, 7
  %v9982 = vsub.s32 %v9979, %v9981
  %v9983 = vrot.slane %v9955, %v9982
  %v9984 = vcombine.low %v9962, %v9969
  %v9985 = vcombine.low %v9976, %v9983
  %v9987 = vunpack.c.l.s4 1966171168
  %v9988 = vunpack.c.0.s8 %v9987
  %v9989 = vlaneseq
  %v9990 = vshrl.u32 %v9989, 7
  %v9991 = vsub.s32 %v9988, %v9990
  %v9992 = vrot.slane %v9984, %v9991
  %v9994 = vunpack.c.l.s4 1966171168
  %v9995 = vunpack.c.0.s8 %v9994
  %v9996 = vlaneseq
  %v9997 = vshrl.u32 %v9996, 7
  %v9998 = vsub.s32 %v9995, %v9997
  %v9999 = vrot.slane %v9985, %v9998
  %v10000 = vcombine.low %v9992, %v9999
  %v10001 = vcombine.low %v5041, %v5045
  %v10002 = vcombine.low %v5049, %v5053
  %v10003 = vcombine.low %v5057, %v5061
  %v10004 = vcombine.low %v5065, %v5069
  %v10006 = vunpack.c.l.s4 1966171168
  %v10007 = vunpack.c.0.s8 %v10006
  %v10008 = vlaneseq
  %v10009 = vshrl.u32 %v10008, 7
  %v10010 = vsub.s32 %v10007, %v10009
  %v10011 = vrot.slane %v10001, %v10010
  %v10013 = vunpack.c.l.s4 1966171168
  %v10014 = vunpack.c.0.s8 %v10013
  %v10015 = vlaneseq
  %v10016 = vshrl.u32 %v10015, 7
  %v10017 = vsub.s32 %v10014, %v10016
  %v10018 = vrot.slane %v10002, %v10017
  %v10020 = vunpack.c.l.s4 1966171168
  %v10021 = vunpack.c.0.s8 %v10020
  %v10022 = vlaneseq
  %v10023 = vshrl.u32 %v10022, 7
  %v10024 = vsub.s32 %v10021, %v10023
  %v10025 = vrot.slane %v10003, %v10024
  %v10027 = vunpack.c.l.s4 1966171168
  %v10028 = vunpack.c.0.s8 %v10027
  %v10029 = vlaneseq
  %v10030 = vshrl.u32 %v10029, 7
  %v10031 = vsub.s32 %v10028, %v10030
  %v10032 = vrot.slane %v10004, %v10031
  %v10033 = vcombine.low %v10011, %v10018
  %v10034 = vcombine.low %v10025, %v10032
  %v10036 = vunpack.c.l.s4 1966171168
  %v10037 = vunpack.c.0.s8 %v10036
  %v10038 = vlaneseq
  %v10039 = vshrl.u32 %v10038, 7
  %v10040 = vsub.s32 %v10037, %v10039
  %v10041 = vrot.slane %v10033, %v10040
  %v10043 = vunpack.c.l.s4 1966171168
  %v10044 = vunpack.c.0.s8 %v10043
  %v10045 = vlaneseq
  %v10046 = vshrl.u32 %v10045, 7
  %v10047 = vsub.s32 %v10044, %v10046
  %v10048 = vrot.slane %v10034, %v10047
  %v10049 = vcombine.low %v10041, %v10048
  %v10050 = vcombine.low %v5073, %v5077
  %v10051 = vcombine.low %v5081, %v5085
  %v10052 = vcombine.low %v5089, %v5093
  %v10053 = vcombine.low %v5097, %v5101
  %v10055 = vunpack.c.l.s4 1966171168
  %v10056 = vunpack.c.0.s8 %v10055
  %v10057 = vlaneseq
  %v10058 = vshrl.u32 %v10057, 7
  %v10059 = vsub.s32 %v10056, %v10058
  %v10060 = vrot.slane %v10050, %v10059
  %v10062 = vunpack.c.l.s4 1966171168
  %v10063 = vunpack.c.0.s8 %v10062
  %v10064 = vlaneseq
  %v10065 = vshrl.u32 %v10064, 7
  %v10066 = vsub.s32 %v10063, %v10065
  %v10067 = vrot.slane %v10051, %v10066
  %v10069 = vunpack.c.l.s4 1966171168
  %v10070 = vunpack.c.0.s8 %v10069
  %v10071 = vlaneseq
  %v10072 = vshrl.u32 %v10071, 7
  %v10073 = vsub.s32 %v10070, %v10072
  %v10074 = vrot.slane %v10052, %v10073
  %v10076 = vunpack.c.l.s4 1966171168
  %v10077 = vunpack.c.0.s8 %v10076
  %v10078 = vlaneseq
  %v10079 = vshrl.u32 %v10078, 7
  %v10080 = vsub.s32 %v10077, %v10079
  %v10081 = vrot.slane %v10053, %v10080
  %v10082 = vcombine.low %v10060, %v10067
  %v10083 = vcombine.low %v10074, %v10081
  %v10085 = vunpack.c.l.s4 1966171168
  %v10086 = vunpack.c.0.s8 %v10085
  %v10087 = vlaneseq
  %v10088 = vshrl.u32 %v10087, 7
  %v10089 = vsub.s32 %v10086, %v10088
  %v10090 = vrot.slane %v10082, %v10089
  %v10092 = vunpack.c.l.s4 1966171168
  %v10093 = vunpack.c.0.s8 %v10092
  %v10094 = vlaneseq
  %v10095 = vshrl.u32 %v10094, 7
  %v10096 = vsub.s32 %v10093, %v10095
  %v10097 = vrot.slane %v10083, %v10096
  %v10098 = vcombine.low %v10090, %v10097
  %v10099 = vcombine.low %v5105, %v5109
  %v10100 = vcombine.low %v5113, %v5117
  %v10101 = vcombine.low %v5121, %v5125
  %v10102 = vcombine.low %v5129, %v5133
  %v10104 = vunpack.c.l.s4 1966171168
  %v10105 = vunpack.c.0.s8 %v10104
  %v10106 = vlaneseq
  %v10107 = vshrl.u32 %v10106, 7
  %v10108 = vsub.s32 %v10105, %v10107
  %v10109 = vrot.slane %v10099, %v10108
  %v10111 = vunpack.c.l.s4 1966171168
  %v10112 = vunpack.c.0.s8 %v10111
  %v10113 = vlaneseq
  %v10114 = vshrl.u32 %v10113, 7
  %v10115 = vsub.s32 %v10112, %v10114
  %v10116 = vrot.slane %v10100, %v10115
  %v10118 = vunpack.c.l.s4 1966171168
  %v10119 = vunpack.c.0.s8 %v10118
  %v10120 = vlaneseq
  %v10121 = vshrl.u32 %v10120, 7
  %v10122 = vsub.s32 %v10119, %v10121
  %v10123 = vrot.slane %v10101, %v10122
  %v10125 = vunpack.c.l.s4 1966171168
  %v10126 = vunpack.c.0.s8 %v10125
  %v10127 = vlaneseq
  %v10128 = vshrl.u32 %v10127, 7
  %v10129 = vsub.s32 %v10126, %v10128
  %v10130 = vrot.slane %v10102, %v10129
  %v10131 = vcombine.low %v10109, %v10116
  %v10132 = vcombine.low %v10123, %v10130
  %v10134 = vunpack.c.l.s4 1966171168
  %v10135 = vunpack.c.0.s8 %v10134
  %v10136 = vlaneseq
  %v10137 = vshrl.u32 %v10136, 7
  %v10138 = vsub.s32 %v10135, %v10137
  %v10139 = vrot.slane %v10131, %v10138
  %v10141 = vunpack.c.l.s4 1966171168
  %v10142 = vunpack.c.0.s8 %v10141
  %v10143 = vlaneseq
  %v10144 = vshrl.u32 %v10143, 7
  %v10145 = vsub.s32 %v10142, %v10144
  %v10146 = vrot.slane %v10132, %v10145
  %v10147 = vcombine.low %v10139, %v10146
  %v10148 = vcombine.low %v5137, %v5141
  %v10149 = vcombine.low %v5145, %v5149
  %v10150 = vcombine.low %v5153, %v5157
  %v10151 = vcombine.low %v5161, %v5165
  %v10153 = vunpack.c.l.s4 1966171168
  %v10154 = vunpack.c.0.s8 %v10153
  %v10155 = vlaneseq
  %v10156 = vshrl.u32 %v10155, 7
  %v10157 = vsub.s32 %v10154, %v10156
  %v10158 = vrot.slane %v10148, %v10157
  %v10160 = vunpack.c.l.s4 1966171168
  %v10161 = vunpack.c.0.s8 %v10160
  %v10162 = vlaneseq
  %v10163 = vshrl.u32 %v10162, 7
  %v10164 = vsub.s32 %v10161, %v10163
  %v10165 = vrot.slane %v10149, %v10164
  %v10167 = vunpack.c.l.s4 1966171168
  %v10168 = vunpack.c.0.s8 %v10167
  %v10169 = vlaneseq
  %v10170 = vshrl.u32 %v10169, 7
  %v10171 = vsub.s32 %v10168, %v10170
  %v10172 = vrot.slane %v10150, %v10171
  %v10174 = vunpack.c.l.s4 1966171168
  %v10175 = vunpack.c.0.s8 %v10174
  %v10176 = vlaneseq
  %v10177 = vshrl.u32 %v10176, 7
  %v10178 = vsub.s32 %v10175, %v10177
  %v10179 = vrot.slane %v10151, %v10178
  %v10180 = vcombine.low %v10158, %v10165
  %v10181 = vcombine.low %v10172, %v10179
  %v10183 = vunpack.c.l.s4 1966171168
  %v10184 = vunpack.c.0.s8 %v10183
  %v10185 = vlaneseq
  %v10186 = vshrl.u32 %v10185, 7
  %v10187 = vsub.s32 %v10184, %v10186
  %v10188 = vrot.slane %v10180, %v10187
  %v10190 = vunpack.c.l.s4 1966171168
  %v10191 = vunpack.c.0.s8 %v10190
  %v10192 = vlaneseq
  %v10193 = vshrl.u32 %v10192, 7
  %v10194 = vsub.s32 %v10191, %v10193
  %v10195 = vrot.slane %v10181, %v10194
  %v10196 = vcombine.low %v10188, %v10195
  %v10197 = vcombine.low %v5169, %v5173
  %v10198 = vcombine.low %v5177, %v5181
  %v10199 = vcombine.low %v5185, %v5189
  %v10200 = vcombine.low %v5193, %v5197
  %v10202 = vunpack.c.l.s4 1966171168
  %v10203 = vunpack.c.0.s8 %v10202
  %v10204 = vlaneseq
  %v10205 = vshrl.u32 %v10204, 7
  %v10206 = vsub.s32 %v10203, %v10205
  %v10207 = vrot.slane %v10197, %v10206
  %v10209 = vunpack.c.l.s4 1966171168
  %v10210 = vunpack.c.0.s8 %v10209
  %v10211 = vlaneseq
  %v10212 = vshrl.u32 %v10211, 7
  %v10213 = vsub.s32 %v10210, %v10212
  %v10214 = vrot.slane %v10198, %v10213
  %v10216 = vunpack.c.l.s4 1966171168
  %v10217 = vunpack.c.0.s8 %v10216
  %v10218 = vlaneseq
  %v10219 = vshrl.u32 %v10218, 7
  %v10220 = vsub.s32 %v10217, %v10219
  %v10221 = vrot.slane %v10199, %v10220
  %v10223 = vunpack.c.l.s4 1966171168
  %v10224 = vunpack.c.0.s8 %v10223
  %v10225 = vlaneseq
  %v10226 = vshrl.u32 %v10225, 7
  %v10227 = vsub.s32 %v10224, %v10226
  %v10228 = vrot.slane %v10200, %v10227
  %v10229 = vcombine.low %v10207, %v10214
  %v10230 = vcombine.low %v10221, %v10228
  %v10232 = vunpack.c.l.s4 1966171168
  %v10233 = vunpack.c.0.s8 %v10232
  %v10234 = vlaneseq
  %v10235 = vshrl.u32 %v10234, 7
  %v10236 = vsub.s32 %v10233, %v10235
  %v10237 = vrot.slane %v10229, %v10236
  %v10239 = vunpack.c.l.s4 1966171168
  %v10240 = vunpack.c.0.s8 %v10239
  %v10241 = vlaneseq
  %v10242 = vshrl.u32 %v10241, 7
  %v10243 = vsub.s32 %v10240, %v10242
  %v10244 = vrot.slane %v10230, %v10243
  %v10245 = vcombine.low %v10237, %v10244
  %v10246 = vcombine.low %v5201, %v5205
  %v10247 = vcombine.low %v5209, %v5213
  %v10248 = vcombine.low %v5217, %v5221
  %v10249 = vcombine.low %v5225, %v5229
  %v10251 = vunpack.c.l.s4 1966171168
  %v10252 = vunpack.c.0.s8 %v10251
  %v10253 = vlaneseq
  %v10254 = vshrl.u32 %v10253, 7
  %v10255 = vsub.s32 %v10252, %v10254
  %v10256 = vrot.slane %v10246, %v10255
  %v10258 = vunpack.c.l.s4 1966171168
  %v10259 = vunpack.c.0.s8 %v10258
  %v10260 = vlaneseq
  %v10261 = vshrl.u32 %v10260, 7
  %v10262 = vsub.s32 %v10259, %v10261
  %v10263 = vrot.slane %v10247, %v10262
  %v10265 = vunpack.c.l.s4 1966171168
  %v10266 = vunpack.c.0.s8 %v10265
  %v10267 = vlaneseq
  %v10268 = vshrl.u32 %v10267, 7
  %v10269 = vsub.s32 %v10266, %v10268
  %v10270 = vrot.slane %v10248, %v10269
  %v10272 = vunpack.c.l.s4 1966171168
  %v10273 = vunpack.c.0.s8 %v10272
  %v10274 = vlaneseq
  %v10275 = vshrl.u32 %v10274, 7
  %v10276 = vsub.s32 %v10273, %v10275
  %v10277 = vrot.slane %v10249, %v10276
  %v10278 = vcombine.low %v10256, %v10263
  %v10279 = vcombine.low %v10270, %v10277
  %v10281 = vunpack.c.l.s4 1966171168
  %v10282 = vunpack.c.0.s8 %v10281
  %v10283 = vlaneseq
  %v10284 = vshrl.u32 %v10283, 7
  %v10285 = vsub.s32 %v10282, %v10284
  %v10286 = vrot.slane %v10278, %v10285
  %v10288 = vunpack.c.l.s4 1966171168
  %v10289 = vunpack.c.0.s8 %v10288
  %v10290 = vlaneseq
  %v10291 = vshrl.u32 %v10290, 7
  %v10292 = vsub.s32 %v10289, %v10291
  %v10293 = vrot.slane %v10279, %v10292
  %v10294 = vcombine.low %v10286, %v10293
  %v10295 = vcombine.low %v5233, %v5237
  %v10296 = vcombine.low %v5241, %v5245
  %v10297 = vcombine.low %v5249, %v5253
  %v10298 = vcombine.low %v5257, %v5261
  %v10300 = vunpack.c.l.s4 1966171168
  %v10301 = vunpack.c.0.s8 %v10300
  %v10302 = vlaneseq
  %v10303 = vshrl.u32 %v10302, 7
  %v10304 = vsub.s32 %v10301, %v10303
  %v10305 = vrot.slane %v10295, %v10304
  %v10307 = vunpack.c.l.s4 1966171168
  %v10308 = vunpack.c.0.s8 %v10307
  %v10309 = vlaneseq
  %v10310 = vshrl.u32 %v10309, 7
  %v10311 = vsub.s32 %v10308, %v10310
  %v10312 = vrot.slane %v10296, %v10311
  %v10314 = vunpack.c.l.s4 1966171168
  %v10315 = vunpack.c.0.s8 %v10314
  %v10316 = vlaneseq
  %v10317 = vshrl.u32 %v10316, 7
  %v10318 = vsub.s32 %v10315, %v10317
  %v10319 = vrot.slane %v10297, %v10318
  %v10321 = vunpack.c.l.s4 1966171168
  %v10322 = vunpack.c.0.s8 %v10321
  %v10323 = vlaneseq
  %v10324 = vshrl.u32 %v10323, 7
  %v10325 = vsub.s32 %v10322, %v10324
  %v10326 = vrot.slane %v10298, %v10325
  %v10327 = vcombine.low %v10305, %v10312
  %v10328 = vcombine.low %v10319, %v10326
  %v10330 = vunpack.c.l.s4 1966171168
  %v10331 = vunpack.c.0.s8 %v10330
  %v10332 = vlaneseq
  %v10333 = vshrl.u32 %v10332, 7
  %v10334 = vsub.s32 %v10331, %v10333
  %v10335 = vrot.slane %v10327, %v10334
  %v10337 = vunpack.c.l.s4 1966171168
  %v10338 = vunpack.c.0.s8 %v10337
  %v10339 = vlaneseq
  %v10340 = vshrl.u32 %v10339, 7
  %v10341 = vsub.s32 %v10338, %v10340
  %v10342 = vrot.slane %v10328, %v10341
  %v10343 = vcombine.low %v10335, %v10342
  %v10344 = vcombine.low %v5265, %v5269
  %v10345 = vcombine.low %v5273, %v5277
  %v10346 = vcombine.low %v5281, %v5285
  %v10347 = vcombine.low %v5289, %v5293
  %v10349 = vunpack.c.l.s4 1966171168
  %v10350 = vunpack.c.0.s8 %v10349
  %v10351 = vlaneseq
  %v10352 = vshrl.u32 %v10351, 7
  %v10353 = vsub.s32 %v10350, %v10352
  %v10354 = vrot.slane %v10344, %v10353
  %v10356 = vunpack.c.l.s4 1966171168
  %v10357 = vunpack.c.0.s8 %v10356
  %v10358 = vlaneseq
  %v10359 = vshrl.u32 %v10358, 7
  %v10360 = vsub.s32 %v10357, %v10359
  %v10361 = vrot.slane %v10345, %v10360
  %v10363 = vunpack.c.l.s4 1966171168
  %v10364 = vunpack.c.0.s8 %v10363
  %v10365 = vlaneseq
  %v10366 = vshrl.u32 %v10365, 7
  %v10367 = vsub.s32 %v10364, %v10366
  %v10368 = vrot.slane %v10346, %v10367
  %v10370 = vunpack.c.l.s4 1966171168
  %v10371 = vunpack.c.0.s8 %v10370
  %v10372 = vlaneseq
  %v10373 = vshrl.u32 %v10372, 7
  %v10374 = vsub.s32 %v10371, %v10373
  %v10375 = vrot.slane %v10347, %v10374
  %v10376 = vcombine.low %v10354, %v10361
  %v10377 = vcombine.low %v10368, %v10375
  %v10379 = vunpack.c.l.s4 1966171168
  %v10380 = vunpack.c.0.s8 %v10379
  %v10381 = vlaneseq
  %v10382 = vshrl.u32 %v10381, 7
  %v10383 = vsub.s32 %v10380, %v10382
  %v10384 = vrot.slane %v10376, %v10383
  %v10386 = vunpack.c.l.s4 1966171168
  %v10387 = vunpack.c.0.s8 %v10386
  %v10388 = vlaneseq
  %v10389 = vshrl.u32 %v10388, 7
  %v10390 = vsub.s32 %v10387, %v10389
  %v10391 = vrot.slane %v10377, %v10390
  %v10392 = vcombine.low %v10384, %v10391
  %v10393 = vcombine.low %v5297, %v5301
  %v10394 = vcombine.low %v5305, %v5309
  %v10395 = vcombine.low %v5313, %v5317
  %v10396 = vcombine.low %v5321, %v5325
  %v10398 = vunpack.c.l.s4 1966171168
  %v10399 = vunpack.c.0.s8 %v10398
  %v10400 = vlaneseq
  %v10401 = vshrl.u32 %v10400, 7
  %v10402 = vsub.s32 %v10399, %v10401
  %v10403 = vrot.slane %v10393, %v10402
  %v10405 = vunpack.c.l.s4 1966171168
  %v10406 = vunpack.c.0.s8 %v10405
  %v10407 = vlaneseq
  %v10408 = vshrl.u32 %v10407, 7
  %v10409 = vsub.s32 %v10406, %v10408
  %v10410 = vrot.slane %v10394, %v10409
  %v10412 = vunpack.c.l.s4 1966171168
  %v10413 = vunpack.c.0.s8 %v10412
  %v10414 = vlaneseq
  %v10415 = vshrl.u32 %v10414, 7
  %v10416 = vsub.s32 %v10413, %v10415
  %v10417 = vrot.slane %v10395, %v10416
  %v10419 = vunpack.c.l.s4 1966171168
  %v10420 = vunpack.c.0.s8 %v10419
  %v10421 = vlaneseq
  %v10422 = vshrl.u32 %v10421, 7
  %v10423 = vsub.s32 %v10420, %v10422
  %v10424 = vrot.slane %v10396, %v10423
  %v10425 = vcombine.low %v10403, %v10410
  %v10426 = vcombine.low %v10417, %v10424
  %v10428 = vunpack.c.l.s4 1966171168
  %v10429 = vunpack.c.0.s8 %v10428
  %v10430 = vlaneseq
  %v10431 = vshrl.u32 %v10430, 7
  %v10432 = vsub.s32 %v10429, %v10431
  %v10433 = vrot.slane %v10425, %v10432
  %v10435 = vunpack.c.l.s4 1966171168
  %v10436 = vunpack.c.0.s8 %v10435
  %v10437 = vlaneseq
  %v10438 = vshrl.u32 %v10437, 7
  %v10439 = vsub.s32 %v10436, %v10438
  %v10440 = vrot.slane %v10426, %v10439
  %v10441 = vcombine.low %v10433, %v10440
  %v10442 = vcombine.low %v5329, %v5333
  %v10443 = vcombine.low %v5337, %v5341
  %v10444 = vcombine.low %v5345, %v5349
  %v10445 = vcombine.low %v5353, %v5357
  %v10447 = vunpack.c.l.s4 1966171168
  %v10448 = vunpack.c.0.s8 %v10447
  %v10449 = vlaneseq
  %v10450 = vshrl.u32 %v10449, 7
  %v10451 = vsub.s32 %v10448, %v10450
  %v10452 = vrot.slane %v10442, %v10451
  %v10454 = vunpack.c.l.s4 1966171168
  %v10455 = vunpack.c.0.s8 %v10454
  %v10456 = vlaneseq
  %v10457 = vshrl.u32 %v10456, 7
  %v10458 = vsub.s32 %v10455, %v10457
  %v10459 = vrot.slane %v10443, %v10458
  %v10461 = vunpack.c.l.s4 1966171168
  %v10462 = vunpack.c.0.s8 %v10461
  %v10463 = vlaneseq
  %v10464 = vshrl.u32 %v10463, 7
  %v10465 = vsub.s32 %v10462, %v10464
  %v10466 = vrot.slane %v10444, %v10465
  %v10468 = vunpack.c.l.s4 1966171168
  %v10469 = vunpack.c.0.s8 %v10468
  %v10470 = vlaneseq
  %v10471 = vshrl.u32 %v10470, 7
  %v10472 = vsub.s32 %v10469, %v10471
  %v10473 = vrot.slane %v10445, %v10472
  %v10474 = vcombine.low %v10452, %v10459
  %v10475 = vcombine.low %v10466, %v10473
  %v10477 = vunpack.c.l.s4 1966171168
  %v10478 = vunpack.c.0.s8 %v10477
  %v10479 = vlaneseq
  %v10480 = vshrl.u32 %v10479, 7
  %v10481 = vsub.s32 %v10478, %v10480
  %v10482 = vrot.slane %v10474, %v10481
  %v10484 = vunpack.c.l.s4 1966171168
  %v10485 = vunpack.c.0.s8 %v10484
  %v10486 = vlaneseq
  %v10487 = vshrl.u32 %v10486, 7
  %v10488 = vsub.s32 %v10485, %v10487
  %v10489 = vrot.slane %v10475, %v10488
  %v10490 = vcombine.low %v10482, %v10489
  %v10491 = vcombine.low %v5361, %v5365
  %v10492 = vcombine.low %v5369, %v5373
  %v10493 = vcombine.low %v5377, %v5381
  %v10494 = vcombine.low %v5385, %v5389
  %v10496 = vunpack.c.l.s4 1966171168
  %v10497 = vunpack.c.0.s8 %v10496
  %v10498 = vlaneseq
  %v10499 = vshrl.u32 %v10498, 7
  %v10500 = vsub.s32 %v10497, %v10499
  %v10501 = vrot.slane %v10491, %v10500
  %v10503 = vunpack.c.l.s4 1966171168
  %v10504 = vunpack.c.0.s8 %v10503
  %v10505 = vlaneseq
  %v10506 = vshrl.u32 %v10505, 7
  %v10507 = vsub.s32 %v10504, %v10506
  %v10508 = vrot.slane %v10492, %v10507
  %v10510 = vunpack.c.l.s4 1966171168
  %v10511 = vunpack.c.0.s8 %v10510
  %v10512 = vlaneseq
  %v10513 = vshrl.u32 %v10512, 7
  %v10514 = vsub.s32 %v10511, %v10513
  %v10515 = vrot.slane %v10493, %v10514
  %v10517 = vunpack.c.l.s4 1966171168
  %v10518 = vunpack.c.0.s8 %v10517
  %v10519 = vlaneseq
  %v10520 = vshrl.u32 %v10519, 7
  %v10521 = vsub.s32 %v10518, %v10520
  %v10522 = vrot.slane %v10494, %v10521
  %v10523 = vcombine.low %v10501, %v10508
  %v10524 = vcombine.low %v10515, %v10522
  %v10526 = vunpack.c.l.s4 1966171168
  %v10527 = vunpack.c.0.s8 %v10526
  %v10528 = vlaneseq
  %v10529 = vshrl.u32 %v10528, 7
  %v10530 = vsub.s32 %v10527, %v10529
  %v10531 = vrot.slane %v10523, %v10530
  %v10533 = vunpack.c.l.s4 1966171168
  %v10534 = vunpack.c.0.s8 %v10533
  %v10535 = vlaneseq
  %v10536 = vshrl.u32 %v10535, 7
  %v10537 = vsub.s32 %v10534, %v10536
  %v10538 = vrot.slane %v10524, %v10537
  %v10539 = vcombine.low %v10531, %v10538
  %v10540 = vcombine.low %v5393, %v5397
  %v10541 = vcombine.low %v5401, %v5405
  %v10542 = vcombine.low %v5409, %v5413
  %v10543 = vcombine.low %v5417, %v5421
  %v10545 = vunpack.c.l.s4 1966171168
  %v10546 = vunpack.c.0.s8 %v10545
  %v10547 = vlaneseq
  %v10548 = vshrl.u32 %v10547, 7
  %v10549 = vsub.s32 %v10546, %v10548
  %v10550 = vrot.slane %v10540, %v10549
  %v10552 = vunpack.c.l.s4 1966171168
  %v10553 = vunpack.c.0.s8 %v10552
  %v10554 = vlaneseq
  %v10555 = vshrl.u32 %v10554, 7
  %v10556 = vsub.s32 %v10553, %v10555
  %v10557 = vrot.slane %v10541, %v10556
  %v10559 = vunpack.c.l.s4 1966171168
  %v10560 = vunpack.c.0.s8 %v10559
  %v10561 = vlaneseq
  %v10562 = vshrl.u32 %v10561, 7
  %v10563 = vsub.s32 %v10560, %v10562
  %v10564 = vrot.slane %v10542, %v10563
  %v10566 = vunpack.c.l.s4 1966171168
  %v10567 = vunpack.c.0.s8 %v10566
  %v10568 = vlaneseq
  %v10569 = vshrl.u32 %v10568, 7
  %v10570 = vsub.s32 %v10567, %v10569
  %v10571 = vrot.slane %v10543, %v10570
  %v10572 = vcombine.low %v10550, %v10557
  %v10573 = vcombine.low %v10564, %v10571
  %v10575 = vunpack.c.l.s4 1966171168
  %v10576 = vunpack.c.0.s8 %v10575
  %v10577 = vlaneseq
  %v10578 = vshrl.u32 %v10577, 7
  %v10579 = vsub.s32 %v10576, %v10578
  %v10580 = vrot.slane %v10572, %v10579
  %v10582 = vunpack.c.l.s4 1966171168
  %v10583 = vunpack.c.0.s8 %v10582
  %v10584 = vlaneseq
  %v10585 = vshrl.u32 %v10584, 7
  %v10586 = vsub.s32 %v10583, %v10585
  %v10587 = vrot.slane %v10573, %v10586
  %v10588 = vcombine.low %v10580, %v10587
  %v10589 = vcombine.low %v5425, %v5429
  %v10590 = vcombine.low %v5433, %v5437
  %v10591 = vcombine.low %v5441, %v5445
  %v10592 = vcombine.low %v5449, %v5453
  %v10594 = vunpack.c.l.s4 1966171168
  %v10595 = vunpack.c.0.s8 %v10594
  %v10596 = vlaneseq
  %v10597 = vshrl.u32 %v10596, 7
  %v10598 = vsub.s32 %v10595, %v10597
  %v10599 = vrot.slane %v10589, %v10598
  %v10601 = vunpack.c.l.s4 1966171168
  %v10602 = vunpack.c.0.s8 %v10601
  %v10603 = vlaneseq
  %v10604 = vshrl.u32 %v10603, 7
  %v10605 = vsub.s32 %v10602, %v10604
  %v10606 = vrot.slane %v10590, %v10605
  %v10608 = vunpack.c.l.s4 1966171168
  %v10609 = vunpack.c.0.s8 %v10608
  %v10610 = vlaneseq
  %v10611 = vshrl.u32 %v10610, 7
  %v10612 = vsub.s32 %v10609, %v10611
  %v10613 = vrot.slane %v10591, %v10612
  %v10615 = vunpack.c.l.s4 1966171168
  %v10616 = vunpack.c.0.s8 %v10615
  %v10617 = vlaneseq
  %v10618 = vshrl.u32 %v10617, 7
  %v10619 = vsub.s32 %v10616, %v10618
  %v10620 = vrot.slane %v10592, %v10619
  %v10621 = vcombine.low %v10599, %v10606
  %v10622 = vcombine.low %v10613, %v10620
  %v10624 = vunpack.c.l.s4 1966171168
  %v10625 = vunpack.c.0.s8 %v10624
  %v10626 = vlaneseq
  %v10627 = vshrl.u32 %v10626, 7
  %v10628 = vsub.s32 %v10625, %v10627
  %v10629 = vrot.slane %v10621, %v10628
  %v10631 = vunpack.c.l.s4 1966171168
  %v10632 = vunpack.c.0.s8 %v10631
  %v10633 = vlaneseq
  %v10634 = vshrl.u32 %v10633, 7
  %v10635 = vsub.s32 %v10632, %v10634
  %v10636 = vrot.slane %v10622, %v10635
  %v10637 = vcombine.low %v10629, %v10636
  %v10638 = vcombine.low %v5457, %v5461
  %v10639 = vcombine.low %v5465, %v5469
  %v10640 = vcombine.low %v5473, %v5477
  %v10641 = vcombine.low %v5481, %v5485
  %v10643 = vunpack.c.l.s4 1966171168
  %v10644 = vunpack.c.0.s8 %v10643
  %v10645 = vlaneseq
  %v10646 = vshrl.u32 %v10645, 7
  %v10647 = vsub.s32 %v10644, %v10646
  %v10648 = vrot.slane %v10638, %v10647
  %v10650 = vunpack.c.l.s4 1966171168
  %v10651 = vunpack.c.0.s8 %v10650
  %v10652 = vlaneseq
  %v10653 = vshrl.u32 %v10652, 7
  %v10654 = vsub.s32 %v10651, %v10653
  %v10655 = vrot.slane %v10639, %v10654
  %v10657 = vunpack.c.l.s4 1966171168
  %v10658 = vunpack.c.0.s8 %v10657
  %v10659 = vlaneseq
  %v10660 = vshrl.u32 %v10659, 7
  %v10661 = vsub.s32 %v10658, %v10660
  %v10662 = vrot.slane %v10640, %v10661
  %v10664 = vunpack.c.l.s4 1966171168
  %v10665 = vunpack.c.0.s8 %v10664
  %v10666 = vlaneseq
  %v10667 = vshrl.u32 %v10666, 7
  %v10668 = vsub.s32 %v10665, %v10667
  %v10669 = vrot.slane %v10641, %v10668
  %v10670 = vcombine.low %v10648, %v10655
  %v10671 = vcombine.low %v10662, %v10669
  %v10673 = vunpack.c.l.s4 1966171168
  %v10674 = vunpack.c.0.s8 %v10673
  %v10675 = vlaneseq
  %v10676 = vshrl.u32 %v10675, 7
  %v10677 = vsub.s32 %v10674, %v10676
  %v10678 = vrot.slane %v10670, %v10677
  %v10680 = vunpack.c.l.s4 1966171168
  %v10681 = vunpack.c.0.s8 %v10680
  %v10682 = vlaneseq
  %v10683 = vshrl.u32 %v10682, 7
  %v10684 = vsub.s32 %v10681, %v10683
  %v10685 = vrot.slane %v10671, %v10684
  %v10686 = vcombine.low %v10678, %v10685
  %v10687 = vcombine.low %v5489, %v5493
  %v10688 = vcombine.low %v5497, %v5501
  %v10689 = vcombine.low %v5505, %v5509
  %v10690 = vcombine.low %v5513, %v5517
  %v10692 = vunpack.c.l.s4 1966171168
  %v10693 = vunpack.c.0.s8 %v10692
  %v10694 = vlaneseq
  %v10695 = vshrl.u32 %v10694, 7
  %v10696 = vsub.s32 %v10693, %v10695
  %v10697 = vrot.slane %v10687, %v10696
  %v10699 = vunpack.c.l.s4 1966171168
  %v10700 = vunpack.c.0.s8 %v10699
  %v10701 = vlaneseq
  %v10702 = vshrl.u32 %v10701, 7
  %v10703 = vsub.s32 %v10700, %v10702
  %v10704 = vrot.slane %v10688, %v10703
  %v10706 = vunpack.c.l.s4 1966171168
  %v10707 = vunpack.c.0.s8 %v10706
  %v10708 = vlaneseq
  %v10709 = vshrl.u32 %v10708, 7
  %v10710 = vsub.s32 %v10707, %v10709
  %v10711 = vrot.slane %v10689, %v10710
  %v10713 = vunpack.c.l.s4 1966171168
  %v10714 = vunpack.c.0.s8 %v10713
  %v10715 = vlaneseq
  %v10716 = vshrl.u32 %v10715, 7
  %v10717 = vsub.s32 %v10714, %v10716
  %v10718 = vrot.slane %v10690, %v10717
  %v10719 = vcombine.low %v10697, %v10704
  %v10720 = vcombine.low %v10711, %v10718
  %v10722 = vunpack.c.l.s4 1966171168
  %v10723 = vunpack.c.0.s8 %v10722
  %v10724 = vlaneseq
  %v10725 = vshrl.u32 %v10724, 7
  %v10726 = vsub.s32 %v10723, %v10725
  %v10727 = vrot.slane %v10719, %v10726
  %v10729 = vunpack.c.l.s4 1966171168
  %v10730 = vunpack.c.0.s8 %v10729
  %v10731 = vlaneseq
  %v10732 = vshrl.u32 %v10731, 7
  %v10733 = vsub.s32 %v10730, %v10732
  %v10734 = vrot.slane %v10720, %v10733
  %v10735 = vcombine.low %v10727, %v10734
  %v10736 = vcombine.low %v5521, %v5525
  %v10737 = vcombine.low %v5529, %v5533
  %v10738 = vcombine.low %v5537, %v5541
  %v10739 = vcombine.low %v5545, %v5549
  %v10741 = vunpack.c.l.s4 1966171168
  %v10742 = vunpack.c.0.s8 %v10741
  %v10743 = vlaneseq
  %v10744 = vshrl.u32 %v10743, 7
  %v10745 = vsub.s32 %v10742, %v10744
  %v10746 = vrot.slane %v10736, %v10745
  %v10748 = vunpack.c.l.s4 1966171168
  %v10749 = vunpack.c.0.s8 %v10748
  %v10750 = vlaneseq
  %v10751 = vshrl.u32 %v10750, 7
  %v10752 = vsub.s32 %v10749, %v10751
  %v10753 = vrot.slane %v10737, %v10752
  %v10755 = vunpack.c.l.s4 1966171168
  %v10756 = vunpack.c.0.s8 %v10755
  %v10757 = vlaneseq
  %v10758 = vshrl.u32 %v10757, 7
  %v10759 = vsub.s32 %v10756, %v10758
  %v10760 = vrot.slane %v10738, %v10759
  %v10762 = vunpack.c.l.s4 1966171168
  %v10763 = vunpack.c.0.s8 %v10762
  %v10764 = vlaneseq
  %v10765 = vshrl.u32 %v10764, 7
  %v10766 = vsub.s32 %v10763, %v10765
  %v10767 = vrot.slane %v10739, %v10766
  %v10768 = vcombine.low %v10746, %v10753
  %v10769 = vcombine.low %v10760, %v10767
  %v10771 = vunpack.c.l.s4 1966171168
  %v10772 = vunpack.c.0.s8 %v10771
  %v10773 = vlaneseq
  %v10774 = vshrl.u32 %v10773, 7
  %v10775 = vsub.s32 %v10772, %v10774
  %v10776 = vrot.slane %v10768, %v10775
  %v10778 = vunpack.c.l.s4 1966171168
  %v10779 = vunpack.c.0.s8 %v10778
  %v10780 = vlaneseq
  %v10781 = vshrl.u32 %v10780, 7
  %v10782 = vsub.s32 %v10779, %v10781
  %v10783 = vrot.slane %v10769, %v10782
  %v10784 = vcombine.low %v10776, %v10783
  %v10785 = vcombine.low %v5553, %v5557
  %v10786 = vcombine.low %v5561, %v5565
  %v10787 = vcombine.low %v5569, %v5573
  %v10788 = vcombine.low %v5577, %v5581
  %v10790 = vunpack.c.l.s4 1966171168
  %v10791 = vunpack.c.0.s8 %v10790
  %v10792 = vlaneseq
  %v10793 = vshrl.u32 %v10792, 7
  %v10794 = vsub.s32 %v10791, %v10793
  %v10795 = vrot.slane %v10785, %v10794
  %v10797 = vunpack.c.l.s4 1966171168
  %v10798 = vunpack.c.0.s8 %v10797
  %v10799 = vlaneseq
  %v10800 = vshrl.u32 %v10799, 7
  %v10801 = vsub.s32 %v10798, %v10800
  %v10802 = vrot.slane %v10786, %v10801
  %v10804 = vunpack.c.l.s4 1966171168
  %v10805 = vunpack.c.0.s8 %v10804
  %v10806 = vlaneseq
  %v10807 = vshrl.u32 %v10806, 7
  %v10808 = vsub.s32 %v10805, %v10807
  %v10809 = vrot.slane %v10787, %v10808
  %v10811 = vunpack.c.l.s4 1966171168
  %v10812 = vunpack.c.0.s8 %v10811
  %v10813 = vlaneseq
  %v10814 = vshrl.u32 %v10813, 7
  %v10815 = vsub.s32 %v10812, %v10814
  %v10816 = vrot.slane %v10788, %v10815
  %v10817 = vcombine.low %v10795, %v10802
  %v10818 = vcombine.low %v10809, %v10816
  %v10820 = vunpack.c.l.s4 1966171168
  %v10821 = vunpack.c.0.s8 %v10820
  %v10822 = vlaneseq
  %v10823 = vshrl.u32 %v10822, 7
  %v10824 = vsub.s32 %v10821, %v10823
  %v10825 = vrot.slane %v10817, %v10824
  %v10827 = vunpack.c.l.s4 1966171168
  %v10828 = vunpack.c.0.s8 %v10827
  %v10829 = vlaneseq
  %v10830 = vshrl.u32 %v10829, 7
  %v10831 = vsub.s32 %v10828, %v10830
  %v10832 = vrot.slane %v10818, %v10831
  %v10833 = vcombine.low %v10825, %v10832
  %v10834 = vcombine.low %v5585, %v5589
  %v10835 = vcombine.low %v5593, %v5597
  %v10836 = vcombine.low %v5601, %v5605
  %v10837 = vcombine.low %v5609, %v5613
  %v10839 = vunpack.c.l.s4 1966171168
  %v10840 = vunpack.c.0.s8 %v10839
  %v10841 = vlaneseq
  %v10842 = vshrl.u32 %v10841, 7
  %v10843 = vsub.s32 %v10840, %v10842
  %v10844 = vrot.slane %v10834, %v10843
  %v10846 = vunpack.c.l.s4 1966171168
  %v10847 = vunpack.c.0.s8 %v10846
  %v10848 = vlaneseq
  %v10849 = vshrl.u32 %v10848, 7
  %v10850 = vsub.s32 %v10847, %v10849
  %v10851 = vrot.slane %v10835, %v10850
  %v10853 = vunpack.c.l.s4 1966171168
  %v10854 = vunpack.c.0.s8 %v10853
  %v10855 = vlaneseq
  %v10856 = vshrl.u32 %v10855, 7
  %v10857 = vsub.s32 %v10854, %v10856
  %v10858 = vrot.slane %v10836, %v10857
  %v10860 = vunpack.c.l.s4 1966171168
  %v10861 = vunpack.c.0.s8 %v10860
  %v10862 = vlaneseq
  %v10863 = vshrl.u32 %v10862, 7
  %v10864 = vsub.s32 %v10861, %v10863
  %v10865 = vrot.slane %v10837, %v10864
  %v10866 = vcombine.low %v10844, %v10851
  %v10867 = vcombine.low %v10858, %v10865
  %v10869 = vunpack.c.l.s4 1966171168
  %v10870 = vunpack.c.0.s8 %v10869
  %v10871 = vlaneseq
  %v10872 = vshrl.u32 %v10871, 7
  %v10873 = vsub.s32 %v10870, %v10872
  %v10874 = vrot.slane %v10866, %v10873
  %v10876 = vunpack.c.l.s4 1966171168
  %v10877 = vunpack.c.0.s8 %v10876
  %v10878 = vlaneseq
  %v10879 = vshrl.u32 %v10878, 7
  %v10880 = vsub.s32 %v10877, %v10879
  %v10881 = vrot.slane %v10867, %v10880
  %v10882 = vcombine.low %v10874, %v10881
  %v10883 = vcombine.low %v5617, %v5621
  %v10884 = vcombine.low %v5625, %v5629
  %v10885 = vcombine.low %v5633, %v5637
  %v10886 = vcombine.low %v5641, %v5645
  %v10888 = vunpack.c.l.s4 1966171168
  %v10889 = vunpack.c.0.s8 %v10888
  %v10890 = vlaneseq
  %v10891 = vshrl.u32 %v10890, 7
  %v10892 = vsub.s32 %v10889, %v10891
  %v10893 = vrot.slane %v10883, %v10892
  %v10895 = vunpack.c.l.s4 1966171168
  %v10896 = vunpack.c.0.s8 %v10895
  %v10897 = vlaneseq
  %v10898 = vshrl.u32 %v10897, 7
  %v10899 = vsub.s32 %v10896, %v10898
  %v10900 = vrot.slane %v10884, %v10899
  %v10902 = vunpack.c.l.s4 1966171168
  %v10903 = vunpack.c.0.s8 %v10902
  %v10904 = vlaneseq
  %v10905 = vshrl.u32 %v10904, 7
  %v10906 = vsub.s32 %v10903, %v10905
  %v10907 = vrot.slane %v10885, %v10906
  %v10909 = vunpack.c.l.s4 1966171168
  %v10910 = vunpack.c.0.s8 %v10909
  %v10911 = vlaneseq
  %v10912 = vshrl.u32 %v10911, 7
  %v10913 = vsub.s32 %v10910, %v10912
  %v10914 = vrot.slane %v10886, %v10913
  %v10915 = vcombine.low %v10893, %v10900
  %v10916 = vcombine.low %v10907, %v10914
  %v10918 = vunpack.c.l.s4 1966171168
  %v10919 = vunpack.c.0.s8 %v10918
  %v10920 = vlaneseq
  %v10921 = vshrl.u32 %v10920, 7
  %v10922 = vsub.s32 %v10919, %v10921
  %v10923 = vrot.slane %v10915, %v10922
  %v10925 = vunpack.c.l.s4 1966171168
  %v10926 = vunpack.c.0.s8 %v10925
  %v10927 = vlaneseq
  %v10928 = vshrl.u32 %v10927, 7
  %v10929 = vsub.s32 %v10926, %v10928
  %v10930 = vrot.slane %v10916, %v10929
  %v10931 = vcombine.low %v10923, %v10930
  %v10932 = vcombine.low %v5649, %v5653
  %v10933 = vcombine.low %v5657, %v5661
  %v10934 = vcombine.low %v5665, %v5669
  %v10935 = vcombine.low %v5673, %v5677
  %v10937 = vunpack.c.l.s4 1966171168
  %v10938 = vunpack.c.0.s8 %v10937
  %v10939 = vlaneseq
  %v10940 = vshrl.u32 %v10939, 7
  %v10941 = vsub.s32 %v10938, %v10940
  %v10942 = vrot.slane %v10932, %v10941
  %v10944 = vunpack.c.l.s4 1966171168
  %v10945 = vunpack.c.0.s8 %v10944
  %v10946 = vlaneseq
  %v10947 = vshrl.u32 %v10946, 7
  %v10948 = vsub.s32 %v10945, %v10947
  %v10949 = vrot.slane %v10933, %v10948
  %v10951 = vunpack.c.l.s4 1966171168
  %v10952 = vunpack.c.0.s8 %v10951
  %v10953 = vlaneseq
  %v10954 = vshrl.u32 %v10953, 7
  %v10955 = vsub.s32 %v10952, %v10954
  %v10956 = vrot.slane %v10934, %v10955
  %v10958 = vunpack.c.l.s4 1966171168
  %v10959 = vunpack.c.0.s8 %v10958
  %v10960 = vlaneseq
  %v10961 = vshrl.u32 %v10960, 7
  %v10962 = vsub.s32 %v10959, %v10961
  %v10963 = vrot.slane %v10935, %v10962
  %v10964 = vcombine.low %v10942, %v10949
  %v10965 = vcombine.low %v10956, %v10963
  %v10967 = vunpack.c.l.s4 1966171168
  %v10968 = vunpack.c.0.s8 %v10967
  %v10969 = vlaneseq
  %v10970 = vshrl.u32 %v10969, 7
  %v10971 = vsub.s32 %v10968, %v10970
  %v10972 = vrot.slane %v10964, %v10971
  %v10974 = vunpack.c.l.s4 1966171168
  %v10975 = vunpack.c.0.s8 %v10974
  %v10976 = vlaneseq
  %v10977 = vshrl.u32 %v10976, 7
  %v10978 = vsub.s32 %v10975, %v10977
  %v10979 = vrot.slane %v10965, %v10978
  %v10980 = vcombine.low %v10972, %v10979
  %v10981 = vcombine.low %v5681, %v5685
  %v10982 = vcombine.low %v5689, %v5693
  %v10983 = vcombine.low %v5697, %v5701
  %v10984 = vcombine.low %v5705, %v5709
  %v10986 = vunpack.c.l.s4 1966171168
  %v10987 = vunpack.c.0.s8 %v10986
  %v10988 = vlaneseq
  %v10989 = vshrl.u32 %v10988, 7
  %v10990 = vsub.s32 %v10987, %v10989
  %v10991 = vrot.slane %v10981, %v10990
  %v10993 = vunpack.c.l.s4 1966171168
  %v10994 = vunpack.c.0.s8 %v10993
  %v10995 = vlaneseq
  %v10996 = vshrl.u32 %v10995, 7
  %v10997 = vsub.s32 %v10994, %v10996
  %v10998 = vrot.slane %v10982, %v10997
  %v11000 = vunpack.c.l.s4 1966171168
  %v11001 = vunpack.c.0.s8 %v11000
  %v11002 = vlaneseq
  %v11003 = vshrl.u32 %v11002, 7
  %v11004 = vsub.s32 %v11001, %v11003
  %v11005 = vrot.slane %v10983, %v11004
  %v11007 = vunpack.c.l.s4 1966171168
  %v11008 = vunpack.c.0.s8 %v11007
  %v11009 = vlaneseq
  %v11010 = vshrl.u32 %v11009, 7
  %v11011 = vsub.s32 %v11008, %v11010
  %v11012 = vrot.slane %v10984, %v11011
  %v11013 = vcombine.low %v10991, %v10998
  %v11014 = vcombine.low %v11005, %v11012
  %v11016 = vunpack.c.l.s4 1966171168
  %v11017 = vunpack.c.0.s8 %v11016
  %v11018 = vlaneseq
  %v11019 = vshrl.u32 %v11018, 7
  %v11020 = vsub.s32 %v11017, %v11019
  %v11021 = vrot.slane %v11013, %v11020
  %v11023 = vunpack.c.l.s4 1966171168
  %v11024 = vunpack.c.0.s8 %v11023
  %v11025 = vlaneseq
  %v11026 = vshrl.u32 %v11025, 7
  %v11027 = vsub.s32 %v11024, %v11026
  %v11028 = vrot.slane %v11014, %v11027
  %v11029 = vcombine.low %v11021, %v11028
  %v11030 = vcombine.low %v5713, %v5717
  %v11031 = vcombine.low %v5721, %v5725
  %v11032 = vcombine.low %v5729, %v5733
  %v11033 = vcombine.low %v5737, %v5741
  %v11035 = vunpack.c.l.s4 1966171168
  %v11036 = vunpack.c.0.s8 %v11035
  %v11037 = vlaneseq
  %v11038 = vshrl.u32 %v11037, 7
  %v11039 = vsub.s32 %v11036, %v11038
  %v11040 = vrot.slane %v11030, %v11039
  %v11042 = vunpack.c.l.s4 1966171168
  %v11043 = vunpack.c.0.s8 %v11042
  %v11044 = vlaneseq
  %v11045 = vshrl.u32 %v11044, 7
  %v11046 = vsub.s32 %v11043, %v11045
  %v11047 = vrot.slane %v11031, %v11046
  %v11049 = vunpack.c.l.s4 1966171168
  %v11050 = vunpack.c.0.s8 %v11049
  %v11051 = vlaneseq
  %v11052 = vshrl.u32 %v11051, 7
  %v11053 = vsub.s32 %v11050, %v11052
  %v11054 = vrot.slane %v11032, %v11053
  %v11056 = vunpack.c.l.s4 1966171168
  %v11057 = vunpack.c.0.s8 %v11056
  %v11058 = vlaneseq
  %v11059 = vshrl.u32 %v11058, 7
  %v11060 = vsub.s32 %v11057, %v11059
  %v11061 = vrot.slane %v11033, %v11060
  %v11062 = vcombine.low %v11040, %v11047
  %v11063 = vcombine.low %v11054, %v11061
  %v11065 = vunpack.c.l.s4 1966171168
  %v11066 = vunpack.c.0.s8 %v11065
  %v11067 = vlaneseq
  %v11068 = vshrl.u32 %v11067, 7
  %v11069 = vsub.s32 %v11066, %v11068
  %v11070 = vrot.slane %v11062, %v11069
  %v11072 = vunpack.c.l.s4 1966171168
  %v11073 = vunpack.c.0.s8 %v11072
  %v11074 = vlaneseq
  %v11075 = vshrl.u32 %v11074, 7
  %v11076 = vsub.s32 %v11073, %v11075
  %v11077 = vrot.slane %v11063, %v11076
  %v11078 = vcombine.low %v11070, %v11077
  %v11079 = vcombine.low %v5745, %v5749
  %v11080 = vcombine.low %v5753, %v5757
  %v11081 = vcombine.low %v5761, %v5765
  %v11082 = vcombine.low %v5769, %v5773
  %v11084 = vunpack.c.l.s4 1966171168
  %v11085 = vunpack.c.0.s8 %v11084
  %v11086 = vlaneseq
  %v11087 = vshrl.u32 %v11086, 7
  %v11088 = vsub.s32 %v11085, %v11087
  %v11089 = vrot.slane %v11079, %v11088
  %v11091 = vunpack.c.l.s4 1966171168
  %v11092 = vunpack.c.0.s8 %v11091
  %v11093 = vlaneseq
  %v11094 = vshrl.u32 %v11093, 7
  %v11095 = vsub.s32 %v11092, %v11094
  %v11096 = vrot.slane %v11080, %v11095
  %v11098 = vunpack.c.l.s4 1966171168
  %v11099 = vunpack.c.0.s8 %v11098
  %v11100 = vlaneseq
  %v11101 = vshrl.u32 %v11100, 7
  %v11102 = vsub.s32 %v11099, %v11101
  %v11103 = vrot.slane %v11081, %v11102
  %v11105 = vunpack.c.l.s4 1966171168
  %v11106 = vunpack.c.0.s8 %v11105
  %v11107 = vlaneseq
  %v11108 = vshrl.u32 %v11107, 7
  %v11109 = vsub.s32 %v11106, %v11108
  %v11110 = vrot.slane %v11082, %v11109
  %v11111 = vcombine.low %v11089, %v11096
  %v11112 = vcombine.low %v11103, %v11110
  %v11114 = vunpack.c.l.s4 1966171168
  %v11115 = vunpack.c.0.s8 %v11114
  %v11116 = vlaneseq
  %v11117 = vshrl.u32 %v11116, 7
  %v11118 = vsub.s32 %v11115, %v11117
  %v11119 = vrot.slane %v11111, %v11118
  %v11121 = vunpack.c.l.s4 1966171168
  %v11122 = vunpack.c.0.s8 %v11121
  %v11123 = vlaneseq
  %v11124 = vshrl.u32 %v11123, 7
  %v11125 = vsub.s32 %v11122, %v11124
  %v11126 = vrot.slane %v11112, %v11125
  %v11127 = vcombine.low %v11119, %v11126
  %v11128 = vcombine.low %v5777, %v5781
  %v11129 = vcombine.low %v5785, %v5789
  %v11130 = vcombine.low %v5793, %v5797
  %v11131 = vcombine.low %v5801, %v5805
  %v11133 = vunpack.c.l.s4 1966171168
  %v11134 = vunpack.c.0.s8 %v11133
  %v11135 = vlaneseq
  %v11136 = vshrl.u32 %v11135, 7
  %v11137 = vsub.s32 %v11134, %v11136
  %v11138 = vrot.slane %v11128, %v11137
  %v11140 = vunpack.c.l.s4 1966171168
  %v11141 = vunpack.c.0.s8 %v11140
  %v11142 = vlaneseq
  %v11143 = vshrl.u32 %v11142, 7
  %v11144 = vsub.s32 %v11141, %v11143
  %v11145 = vrot.slane %v11129, %v11144
  %v11147 = vunpack.c.l.s4 1966171168
  %v11148 = vunpack.c.0.s8 %v11147
  %v11149 = vlaneseq
  %v11150 = vshrl.u32 %v11149, 7
  %v11151 = vsub.s32 %v11148, %v11150
  %v11152 = vrot.slane %v11130, %v11151
  %v11154 = vunpack.c.l.s4 1966171168
  %v11155 = vunpack.c.0.s8 %v11154
  %v11156 = vlaneseq
  %v11157 = vshrl.u32 %v11156, 7
  %v11158 = vsub.s32 %v11155, %v11157
  %v11159 = vrot.slane %v11131, %v11158
  %v11160 = vcombine.low %v11138, %v11145
  %v11161 = vcombine.low %v11152, %v11159
  %v11163 = vunpack.c.l.s4 1966171168
  %v11164 = vunpack.c.0.s8 %v11163
  %v11165 = vlaneseq
  %v11166 = vshrl.u32 %v11165, 7
  %v11167 = vsub.s32 %v11164, %v11166
  %v11168 = vrot.slane %v11160, %v11167
  %v11170 = vunpack.c.l.s4 1966171168
  %v11171 = vunpack.c.0.s8 %v11170
  %v11172 = vlaneseq
  %v11173 = vshrl.u32 %v11172, 7
  %v11174 = vsub.s32 %v11171, %v11173
  %v11175 = vrot.slane %v11161, %v11174
  %v11176 = vcombine.low %v11168, %v11175
  %v11177 = vcombine.low %v5809, %v5813
  %v11178 = vcombine.low %v5817, %v5821
  %v11179 = vcombine.low %v5825, %v5829
  %v11180 = vcombine.low %v5833, %v5837
  %v11182 = vunpack.c.l.s4 1966171168
  %v11183 = vunpack.c.0.s8 %v11182
  %v11184 = vlaneseq
  %v11185 = vshrl.u32 %v11184, 7
  %v11186 = vsub.s32 %v11183, %v11185
  %v11187 = vrot.slane %v11177, %v11186
  %v11189 = vunpack.c.l.s4 1966171168
  %v11190 = vunpack.c.0.s8 %v11189
  %v11191 = vlaneseq
  %v11192 = vshrl.u32 %v11191, 7
  %v11193 = vsub.s32 %v11190, %v11192
  %v11194 = vrot.slane %v11178, %v11193
  %v11196 = vunpack.c.l.s4 1966171168
  %v11197 = vunpack.c.0.s8 %v11196
  %v11198 = vlaneseq
  %v11199 = vshrl.u32 %v11198, 7
  %v11200 = vsub.s32 %v11197, %v11199
  %v11201 = vrot.slane %v11179, %v11200
  %v11203 = vunpack.c.l.s4 1966171168
  %v11204 = vunpack.c.0.s8 %v11203
  %v11205 = vlaneseq
  %v11206 = vshrl.u32 %v11205, 7
  %v11207 = vsub.s32 %v11204, %v11206
  %v11208 = vrot.slane %v11180, %v11207
  %v11209 = vcombine.low %v11187, %v11194
  %v11210 = vcombine.low %v11201, %v11208
  %v11212 = vunpack.c.l.s4 1966171168
  %v11213 = vunpack.c.0.s8 %v11212
  %v11214 = vlaneseq
  %v11215 = vshrl.u32 %v11214, 7
  %v11216 = vsub.s32 %v11213, %v11215
  %v11217 = vrot.slane %v11209, %v11216
  %v11219 = vunpack.c.l.s4 1966171168
  %v11220 = vunpack.c.0.s8 %v11219
  %v11221 = vlaneseq
  %v11222 = vshrl.u32 %v11221, 7
  %v11223 = vsub.s32 %v11220, %v11222
  %v11224 = vrot.slane %v11210, %v11223
  %v11225 = vcombine.low %v11217, %v11224
  %v11226 = vcombine.low %v5841, %v5845
  %v11227 = vcombine.low %v5849, %v5853
  %v11228 = vcombine.low %v5857, %v5861
  %v11229 = vcombine.low %v5865, %v5869
  %v11231 = vunpack.c.l.s4 1966171168
  %v11232 = vunpack.c.0.s8 %v11231
  %v11233 = vlaneseq
  %v11234 = vshrl.u32 %v11233, 7
  %v11235 = vsub.s32 %v11232, %v11234
  %v11236 = vrot.slane %v11226, %v11235
  %v11238 = vunpack.c.l.s4 1966171168
  %v11239 = vunpack.c.0.s8 %v11238
  %v11240 = vlaneseq
  %v11241 = vshrl.u32 %v11240, 7
  %v11242 = vsub.s32 %v11239, %v11241
  %v11243 = vrot.slane %v11227, %v11242
  %v11245 = vunpack.c.l.s4 1966171168
  %v11246 = vunpack.c.0.s8 %v11245
  %v11247 = vlaneseq
  %v11248 = vshrl.u32 %v11247, 7
  %v11249 = vsub.s32 %v11246, %v11248
  %v11250 = vrot.slane %v11228, %v11249
  %v11252 = vunpack.c.l.s4 1966171168
  %v11253 = vunpack.c.0.s8 %v11252
  %v11254 = vlaneseq
  %v11255 = vshrl.u32 %v11254, 7
  %v11256 = vsub.s32 %v11253, %v11255
  %v11257 = vrot.slane %v11229, %v11256
  %v11258 = vcombine.low %v11236, %v11243
  %v11259 = vcombine.low %v11250, %v11257
  %v11261 = vunpack.c.l.s4 1966171168
  %v11262 = vunpack.c.0.s8 %v11261
  %v11263 = vlaneseq
  %v11264 = vshrl.u32 %v11263, 7
  %v11265 = vsub.s32 %v11262, %v11264
  %v11266 = vrot.slane %v11258, %v11265
  %v11268 = vunpack.c.l.s4 1966171168
  %v11269 = vunpack.c.0.s8 %v11268
  %v11270 = vlaneseq
  %v11271 = vshrl.u32 %v11270, 7
  %v11272 = vsub.s32 %v11269, %v11271
  %v11273 = vrot.slane %v11259, %v11272
  %v11274 = vcombine.low %v11266, %v11273
  %v11275 = vcombine.low %v5873, %v5877
  %v11276 = vcombine.low %v5881, %v5885
  %v11277 = vcombine.low %v5889, %v5893
  %v11278 = vcombine.low %v5897, %v5901
  %v11280 = vunpack.c.l.s4 1966171168
  %v11281 = vunpack.c.0.s8 %v11280
  %v11282 = vlaneseq
  %v11283 = vshrl.u32 %v11282, 7
  %v11284 = vsub.s32 %v11281, %v11283
  %v11285 = vrot.slane %v11275, %v11284
  %v11287 = vunpack.c.l.s4 1966171168
  %v11288 = vunpack.c.0.s8 %v11287
  %v11289 = vlaneseq
  %v11290 = vshrl.u32 %v11289, 7
  %v11291 = vsub.s32 %v11288, %v11290
  %v11292 = vrot.slane %v11276, %v11291
  %v11294 = vunpack.c.l.s4 1966171168
  %v11295 = vunpack.c.0.s8 %v11294
  %v11296 = vlaneseq
  %v11297 = vshrl.u32 %v11296, 7
  %v11298 = vsub.s32 %v11295, %v11297
  %v11299 = vrot.slane %v11277, %v11298
  %v11301 = vunpack.c.l.s4 1966171168
  %v11302 = vunpack.c.0.s8 %v11301
  %v11303 = vlaneseq
  %v11304 = vshrl.u32 %v11303, 7
  %v11305 = vsub.s32 %v11302, %v11304
  %v11306 = vrot.slane %v11278, %v11305
  %v11307 = vcombine.low %v11285, %v11292
  %v11308 = vcombine.low %v11299, %v11306
  %v11310 = vunpack.c.l.s4 1966171168
  %v11311 = vunpack.c.0.s8 %v11310
  %v11312 = vlaneseq
  %v11313 = vshrl.u32 %v11312, 7
  %v11314 = vsub.s32 %v11311, %v11313
  %v11315 = vrot.slane %v11307, %v11314
  %v11317 = vunpack.c.l.s4 1966171168
  %v11318 = vunpack.c.0.s8 %v11317
  %v11319 = vlaneseq
  %v11320 = vshrl.u32 %v11319, 7
  %v11321 = vsub.s32 %v11318, %v11320
  %v11322 = vrot.slane %v11308, %v11321
  %v11323 = vcombine.low %v11315, %v11322
  %v11324 = vcombine.low %v5905, %v5909
  %v11325 = vcombine.low %v5913, %v5917
  %v11326 = vcombine.low %v5921, %v5925
  %v11327 = vcombine.low %v5929, %v5933
  %v11329 = vunpack.c.l.s4 1966171168
  %v11330 = vunpack.c.0.s8 %v11329
  %v11331 = vlaneseq
  %v11332 = vshrl.u32 %v11331, 7
  %v11333 = vsub.s32 %v11330, %v11332
  %v11334 = vrot.slane %v11324, %v11333
  %v11336 = vunpack.c.l.s4 1966171168
  %v11337 = vunpack.c.0.s8 %v11336
  %v11338 = vlaneseq
  %v11339 = vshrl.u32 %v11338, 7
  %v11340 = vsub.s32 %v11337, %v11339
  %v11341 = vrot.slane %v11325, %v11340
  %v11343 = vunpack.c.l.s4 1966171168
  %v11344 = vunpack.c.0.s8 %v11343
  %v11345 = vlaneseq
  %v11346 = vshrl.u32 %v11345, 7
  %v11347 = vsub.s32 %v11344, %v11346
  %v11348 = vrot.slane %v11326, %v11347
  %v11350 = vunpack.c.l.s4 1966171168
  %v11351 = vunpack.c.0.s8 %v11350
  %v11352 = vlaneseq
  %v11353 = vshrl.u32 %v11352, 7
  %v11354 = vsub.s32 %v11351, %v11353
  %v11355 = vrot.slane %v11327, %v11354
  %v11356 = vcombine.low %v11334, %v11341
  %v11357 = vcombine.low %v11348, %v11355
  %v11359 = vunpack.c.l.s4 1966171168
  %v11360 = vunpack.c.0.s8 %v11359
  %v11361 = vlaneseq
  %v11362 = vshrl.u32 %v11361, 7
  %v11363 = vsub.s32 %v11360, %v11362
  %v11364 = vrot.slane %v11356, %v11363
  %v11366 = vunpack.c.l.s4 1966171168
  %v11367 = vunpack.c.0.s8 %v11366
  %v11368 = vlaneseq
  %v11369 = vshrl.u32 %v11368, 7
  %v11370 = vsub.s32 %v11367, %v11369
  %v11371 = vrot.slane %v11357, %v11370
  %v11372 = vcombine.low %v11364, %v11371
  %v11373 = vcombine.low %v5937, %v5941
  %v11374 = vcombine.low %v5945, %v5949
  %v11375 = vcombine.low %v5953, %v5957
  %v11376 = vcombine.low %v5961, %v5965
  %v11378 = vunpack.c.l.s4 1966171168
  %v11379 = vunpack.c.0.s8 %v11378
  %v11380 = vlaneseq
  %v11381 = vshrl.u32 %v11380, 7
  %v11382 = vsub.s32 %v11379, %v11381
  %v11383 = vrot.slane %v11373, %v11382
  %v11385 = vunpack.c.l.s4 1966171168
  %v11386 = vunpack.c.0.s8 %v11385
  %v11387 = vlaneseq
  %v11388 = vshrl.u32 %v11387, 7
  %v11389 = vsub.s32 %v11386, %v11388
  %v11390 = vrot.slane %v11374, %v11389
  %v11392 = vunpack.c.l.s4 1966171168
  %v11393 = vunpack.c.0.s8 %v11392
  %v11394 = vlaneseq
  %v11395 = vshrl.u32 %v11394, 7
  %v11396 = vsub.s32 %v11393, %v11395
  %v11397 = vrot.slane %v11375, %v11396
  %v11399 = vunpack.c.l.s4 1966171168
  %v11400 = vunpack.c.0.s8 %v11399
  %v11401 = vlaneseq
  %v11402 = vshrl.u32 %v11401, 7
  %v11403 = vsub.s32 %v11400, %v11402
  %v11404 = vrot.slane %v11376, %v11403
  %v11405 = vcombine.low %v11383, %v11390
  %v11406 = vcombine.low %v11397, %v11404
  %v11408 = vunpack.c.l.s4 1966171168
  %v11409 = vunpack.c.0.s8 %v11408
  %v11410 = vlaneseq
  %v11411 = vshrl.u32 %v11410, 7
  %v11412 = vsub.s32 %v11409, %v11411
  %v11413 = vrot.slane %v11405, %v11412
  %v11415 = vunpack.c.l.s4 1966171168
  %v11416 = vunpack.c.0.s8 %v11415
  %v11417 = vlaneseq
  %v11418 = vshrl.u32 %v11417, 7
  %v11419 = vsub.s32 %v11416, %v11418
  %v11420 = vrot.slane %v11406, %v11419
  %v11421 = vcombine.low %v11413, %v11420
  %v11422 = vcombine.low %v5969, %v5973
  %v11423 = vcombine.low %v5977, %v5981
  %v11424 = vcombine.low %v5985, %v5989
  %v11425 = vcombine.low %v5993, %v5997
  %v11427 = vunpack.c.l.s4 1966171168
  %v11428 = vunpack.c.0.s8 %v11427
  %v11429 = vlaneseq
  %v11430 = vshrl.u32 %v11429, 7
  %v11431 = vsub.s32 %v11428, %v11430
  %v11432 = vrot.slane %v11422, %v11431
  %v11434 = vunpack.c.l.s4 1966171168
  %v11435 = vunpack.c.0.s8 %v11434
  %v11436 = vlaneseq
  %v11437 = vshrl.u32 %v11436, 7
  %v11438 = vsub.s32 %v11435, %v11437
  %v11439 = vrot.slane %v11423, %v11438
  %v11441 = vunpack.c.l.s4 1966171168
  %v11442 = vunpack.c.0.s8 %v11441
  %v11443 = vlaneseq
  %v11444 = vshrl.u32 %v11443, 7
  %v11445 = vsub.s32 %v11442, %v11444
  %v11446 = vrot.slane %v11424, %v11445
  %v11448 = vunpack.c.l.s4 1966171168
  %v11449 = vunpack.c.0.s8 %v11448
  %v11450 = vlaneseq
  %v11451 = vshrl.u32 %v11450, 7
  %v11452 = vsub.s32 %v11449, %v11451
  %v11453 = vrot.slane %v11425, %v11452
  %v11454 = vcombine.low %v11432, %v11439
  %v11455 = vcombine.low %v11446, %v11453
  %v11457 = vunpack.c.l.s4 1966171168
  %v11458 = vunpack.c.0.s8 %v11457
  %v11459 = vlaneseq
  %v11460 = vshrl.u32 %v11459, 7
  %v11461 = vsub.s32 %v11458, %v11460
  %v11462 = vrot.slane %v11454, %v11461
  %v11464 = vunpack.c.l.s4 1966171168
  %v11465 = vunpack.c.0.s8 %v11464
  %v11466 = vlaneseq
  %v11467 = vshrl.u32 %v11466, 7
  %v11468 = vsub.s32 %v11465, %v11467
  %v11469 = vrot.slane %v11455, %v11468
  %v11470 = vcombine.low %v11462, %v11469
  %v11471 = vcombine.low %v6001, %v6005
  %v11472 = vcombine.low %v6009, %v6013
  %v11473 = vcombine.low %v6017, %v6021
  %v11474 = vcombine.low %v6025, %v6029
  %v11476 = vunpack.c.l.s4 1966171168
  %v11477 = vunpack.c.0.s8 %v11476
  %v11478 = vlaneseq
  %v11479 = vshrl.u32 %v11478, 7
  %v11480 = vsub.s32 %v11477, %v11479
  %v11481 = vrot.slane %v11471, %v11480
  %v11483 = vunpack.c.l.s4 1966171168
  %v11484 = vunpack.c.0.s8 %v11483
  %v11485 = vlaneseq
  %v11486 = vshrl.u32 %v11485, 7
  %v11487 = vsub.s32 %v11484, %v11486
  %v11488 = vrot.slane %v11472, %v11487
  %v11490 = vunpack.c.l.s4 1966171168
  %v11491 = vunpack.c.0.s8 %v11490
  %v11492 = vlaneseq
  %v11493 = vshrl.u32 %v11492, 7
  %v11494 = vsub.s32 %v11491, %v11493
  %v11495 = vrot.slane %v11473, %v11494
  %v11497 = vunpack.c.l.s4 1966171168
  %v11498 = vunpack.c.0.s8 %v11497
  %v11499 = vlaneseq
  %v11500 = vshrl.u32 %v11499, 7
  %v11501 = vsub.s32 %v11498, %v11500
  %v11502 = vrot.slane %v11474, %v11501
  %v11503 = vcombine.low %v11481, %v11488
  %v11504 = vcombine.low %v11495, %v11502
  %v11506 = vunpack.c.l.s4 1966171168
  %v11507 = vunpack.c.0.s8 %v11506
  %v11508 = vlaneseq
  %v11509 = vshrl.u32 %v11508, 7
  %v11510 = vsub.s32 %v11507, %v11509
  %v11511 = vrot.slane %v11503, %v11510
  %v11513 = vunpack.c.l.s4 1966171168
  %v11514 = vunpack.c.0.s8 %v11513
  %v11515 = vlaneseq
  %v11516 = vshrl.u32 %v11515, 7
  %v11517 = vsub.s32 %v11514, %v11516
  %v11518 = vrot.slane %v11504, %v11517
  %v11519 = vcombine.low %v11511, %v11518
  %v11520 = vcombine.low %v6033, %v6037
  %v11521 = vcombine.low %v6041, %v6045
  %v11522 = vcombine.low %v6049, %v6053
  %v11523 = vcombine.low %v6057, %v6061
  %v11525 = vunpack.c.l.s4 1966171168
  %v11526 = vunpack.c.0.s8 %v11525
  %v11527 = vlaneseq
  %v11528 = vshrl.u32 %v11527, 7
  %v11529 = vsub.s32 %v11526, %v11528
  %v11530 = vrot.slane %v11520, %v11529
  %v11532 = vunpack.c.l.s4 1966171168
  %v11533 = vunpack.c.0.s8 %v11532
  %v11534 = vlaneseq
  %v11535 = vshrl.u32 %v11534, 7
  %v11536 = vsub.s32 %v11533, %v11535
  %v11537 = vrot.slane %v11521, %v11536
  %v11539 = vunpack.c.l.s4 1966171168
  %v11540 = vunpack.c.0.s8 %v11539
  %v11541 = vlaneseq
  %v11542 = vshrl.u32 %v11541, 7
  %v11543 = vsub.s32 %v11540, %v11542
  %v11544 = vrot.slane %v11522, %v11543
  %v11546 = vunpack.c.l.s4 1966171168
  %v11547 = vunpack.c.0.s8 %v11546
  %v11548 = vlaneseq
  %v11549 = vshrl.u32 %v11548, 7
  %v11550 = vsub.s32 %v11547, %v11549
  %v11551 = vrot.slane %v11523, %v11550
  %v11552 = vcombine.low %v11530, %v11537
  %v11553 = vcombine.low %v11544, %v11551
  %v11555 = vunpack.c.l.s4 1966171168
  %v11556 = vunpack.c.0.s8 %v11555
  %v11557 = vlaneseq
  %v11558 = vshrl.u32 %v11557, 7
  %v11559 = vsub.s32 %v11556, %v11558
  %v11560 = vrot.slane %v11552, %v11559
  %v11562 = vunpack.c.l.s4 1966171168
  %v11563 = vunpack.c.0.s8 %v11562
  %v11564 = vlaneseq
  %v11565 = vshrl.u32 %v11564, 7
  %v11566 = vsub.s32 %v11563, %v11565
  %v11567 = vrot.slane %v11553, %v11566
  %v11568 = vcombine.low %v11560, %v11567
  %v11569 = vcombine.low %v6065, %v6069
  %v11570 = vcombine.low %v6073, %v6077
  %v11571 = vcombine.low %v6081, %v6085
  %v11572 = vcombine.low %v6089, %v6093
  %v11574 = vunpack.c.l.s4 1966171168
  %v11575 = vunpack.c.0.s8 %v11574
  %v11576 = vlaneseq
  %v11577 = vshrl.u32 %v11576, 7
  %v11578 = vsub.s32 %v11575, %v11577
  %v11579 = vrot.slane %v11569, %v11578
  %v11581 = vunpack.c.l.s4 1966171168
  %v11582 = vunpack.c.0.s8 %v11581
  %v11583 = vlaneseq
  %v11584 = vshrl.u32 %v11583, 7
  %v11585 = vsub.s32 %v11582, %v11584
  %v11586 = vrot.slane %v11570, %v11585
  %v11588 = vunpack.c.l.s4 1966171168
  %v11589 = vunpack.c.0.s8 %v11588
  %v11590 = vlaneseq
  %v11591 = vshrl.u32 %v11590, 7
  %v11592 = vsub.s32 %v11589, %v11591
  %v11593 = vrot.slane %v11571, %v11592
  %v11595 = vunpack.c.l.s4 1966171168
  %v11596 = vunpack.c.0.s8 %v11595
  %v11597 = vlaneseq
  %v11598 = vshrl.u32 %v11597, 7
  %v11599 = vsub.s32 %v11596, %v11598
  %v11600 = vrot.slane %v11572, %v11599
  %v11601 = vcombine.low %v11579, %v11586
  %v11602 = vcombine.low %v11593, %v11600
  %v11604 = vunpack.c.l.s4 1966171168
  %v11605 = vunpack.c.0.s8 %v11604
  %v11606 = vlaneseq
  %v11607 = vshrl.u32 %v11606, 7
  %v11608 = vsub.s32 %v11605, %v11607
  %v11609 = vrot.slane %v11601, %v11608
  %v11611 = vunpack.c.l.s4 1966171168
  %v11612 = vunpack.c.0.s8 %v11611
  %v11613 = vlaneseq
  %v11614 = vshrl.u32 %v11613, 7
  %v11615 = vsub.s32 %v11612, %v11614
  %v11616 = vrot.slane %v11602, %v11615
  %v11617 = vcombine.low %v11609, %v11616
  %v11618 = vcombine.low %v6097, %v6101
  %v11619 = vcombine.low %v6105, %v6109
  %v11620 = vcombine.low %v6113, %v6117
  %v11621 = vcombine.low %v6121, %v6125
  %v11623 = vunpack.c.l.s4 1966171168
  %v11624 = vunpack.c.0.s8 %v11623
  %v11625 = vlaneseq
  %v11626 = vshrl.u32 %v11625, 7
  %v11627 = vsub.s32 %v11624, %v11626
  %v11628 = vrot.slane %v11618, %v11627
  %v11630 = vunpack.c.l.s4 1966171168
  %v11631 = vunpack.c.0.s8 %v11630
  %v11632 = vlaneseq
  %v11633 = vshrl.u32 %v11632, 7
  %v11634 = vsub.s32 %v11631, %v11633
  %v11635 = vrot.slane %v11619, %v11634
  %v11637 = vunpack.c.l.s4 1966171168
  %v11638 = vunpack.c.0.s8 %v11637
  %v11639 = vlaneseq
  %v11640 = vshrl.u32 %v11639, 7
  %v11641 = vsub.s32 %v11638, %v11640
  %v11642 = vrot.slane %v11620, %v11641
  %v11644 = vunpack.c.l.s4 1966171168
  %v11645 = vunpack.c.0.s8 %v11644
  %v11646 = vlaneseq
  %v11647 = vshrl.u32 %v11646, 7
  %v11648 = vsub.s32 %v11645, %v11647
  %v11649 = vrot.slane %v11621, %v11648
  %v11650 = vcombine.low %v11628, %v11635
  %v11651 = vcombine.low %v11642, %v11649
  %v11653 = vunpack.c.l.s4 1966171168
  %v11654 = vunpack.c.0.s8 %v11653
  %v11655 = vlaneseq
  %v11656 = vshrl.u32 %v11655, 7
  %v11657 = vsub.s32 %v11654, %v11656
  %v11658 = vrot.slane %v11650, %v11657
  %v11660 = vunpack.c.l.s4 1966171168
  %v11661 = vunpack.c.0.s8 %v11660
  %v11662 = vlaneseq
  %v11663 = vshrl.u32 %v11662, 7
  %v11664 = vsub.s32 %v11661, %v11663
  %v11665 = vrot.slane %v11651, %v11664
  %v11666 = vcombine.low %v11658, %v11665
  %v11667 = vcombine.low %v6129, %v6133
  %v11668 = vcombine.low %v6137, %v6141
  %v11669 = vcombine.low %v6145, %v6149
  %v11670 = vcombine.low %v6153, %v6157
  %v11672 = vunpack.c.l.s4 1966171168
  %v11673 = vunpack.c.0.s8 %v11672
  %v11674 = vlaneseq
  %v11675 = vshrl.u32 %v11674, 7
  %v11676 = vsub.s32 %v11673, %v11675
  %v11677 = vrot.slane %v11667, %v11676
  %v11679 = vunpack.c.l.s4 1966171168
  %v11680 = vunpack.c.0.s8 %v11679
  %v11681 = vlaneseq
  %v11682 = vshrl.u32 %v11681, 7
  %v11683 = vsub.s32 %v11680, %v11682
  %v11684 = vrot.slane %v11668, %v11683
  %v11686 = vunpack.c.l.s4 1966171168
  %v11687 = vunpack.c.0.s8 %v11686
  %v11688 = vlaneseq
  %v11689 = vshrl.u32 %v11688, 7
  %v11690 = vsub.s32 %v11687, %v11689
  %v11691 = vrot.slane %v11669, %v11690
  %v11693 = vunpack.c.l.s4 1966171168
  %v11694 = vunpack.c.0.s8 %v11693
  %v11695 = vlaneseq
  %v11696 = vshrl.u32 %v11695, 7
  %v11697 = vsub.s32 %v11694, %v11696
  %v11698 = vrot.slane %v11670, %v11697
  %v11699 = vcombine.low %v11677, %v11684
  %v11700 = vcombine.low %v11691, %v11698
  %v11702 = vunpack.c.l.s4 1966171168
  %v11703 = vunpack.c.0.s8 %v11702
  %v11704 = vlaneseq
  %v11705 = vshrl.u32 %v11704, 7
  %v11706 = vsub.s32 %v11703, %v11705
  %v11707 = vrot.slane %v11699, %v11706
  %v11709 = vunpack.c.l.s4 1966171168
  %v11710 = vunpack.c.0.s8 %v11709
  %v11711 = vlaneseq
  %v11712 = vshrl.u32 %v11711, 7
  %v11713 = vsub.s32 %v11710, %v11712
  %v11714 = vrot.slane %v11700, %v11713
  %v11715 = vcombine.low %v11707, %v11714
  %v11716 = vcombine.low %v6161, %v6165
  %v11717 = vcombine.low %v6169, %v6173
  %v11718 = vcombine.low %v6177, %v6181
  %v11719 = vcombine.low %v6185, %v6189
  %v11721 = vunpack.c.l.s4 1966171168
  %v11722 = vunpack.c.0.s8 %v11721
  %v11723 = vlaneseq
  %v11724 = vshrl.u32 %v11723, 7
  %v11725 = vsub.s32 %v11722, %v11724
  %v11726 = vrot.slane %v11716, %v11725
  %v11728 = vunpack.c.l.s4 1966171168
  %v11729 = vunpack.c.0.s8 %v11728
  %v11730 = vlaneseq
  %v11731 = vshrl.u32 %v11730, 7
  %v11732 = vsub.s32 %v11729, %v11731
  %v11733 = vrot.slane %v11717, %v11732
  %v11735 = vunpack.c.l.s4 1966171168
  %v11736 = vunpack.c.0.s8 %v11735
  %v11737 = vlaneseq
  %v11738 = vshrl.u32 %v11737, 7
  %v11739 = vsub.s32 %v11736, %v11738
  %v11740 = vrot.slane %v11718, %v11739
  %v11742 = vunpack.c.l.s4 1966171168
  %v11743 = vunpack.c.0.s8 %v11742
  %v11744 = vlaneseq
  %v11745 = vshrl.u32 %v11744, 7
  %v11746 = vsub.s32 %v11743, %v11745
  %v11747 = vrot.slane %v11719, %v11746
  %v11748 = vcombine.low %v11726, %v11733
  %v11749 = vcombine.low %v11740, %v11747
  %v11751 = vunpack.c.l.s4 1966171168
  %v11752 = vunpack.c.0.s8 %v11751
  %v11753 = vlaneseq
  %v11754 = vshrl.u32 %v11753, 7
  %v11755 = vsub.s32 %v11752, %v11754
  %v11756 = vrot.slane %v11748, %v11755
  %v11758 = vunpack.c.l.s4 1966171168
  %v11759 = vunpack.c.0.s8 %v11758
  %v11760 = vlaneseq
  %v11761 = vshrl.u32 %v11760, 7
  %v11762 = vsub.s32 %v11759, %v11761
  %v11763 = vrot.slane %v11749, %v11762
  %v11764 = vcombine.low %v11756, %v11763
  %v11765 = vcombine.low %v6193, %v6197
  %v11766 = vcombine.low %v6201, %v6205
  %v11767 = vcombine.low %v6209, %v6213
  %v11768 = vcombine.low %v6217, %v6221
  %v11770 = vunpack.c.l.s4 1966171168
  %v11771 = vunpack.c.0.s8 %v11770
  %v11772 = vlaneseq
  %v11773 = vshrl.u32 %v11772, 7
  %v11774 = vsub.s32 %v11771, %v11773
  %v11775 = vrot.slane %v11765, %v11774
  %v11777 = vunpack.c.l.s4 1966171168
  %v11778 = vunpack.c.0.s8 %v11777
  %v11779 = vlaneseq
  %v11780 = vshrl.u32 %v11779, 7
  %v11781 = vsub.s32 %v11778, %v11780
  %v11782 = vrot.slane %v11766, %v11781
  %v11784 = vunpack.c.l.s4 1966171168
  %v11785 = vunpack.c.0.s8 %v11784
  %v11786 = vlaneseq
  %v11787 = vshrl.u32 %v11786, 7
  %v11788 = vsub.s32 %v11785, %v11787
  %v11789 = vrot.slane %v11767, %v11788
  %v11791 = vunpack.c.l.s4 1966171168
  %v11792 = vunpack.c.0.s8 %v11791
  %v11793 = vlaneseq
  %v11794 = vshrl.u32 %v11793, 7
  %v11795 = vsub.s32 %v11792, %v11794
  %v11796 = vrot.slane %v11768, %v11795
  %v11797 = vcombine.low %v11775, %v11782
  %v11798 = vcombine.low %v11789, %v11796
  %v11800 = vunpack.c.l.s4 1966171168
  %v11801 = vunpack.c.0.s8 %v11800
  %v11802 = vlaneseq
  %v11803 = vshrl.u32 %v11802, 7
  %v11804 = vsub.s32 %v11801, %v11803
  %v11805 = vrot.slane %v11797, %v11804
  %v11807 = vunpack.c.l.s4 1966171168
  %v11808 = vunpack.c.0.s8 %v11807
  %v11809 = vlaneseq
  %v11810 = vshrl.u32 %v11809, 7
  %v11811 = vsub.s32 %v11808, %v11810
  %v11812 = vrot.slane %v11798, %v11811
  %v11813 = vcombine.low %v11805, %v11812
  %v11814 = vcombine.low %v6225, %v6229
  %v11815 = vcombine.low %v6233, %v6237
  %v11816 = vcombine.low %v6241, %v6245
  %v11817 = vcombine.low %v6249, %v6253
  %v11819 = vunpack.c.l.s4 1966171168
  %v11820 = vunpack.c.0.s8 %v11819
  %v11821 = vlaneseq
  %v11822 = vshrl.u32 %v11821, 7
  %v11823 = vsub.s32 %v11820, %v11822
  %v11824 = vrot.slane %v11814, %v11823
  %v11826 = vunpack.c.l.s4 1966171168
  %v11827 = vunpack.c.0.s8 %v11826
  %v11828 = vlaneseq
  %v11829 = vshrl.u32 %v11828, 7
  %v11830 = vsub.s32 %v11827, %v11829
  %v11831 = vrot.slane %v11815, %v11830
  %v11833 = vunpack.c.l.s4 1966171168
  %v11834 = vunpack.c.0.s8 %v11833
  %v11835 = vlaneseq
  %v11836 = vshrl.u32 %v11835, 7
  %v11837 = vsub.s32 %v11834, %v11836
  %v11838 = vrot.slane %v11816, %v11837
  %v11840 = vunpack.c.l.s4 1966171168
  %v11841 = vunpack.c.0.s8 %v11840
  %v11842 = vlaneseq
  %v11843 = vshrl.u32 %v11842, 7
  %v11844 = vsub.s32 %v11841, %v11843
  %v11845 = vrot.slane %v11817, %v11844
  %v11846 = vcombine.low %v11824, %v11831
  %v11847 = vcombine.low %v11838, %v11845
  %v11849 = vunpack.c.l.s4 1966171168
  %v11850 = vunpack.c.0.s8 %v11849
  %v11851 = vlaneseq
  %v11852 = vshrl.u32 %v11851, 7
  %v11853 = vsub.s32 %v11850, %v11852
  %v11854 = vrot.slane %v11846, %v11853
  %v11856 = vunpack.c.l.s4 1966171168
  %v11857 = vunpack.c.0.s8 %v11856
  %v11858 = vlaneseq
  %v11859 = vshrl.u32 %v11858, 7
  %v11860 = vsub.s32 %v11857, %v11859
  %v11861 = vrot.slane %v11847, %v11860
  %v11862 = vcombine.low %v11854, %v11861
  %v11863 = vcombine.low %v6257, %v6261
  %v11864 = vcombine.low %v6265, %v6269
  %v11865 = vcombine.low %v6273, %v6277
  %v11866 = vcombine.low %v6281, %v6285
  %v11868 = vunpack.c.l.s4 1966171168
  %v11869 = vunpack.c.0.s8 %v11868
  %v11870 = vlaneseq
  %v11871 = vshrl.u32 %v11870, 7
  %v11872 = vsub.s32 %v11869, %v11871
  %v11873 = vrot.slane %v11863, %v11872
  %v11875 = vunpack.c.l.s4 1966171168
  %v11876 = vunpack.c.0.s8 %v11875
  %v11877 = vlaneseq
  %v11878 = vshrl.u32 %v11877, 7
  %v11879 = vsub.s32 %v11876, %v11878
  %v11880 = vrot.slane %v11864, %v11879
  %v11882 = vunpack.c.l.s4 1966171168
  %v11883 = vunpack.c.0.s8 %v11882
  %v11884 = vlaneseq
  %v11885 = vshrl.u32 %v11884, 7
  %v11886 = vsub.s32 %v11883, %v11885
  %v11887 = vrot.slane %v11865, %v11886
  %v11889 = vunpack.c.l.s4 1966171168
  %v11890 = vunpack.c.0.s8 %v11889
  %v11891 = vlaneseq
  %v11892 = vshrl.u32 %v11891, 7
  %v11893 = vsub.s32 %v11890, %v11892
  %v11894 = vrot.slane %v11866, %v11893
  %v11895 = vcombine.low %v11873, %v11880
  %v11896 = vcombine.low %v11887, %v11894
  %v11898 = vunpack.c.l.s4 1966171168
  %v11899 = vunpack.c.0.s8 %v11898
  %v11900 = vlaneseq
  %v11901 = vshrl.u32 %v11900, 7
  %v11902 = vsub.s32 %v11899, %v11901
  %v11903 = vrot.slane %v11895, %v11902
  %v11905 = vunpack.c.l.s4 1966171168
  %v11906 = vunpack.c.0.s8 %v11905
  %v11907 = vlaneseq
  %v11908 = vshrl.u32 %v11907, 7
  %v11909 = vsub.s32 %v11906, %v11908
  %v11910 = vrot.slane %v11896, %v11909
  %v11911 = vcombine.low %v11903, %v11910
  %v11912 = vcombine.low %v6289, %v6293
  %v11913 = vcombine.low %v6297, %v6301
  %v11914 = vcombine.low %v6305, %v6309
  %v11915 = vcombine.low %v6313, %v6317
  %v11917 = vunpack.c.l.s4 1966171168
  %v11918 = vunpack.c.0.s8 %v11917
  %v11919 = vlaneseq
  %v11920 = vshrl.u32 %v11919, 7
  %v11921 = vsub.s32 %v11918, %v11920
  %v11922 = vrot.slane %v11912, %v11921
  %v11924 = vunpack.c.l.s4 1966171168
  %v11925 = vunpack.c.0.s8 %v11924
  %v11926 = vlaneseq
  %v11927 = vshrl.u32 %v11926, 7
  %v11928 = vsub.s32 %v11925, %v11927
  %v11929 = vrot.slane %v11913, %v11928
  %v11931 = vunpack.c.l.s4 1966171168
  %v11932 = vunpack.c.0.s8 %v11931
  %v11933 = vlaneseq
  %v11934 = vshrl.u32 %v11933, 7
  %v11935 = vsub.s32 %v11932, %v11934
  %v11936 = vrot.slane %v11914, %v11935
  %v11938 = vunpack.c.l.s4 1966171168
  %v11939 = vunpack.c.0.s8 %v11938
  %v11940 = vlaneseq
  %v11941 = vshrl.u32 %v11940, 7
  %v11942 = vsub.s32 %v11939, %v11941
  %v11943 = vrot.slane %v11915, %v11942
  %v11944 = vcombine.low %v11922, %v11929
  %v11945 = vcombine.low %v11936, %v11943
  %v11947 = vunpack.c.l.s4 1966171168
  %v11948 = vunpack.c.0.s8 %v11947
  %v11949 = vlaneseq
  %v11950 = vshrl.u32 %v11949, 7
  %v11951 = vsub.s32 %v11948, %v11950
  %v11952 = vrot.slane %v11944, %v11951
  %v11954 = vunpack.c.l.s4 1966171168
  %v11955 = vunpack.c.0.s8 %v11954
  %v11956 = vlaneseq
  %v11957 = vshrl.u32 %v11956, 7
  %v11958 = vsub.s32 %v11955, %v11957
  %v11959 = vrot.slane %v11945, %v11958
  %v11960 = vcombine.low %v11952, %v11959
  %v11961 = vcombine.low %v6321, %v6325
  %v11962 = vcombine.low %v6329, %v6333
  %v11963 = vcombine.low %v6337, %v6341
  %v11964 = vcombine.low %v6345, %v6349
  %v11966 = vunpack.c.l.s4 1966171168
  %v11967 = vunpack.c.0.s8 %v11966
  %v11968 = vlaneseq
  %v11969 = vshrl.u32 %v11968, 7
  %v11970 = vsub.s32 %v11967, %v11969
  %v11971 = vrot.slane %v11961, %v11970
  %v11973 = vunpack.c.l.s4 1966171168
  %v11974 = vunpack.c.0.s8 %v11973
  %v11975 = vlaneseq
  %v11976 = vshrl.u32 %v11975, 7
  %v11977 = vsub.s32 %v11974, %v11976
  %v11978 = vrot.slane %v11962, %v11977
  %v11980 = vunpack.c.l.s4 1966171168
  %v11981 = vunpack.c.0.s8 %v11980
  %v11982 = vlaneseq
  %v11983 = vshrl.u32 %v11982, 7
  %v11984 = vsub.s32 %v11981, %v11983
  %v11985 = vrot.slane %v11963, %v11984
  %v11987 = vunpack.c.l.s4 1966171168
  %v11988 = vunpack.c.0.s8 %v11987
  %v11989 = vlaneseq
  %v11990 = vshrl.u32 %v11989, 7
  %v11991 = vsub.s32 %v11988, %v11990
  %v11992 = vrot.slane %v11964, %v11991
  %v11993 = vcombine.low %v11971, %v11978
  %v11994 = vcombine.low %v11985, %v11992
  %v11996 = vunpack.c.l.s4 1966171168
  %v11997 = vunpack.c.0.s8 %v11996
  %v11998 = vlaneseq
  %v11999 = vshrl.u32 %v11998, 7
  %v12000 = vsub.s32 %v11997, %v11999
  %v12001 = vrot.slane %v11993, %v12000
  %v12003 = vunpack.c.l.s4 1966171168
  %v12004 = vunpack.c.0.s8 %v12003
  %v12005 = vlaneseq
  %v12006 = vshrl.u32 %v12005, 7
  %v12007 = vsub.s32 %v12004, %v12006
  %v12008 = vrot.slane %v11994, %v12007
  %v12009 = vcombine.low %v12001, %v12008
  %v12010 = vcombine.low %v6353, %v6357
  %v12011 = vcombine.low %v6361, %v6365
  %v12012 = vcombine.low %v6369, %v6373
  %v12013 = vcombine.low %v6377, %v6381
  %v12015 = vunpack.c.l.s4 1966171168
  %v12016 = vunpack.c.0.s8 %v12015
  %v12017 = vlaneseq
  %v12018 = vshrl.u32 %v12017, 7
  %v12019 = vsub.s32 %v12016, %v12018
  %v12020 = vrot.slane %v12010, %v12019
  %v12022 = vunpack.c.l.s4 1966171168
  %v12023 = vunpack.c.0.s8 %v12022
  %v12024 = vlaneseq
  %v12025 = vshrl.u32 %v12024, 7
  %v12026 = vsub.s32 %v12023, %v12025
  %v12027 = vrot.slane %v12011, %v12026
  %v12029 = vunpack.c.l.s4 1966171168
  %v12030 = vunpack.c.0.s8 %v12029
  %v12031 = vlaneseq
  %v12032 = vshrl.u32 %v12031, 7
  %v12033 = vsub.s32 %v12030, %v12032
  %v12034 = vrot.slane %v12012, %v12033
  %v12036 = vunpack.c.l.s4 1966171168
  %v12037 = vunpack.c.0.s8 %v12036
  %v12038 = vlaneseq
  %v12039 = vshrl.u32 %v12038, 7
  %v12040 = vsub.s32 %v12037, %v12039
  %v12041 = vrot.slane %v12013, %v12040
  %v12042 = vcombine.low %v12020, %v12027
  %v12043 = vcombine.low %v12034, %v12041
  %v12045 = vunpack.c.l.s4 1966171168
  %v12046 = vunpack.c.0.s8 %v12045
  %v12047 = vlaneseq
  %v12048 = vshrl.u32 %v12047, 7
  %v12049 = vsub.s32 %v12046, %v12048
  %v12050 = vrot.slane %v12042, %v12049
  %v12052 = vunpack.c.l.s4 1966171168
  %v12053 = vunpack.c.0.s8 %v12052
  %v12054 = vlaneseq
  %v12055 = vshrl.u32 %v12054, 7
  %v12056 = vsub.s32 %v12053, %v12055
  %v12057 = vrot.slane %v12043, %v12056
  %v12058 = vcombine.low %v12050, %v12057
  %v12059 = vcombine.low %v6385, %v6389
  %v12060 = vcombine.low %v6393, %v6397
  %v12061 = vcombine.low %v6401, %v6405
  %v12062 = vcombine.low %v6409, %v6413
  %v12064 = vunpack.c.l.s4 1966171168
  %v12065 = vunpack.c.0.s8 %v12064
  %v12066 = vlaneseq
  %v12067 = vshrl.u32 %v12066, 7
  %v12068 = vsub.s32 %v12065, %v12067
  %v12069 = vrot.slane %v12059, %v12068
  %v12071 = vunpack.c.l.s4 1966171168
  %v12072 = vunpack.c.0.s8 %v12071
  %v12073 = vlaneseq
  %v12074 = vshrl.u32 %v12073, 7
  %v12075 = vsub.s32 %v12072, %v12074
  %v12076 = vrot.slane %v12060, %v12075
  %v12078 = vunpack.c.l.s4 1966171168
  %v12079 = vunpack.c.0.s8 %v12078
  %v12080 = vlaneseq
  %v12081 = vshrl.u32 %v12080, 7
  %v12082 = vsub.s32 %v12079, %v12081
  %v12083 = vrot.slane %v12061, %v12082
  %v12085 = vunpack.c.l.s4 1966171168
  %v12086 = vunpack.c.0.s8 %v12085
  %v12087 = vlaneseq
  %v12088 = vshrl.u32 %v12087, 7
  %v12089 = vsub.s32 %v12086, %v12088
  %v12090 = vrot.slane %v12062, %v12089
  %v12091 = vcombine.low %v12069, %v12076
  %v12092 = vcombine.low %v12083, %v12090
  %v12094 = vunpack.c.l.s4 1966171168
  %v12095 = vunpack.c.0.s8 %v12094
  %v12096 = vlaneseq
  %v12097 = vshrl.u32 %v12096, 7
  %v12098 = vsub.s32 %v12095, %v12097
  %v12099 = vrot.slane %v12091, %v12098
  %v12101 = vunpack.c.l.s4 1966171168
  %v12102 = vunpack.c.0.s8 %v12101
  %v12103 = vlaneseq
  %v12104 = vshrl.u32 %v12103, 7
  %v12105 = vsub.s32 %v12102, %v12104
  %v12106 = vrot.slane %v12092, %v12105
  %v12107 = vcombine.low %v12099, %v12106
  %v12108 = vcombine.low %v6417, %v6421
  %v12109 = vcombine.low %v6425, %v6429
  %v12110 = vcombine.low %v6433, %v6437
  %v12111 = vcombine.low %v6441, %v6445
  %v12113 = vunpack.c.l.s4 1966171168
  %v12114 = vunpack.c.0.s8 %v12113
  %v12115 = vlaneseq
  %v12116 = vshrl.u32 %v12115, 7
  %v12117 = vsub.s32 %v12114, %v12116
  %v12118 = vrot.slane %v12108, %v12117
  %v12120 = vunpack.c.l.s4 1966171168
  %v12121 = vunpack.c.0.s8 %v12120
  %v12122 = vlaneseq
  %v12123 = vshrl.u32 %v12122, 7
  %v12124 = vsub.s32 %v12121, %v12123
  %v12125 = vrot.slane %v12109, %v12124
  %v12127 = vunpack.c.l.s4 1966171168
  %v12128 = vunpack.c.0.s8 %v12127
  %v12129 = vlaneseq
  %v12130 = vshrl.u32 %v12129, 7
  %v12131 = vsub.s32 %v12128, %v12130
  %v12132 = vrot.slane %v12110, %v12131
  %v12134 = vunpack.c.l.s4 1966171168
  %v12135 = vunpack.c.0.s8 %v12134
  %v12136 = vlaneseq
  %v12137 = vshrl.u32 %v12136, 7
  %v12138 = vsub.s32 %v12135, %v12137
  %v12139 = vrot.slane %v12111, %v12138
  %v12140 = vcombine.low %v12118, %v12125
  %v12141 = vcombine.low %v12132, %v12139
  %v12143 = vunpack.c.l.s4 1966171168
  %v12144 = vunpack.c.0.s8 %v12143
  %v12145 = vlaneseq
  %v12146 = vshrl.u32 %v12145, 7
  %v12147 = vsub.s32 %v12144, %v12146
  %v12148 = vrot.slane %v12140, %v12147
  %v12150 = vunpack.c.l.s4 1966171168
  %v12151 = vunpack.c.0.s8 %v12150
  %v12152 = vlaneseq
  %v12153 = vshrl.u32 %v12152, 7
  %v12154 = vsub.s32 %v12151, %v12153
  %v12155 = vrot.slane %v12141, %v12154
  %v12156 = vcombine.low %v12148, %v12155
  %v12157 = vcombine.low %v6449, %v6453
  %v12158 = vcombine.low %v6457, %v6461
  %v12159 = vcombine.low %v6465, %v6469
  %v12160 = vcombine.low %v6473, %v6477
  %v12162 = vunpack.c.l.s4 1966171168
  %v12163 = vunpack.c.0.s8 %v12162
  %v12164 = vlaneseq
  %v12165 = vshrl.u32 %v12164, 7
  %v12166 = vsub.s32 %v12163, %v12165
  %v12167 = vrot.slane %v12157, %v12166
  %v12169 = vunpack.c.l.s4 1966171168
  %v12170 = vunpack.c.0.s8 %v12169
  %v12171 = vlaneseq
  %v12172 = vshrl.u32 %v12171, 7
  %v12173 = vsub.s32 %v12170, %v12172
  %v12174 = vrot.slane %v12158, %v12173
  %v12176 = vunpack.c.l.s4 1966171168
  %v12177 = vunpack.c.0.s8 %v12176
  %v12178 = vlaneseq
  %v12179 = vshrl.u32 %v12178, 7
  %v12180 = vsub.s32 %v12177, %v12179
  %v12181 = vrot.slane %v12159, %v12180
  %v12183 = vunpack.c.l.s4 1966171168
  %v12184 = vunpack.c.0.s8 %v12183
  %v12185 = vlaneseq
  %v12186 = vshrl.u32 %v12185, 7
  %v12187 = vsub.s32 %v12184, %v12186
  %v12188 = vrot.slane %v12160, %v12187
  %v12189 = vcombine.low %v12167, %v12174
  %v12190 = vcombine.low %v12181, %v12188
  %v12192 = vunpack.c.l.s4 1966171168
  %v12193 = vunpack.c.0.s8 %v12192
  %v12194 = vlaneseq
  %v12195 = vshrl.u32 %v12194, 7
  %v12196 = vsub.s32 %v12193, %v12195
  %v12197 = vrot.slane %v12189, %v12196
  %v12199 = vunpack.c.l.s4 1966171168
  %v12200 = vunpack.c.0.s8 %v12199
  %v12201 = vlaneseq
  %v12202 = vshrl.u32 %v12201, 7
  %v12203 = vsub.s32 %v12200, %v12202
  %v12204 = vrot.slane %v12190, %v12203
  %v12205 = vcombine.low %v12197, %v12204
  %v12206 = vcombine.low %v6481, %v6485
  %v12207 = vcombine.low %v6489, %v6493
  %v12208 = vcombine.low %v6497, %v6501
  %v12209 = vcombine.low %v6505, %v6509
  %v12211 = vunpack.c.l.s4 1966171168
  %v12212 = vunpack.c.0.s8 %v12211
  %v12213 = vlaneseq
  %v12214 = vshrl.u32 %v12213, 7
  %v12215 = vsub.s32 %v12212, %v12214
  %v12216 = vrot.slane %v12206, %v12215
  %v12218 = vunpack.c.l.s4 1966171168
  %v12219 = vunpack.c.0.s8 %v12218
  %v12220 = vlaneseq
  %v12221 = vshrl.u32 %v12220, 7
  %v12222 = vsub.s32 %v12219, %v12221
  %v12223 = vrot.slane %v12207, %v12222
  %v12225 = vunpack.c.l.s4 1966171168
  %v12226 = vunpack.c.0.s8 %v12225
  %v12227 = vlaneseq
  %v12228 = vshrl.u32 %v12227, 7
  %v12229 = vsub.s32 %v12226, %v12228
  %v12230 = vrot.slane %v12208, %v12229
  %v12232 = vunpack.c.l.s4 1966171168
  %v12233 = vunpack.c.0.s8 %v12232
  %v12234 = vlaneseq
  %v12235 = vshrl.u32 %v12234, 7
  %v12236 = vsub.s32 %v12233, %v12235
  %v12237 = vrot.slane %v12209, %v12236
  %v12238 = vcombine.low %v12216, %v12223
  %v12239 = vcombine.low %v12230, %v12237
  %v12241 = vunpack.c.l.s4 1966171168
  %v12242 = vunpack.c.0.s8 %v12241
  %v12243 = vlaneseq
  %v12244 = vshrl.u32 %v12243, 7
  %v12245 = vsub.s32 %v12242, %v12244
  %v12246 = vrot.slane %v12238, %v12245
  %v12248 = vunpack.c.l.s4 1966171168
  %v12249 = vunpack.c.0.s8 %v12248
  %v12250 = vlaneseq
  %v12251 = vshrl.u32 %v12250, 7
  %v12252 = vsub.s32 %v12249, %v12251
  %v12253 = vrot.slane %v12239, %v12252
  %v12254 = vcombine.low %v12246, %v12253
  %v12255 = vcombine.low %v6513, %v6517
  %v12256 = vcombine.low %v6521, %v6525
  %v12257 = vcombine.low %v6529, %v6533
  %v12258 = vcombine.low %v6537, %v6541
  %v12260 = vunpack.c.l.s4 1966171168
  %v12261 = vunpack.c.0.s8 %v12260
  %v12262 = vlaneseq
  %v12263 = vshrl.u32 %v12262, 7
  %v12264 = vsub.s32 %v12261, %v12263
  %v12265 = vrot.slane %v12255, %v12264
  %v12267 = vunpack.c.l.s4 1966171168
  %v12268 = vunpack.c.0.s8 %v12267
  %v12269 = vlaneseq
  %v12270 = vshrl.u32 %v12269, 7
  %v12271 = vsub.s32 %v12268, %v12270
  %v12272 = vrot.slane %v12256, %v12271
  %v12274 = vunpack.c.l.s4 1966171168
  %v12275 = vunpack.c.0.s8 %v12274
  %v12276 = vlaneseq
  %v12277 = vshrl.u32 %v12276, 7
  %v12278 = vsub.s32 %v12275, %v12277
  %v12279 = vrot.slane %v12257, %v12278
  %v12281 = vunpack.c.l.s4 1966171168
  %v12282 = vunpack.c.0.s8 %v12281
  %v12283 = vlaneseq
  %v12284 = vshrl.u32 %v12283, 7
  %v12285 = vsub.s32 %v12282, %v12284
  %v12286 = vrot.slane %v12258, %v12285
  %v12287 = vcombine.low %v12265, %v12272
  %v12288 = vcombine.low %v12279, %v12286
  %v12290 = vunpack.c.l.s4 1966171168
  %v12291 = vunpack.c.0.s8 %v12290
  %v12292 = vlaneseq
  %v12293 = vshrl.u32 %v12292, 7
  %v12294 = vsub.s32 %v12291, %v12293
  %v12295 = vrot.slane %v12287, %v12294
  %v12297 = vunpack.c.l.s4 1966171168
  %v12298 = vunpack.c.0.s8 %v12297
  %v12299 = vlaneseq
  %v12300 = vshrl.u32 %v12299, 7
  %v12301 = vsub.s32 %v12298, %v12300
  %v12302 = vrot.slane %v12288, %v12301
  %v12303 = vcombine.low %v12295, %v12302
  %v12304 = vcombine.low %v6545, %v6549
  %v12305 = vcombine.low %v6553, %v6557
  %v12306 = vcombine.low %v6561, %v6565
  %v12307 = vcombine.low %v6569, %v6573
  %v12309 = vunpack.c.l.s4 1966171168
  %v12310 = vunpack.c.0.s8 %v12309
  %v12311 = vlaneseq
  %v12312 = vshrl.u32 %v12311, 7
  %v12313 = vsub.s32 %v12310, %v12312
  %v12314 = vrot.slane %v12304, %v12313
  %v12316 = vunpack.c.l.s4 1966171168
  %v12317 = vunpack.c.0.s8 %v12316
  %v12318 = vlaneseq
  %v12319 = vshrl.u32 %v12318, 7
  %v12320 = vsub.s32 %v12317, %v12319
  %v12321 = vrot.slane %v12305, %v12320
  %v12323 = vunpack.c.l.s4 1966171168
  %v12324 = vunpack.c.0.s8 %v12323
  %v12325 = vlaneseq
  %v12326 = vshrl.u32 %v12325, 7
  %v12327 = vsub.s32 %v12324, %v12326
  %v12328 = vrot.slane %v12306, %v12327
  %v12330 = vunpack.c.l.s4 1966171168
  %v12331 = vunpack.c.0.s8 %v12330
  %v12332 = vlaneseq
  %v12333 = vshrl.u32 %v12332, 7
  %v12334 = vsub.s32 %v12331, %v12333
  %v12335 = vrot.slane %v12307, %v12334
  %v12336 = vcombine.low %v12314, %v12321
  %v12337 = vcombine.low %v12328, %v12335
  %v12339 = vunpack.c.l.s4 1966171168
  %v12340 = vunpack.c.0.s8 %v12339
  %v12341 = vlaneseq
  %v12342 = vshrl.u32 %v12341, 7
  %v12343 = vsub.s32 %v12340, %v12342
  %v12344 = vrot.slane %v12336, %v12343
  %v12346 = vunpack.c.l.s4 1966171168
  %v12347 = vunpack.c.0.s8 %v12346
  %v12348 = vlaneseq
  %v12349 = vshrl.u32 %v12348, 7
  %v12350 = vsub.s32 %v12347, %v12349
  %v12351 = vrot.slane %v12337, %v12350
  %v12352 = vcombine.low %v12344, %v12351
  %v12353 = vcombine.low %v6577, %v6581
  %v12354 = vcombine.low %v6585, %v6589
  %v12355 = vcombine.low %v6593, %v6597
  %v12356 = vcombine.low %v6601, %v6605
  %v12358 = vunpack.c.l.s4 1966171168
  %v12359 = vunpack.c.0.s8 %v12358
  %v12360 = vlaneseq
  %v12361 = vshrl.u32 %v12360, 7
  %v12362 = vsub.s32 %v12359, %v12361
  %v12363 = vrot.slane %v12353, %v12362
  %v12365 = vunpack.c.l.s4 1966171168
  %v12366 = vunpack.c.0.s8 %v12365
  %v12367 = vlaneseq
  %v12368 = vshrl.u32 %v12367, 7
  %v12369 = vsub.s32 %v12366, %v12368
  %v12370 = vrot.slane %v12354, %v12369
  %v12372 = vunpack.c.l.s4 1966171168
  %v12373 = vunpack.c.0.s8 %v12372
  %v12374 = vlaneseq
  %v12375 = vshrl.u32 %v12374, 7
  %v12376 = vsub.s32 %v12373, %v12375
  %v12377 = vrot.slane %v12355, %v12376
  %v12379 = vunpack.c.l.s4 1966171168
  %v12380 = vunpack.c.0.s8 %v12379
  %v12381 = vlaneseq
  %v12382 = vshrl.u32 %v12381, 7
  %v12383 = vsub.s32 %v12380, %v12382
  %v12384 = vrot.slane %v12356, %v12383
  %v12385 = vcombine.low %v12363, %v12370
  %v12386 = vcombine.low %v12377, %v12384
  %v12388 = vunpack.c.l.s4 1966171168
  %v12389 = vunpack.c.0.s8 %v12388
  %v12390 = vlaneseq
  %v12391 = vshrl.u32 %v12390, 7
  %v12392 = vsub.s32 %v12389, %v12391
  %v12393 = vrot.slane %v12385, %v12392
  %v12395 = vunpack.c.l.s4 1966171168
  %v12396 = vunpack.c.0.s8 %v12395
  %v12397 = vlaneseq
  %v12398 = vshrl.u32 %v12397, 7
  %v12399 = vsub.s32 %v12396, %v12398
  %v12400 = vrot.slane %v12386, %v12399
  %v12401 = vcombine.low %v12393, %v12400
  %v12402 = vcombine.low %v6609, %v6613
  %v12403 = vcombine.low %v6617, %v6621
  %v12404 = vcombine.low %v6625, %v6629
  %v12405 = vcombine.low %v6633, %v6637
  %v12407 = vunpack.c.l.s4 1966171168
  %v12408 = vunpack.c.0.s8 %v12407
  %v12409 = vlaneseq
  %v12410 = vshrl.u32 %v12409, 7
  %v12411 = vsub.s32 %v12408, %v12410
  %v12412 = vrot.slane %v12402, %v12411
  %v12414 = vunpack.c.l.s4 1966171168
  %v12415 = vunpack.c.0.s8 %v12414
  %v12416 = vlaneseq
  %v12417 = vshrl.u32 %v12416, 7
  %v12418 = vsub.s32 %v12415, %v12417
  %v12419 = vrot.slane %v12403, %v12418
  %v12421 = vunpack.c.l.s4 1966171168
  %v12422 = vunpack.c.0.s8 %v12421
  %v12423 = vlaneseq
  %v12424 = vshrl.u32 %v12423, 7
  %v12425 = vsub.s32 %v12422, %v12424
  %v12426 = vrot.slane %v12404, %v12425
  %v12428 = vunpack.c.l.s4 1966171168
  %v12429 = vunpack.c.0.s8 %v12428
  %v12430 = vlaneseq
  %v12431 = vshrl.u32 %v12430, 7
  %v12432 = vsub.s32 %v12429, %v12431
  %v12433 = vrot.slane %v12405, %v12432
  %v12434 = vcombine.low %v12412, %v12419
  %v12435 = vcombine.low %v12426, %v12433
  %v12437 = vunpack.c.l.s4 1966171168
  %v12438 = vunpack.c.0.s8 %v12437
  %v12439 = vlaneseq
  %v12440 = vshrl.u32 %v12439, 7
  %v12441 = vsub.s32 %v12438, %v12440
  %v12442 = vrot.slane %v12434, %v12441
  %v12444 = vunpack.c.l.s4 1966171168
  %v12445 = vunpack.c.0.s8 %v12444
  %v12446 = vlaneseq
  %v12447 = vshrl.u32 %v12446, 7
  %v12448 = vsub.s32 %v12445, %v12447
  %v12449 = vrot.slane %v12435, %v12448
  %v12450 = vcombine.low %v12442, %v12449
  %v12451 = vcombine.low %v6641, %v6645
  %v12452 = vcombine.low %v6649, %v6653
  %v12453 = vcombine.low %v6657, %v6661
  %v12454 = vcombine.low %v6665, %v6669
  %v12456 = vunpack.c.l.s4 1966171168
  %v12457 = vunpack.c.0.s8 %v12456
  %v12458 = vlaneseq
  %v12459 = vshrl.u32 %v12458, 7
  %v12460 = vsub.s32 %v12457, %v12459
  %v12461 = vrot.slane %v12451, %v12460
  %v12463 = vunpack.c.l.s4 1966171168
  %v12464 = vunpack.c.0.s8 %v12463
  %v12465 = vlaneseq
  %v12466 = vshrl.u32 %v12465, 7
  %v12467 = vsub.s32 %v12464, %v12466
  %v12468 = vrot.slane %v12452, %v12467
  %v12470 = vunpack.c.l.s4 1966171168
  %v12471 = vunpack.c.0.s8 %v12470
  %v12472 = vlaneseq
  %v12473 = vshrl.u32 %v12472, 7
  %v12474 = vsub.s32 %v12471, %v12473
  %v12475 = vrot.slane %v12453, %v12474
  %v12477 = vunpack.c.l.s4 1966171168
  %v12478 = vunpack.c.0.s8 %v12477
  %v12479 = vlaneseq
  %v12480 = vshrl.u32 %v12479, 7
  %v12481 = vsub.s32 %v12478, %v12480
  %v12482 = vrot.slane %v12454, %v12481
  %v12483 = vcombine.low %v12461, %v12468
  %v12484 = vcombine.low %v12475, %v12482
  %v12486 = vunpack.c.l.s4 1966171168
  %v12487 = vunpack.c.0.s8 %v12486
  %v12488 = vlaneseq
  %v12489 = vshrl.u32 %v12488, 7
  %v12490 = vsub.s32 %v12487, %v12489
  %v12491 = vrot.slane %v12483, %v12490
  %v12493 = vunpack.c.l.s4 1966171168
  %v12494 = vunpack.c.0.s8 %v12493
  %v12495 = vlaneseq
  %v12496 = vshrl.u32 %v12495, 7
  %v12497 = vsub.s32 %v12494, %v12496
  %v12498 = vrot.slane %v12484, %v12497
  %v12499 = vcombine.low %v12491, %v12498
  %v12500 = vcombine.low %v6673, %v6677
  %v12501 = vcombine.low %v6681, %v6685
  %v12502 = vcombine.low %v6689, %v6693
  %v12503 = vcombine.low %v6697, %v6701
  %v12505 = vunpack.c.l.s4 1966171168
  %v12506 = vunpack.c.0.s8 %v12505
  %v12507 = vlaneseq
  %v12508 = vshrl.u32 %v12507, 7
  %v12509 = vsub.s32 %v12506, %v12508
  %v12510 = vrot.slane %v12500, %v12509
  %v12512 = vunpack.c.l.s4 1966171168
  %v12513 = vunpack.c.0.s8 %v12512
  %v12514 = vlaneseq
  %v12515 = vshrl.u32 %v12514, 7
  %v12516 = vsub.s32 %v12513, %v12515
  %v12517 = vrot.slane %v12501, %v12516
  %v12519 = vunpack.c.l.s4 1966171168
  %v12520 = vunpack.c.0.s8 %v12519
  %v12521 = vlaneseq
  %v12522 = vshrl.u32 %v12521, 7
  %v12523 = vsub.s32 %v12520, %v12522
  %v12524 = vrot.slane %v12502, %v12523
  %v12526 = vunpack.c.l.s4 1966171168
  %v12527 = vunpack.c.0.s8 %v12526
  %v12528 = vlaneseq
  %v12529 = vshrl.u32 %v12528, 7
  %v12530 = vsub.s32 %v12527, %v12529
  %v12531 = vrot.slane %v12503, %v12530
  %v12532 = vcombine.low %v12510, %v12517
  %v12533 = vcombine.low %v12524, %v12531
  %v12535 = vunpack.c.l.s4 1966171168
  %v12536 = vunpack.c.0.s8 %v12535
  %v12537 = vlaneseq
  %v12538 = vshrl.u32 %v12537, 7
  %v12539 = vsub.s32 %v12536, %v12538
  %v12540 = vrot.slane %v12532, %v12539
  %v12542 = vunpack.c.l.s4 1966171168
  %v12543 = vunpack.c.0.s8 %v12542
  %v12544 = vlaneseq
  %v12545 = vshrl.u32 %v12544, 7
  %v12546 = vsub.s32 %v12543, %v12545
  %v12547 = vrot.slane %v12533, %v12546
  %v12548 = vcombine.low %v12540, %v12547
  %v12549 = vcombine.low %v6705, %v6709
  %v12550 = vcombine.low %v6713, %v6717
  %v12551 = vcombine.low %v6721, %v6725
  %v12552 = vcombine.low %v6729, %v6733
  %v12554 = vunpack.c.l.s4 1966171168
  %v12555 = vunpack.c.0.s8 %v12554
  %v12556 = vlaneseq
  %v12557 = vshrl.u32 %v12556, 7
  %v12558 = vsub.s32 %v12555, %v12557
  %v12559 = vrot.slane %v12549, %v12558
  %v12561 = vunpack.c.l.s4 1966171168
  %v12562 = vunpack.c.0.s8 %v12561
  %v12563 = vlaneseq
  %v12564 = vshrl.u32 %v12563, 7
  %v12565 = vsub.s32 %v12562, %v12564
  %v12566 = vrot.slane %v12550, %v12565
  %v12568 = vunpack.c.l.s4 1966171168
  %v12569 = vunpack.c.0.s8 %v12568
  %v12570 = vlaneseq
  %v12571 = vshrl.u32 %v12570, 7
  %v12572 = vsub.s32 %v12569, %v12571
  %v12573 = vrot.slane %v12551, %v12572
  %v12575 = vunpack.c.l.s4 1966171168
  %v12576 = vunpack.c.0.s8 %v12575
  %v12577 = vlaneseq
  %v12578 = vshrl.u32 %v12577, 7
  %v12579 = vsub.s32 %v12576, %v12578
  %v12580 = vrot.slane %v12552, %v12579
  %v12581 = vcombine.low %v12559, %v12566
  %v12582 = vcombine.low %v12573, %v12580
  %v12584 = vunpack.c.l.s4 1966171168
  %v12585 = vunpack.c.0.s8 %v12584
  %v12586 = vlaneseq
  %v12587 = vshrl.u32 %v12586, 7
  %v12588 = vsub.s32 %v12585, %v12587
  %v12589 = vrot.slane %v12581, %v12588
  %v12591 = vunpack.c.l.s4 1966171168
  %v12592 = vunpack.c.0.s8 %v12591
  %v12593 = vlaneseq
  %v12594 = vshrl.u32 %v12593, 7
  %v12595 = vsub.s32 %v12592, %v12594
  %v12596 = vrot.slane %v12582, %v12595
  %v12597 = vcombine.low %v12589, %v12596
  %v12598 = vcombine.low %v6737, %v6741
  %v12599 = vcombine.low %v6745, %v6749
  %v12600 = vcombine.low %v6753, %v6757
  %v12601 = vcombine.low %v6761, %v6765
  %v12603 = vunpack.c.l.s4 1966171168
  %v12604 = vunpack.c.0.s8 %v12603
  %v12605 = vlaneseq
  %v12606 = vshrl.u32 %v12605, 7
  %v12607 = vsub.s32 %v12604, %v12606
  %v12608 = vrot.slane %v12598, %v12607
  %v12610 = vunpack.c.l.s4 1966171168
  %v12611 = vunpack.c.0.s8 %v12610
  %v12612 = vlaneseq
  %v12613 = vshrl.u32 %v12612, 7
  %v12614 = vsub.s32 %v12611, %v12613
  %v12615 = vrot.slane %v12599, %v12614
  %v12617 = vunpack.c.l.s4 1966171168
  %v12618 = vunpack.c.0.s8 %v12617
  %v12619 = vlaneseq
  %v12620 = vshrl.u32 %v12619, 7
  %v12621 = vsub.s32 %v12618, %v12620
  %v12622 = vrot.slane %v12600, %v12621
  %v12624 = vunpack.c.l.s4 1966171168
  %v12625 = vunpack.c.0.s8 %v12624
  %v12626 = vlaneseq
  %v12627 = vshrl.u32 %v12626, 7
  %v12628 = vsub.s32 %v12625, %v12627
  %v12629 = vrot.slane %v12601, %v12628
  %v12630 = vcombine.low %v12608, %v12615
  %v12631 = vcombine.low %v12622, %v12629
  %v12633 = vunpack.c.l.s4 1966171168
  %v12634 = vunpack.c.0.s8 %v12633
  %v12635 = vlaneseq
  %v12636 = vshrl.u32 %v12635, 7
  %v12637 = vsub.s32 %v12634, %v12636
  %v12638 = vrot.slane %v12630, %v12637
  %v12640 = vunpack.c.l.s4 1966171168
  %v12641 = vunpack.c.0.s8 %v12640
  %v12642 = vlaneseq
  %v12643 = vshrl.u32 %v12642, 7
  %v12644 = vsub.s32 %v12641, %v12643
  %v12645 = vrot.slane %v12631, %v12644
  %v12646 = vcombine.low %v12638, %v12645
  %v12647 = vcombine.low %v6769, %v6773
  %v12648 = vcombine.low %v6777, %v6781
  %v12649 = vcombine.low %v6785, %v6789
  %v12650 = vcombine.low %v6793, %v6797
  %v12652 = vunpack.c.l.s4 1966171168
  %v12653 = vunpack.c.0.s8 %v12652
  %v12654 = vlaneseq
  %v12655 = vshrl.u32 %v12654, 7
  %v12656 = vsub.s32 %v12653, %v12655
  %v12657 = vrot.slane %v12647, %v12656
  %v12659 = vunpack.c.l.s4 1966171168
  %v12660 = vunpack.c.0.s8 %v12659
  %v12661 = vlaneseq
  %v12662 = vshrl.u32 %v12661, 7
  %v12663 = vsub.s32 %v12660, %v12662
  %v12664 = vrot.slane %v12648, %v12663
  %v12666 = vunpack.c.l.s4 1966171168
  %v12667 = vunpack.c.0.s8 %v12666
  %v12668 = vlaneseq
  %v12669 = vshrl.u32 %v12668, 7
  %v12670 = vsub.s32 %v12667, %v12669
  %v12671 = vrot.slane %v12649, %v12670
  %v12673 = vunpack.c.l.s4 1966171168
  %v12674 = vunpack.c.0.s8 %v12673
  %v12675 = vlaneseq
  %v12676 = vshrl.u32 %v12675, 7
  %v12677 = vsub.s32 %v12674, %v12676
  %v12678 = vrot.slane %v12650, %v12677
  %v12679 = vcombine.low %v12657, %v12664
  %v12680 = vcombine.low %v12671, %v12678
  %v12682 = vunpack.c.l.s4 1966171168
  %v12683 = vunpack.c.0.s8 %v12682
  %v12684 = vlaneseq
  %v12685 = vshrl.u32 %v12684, 7
  %v12686 = vsub.s32 %v12683, %v12685
  %v12687 = vrot.slane %v12679, %v12686
  %v12689 = vunpack.c.l.s4 1966171168
  %v12690 = vunpack.c.0.s8 %v12689
  %v12691 = vlaneseq
  %v12692 = vshrl.u32 %v12691, 7
  %v12693 = vsub.s32 %v12690, %v12692
  %v12694 = vrot.slane %v12680, %v12693
  %v12695 = vcombine.low %v12687, %v12694
  %v12696 = vcombine.low %v6801, %v6805
  %v12697 = vcombine.low %v6809, %v6813
  %v12698 = vcombine.low %v6817, %v6821
  %v12699 = vcombine.low %v6825, %v6829
  %v12701 = vunpack.c.l.s4 1966171168
  %v12702 = vunpack.c.0.s8 %v12701
  %v12703 = vlaneseq
  %v12704 = vshrl.u32 %v12703, 7
  %v12705 = vsub.s32 %v12702, %v12704
  %v12706 = vrot.slane %v12696, %v12705
  %v12708 = vunpack.c.l.s4 1966171168
  %v12709 = vunpack.c.0.s8 %v12708
  %v12710 = vlaneseq
  %v12711 = vshrl.u32 %v12710, 7
  %v12712 = vsub.s32 %v12709, %v12711
  %v12713 = vrot.slane %v12697, %v12712
  %v12715 = vunpack.c.l.s4 1966171168
  %v12716 = vunpack.c.0.s8 %v12715
  %v12717 = vlaneseq
  %v12718 = vshrl.u32 %v12717, 7
  %v12719 = vsub.s32 %v12716, %v12718
  %v12720 = vrot.slane %v12698, %v12719
  %v12722 = vunpack.c.l.s4 1966171168
  %v12723 = vunpack.c.0.s8 %v12722
  %v12724 = vlaneseq
  %v12725 = vshrl.u32 %v12724, 7
  %v12726 = vsub.s32 %v12723, %v12725
  %v12727 = vrot.slane %v12699, %v12726
  %v12728 = vcombine.low %v12706, %v12713
  %v12729 = vcombine.low %v12720, %v12727
  %v12731 = vunpack.c.l.s4 1966171168
  %v12732 = vunpack.c.0.s8 %v12731
  %v12733 = vlaneseq
  %v12734 = vshrl.u32 %v12733, 7
  %v12735 = vsub.s32 %v12732, %v12734
  %v12736 = vrot.slane %v12728, %v12735
  %v12738 = vunpack.c.l.s4 1966171168
  %v12739 = vunpack.c.0.s8 %v12738
  %v12740 = vlaneseq
  %v12741 = vshrl.u32 %v12740, 7
  %v12742 = vsub.s32 %v12739, %v12741
  %v12743 = vrot.slane %v12729, %v12742
  %v12744 = vcombine.low %v12736, %v12743
  %v12745 = vcombine.low %v6833, %v6837
  %v12746 = vcombine.low %v6841, %v6845
  %v12747 = vcombine.low %v6849, %v6853
  %v12748 = vcombine.low %v6857, %v6861
  %v12750 = vunpack.c.l.s4 1966171168
  %v12751 = vunpack.c.0.s8 %v12750
  %v12752 = vlaneseq
  %v12753 = vshrl.u32 %v12752, 7
  %v12754 = vsub.s32 %v12751, %v12753
  %v12755 = vrot.slane %v12745, %v12754
  %v12757 = vunpack.c.l.s4 1966171168
  %v12758 = vunpack.c.0.s8 %v12757
  %v12759 = vlaneseq
  %v12760 = vshrl.u32 %v12759, 7
  %v12761 = vsub.s32 %v12758, %v12760
  %v12762 = vrot.slane %v12746, %v12761
  %v12764 = vunpack.c.l.s4 1966171168
  %v12765 = vunpack.c.0.s8 %v12764
  %v12766 = vlaneseq
  %v12767 = vshrl.u32 %v12766, 7
  %v12768 = vsub.s32 %v12765, %v12767
  %v12769 = vrot.slane %v12747, %v12768
  %v12771 = vunpack.c.l.s4 1966171168
  %v12772 = vunpack.c.0.s8 %v12771
  %v12773 = vlaneseq
  %v12774 = vshrl.u32 %v12773, 7
  %v12775 = vsub.s32 %v12772, %v12774
  %v12776 = vrot.slane %v12748, %v12775
  %v12777 = vcombine.low %v12755, %v12762
  %v12778 = vcombine.low %v12769, %v12776
  %v12780 = vunpack.c.l.s4 1966171168
  %v12781 = vunpack.c.0.s8 %v12780
  %v12782 = vlaneseq
  %v12783 = vshrl.u32 %v12782, 7
  %v12784 = vsub.s32 %v12781, %v12783
  %v12785 = vrot.slane %v12777, %v12784
  %v12787 = vunpack.c.l.s4 1966171168
  %v12788 = vunpack.c.0.s8 %v12787
  %v12789 = vlaneseq
  %v12790 = vshrl.u32 %v12789, 7
  %v12791 = vsub.s32 %v12788, %v12790
  %v12792 = vrot.slane %v12778, %v12791
  %v12793 = vcombine.low %v12785, %v12792
  %v12794 = vcombine.low %v6865, %v6869
  %v12795 = vcombine.low %v6873, %v6877
  %v12796 = vcombine.low %v6881, %v6885
  %v12797 = vcombine.low %v6889, %v6893
  %v12799 = vunpack.c.l.s4 1966171168
  %v12800 = vunpack.c.0.s8 %v12799
  %v12801 = vlaneseq
  %v12802 = vshrl.u32 %v12801, 7
  %v12803 = vsub.s32 %v12800, %v12802
  %v12804 = vrot.slane %v12794, %v12803
  %v12806 = vunpack.c.l.s4 1966171168
  %v12807 = vunpack.c.0.s8 %v12806
  %v12808 = vlaneseq
  %v12809 = vshrl.u32 %v12808, 7
  %v12810 = vsub.s32 %v12807, %v12809
  %v12811 = vrot.slane %v12795, %v12810
  %v12813 = vunpack.c.l.s4 1966171168
  %v12814 = vunpack.c.0.s8 %v12813
  %v12815 = vlaneseq
  %v12816 = vshrl.u32 %v12815, 7
  %v12817 = vsub.s32 %v12814, %v12816
  %v12818 = vrot.slane %v12796, %v12817
  %v12820 = vunpack.c.l.s4 1966171168
  %v12821 = vunpack.c.0.s8 %v12820
  %v12822 = vlaneseq
  %v12823 = vshrl.u32 %v12822, 7
  %v12824 = vsub.s32 %v12821, %v12823
  %v12825 = vrot.slane %v12797, %v12824
  %v12826 = vcombine.low %v12804, %v12811
  %v12827 = vcombine.low %v12818, %v12825
  %v12829 = vunpack.c.l.s4 1966171168
  %v12830 = vunpack.c.0.s8 %v12829
  %v12831 = vlaneseq
  %v12832 = vshrl.u32 %v12831, 7
  %v12833 = vsub.s32 %v12830, %v12832
  %v12834 = vrot.slane %v12826, %v12833
  %v12836 = vunpack.c.l.s4 1966171168
  %v12837 = vunpack.c.0.s8 %v12836
  %v12838 = vlaneseq
  %v12839 = vshrl.u32 %v12838, 7
  %v12840 = vsub.s32 %v12837, %v12839
  %v12841 = vrot.slane %v12827, %v12840
  %v12842 = vcombine.low %v12834, %v12841
  %v12843 = vcombine.low %v6897, %v6901
  %v12844 = vcombine.low %v6905, %v6909
  %v12845 = vcombine.low %v6913, %v6917
  %v12846 = vcombine.low %v6921, %v6925
  %v12848 = vunpack.c.l.s4 1966171168
  %v12849 = vunpack.c.0.s8 %v12848
  %v12850 = vlaneseq
  %v12851 = vshrl.u32 %v12850, 7
  %v12852 = vsub.s32 %v12849, %v12851
  %v12853 = vrot.slane %v12843, %v12852
  %v12855 = vunpack.c.l.s4 1966171168
  %v12856 = vunpack.c.0.s8 %v12855
  %v12857 = vlaneseq
  %v12858 = vshrl.u32 %v12857, 7
  %v12859 = vsub.s32 %v12856, %v12858
  %v12860 = vrot.slane %v12844, %v12859
  %v12862 = vunpack.c.l.s4 1966171168
  %v12863 = vunpack.c.0.s8 %v12862
  %v12864 = vlaneseq
  %v12865 = vshrl.u32 %v12864, 7
  %v12866 = vsub.s32 %v12863, %v12865
  %v12867 = vrot.slane %v12845, %v12866
  %v12869 = vunpack.c.l.s4 1966171168
  %v12870 = vunpack.c.0.s8 %v12869
  %v12871 = vlaneseq
  %v12872 = vshrl.u32 %v12871, 7
  %v12873 = vsub.s32 %v12870, %v12872
  %v12874 = vrot.slane %v12846, %v12873
  %v12875 = vcombine.low %v12853, %v12860
  %v12876 = vcombine.low %v12867, %v12874
  %v12878 = vunpack.c.l.s4 1966171168
  %v12879 = vunpack.c.0.s8 %v12878
  %v12880 = vlaneseq
  %v12881 = vshrl.u32 %v12880, 7
  %v12882 = vsub.s32 %v12879, %v12881
  %v12883 = vrot.slane %v12875, %v12882
  %v12885 = vunpack.c.l.s4 1966171168
  %v12886 = vunpack.c.0.s8 %v12885
  %v12887 = vlaneseq
  %v12888 = vshrl.u32 %v12887, 7
  %v12889 = vsub.s32 %v12886, %v12888
  %v12890 = vrot.slane %v12876, %v12889
  %v12891 = vcombine.low %v12883, %v12890
  %v12892 = vcombine.low %v6929, %v6933
  %v12893 = vcombine.low %v6937, %v6941
  %v12894 = vcombine.low %v6945, %v6949
  %v12895 = vcombine.low %v6953, %v6957
  %v12897 = vunpack.c.l.s4 1966171168
  %v12898 = vunpack.c.0.s8 %v12897
  %v12899 = vlaneseq
  %v12900 = vshrl.u32 %v12899, 7
  %v12901 = vsub.s32 %v12898, %v12900
  %v12902 = vrot.slane %v12892, %v12901
  %v12904 = vunpack.c.l.s4 1966171168
  %v12905 = vunpack.c.0.s8 %v12904
  %v12906 = vlaneseq
  %v12907 = vshrl.u32 %v12906, 7
  %v12908 = vsub.s32 %v12905, %v12907
  %v12909 = vrot.slane %v12893, %v12908
  %v12911 = vunpack.c.l.s4 1966171168
  %v12912 = vunpack.c.0.s8 %v12911
  %v12913 = vlaneseq
  %v12914 = vshrl.u32 %v12913, 7
  %v12915 = vsub.s32 %v12912, %v12914
  %v12916 = vrot.slane %v12894, %v12915
  %v12918 = vunpack.c.l.s4 1966171168
  %v12919 = vunpack.c.0.s8 %v12918
  %v12920 = vlaneseq
  %v12921 = vshrl.u32 %v12920, 7
  %v12922 = vsub.s32 %v12919, %v12921
  %v12923 = vrot.slane %v12895, %v12922
  %v12924 = vcombine.low %v12902, %v12909
  %v12925 = vcombine.low %v12916, %v12923
  %v12927 = vunpack.c.l.s4 1966171168
  %v12928 = vunpack.c.0.s8 %v12927
  %v12929 = vlaneseq
  %v12930 = vshrl.u32 %v12929, 7
  %v12931 = vsub.s32 %v12928, %v12930
  %v12932 = vrot.slane %v12924, %v12931
  %v12934 = vunpack.c.l.s4 1966171168
  %v12935 = vunpack.c.0.s8 %v12934
  %v12936 = vlaneseq
  %v12937 = vshrl.u32 %v12936, 7
  %v12938 = vsub.s32 %v12935, %v12937
  %v12939 = vrot.slane %v12925, %v12938
  %v12940 = vcombine.low %v12932, %v12939
  %v12941 = vcombine.low %v6961, %v6965
  %v12942 = vcombine.low %v6969, %v6973
  %v12943 = vcombine.low %v6977, %v6981
  %v12944 = vcombine.low %v6985, %v6989
  %v12946 = vunpack.c.l.s4 1966171168
  %v12947 = vunpack.c.0.s8 %v12946
  %v12948 = vlaneseq
  %v12949 = vshrl.u32 %v12948, 7
  %v12950 = vsub.s32 %v12947, %v12949
  %v12951 = vrot.slane %v12941, %v12950
  %v12953 = vunpack.c.l.s4 1966171168
  %v12954 = vunpack.c.0.s8 %v12953
  %v12955 = vlaneseq
  %v12956 = vshrl.u32 %v12955, 7
  %v12957 = vsub.s32 %v12954, %v12956
  %v12958 = vrot.slane %v12942, %v12957
  %v12960 = vunpack.c.l.s4 1966171168
  %v12961 = vunpack.c.0.s8 %v12960
  %v12962 = vlaneseq
  %v12963 = vshrl.u32 %v12962, 7
  %v12964 = vsub.s32 %v12961, %v12963
  %v12965 = vrot.slane %v12943, %v12964
  %v12967 = vunpack.c.l.s4 1966171168
  %v12968 = vunpack.c.0.s8 %v12967
  %v12969 = vlaneseq
  %v12970 = vshrl.u32 %v12969, 7
  %v12971 = vsub.s32 %v12968, %v12970
  %v12972 = vrot.slane %v12944, %v12971
  %v12973 = vcombine.low %v12951, %v12958
  %v12974 = vcombine.low %v12965, %v12972
  %v12976 = vunpack.c.l.s4 1966171168
  %v12977 = vunpack.c.0.s8 %v12976
  %v12978 = vlaneseq
  %v12979 = vshrl.u32 %v12978, 7
  %v12980 = vsub.s32 %v12977, %v12979
  %v12981 = vrot.slane %v12973, %v12980
  %v12983 = vunpack.c.l.s4 1966171168
  %v12984 = vunpack.c.0.s8 %v12983
  %v12985 = vlaneseq
  %v12986 = vshrl.u32 %v12985, 7
  %v12987 = vsub.s32 %v12984, %v12986
  %v12988 = vrot.slane %v12974, %v12987
  %v12989 = vcombine.low %v12981, %v12988
  %v12990 = vcombine.low %v6993, %v6997
  %v12991 = vcombine.low %v7001, %v7005
  %v12992 = vcombine.low %v7009, %v7013
  %v12993 = vcombine.low %v7017, %v7021
  %v12995 = vunpack.c.l.s4 1966171168
  %v12996 = vunpack.c.0.s8 %v12995
  %v12997 = vlaneseq
  %v12998 = vshrl.u32 %v12997, 7
  %v12999 = vsub.s32 %v12996, %v12998
  %v13000 = vrot.slane %v12990, %v12999
  %v13002 = vunpack.c.l.s4 1966171168
  %v13003 = vunpack.c.0.s8 %v13002
  %v13004 = vlaneseq
  %v13005 = vshrl.u32 %v13004, 7
  %v13006 = vsub.s32 %v13003, %v13005
  %v13007 = vrot.slane %v12991, %v13006
  %v13009 = vunpack.c.l.s4 1966171168
  %v13010 = vunpack.c.0.s8 %v13009
  %v13011 = vlaneseq
  %v13012 = vshrl.u32 %v13011, 7
  %v13013 = vsub.s32 %v13010, %v13012
  %v13014 = vrot.slane %v12992, %v13013
  %v13016 = vunpack.c.l.s4 1966171168
  %v13017 = vunpack.c.0.s8 %v13016
  %v13018 = vlaneseq
  %v13019 = vshrl.u32 %v13018, 7
  %v13020 = vsub.s32 %v13017, %v13019
  %v13021 = vrot.slane %v12993, %v13020
  %v13022 = vcombine.low %v13000, %v13007
  %v13023 = vcombine.low %v13014, %v13021
  %v13025 = vunpack.c.l.s4 1966171168
  %v13026 = vunpack.c.0.s8 %v13025
  %v13027 = vlaneseq
  %v13028 = vshrl.u32 %v13027, 7
  %v13029 = vsub.s32 %v13026, %v13028
  %v13030 = vrot.slane %v13022, %v13029
  %v13032 = vunpack.c.l.s4 1966171168
  %v13033 = vunpack.c.0.s8 %v13032
  %v13034 = vlaneseq
  %v13035 = vshrl.u32 %v13034, 7
  %v13036 = vsub.s32 %v13033, %v13035
  %v13037 = vrot.slane %v13023, %v13036
  %v13038 = vcombine.low %v13030, %v13037
  %v13039 = vcombine.low %v7025, %v7029
  %v13040 = vcombine.low %v7033, %v7037
  %v13041 = vcombine.low %v7041, %v7045
  %v13042 = vcombine.low %v7049, %v7053
  %v13044 = vunpack.c.l.s4 1966171168
  %v13045 = vunpack.c.0.s8 %v13044
  %v13046 = vlaneseq
  %v13047 = vshrl.u32 %v13046, 7
  %v13048 = vsub.s32 %v13045, %v13047
  %v13049 = vrot.slane %v13039, %v13048
  %v13051 = vunpack.c.l.s4 1966171168
  %v13052 = vunpack.c.0.s8 %v13051
  %v13053 = vlaneseq
  %v13054 = vshrl.u32 %v13053, 7
  %v13055 = vsub.s32 %v13052, %v13054
  %v13056 = vrot.slane %v13040, %v13055
  %v13058 = vunpack.c.l.s4 1966171168
  %v13059 = vunpack.c.0.s8 %v13058
  %v13060 = vlaneseq
  %v13061 = vshrl.u32 %v13060, 7
  %v13062 = vsub.s32 %v13059, %v13061
  %v13063 = vrot.slane %v13041, %v13062
  %v13065 = vunpack.c.l.s4 1966171168
  %v13066 = vunpack.c.0.s8 %v13065
  %v13067 = vlaneseq
  %v13068 = vshrl.u32 %v13067, 7
  %v13069 = vsub.s32 %v13066, %v13068
  %v13070 = vrot.slane %v13042, %v13069
  %v13071 = vcombine.low %v13049, %v13056
  %v13072 = vcombine.low %v13063, %v13070
  %v13074 = vunpack.c.l.s4 1966171168
  %v13075 = vunpack.c.0.s8 %v13074
  %v13076 = vlaneseq
  %v13077 = vshrl.u32 %v13076, 7
  %v13078 = vsub.s32 %v13075, %v13077
  %v13079 = vrot.slane %v13071, %v13078
  %v13081 = vunpack.c.l.s4 1966171168
  %v13082 = vunpack.c.0.s8 %v13081
  %v13083 = vlaneseq
  %v13084 = vshrl.u32 %v13083, 7
  %v13085 = vsub.s32 %v13082, %v13084
  %v13086 = vrot.slane %v13072, %v13085
  %v13087 = vcombine.low %v13079, %v13086
  %v13088 = vcombine.low %v7057, %v7061
  %v13089 = vcombine.low %v7065, %v7069
  %v13090 = vcombine.low %v7073, %v7077
  %v13091 = vcombine.low %v7081, %v7085
  %v13093 = vunpack.c.l.s4 1966171168
  %v13094 = vunpack.c.0.s8 %v13093
  %v13095 = vlaneseq
  %v13096 = vshrl.u32 %v13095, 7
  %v13097 = vsub.s32 %v13094, %v13096
  %v13098 = vrot.slane %v13088, %v13097
  %v13100 = vunpack.c.l.s4 1966171168
  %v13101 = vunpack.c.0.s8 %v13100
  %v13102 = vlaneseq
  %v13103 = vshrl.u32 %v13102, 7
  %v13104 = vsub.s32 %v13101, %v13103
  %v13105 = vrot.slane %v13089, %v13104
  %v13107 = vunpack.c.l.s4 1966171168
  %v13108 = vunpack.c.0.s8 %v13107
  %v13109 = vlaneseq
  %v13110 = vshrl.u32 %v13109, 7
  %v13111 = vsub.s32 %v13108, %v13110
  %v13112 = vrot.slane %v13090, %v13111
  %v13114 = vunpack.c.l.s4 1966171168
  %v13115 = vunpack.c.0.s8 %v13114
  %v13116 = vlaneseq
  %v13117 = vshrl.u32 %v13116, 7
  %v13118 = vsub.s32 %v13115, %v13117
  %v13119 = vrot.slane %v13091, %v13118
  %v13120 = vcombine.low %v13098, %v13105
  %v13121 = vcombine.low %v13112, %v13119
  %v13123 = vunpack.c.l.s4 1966171168
  %v13124 = vunpack.c.0.s8 %v13123
  %v13125 = vlaneseq
  %v13126 = vshrl.u32 %v13125, 7
  %v13127 = vsub.s32 %v13124, %v13126
  %v13128 = vrot.slane %v13120, %v13127
  %v13130 = vunpack.c.l.s4 1966171168
  %v13131 = vunpack.c.0.s8 %v13130
  %v13132 = vlaneseq
  %v13133 = vshrl.u32 %v13132, 7
  %v13134 = vsub.s32 %v13131, %v13133
  %v13135 = vrot.slane %v13121, %v13134
  %v13136 = vcombine.low %v13128, %v13135
  %v13137 = vcombine.low %v7089, %v7093
  %v13138 = vcombine.low %v7097, %v7101
  %v13139 = vcombine.low %v7105, %v7109
  %v13140 = vcombine.low %v7113, %v7117
  %v13142 = vunpack.c.l.s4 1966171168
  %v13143 = vunpack.c.0.s8 %v13142
  %v13144 = vlaneseq
  %v13145 = vshrl.u32 %v13144, 7
  %v13146 = vsub.s32 %v13143, %v13145
  %v13147 = vrot.slane %v13137, %v13146
  %v13149 = vunpack.c.l.s4 1966171168
  %v13150 = vunpack.c.0.s8 %v13149
  %v13151 = vlaneseq
  %v13152 = vshrl.u32 %v13151, 7
  %v13153 = vsub.s32 %v13150, %v13152
  %v13154 = vrot.slane %v13138, %v13153
  %v13156 = vunpack.c.l.s4 1966171168
  %v13157 = vunpack.c.0.s8 %v13156
  %v13158 = vlaneseq
  %v13159 = vshrl.u32 %v13158, 7
  %v13160 = vsub.s32 %v13157, %v13159
  %v13161 = vrot.slane %v13139, %v13160
  %v13163 = vunpack.c.l.s4 1966171168
  %v13164 = vunpack.c.0.s8 %v13163
  %v13165 = vlaneseq
  %v13166 = vshrl.u32 %v13165, 7
  %v13167 = vsub.s32 %v13164, %v13166
  %v13168 = vrot.slane %v13140, %v13167
  %v13169 = vcombine.low %v13147, %v13154
  %v13170 = vcombine.low %v13161, %v13168
  %v13172 = vunpack.c.l.s4 1966171168
  %v13173 = vunpack.c.0.s8 %v13172
  %v13174 = vlaneseq
  %v13175 = vshrl.u32 %v13174, 7
  %v13176 = vsub.s32 %v13173, %v13175
  %v13177 = vrot.slane %v13169, %v13176
  %v13179 = vunpack.c.l.s4 1966171168
  %v13180 = vunpack.c.0.s8 %v13179
  %v13181 = vlaneseq
  %v13182 = vshrl.u32 %v13181, 7
  %v13183 = vsub.s32 %v13180, %v13182
  %v13184 = vrot.slane %v13170, %v13183
  %v13185 = vcombine.low %v13177, %v13184
  %v13186 = vcombine.low %v7121, %v7125
  %v13187 = vcombine.low %v7129, %v7133
  %v13188 = vcombine.low %v7137, %v7141
  %v13189 = vcombine.low %v7145, %v7149
  %v13191 = vunpack.c.l.s4 1966171168
  %v13192 = vunpack.c.0.s8 %v13191
  %v13193 = vlaneseq
  %v13194 = vshrl.u32 %v13193, 7
  %v13195 = vsub.s32 %v13192, %v13194
  %v13196 = vrot.slane %v13186, %v13195
  %v13198 = vunpack.c.l.s4 1966171168
  %v13199 = vunpack.c.0.s8 %v13198
  %v13200 = vlaneseq
  %v13201 = vshrl.u32 %v13200, 7
  %v13202 = vsub.s32 %v13199, %v13201
  %v13203 = vrot.slane %v13187, %v13202
  %v13205 = vunpack.c.l.s4 1966171168
  %v13206 = vunpack.c.0.s8 %v13205
  %v13207 = vlaneseq
  %v13208 = vshrl.u32 %v13207, 7
  %v13209 = vsub.s32 %v13206, %v13208
  %v13210 = vrot.slane %v13188, %v13209
  %v13212 = vunpack.c.l.s4 1966171168
  %v13213 = vunpack.c.0.s8 %v13212
  %v13214 = vlaneseq
  %v13215 = vshrl.u32 %v13214, 7
  %v13216 = vsub.s32 %v13213, %v13215
  %v13217 = vrot.slane %v13189, %v13216
  %v13218 = vcombine.low %v13196, %v13203
  %v13219 = vcombine.low %v13210, %v13217
  %v13221 = vunpack.c.l.s4 1966171168
  %v13222 = vunpack.c.0.s8 %v13221
  %v13223 = vlaneseq
  %v13224 = vshrl.u32 %v13223, 7
  %v13225 = vsub.s32 %v13222, %v13224
  %v13226 = vrot.slane %v13218, %v13225
  %v13228 = vunpack.c.l.s4 1966171168
  %v13229 = vunpack.c.0.s8 %v13228
  %v13230 = vlaneseq
  %v13231 = vshrl.u32 %v13230, 7
  %v13232 = vsub.s32 %v13229, %v13231
  %v13233 = vrot.slane %v13219, %v13232
  %v13234 = vcombine.low %v13226, %v13233
  %v13235 = vcombine.low %v7153, %v7157
  %v13236 = vcombine.low %v7161, %v7165
  %v13237 = vcombine.low %v7169, %v7173
  %v13238 = vcombine.low %v7177, %v7181
  %v13240 = vunpack.c.l.s4 1966171168
  %v13241 = vunpack.c.0.s8 %v13240
  %v13242 = vlaneseq
  %v13243 = vshrl.u32 %v13242, 7
  %v13244 = vsub.s32 %v13241, %v13243
  %v13245 = vrot.slane %v13235, %v13244
  %v13247 = vunpack.c.l.s4 1966171168
  %v13248 = vunpack.c.0.s8 %v13247
  %v13249 = vlaneseq
  %v13250 = vshrl.u32 %v13249, 7
  %v13251 = vsub.s32 %v13248, %v13250
  %v13252 = vrot.slane %v13236, %v13251
  %v13254 = vunpack.c.l.s4 1966171168
  %v13255 = vunpack.c.0.s8 %v13254
  %v13256 = vlaneseq
  %v13257 = vshrl.u32 %v13256, 7
  %v13258 = vsub.s32 %v13255, %v13257
  %v13259 = vrot.slane %v13237, %v13258
  %v13261 = vunpack.c.l.s4 1966171168
  %v13262 = vunpack.c.0.s8 %v13261
  %v13263 = vlaneseq
  %v13264 = vshrl.u32 %v13263, 7
  %v13265 = vsub.s32 %v13262, %v13264
  %v13266 = vrot.slane %v13238, %v13265
  %v13267 = vcombine.low %v13245, %v13252
  %v13268 = vcombine.low %v13259, %v13266
  %v13270 = vunpack.c.l.s4 1966171168
  %v13271 = vunpack.c.0.s8 %v13270
  %v13272 = vlaneseq
  %v13273 = vshrl.u32 %v13272, 7
  %v13274 = vsub.s32 %v13271, %v13273
  %v13275 = vrot.slane %v13267, %v13274
  %v13277 = vunpack.c.l.s4 1966171168
  %v13278 = vunpack.c.0.s8 %v13277
  %v13279 = vlaneseq
  %v13280 = vshrl.u32 %v13279, 7
  %v13281 = vsub.s32 %v13278, %v13280
  %v13282 = vrot.slane %v13268, %v13281
  %v13283 = vcombine.low %v13275, %v13282
  %v13284 = vcombine.low %v7185, %v7189
  %v13285 = vcombine.low %v7193, %v7197
  %v13286 = vcombine.low %v7201, %v7205
  %v13287 = vcombine.low %v7209, %v7213
  %v13289 = vunpack.c.l.s4 1966171168
  %v13290 = vunpack.c.0.s8 %v13289
  %v13291 = vlaneseq
  %v13292 = vshrl.u32 %v13291, 7
  %v13293 = vsub.s32 %v13290, %v13292
  %v13294 = vrot.slane %v13284, %v13293
  %v13296 = vunpack.c.l.s4 1966171168
  %v13297 = vunpack.c.0.s8 %v13296
  %v13298 = vlaneseq
  %v13299 = vshrl.u32 %v13298, 7
  %v13300 = vsub.s32 %v13297, %v13299
  %v13301 = vrot.slane %v13285, %v13300
  %v13303 = vunpack.c.l.s4 1966171168
  %v13304 = vunpack.c.0.s8 %v13303
  %v13305 = vlaneseq
  %v13306 = vshrl.u32 %v13305, 7
  %v13307 = vsub.s32 %v13304, %v13306
  %v13308 = vrot.slane %v13286, %v13307
  %v13310 = vunpack.c.l.s4 1966171168
  %v13311 = vunpack.c.0.s8 %v13310
  %v13312 = vlaneseq
  %v13313 = vshrl.u32 %v13312, 7
  %v13314 = vsub.s32 %v13311, %v13313
  %v13315 = vrot.slane %v13287, %v13314
  %v13316 = vcombine.low %v13294, %v13301
  %v13317 = vcombine.low %v13308, %v13315
  %v13319 = vunpack.c.l.s4 1966171168
  %v13320 = vunpack.c.0.s8 %v13319
  %v13321 = vlaneseq
  %v13322 = vshrl.u32 %v13321, 7
  %v13323 = vsub.s32 %v13320, %v13322
  %v13324 = vrot.slane %v13316, %v13323
  %v13326 = vunpack.c.l.s4 1966171168
  %v13327 = vunpack.c.0.s8 %v13326
  %v13328 = vlaneseq
  %v13329 = vshrl.u32 %v13328, 7
  %v13330 = vsub.s32 %v13327, %v13329
  %v13331 = vrot.slane %v13317, %v13330
  %v13332 = vcombine.low %v13324, %v13331
  %v13333 = vcombine.low %v7217, %v7221
  %v13334 = vcombine.low %v7225, %v7229
  %v13335 = vcombine.low %v7233, %v7237
  %v13336 = vcombine.low %v7241, %v7245
  %v13338 = vunpack.c.l.s4 1966171168
  %v13339 = vunpack.c.0.s8 %v13338
  %v13340 = vlaneseq
  %v13341 = vshrl.u32 %v13340, 7
  %v13342 = vsub.s32 %v13339, %v13341
  %v13343 = vrot.slane %v13333, %v13342
  %v13345 = vunpack.c.l.s4 1966171168
  %v13346 = vunpack.c.0.s8 %v13345
  %v13347 = vlaneseq
  %v13348 = vshrl.u32 %v13347, 7
  %v13349 = vsub.s32 %v13346, %v13348
  %v13350 = vrot.slane %v13334, %v13349
  %v13352 = vunpack.c.l.s4 1966171168
  %v13353 = vunpack.c.0.s8 %v13352
  %v13354 = vlaneseq
  %v13355 = vshrl.u32 %v13354, 7
  %v13356 = vsub.s32 %v13353, %v13355
  %v13357 = vrot.slane %v13335, %v13356
  %v13359 = vunpack.c.l.s4 1966171168
  %v13360 = vunpack.c.0.s8 %v13359
  %v13361 = vlaneseq
  %v13362 = vshrl.u32 %v13361, 7
  %v13363 = vsub.s32 %v13360, %v13362
  %v13364 = vrot.slane %v13336, %v13363
  %v13365 = vcombine.low %v13343, %v13350
  %v13366 = vcombine.low %v13357, %v13364
  %v13368 = vunpack.c.l.s4 1966171168
  %v13369 = vunpack.c.0.s8 %v13368
  %v13370 = vlaneseq
  %v13371 = vshrl.u32 %v13370, 7
  %v13372 = vsub.s32 %v13369, %v13371
  %v13373 = vrot.slane %v13365, %v13372
  %v13375 = vunpack.c.l.s4 1966171168
  %v13376 = vunpack.c.0.s8 %v13375
  %v13377 = vlaneseq
  %v13378 = vshrl.u32 %v13377, 7
  %v13379 = vsub.s32 %v13376, %v13378
  %v13380 = vrot.slane %v13366, %v13379
  %v13381 = vcombine.low %v13373, %v13380
  %v13382 = vcombine.low %v7249, %v7253
  %v13383 = vcombine.low %v7257, %v7261
  %v13384 = vcombine.low %v7265, %v7269
  %v13385 = vcombine.low %v7273, %v7277
  %v13387 = vunpack.c.l.s4 1966171168
  %v13388 = vunpack.c.0.s8 %v13387
  %v13389 = vlaneseq
  %v13390 = vshrl.u32 %v13389, 7
  %v13391 = vsub.s32 %v13388, %v13390
  %v13392 = vrot.slane %v13382, %v13391
  %v13394 = vunpack.c.l.s4 1966171168
  %v13395 = vunpack.c.0.s8 %v13394
  %v13396 = vlaneseq
  %v13397 = vshrl.u32 %v13396, 7
  %v13398 = vsub.s32 %v13395, %v13397
  %v13399 = vrot.slane %v13383, %v13398
  %v13401 = vunpack.c.l.s4 1966171168
  %v13402 = vunpack.c.0.s8 %v13401
  %v13403 = vlaneseq
  %v13404 = vshrl.u32 %v13403, 7
  %v13405 = vsub.s32 %v13402, %v13404
  %v13406 = vrot.slane %v13384, %v13405
  %v13408 = vunpack.c.l.s4 1966171168
  %v13409 = vunpack.c.0.s8 %v13408
  %v13410 = vlaneseq
  %v13411 = vshrl.u32 %v13410, 7
  %v13412 = vsub.s32 %v13409, %v13411
  %v13413 = vrot.slane %v13385, %v13412
  %v13414 = vcombine.low %v13392, %v13399
  %v13415 = vcombine.low %v13406, %v13413
  %v13417 = vunpack.c.l.s4 1966171168
  %v13418 = vunpack.c.0.s8 %v13417
  %v13419 = vlaneseq
  %v13420 = vshrl.u32 %v13419, 7
  %v13421 = vsub.s32 %v13418, %v13420
  %v13422 = vrot.slane %v13414, %v13421
  %v13424 = vunpack.c.l.s4 1966171168
  %v13425 = vunpack.c.0.s8 %v13424
  %v13426 = vlaneseq
  %v13427 = vshrl.u32 %v13426, 7
  %v13428 = vsub.s32 %v13425, %v13427
  %v13429 = vrot.slane %v13415, %v13428
  %v13430 = vcombine.low %v13422, %v13429
  %v13431 = vcombine.low %v7281, %v7285
  %v13432 = vcombine.low %v7289, %v7293
  %v13433 = vcombine.low %v7297, %v7301
  %v13434 = vcombine.low %v7305, %v7309
  %v13436 = vunpack.c.l.s4 1966171168
  %v13437 = vunpack.c.0.s8 %v13436
  %v13438 = vlaneseq
  %v13439 = vshrl.u32 %v13438, 7
  %v13440 = vsub.s32 %v13437, %v13439
  %v13441 = vrot.slane %v13431, %v13440
  %v13443 = vunpack.c.l.s4 1966171168
  %v13444 = vunpack.c.0.s8 %v13443
  %v13445 = vlaneseq
  %v13446 = vshrl.u32 %v13445, 7
  %v13447 = vsub.s32 %v13444, %v13446
  %v13448 = vrot.slane %v13432, %v13447
  %v13450 = vunpack.c.l.s4 1966171168
  %v13451 = vunpack.c.0.s8 %v13450
  %v13452 = vlaneseq
  %v13453 = vshrl.u32 %v13452, 7
  %v13454 = vsub.s32 %v13451, %v13453
  %v13455 = vrot.slane %v13433, %v13454
  %v13457 = vunpack.c.l.s4 1966171168
  %v13458 = vunpack.c.0.s8 %v13457
  %v13459 = vlaneseq
  %v13460 = vshrl.u32 %v13459, 7
  %v13461 = vsub.s32 %v13458, %v13460
  %v13462 = vrot.slane %v13434, %v13461
  %v13463 = vcombine.low %v13441, %v13448
  %v13464 = vcombine.low %v13455, %v13462
  %v13466 = vunpack.c.l.s4 1966171168
  %v13467 = vunpack.c.0.s8 %v13466
  %v13468 = vlaneseq
  %v13469 = vshrl.u32 %v13468, 7
  %v13470 = vsub.s32 %v13467, %v13469
  %v13471 = vrot.slane %v13463, %v13470
  %v13473 = vunpack.c.l.s4 1966171168
  %v13474 = vunpack.c.0.s8 %v13473
  %v13475 = vlaneseq
  %v13476 = vshrl.u32 %v13475, 7
  %v13477 = vsub.s32 %v13474, %v13476
  %v13478 = vrot.slane %v13464, %v13477
  %v13479 = vcombine.low %v13471, %v13478
  %v13480 = vcombine.low %v7313, %v7317
  %v13481 = vcombine.low %v7321, %v7325
  %v13482 = vcombine.low %v7329, %v7333
  %v13483 = vcombine.low %v7337, %v7341
  %v13485 = vunpack.c.l.s4 1966171168
  %v13486 = vunpack.c.0.s8 %v13485
  %v13487 = vlaneseq
  %v13488 = vshrl.u32 %v13487, 7
  %v13489 = vsub.s32 %v13486, %v13488
  %v13490 = vrot.slane %v13480, %v13489
  %v13492 = vunpack.c.l.s4 1966171168
  %v13493 = vunpack.c.0.s8 %v13492
  %v13494 = vlaneseq
  %v13495 = vshrl.u32 %v13494, 7
  %v13496 = vsub.s32 %v13493, %v13495
  %v13497 = vrot.slane %v13481, %v13496
  %v13499 = vunpack.c.l.s4 1966171168
  %v13500 = vunpack.c.0.s8 %v13499
  %v13501 = vlaneseq
  %v13502 = vshrl.u32 %v13501, 7
  %v13503 = vsub.s32 %v13500, %v13502
  %v13504 = vrot.slane %v13482, %v13503
  %v13506 = vunpack.c.l.s4 1966171168
  %v13507 = vunpack.c.0.s8 %v13506
  %v13508 = vlaneseq
  %v13509 = vshrl.u32 %v13508, 7
  %v13510 = vsub.s32 %v13507, %v13509
  %v13511 = vrot.slane %v13483, %v13510
  %v13512 = vcombine.low %v13490, %v13497
  %v13513 = vcombine.low %v13504, %v13511
  %v13515 = vunpack.c.l.s4 1966171168
  %v13516 = vunpack.c.0.s8 %v13515
  %v13517 = vlaneseq
  %v13518 = vshrl.u32 %v13517, 7
  %v13519 = vsub.s32 %v13516, %v13518
  %v13520 = vrot.slane %v13512, %v13519
  %v13522 = vunpack.c.l.s4 1966171168
  %v13523 = vunpack.c.0.s8 %v13522
  %v13524 = vlaneseq
  %v13525 = vshrl.u32 %v13524, 7
  %v13526 = vsub.s32 %v13523, %v13525
  %v13527 = vrot.slane %v13513, %v13526
  %v13528 = vcombine.low %v13520, %v13527
  %v13529 = vcombine.low %v7345, %v7349
  %v13530 = vcombine.low %v7353, %v7357
  %v13531 = vcombine.low %v7361, %v7365
  %v13532 = vcombine.low %v7369, %v7373
  %v13534 = vunpack.c.l.s4 1966171168
  %v13535 = vunpack.c.0.s8 %v13534
  %v13536 = vlaneseq
  %v13537 = vshrl.u32 %v13536, 7
  %v13538 = vsub.s32 %v13535, %v13537
  %v13539 = vrot.slane %v13529, %v13538
  %v13541 = vunpack.c.l.s4 1966171168
  %v13542 = vunpack.c.0.s8 %v13541
  %v13543 = vlaneseq
  %v13544 = vshrl.u32 %v13543, 7
  %v13545 = vsub.s32 %v13542, %v13544
  %v13546 = vrot.slane %v13530, %v13545
  %v13548 = vunpack.c.l.s4 1966171168
  %v13549 = vunpack.c.0.s8 %v13548
  %v13550 = vlaneseq
  %v13551 = vshrl.u32 %v13550, 7
  %v13552 = vsub.s32 %v13549, %v13551
  %v13553 = vrot.slane %v13531, %v13552
  %v13555 = vunpack.c.l.s4 1966171168
  %v13556 = vunpack.c.0.s8 %v13555
  %v13557 = vlaneseq
  %v13558 = vshrl.u32 %v13557, 7
  %v13559 = vsub.s32 %v13556, %v13558
  %v13560 = vrot.slane %v13532, %v13559
  %v13561 = vcombine.low %v13539, %v13546
  %v13562 = vcombine.low %v13553, %v13560
  %v13564 = vunpack.c.l.s4 1966171168
  %v13565 = vunpack.c.0.s8 %v13564
  %v13566 = vlaneseq
  %v13567 = vshrl.u32 %v13566, 7
  %v13568 = vsub.s32 %v13565, %v13567
  %v13569 = vrot.slane %v13561, %v13568
  %v13571 = vunpack.c.l.s4 1966171168
  %v13572 = vunpack.c.0.s8 %v13571
  %v13573 = vlaneseq
  %v13574 = vshrl.u32 %v13573, 7
  %v13575 = vsub.s32 %v13572, %v13574
  %v13576 = vrot.slane %v13562, %v13575
  %v13577 = vcombine.low %v13569, %v13576
  %v13578 = vcombine.low %v7377, %v7381
  %v13579 = vcombine.low %v7385, %v7389
  %v13580 = vcombine.low %v7393, %v7397
  %v13581 = vcombine.low %v7401, %v7405
  %v13583 = vunpack.c.l.s4 1966171168
  %v13584 = vunpack.c.0.s8 %v13583
  %v13585 = vlaneseq
  %v13586 = vshrl.u32 %v13585, 7
  %v13587 = vsub.s32 %v13584, %v13586
  %v13588 = vrot.slane %v13578, %v13587
  %v13590 = vunpack.c.l.s4 1966171168
  %v13591 = vunpack.c.0.s8 %v13590
  %v13592 = vlaneseq
  %v13593 = vshrl.u32 %v13592, 7
  %v13594 = vsub.s32 %v13591, %v13593
  %v13595 = vrot.slane %v13579, %v13594
  %v13597 = vunpack.c.l.s4 1966171168
  %v13598 = vunpack.c.0.s8 %v13597
  %v13599 = vlaneseq
  %v13600 = vshrl.u32 %v13599, 7
  %v13601 = vsub.s32 %v13598, %v13600
  %v13602 = vrot.slane %v13580, %v13601
  %v13604 = vunpack.c.l.s4 1966171168
  %v13605 = vunpack.c.0.s8 %v13604
  %v13606 = vlaneseq
  %v13607 = vshrl.u32 %v13606, 7
  %v13608 = vsub.s32 %v13605, %v13607
  %v13609 = vrot.slane %v13581, %v13608
  %v13610 = vcombine.low %v13588, %v13595
  %v13611 = vcombine.low %v13602, %v13609
  %v13613 = vunpack.c.l.s4 1966171168
  %v13614 = vunpack.c.0.s8 %v13613
  %v13615 = vlaneseq
  %v13616 = vshrl.u32 %v13615, 7
  %v13617 = vsub.s32 %v13614, %v13616
  %v13618 = vrot.slane %v13610, %v13617
  %v13620 = vunpack.c.l.s4 1966171168
  %v13621 = vunpack.c.0.s8 %v13620
  %v13622 = vlaneseq
  %v13623 = vshrl.u32 %v13622, 7
  %v13624 = vsub.s32 %v13621, %v13623
  %v13625 = vrot.slane %v13611, %v13624
  %v13626 = vcombine.low %v13618, %v13625
  %v13627 = vcombine.low %v7409, %v7413
  %v13628 = vcombine.low %v7417, %v7421
  %v13629 = vcombine.low %v7425, %v7429
  %v13630 = vcombine.low %v7433, %v7437
  %v13632 = vunpack.c.l.s4 1966171168
  %v13633 = vunpack.c.0.s8 %v13632
  %v13634 = vlaneseq
  %v13635 = vshrl.u32 %v13634, 7
  %v13636 = vsub.s32 %v13633, %v13635
  %v13637 = vrot.slane %v13627, %v13636
  %v13639 = vunpack.c.l.s4 1966171168
  %v13640 = vunpack.c.0.s8 %v13639
  %v13641 = vlaneseq
  %v13642 = vshrl.u32 %v13641, 7
  %v13643 = vsub.s32 %v13640, %v13642
  %v13644 = vrot.slane %v13628, %v13643
  %v13646 = vunpack.c.l.s4 1966171168
  %v13647 = vunpack.c.0.s8 %v13646
  %v13648 = vlaneseq
  %v13649 = vshrl.u32 %v13648, 7
  %v13650 = vsub.s32 %v13647, %v13649
  %v13651 = vrot.slane %v13629, %v13650
  %v13653 = vunpack.c.l.s4 1966171168
  %v13654 = vunpack.c.0.s8 %v13653
  %v13655 = vlaneseq
  %v13656 = vshrl.u32 %v13655, 7
  %v13657 = vsub.s32 %v13654, %v13656
  %v13658 = vrot.slane %v13630, %v13657
  %v13659 = vcombine.low %v13637, %v13644
  %v13660 = vcombine.low %v13651, %v13658
  %v13662 = vunpack.c.l.s4 1966171168
  %v13663 = vunpack.c.0.s8 %v13662
  %v13664 = vlaneseq
  %v13665 = vshrl.u32 %v13664, 7
  %v13666 = vsub.s32 %v13663, %v13665
  %v13667 = vrot.slane %v13659, %v13666
  %v13669 = vunpack.c.l.s4 1966171168
  %v13670 = vunpack.c.0.s8 %v13669
  %v13671 = vlaneseq
  %v13672 = vshrl.u32 %v13671, 7
  %v13673 = vsub.s32 %v13670, %v13672
  %v13674 = vrot.slane %v13660, %v13673
  %v13675 = vcombine.low %v13667, %v13674
  %v13676 = vcombine.low %v7441, %v7445
  %v13677 = vcombine.low %v7449, %v7453
  %v13678 = vcombine.low %v7457, %v7461
  %v13679 = vcombine.low %v7465, %v7469
  %v13681 = vunpack.c.l.s4 1966171168
  %v13682 = vunpack.c.0.s8 %v13681
  %v13683 = vlaneseq
  %v13684 = vshrl.u32 %v13683, 7
  %v13685 = vsub.s32 %v13682, %v13684
  %v13686 = vrot.slane %v13676, %v13685
  %v13688 = vunpack.c.l.s4 1966171168
  %v13689 = vunpack.c.0.s8 %v13688
  %v13690 = vlaneseq
  %v13691 = vshrl.u32 %v13690, 7
  %v13692 = vsub.s32 %v13689, %v13691
  %v13693 = vrot.slane %v13677, %v13692
  %v13695 = vunpack.c.l.s4 1966171168
  %v13696 = vunpack.c.0.s8 %v13695
  %v13697 = vlaneseq
  %v13698 = vshrl.u32 %v13697, 7
  %v13699 = vsub.s32 %v13696, %v13698
  %v13700 = vrot.slane %v13678, %v13699
  %v13702 = vunpack.c.l.s4 1966171168
  %v13703 = vunpack.c.0.s8 %v13702
  %v13704 = vlaneseq
  %v13705 = vshrl.u32 %v13704, 7
  %v13706 = vsub.s32 %v13703, %v13705
  %v13707 = vrot.slane %v13679, %v13706
  %v13708 = vcombine.low %v13686, %v13693
  %v13709 = vcombine.low %v13700, %v13707
  %v13711 = vunpack.c.l.s4 1966171168
  %v13712 = vunpack.c.0.s8 %v13711
  %v13713 = vlaneseq
  %v13714 = vshrl.u32 %v13713, 7
  %v13715 = vsub.s32 %v13712, %v13714
  %v13716 = vrot.slane %v13708, %v13715
  %v13718 = vunpack.c.l.s4 1966171168
  %v13719 = vunpack.c.0.s8 %v13718
  %v13720 = vlaneseq
  %v13721 = vshrl.u32 %v13720, 7
  %v13722 = vsub.s32 %v13719, %v13721
  %v13723 = vrot.slane %v13709, %v13722
  %v13724 = vcombine.low %v13716, %v13723
  %v13725 = vcombine.low %v7473, %v7477
  %v13726 = vcombine.low %v7481, %v7485
  %v13727 = vcombine.low %v7489, %v7493
  %v13728 = vcombine.low %v7497, %v7501
  %v13730 = vunpack.c.l.s4 1966171168
  %v13731 = vunpack.c.0.s8 %v13730
  %v13732 = vlaneseq
  %v13733 = vshrl.u32 %v13732, 7
  %v13734 = vsub.s32 %v13731, %v13733
  %v13735 = vrot.slane %v13725, %v13734
  %v13737 = vunpack.c.l.s4 1966171168
  %v13738 = vunpack.c.0.s8 %v13737
  %v13739 = vlaneseq
  %v13740 = vshrl.u32 %v13739, 7
  %v13741 = vsub.s32 %v13738, %v13740
  %v13742 = vrot.slane %v13726, %v13741
  %v13744 = vunpack.c.l.s4 1966171168
  %v13745 = vunpack.c.0.s8 %v13744
  %v13746 = vlaneseq
  %v13747 = vshrl.u32 %v13746, 7
  %v13748 = vsub.s32 %v13745, %v13747
  %v13749 = vrot.slane %v13727, %v13748
  %v13751 = vunpack.c.l.s4 1966171168
  %v13752 = vunpack.c.0.s8 %v13751
  %v13753 = vlaneseq
  %v13754 = vshrl.u32 %v13753, 7
  %v13755 = vsub.s32 %v13752, %v13754
  %v13756 = vrot.slane %v13728, %v13755
  %v13757 = vcombine.low %v13735, %v13742
  %v13758 = vcombine.low %v13749, %v13756
  %v13760 = vunpack.c.l.s4 1966171168
  %v13761 = vunpack.c.0.s8 %v13760
  %v13762 = vlaneseq
  %v13763 = vshrl.u32 %v13762, 7
  %v13764 = vsub.s32 %v13761, %v13763
  %v13765 = vrot.slane %v13757, %v13764
  %v13767 = vunpack.c.l.s4 1966171168
  %v13768 = vunpack.c.0.s8 %v13767
  %v13769 = vlaneseq
  %v13770 = vshrl.u32 %v13769, 7
  %v13771 = vsub.s32 %v13768, %v13770
  %v13772 = vrot.slane %v13758, %v13771
  %v13773 = vcombine.low %v13765, %v13772
  %13774 = vset.pattern.permute.xlu0 0
  %13775 = vperm.xlu0 %13774, %v7550
  %v13776 = vpop.permute.xlu0 %13775
  %13777 = vset.pattern.permute.xlu0 0
  %13778 = vperm.xlu0 %13777, %v7599
  %v13779 = vpop.permute.xlu0 %13778
  %13780 = vset.pattern.permute.xlu0 0
  %13781 = vperm.xlu0 %13780, %v7648
  %v13782 = vpop.permute.xlu0 %13781
  %13783 = vset.pattern.permute.xlu0 0
  %13784 = vperm.xlu0 %13783, %v7697
  %v13785 = vpop.permute.xlu0 %13784
  %13786 = vset.pattern.permute.xlu0 0
  %13787 = vperm.xlu0 %13786, %v7746
  %v13788 = vpop.permute.xlu0 %13787
  %13789 = vset.pattern.permute.xlu0 0
  %13790 = vperm.xlu0 %13789, %v7795
  %v13791 = vpop.permute.xlu0 %13790
  %13792 = vset.pattern.permute.xlu0 0
  %13793 = vperm.xlu0 %13792, %v7844
  %v13794 = vpop.permute.xlu0 %13793
  %13795 = vset.pattern.permute.xlu0 0
  %13796 = vperm.xlu0 %13795, %v7893
  %v13797 = vpop.permute.xlu0 %13796
  %13798 = vset.pattern.permute.xlu0 0
  %13799 = vperm.xlu0 %13798, %v7942
  %v13800 = vpop.permute.xlu0 %13799
  %13801 = vset.pattern.permute.xlu0 0
  %13802 = vperm.xlu0 %13801, %v7991
  %v13803 = vpop.permute.xlu0 %13802
  %13804 = vset.pattern.permute.xlu0 0
  %13805 = vperm.xlu0 %13804, %v8040
  %v13806 = vpop.permute.xlu0 %13805
  %13807 = vset.pattern.permute.xlu0 0
  %13808 = vperm.xlu0 %13807, %v8089
  %v13809 = vpop.permute.xlu0 %13808
  %13810 = vset.pattern.permute.xlu0 0
  %13811 = vperm.xlu0 %13810, %v8138
  %v13812 = vpop.permute.xlu0 %13811
  %13813 = vset.pattern.permute.xlu0 0
  %13814 = vperm.xlu0 %13813, %v8187
  %v13815 = vpop.permute.xlu0 %13814
  %13816 = vset.pattern.permute.xlu0 0
  %13817 = vperm.xlu0 %13816, %v8236
  %v13818 = vpop.permute.xlu0 %13817
  %13819 = vset.pattern.permute.xlu0 0
  %13820 = vperm.xlu0 %13819, %v8285
  %v13821 = vpop.permute.xlu0 %13820
  %13822 = vset.pattern.permute.xlu0 0
  %13823 = vperm.xlu0 %13822, %v8334
  %v13824 = vpop.permute.xlu0 %13823
  %13825 = vset.pattern.permute.xlu0 0
  %13826 = vperm.xlu0 %13825, %v8383
  %v13827 = vpop.permute.xlu0 %13826
  %13828 = vset.pattern.permute.xlu0 0
  %13829 = vperm.xlu0 %13828, %v8432
  %v13830 = vpop.permute.xlu0 %13829
  %13831 = vset.pattern.permute.xlu0 0
  %13832 = vperm.xlu0 %13831, %v8481
  %v13833 = vpop.permute.xlu0 %13832
  %13834 = vset.pattern.permute.xlu0 0
  %13835 = vperm.xlu0 %13834, %v8530
  %v13836 = vpop.permute.xlu0 %13835
  %13837 = vset.pattern.permute.xlu0 0
  %13838 = vperm.xlu0 %13837, %v8579
  %v13839 = vpop.permute.xlu0 %13838
  %13840 = vset.pattern.permute.xlu0 0
  %13841 = vperm.xlu0 %13840, %v8628
  %v13842 = vpop.permute.xlu0 %13841
  %13843 = vset.pattern.permute.xlu0 0
  %13844 = vperm.xlu0 %13843, %v8677
  %v13845 = vpop.permute.xlu0 %13844
  %13846 = vset.pattern.permute.xlu0 0
  %13847 = vperm.xlu0 %13846, %v8726
  %v13848 = vpop.permute.xlu0 %13847
  %13849 = vset.pattern.permute.xlu0 0
  %13850 = vperm.xlu0 %13849, %v8775
  %v13851 = vpop.permute.xlu0 %13850
  %13852 = vset.pattern.permute.xlu0 0
  %13853 = vperm.xlu0 %13852, %v8824
  %v13854 = vpop.permute.xlu0 %13853
  %13855 = vset.pattern.permute.xlu0 0
  %13856 = vperm.xlu0 %13855, %v8873
  %v13857 = vpop.permute.xlu0 %13856
  %13858 = vset.pattern.permute.xlu0 0
  %13859 = vperm.xlu0 %13858, %v8922
  %v13860 = vpop.permute.xlu0 %13859
  %13861 = vset.pattern.permute.xlu0 0
  %13862 = vperm.xlu0 %13861, %v8971
  %v13863 = vpop.permute.xlu0 %13862
  %13864 = vset.pattern.permute.xlu0 0
  %13865 = vperm.xlu0 %13864, %v9020
  %v13866 = vpop.permute.xlu0 %13865
  %13867 = vset.pattern.permute.xlu0 0
  %13868 = vperm.xlu0 %13867, %v9069
  %v13869 = vpop.permute.xlu0 %13868
  %13870 = vset.pattern.permute.xlu0 0
  %13871 = vperm.xlu0 %13870, %v9118
  %v13872 = vpop.permute.xlu0 %13871
  %13873 = vset.pattern.permute.xlu0 0
  %13874 = vperm.xlu0 %13873, %v9167
  %v13875 = vpop.permute.xlu0 %13874
  %13876 = vset.pattern.permute.xlu0 0
  %13877 = vperm.xlu0 %13876, %v9216
  %v13878 = vpop.permute.xlu0 %13877
  %13879 = vset.pattern.permute.xlu0 0
  %13880 = vperm.xlu0 %13879, %v9265
  %v13881 = vpop.permute.xlu0 %13880
  %13882 = vset.pattern.permute.xlu0 0
  %13883 = vperm.xlu0 %13882, %v9314
  %v13884 = vpop.permute.xlu0 %13883
  %13885 = vset.pattern.permute.xlu0 0
  %13886 = vperm.xlu0 %13885, %v9363
  %v13887 = vpop.permute.xlu0 %13886
  %13888 = vset.pattern.permute.xlu0 0
  %13889 = vperm.xlu0 %13888, %v9412
  %v13890 = vpop.permute.xlu0 %13889
  %13891 = vset.pattern.permute.xlu0 0
  %13892 = vperm.xlu0 %13891, %v9461
  %v13893 = vpop.permute.xlu0 %13892
  %13894 = vset.pattern.permute.xlu0 0
  %13895 = vperm.xlu0 %13894, %v9510
  %v13896 = vpop.permute.xlu0 %13895
  %13897 = vset.pattern.permute.xlu0 0
  %13898 = vperm.xlu0 %13897, %v9559
  %v13899 = vpop.permute.xlu0 %13898
  %13900 = vset.pattern.permute.xlu0 0
  %13901 = vperm.xlu0 %13900, %v9608
  %v13902 = vpop.permute.xlu0 %13901
  %13903 = vset.pattern.permute.xlu0 0
  %13904 = vperm.xlu0 %13903, %v9657
  %v13905 = vpop.permute.xlu0 %13904
  %13906 = vset.pattern.permute.xlu0 0
  %13907 = vperm.xlu0 %13906, %v9706
  %v13908 = vpop.permute.xlu0 %13907
  %13909 = vset.pattern.permute.xlu0 0
  %13910 = vperm.xlu0 %13909, %v9755
  %v13911 = vpop.permute.xlu0 %13910
  %13912 = vset.pattern.permute.xlu0 0
  %13913 = vperm.xlu0 %13912, %v9804
  %v13914 = vpop.permute.xlu0 %13913
  %13915 = vset.pattern.permute.xlu0 0
  %13916 = vperm.xlu0 %13915, %v9853
  %v13917 = vpop.permute.xlu0 %13916
  %13918 = vset.pattern.permute.xlu0 0
  %13919 = vperm.xlu0 %13918, %v9902
  %v13920 = vpop.permute.xlu0 %13919
  %13921 = vset.pattern.permute.xlu0 0
  %13922 = vperm.xlu0 %13921, %v9951
  %v13923 = vpop.permute.xlu0 %13922
  %13924 = vset.pattern.permute.xlu0 0
  %13925 = vperm.xlu0 %13924, %v10000
  %v13926 = vpop.permute.xlu0 %13925
  %13927 = vset.pattern.permute.xlu0 0
  %13928 = vperm.xlu0 %13927, %v10049
  %v13929 = vpop.permute.xlu0 %13928
  %13930 = vset.pattern.permute.xlu0 0
  %13931 = vperm.xlu0 %13930, %v10098
  %v13932 = vpop.permute.xlu0 %13931
  %13933 = vset.pattern.permute.xlu0 0
  %13934 = vperm.xlu0 %13933, %v10147
  %v13935 = vpop.permute.xlu0 %13934
  %13936 = vset.pattern.permute.xlu0 0
  %13937 = vperm.xlu0 %13936, %v10196
  %v13938 = vpop.permute.xlu0 %13937
  %13939 = vset.pattern.permute.xlu0 0
  %13940 = vperm.xlu0 %13939, %v10245
  %v13941 = vpop.permute.xlu0 %13940
  %13942 = vset.pattern.permute.xlu0 0
  %13943 = vperm.xlu0 %13942, %v10294
  %v13944 = vpop.permute.xlu0 %13943
  %13945 = vset.pattern.permute.xlu0 0
  %13946 = vperm.xlu0 %13945, %v10343
  %v13947 = vpop.permute.xlu0 %13946
  %13948 = vset.pattern.permute.xlu0 0
  %13949 = vperm.xlu0 %13948, %v10392
  %v13950 = vpop.permute.xlu0 %13949
  %13951 = vset.pattern.permute.xlu0 0
  %13952 = vperm.xlu0 %13951, %v10441
  %v13953 = vpop.permute.xlu0 %13952
  %13954 = vset.pattern.permute.xlu0 0
  %13955 = vperm.xlu0 %13954, %v10490
  %v13956 = vpop.permute.xlu0 %13955
  %13957 = vset.pattern.permute.xlu0 0
  %13958 = vperm.xlu0 %13957, %v10539
  %v13959 = vpop.permute.xlu0 %13958
  %13960 = vset.pattern.permute.xlu0 0
  %13961 = vperm.xlu0 %13960, %v10588
  %v13962 = vpop.permute.xlu0 %13961
  %13963 = vset.pattern.permute.xlu0 0
  %13964 = vperm.xlu0 %13963, %v10637
  %v13965 = vpop.permute.xlu0 %13964
  %13966 = vset.pattern.permute.xlu0 0
  %13967 = vperm.xlu0 %13966, %v10686
  %v13968 = vpop.permute.xlu0 %13967
  %13969 = vset.pattern.permute.xlu0 0
  %13970 = vperm.xlu0 %13969, %v10735
  %v13971 = vpop.permute.xlu0 %13970
  %13972 = vset.pattern.permute.xlu0 0
  %13973 = vperm.xlu0 %13972, %v10784
  %v13974 = vpop.permute.xlu0 %13973
  %13975 = vset.pattern.permute.xlu0 0
  %13976 = vperm.xlu0 %13975, %v10833
  %v13977 = vpop.permute.xlu0 %13976
  %13978 = vset.pattern.permute.xlu0 0
  %13979 = vperm.xlu0 %13978, %v10882
  %v13980 = vpop.permute.xlu0 %13979
  %13981 = vset.pattern.permute.xlu0 0
  %13982 = vperm.xlu0 %13981, %v10931
  %v13983 = vpop.permute.xlu0 %13982
  %13984 = vset.pattern.permute.xlu0 0
  %13985 = vperm.xlu0 %13984, %v10980
  %v13986 = vpop.permute.xlu0 %13985
  %13987 = vset.pattern.permute.xlu0 0
  %13988 = vperm.xlu0 %13987, %v11029
  %v13989 = vpop.permute.xlu0 %13988
  %13990 = vset.pattern.permute.xlu0 0
  %13991 = vperm.xlu0 %13990, %v11078
  %v13992 = vpop.permute.xlu0 %13991
  %13993 = vset.pattern.permute.xlu0 0
  %13994 = vperm.xlu0 %13993, %v11127
  %v13995 = vpop.permute.xlu0 %13994
  %13996 = vset.pattern.permute.xlu0 0
  %13997 = vperm.xlu0 %13996, %v11176
  %v13998 = vpop.permute.xlu0 %13997
  %13999 = vset.pattern.permute.xlu0 0
  %14000 = vperm.xlu0 %13999, %v11225
  %v14001 = vpop.permute.xlu0 %14000
  %14002 = vset.pattern.permute.xlu0 0
  %14003 = vperm.xlu0 %14002, %v11274
  %v14004 = vpop.permute.xlu0 %14003
  %14005 = vset.pattern.permute.xlu0 0
  %14006 = vperm.xlu0 %14005, %v11323
  %v14007 = vpop.permute.xlu0 %14006
  %14008 = vset.pattern.permute.xlu0 0
  %14009 = vperm.xlu0 %14008, %v11372
  %v14010 = vpop.permute.xlu0 %14009
  %14011 = vset.pattern.permute.xlu0 0
  %14012 = vperm.xlu0 %14011, %v11421
  %v14013 = vpop.permute.xlu0 %14012
  %14014 = vset.pattern.permute.xlu0 0
  %14015 = vperm.xlu0 %14014, %v11470
  %v14016 = vpop.permute.xlu0 %14015
  %14017 = vset.pattern.permute.xlu0 0
  %14018 = vperm.xlu0 %14017, %v11519
  %v14019 = vpop.permute.xlu0 %14018
  %14020 = vset.pattern.permute.xlu0 0
  %14021 = vperm.xlu0 %14020, %v11568
  %v14022 = vpop.permute.xlu0 %14021
  %14023 = vset.pattern.permute.xlu0 0
  %14024 = vperm.xlu0 %14023, %v11617
  %v14025 = vpop.permute.xlu0 %14024
  %14026 = vset.pattern.permute.xlu0 0
  %14027 = vperm.xlu0 %14026, %v11666
  %v14028 = vpop.permute.xlu0 %14027
  %14029 = vset.pattern.permute.xlu0 0
  %14030 = vperm.xlu0 %14029, %v11715
  %v14031 = vpop.permute.xlu0 %14030
  %14032 = vset.pattern.permute.xlu0 0
  %14033 = vperm.xlu0 %14032, %v11764
  %v14034 = vpop.permute.xlu0 %14033
  %14035 = vset.pattern.permute.xlu0 0
  %14036 = vperm.xlu0 %14035, %v11813
  %v14037 = vpop.permute.xlu0 %14036
  %14038 = vset.pattern.permute.xlu0 0
  %14039 = vperm.xlu0 %14038, %v11862
  %v14040 = vpop.permute.xlu0 %14039
  %14041 = vset.pattern.permute.xlu0 0
  %14042 = vperm.xlu0 %14041, %v11911
  %v14043 = vpop.permute.xlu0 %14042
  %14044 = vset.pattern.permute.xlu0 0
  %14045 = vperm.xlu0 %14044, %v11960
  %v14046 = vpop.permute.xlu0 %14045
  %14047 = vset.pattern.permute.xlu0 0
  %14048 = vperm.xlu0 %14047, %v12009
  %v14049 = vpop.permute.xlu0 %14048
  %14050 = vset.pattern.permute.xlu0 0
  %14051 = vperm.xlu0 %14050, %v12058
  %v14052 = vpop.permute.xlu0 %14051
  %14053 = vset.pattern.permute.xlu0 0
  %14054 = vperm.xlu0 %14053, %v12107
  %v14055 = vpop.permute.xlu0 %14054
  %14056 = vset.pattern.permute.xlu0 0
  %14057 = vperm.xlu0 %14056, %v12156
  %v14058 = vpop.permute.xlu0 %14057
  %14059 = vset.pattern.permute.xlu0 0
  %14060 = vperm.xlu0 %14059, %v12205
  %v14061 = vpop.permute.xlu0 %14060
  %14062 = vset.pattern.permute.xlu0 0
  %14063 = vperm.xlu0 %14062, %v12254
  %v14064 = vpop.permute.xlu0 %14063
  %14065 = vset.pattern.permute.xlu0 0
  %14066 = vperm.xlu0 %14065, %v12303
  %v14067 = vpop.permute.xlu0 %14066
  %14068 = vset.pattern.permute.xlu0 0
  %14069 = vperm.xlu0 %14068, %v12352
  %v14070 = vpop.permute.xlu0 %14069
  %14071 = vset.pattern.permute.xlu0 0
  %14072 = vperm.xlu0 %14071, %v12401
  %v14073 = vpop.permute.xlu0 %14072
  %14074 = vset.pattern.permute.xlu0 0
  %14075 = vperm.xlu0 %14074, %v12450
  %v14076 = vpop.permute.xlu0 %14075
  %14077 = vset.pattern.permute.xlu0 0
  %14078 = vperm.xlu0 %14077, %v12499
  %v14079 = vpop.permute.xlu0 %14078
  %14080 = vset.pattern.permute.xlu0 0
  %14081 = vperm.xlu0 %14080, %v12548
  %v14082 = vpop.permute.xlu0 %14081
  %14083 = vset.pattern.permute.xlu0 0
  %14084 = vperm.xlu0 %14083, %v12597
  %v14085 = vpop.permute.xlu0 %14084
  %14086 = vset.pattern.permute.xlu0 0
  %14087 = vperm.xlu0 %14086, %v12646
  %v14088 = vpop.permute.xlu0 %14087
  %14089 = vset.pattern.permute.xlu0 0
  %14090 = vperm.xlu0 %14089, %v12695
  %v14091 = vpop.permute.xlu0 %14090
  %14092 = vset.pattern.permute.xlu0 0
  %14093 = vperm.xlu0 %14092, %v12744
  %v14094 = vpop.permute.xlu0 %14093
  %14095 = vset.pattern.permute.xlu0 0
  %14096 = vperm.xlu0 %14095, %v12793
  %v14097 = vpop.permute.xlu0 %14096
  %14098 = vset.pattern.permute.xlu0 0
  %14099 = vperm.xlu0 %14098, %v12842
  %v14100 = vpop.permute.xlu0 %14099
  %14101 = vset.pattern.permute.xlu0 0
  %14102 = vperm.xlu0 %14101, %v12891
  %v14103 = vpop.permute.xlu0 %14102
  %14104 = vset.pattern.permute.xlu0 0
  %14105 = vperm.xlu0 %14104, %v12940
  %v14106 = vpop.permute.xlu0 %14105
  %14107 = vset.pattern.permute.xlu0 0
  %14108 = vperm.xlu0 %14107, %v12989
  %v14109 = vpop.permute.xlu0 %14108
  %14110 = vset.pattern.permute.xlu0 0
  %14111 = vperm.xlu0 %14110, %v13038
  %v14112 = vpop.permute.xlu0 %14111
  %14113 = vset.pattern.permute.xlu0 0
  %14114 = vperm.xlu0 %14113, %v13087
  %v14115 = vpop.permute.xlu0 %14114
  %14116 = vset.pattern.permute.xlu0 0
  %14117 = vperm.xlu0 %14116, %v13136
  %v14118 = vpop.permute.xlu0 %14117
  %14119 = vset.pattern.permute.xlu0 0
  %14120 = vperm.xlu0 %14119, %v13185
  %v14121 = vpop.permute.xlu0 %14120
  %14122 = vset.pattern.permute.xlu0 0
  %14123 = vperm.xlu0 %14122, %v13234
  %v14124 = vpop.permute.xlu0 %14123
  %14125 = vset.pattern.permute.xlu0 0
  %14126 = vperm.xlu0 %14125, %v13283
  %v14127 = vpop.permute.xlu0 %14126
  %14128 = vset.pattern.permute.xlu0 0
  %14129 = vperm.xlu0 %14128, %v13332
  %v14130 = vpop.permute.xlu0 %14129
  %14131 = vset.pattern.permute.xlu0 0
  %14132 = vperm.xlu0 %14131, %v13381
  %v14133 = vpop.permute.xlu0 %14132
  %14134 = vset.pattern.permute.xlu0 0
  %14135 = vperm.xlu0 %14134, %v13430
  %v14136 = vpop.permute.xlu0 %14135
  %14137 = vset.pattern.permute.xlu0 0
  %14138 = vperm.xlu0 %14137, %v13479
  %v14139 = vpop.permute.xlu0 %14138
  %14140 = vset.pattern.permute.xlu0 0
  %14141 = vperm.xlu0 %14140, %v13528
  %v14142 = vpop.permute.xlu0 %14141
  %14143 = vset.pattern.permute.xlu0 0
  %14144 = vperm.xlu0 %14143, %v13577
  %v14145 = vpop.permute.xlu0 %14144
  %14146 = vset.pattern.permute.xlu0 0
  %14147 = vperm.xlu0 %14146, %v13626
  %v14148 = vpop.permute.xlu0 %14147
  %14149 = vset.pattern.permute.xlu0 0
  %14150 = vperm.xlu0 %14149, %v13675
  %v14151 = vpop.permute.xlu0 %14150
  %14152 = vset.pattern.permute.xlu0 0
  %14153 = vperm.xlu0 %14152, %v13724
  %v14154 = vpop.permute.xlu0 %14153
  %14155 = vset.pattern.permute.xlu0 0
  %14156 = vperm.xlu0 %14155, %v13773
  %v14157 = vpop.permute.xlu0 %14156
  %v14158 = vlaneseq
  %v14159 = vand.u32 %v14158, 127
  %v14160 = vlaneseq
  %v14161 = vshrl.u32 %v14160, 7
  %v14162 = vsub.s32 %v14159, %v14161
  %v14163 = vrot.slane %v13776, %v14162
  %v14164 = vadd.s32 %v14159, 4294967288
  %v14165 = vlaneseq
  %v14166 = vshrl.u32 %v14165, 7
  %v14167 = vsub.s32 %v14164, %v14166
  %v14168 = vrot.slane %v13779, %v14167
  %vm14169 = vcmask 130112
  %v14170 = vsel %vm14169, %v14168, %v14163
  %v14171 = vadd.s32 %v14159, 4294967280
  %v14172 = vlaneseq
  %v14173 = vshrl.u32 %v14172, 7
  %v14174 = vsub.s32 %v14171, %v14173
  %v14175 = vrot.slane %v13782, %v14174
  %vm14176 = vcmask 195712
  %v14177 = vsel %vm14176, %v14175, %v14170
  %v14178 = vadd.s32 %v14159, 4294967272
  %v14179 = vlaneseq
  %v14180 = vshrl.u32 %v14179, 7
  %v14181 = vsub.s32 %v14178, %v14180
  %v14182 = vrot.slane %v13785, %v14181
  %vm14183 = vcmask 261312
  %v14184 = vsel %vm14183, %v14182, %v14177
  %v14185 = vadd.s32 %v14159, 4294967264
  %v14186 = vlaneseq
  %v14187 = vshrl.u32 %v14186, 7
  %v14188 = vsub.s32 %v14185, %v14187
  %v14189 = vrot.slane %v13788, %v14188
  %vm14190 = vcmask 326912
  %v14191 = vsel %vm14190, %v14189, %v14184
  %v14192 = vadd.s32 %v14159, 4294967256
  %v14193 = vlaneseq
  %v14194 = vshrl.u32 %v14193, 7
  %v14195 = vsub.s32 %v14192, %v14194
  %v14196 = vrot.slane %v13791, %v14195
  %vm14197 = vcmask 392512
  %v14198 = vsel %vm14197, %v14196, %v14191
  %v14199 = vadd.s32 %v14159, 4294967248
  %v14200 = vlaneseq
  %v14201 = vshrl.u32 %v14200, 7
  %v14202 = vsub.s32 %v14199, %v14201
  %v14203 = vrot.slane %v13794, %v14202
  %vm14204 = vcmask 458112
  %v14205 = vsel %vm14204, %v14203, %v14198
  %v14206 = vadd.s32 %v14159, 4294967240
  %v14207 = vlaneseq
  %v14208 = vshrl.u32 %v14207, 7
  %v14209 = vsub.s32 %v14206, %v14208
  %v14210 = vrot.slane %v13797, %v14209
  %vm14211 = vcmask 523712
  %v14212 = vsel %vm14211, %v14210, %v14205
  %v14213 = vadd.s32 %v14159, 4294967232
  %v14214 = vlaneseq
  %v14215 = vshrl.u32 %v14214, 7
  %v14216 = vsub.s32 %v14213, %v14215
  %v14217 = vrot.slane %v13800, %v14216
  %vm14218 = vcmask 589312
  %v14219 = vsel %vm14218, %v14217, %v14212
  %v14220 = vadd.s32 %v14159, 4294967224
  %v14221 = vlaneseq
  %v14222 = vshrl.u32 %v14221, 7
  %v14223 = vsub.s32 %v14220, %v14222
  %v14224 = vrot.slane %v13803, %v14223
  %vm14225 = vcmask 654912
  %v14226 = vsel %vm14225, %v14224, %v14219
  %v14227 = vadd.s32 %v14159, 4294967216
  %v14228 = vlaneseq
  %v14229 = vshrl.u32 %v14228, 7
  %v14230 = vsub.s32 %v14227, %v14229
  %v14231 = vrot.slane %v13806, %v14230
  %vm14232 = vcmask 720512
  %v14233 = vsel %vm14232, %v14231, %v14226
  %v14234 = vadd.s32 %v14159, 4294967208
  %v14235 = vlaneseq
  %v14236 = vshrl.u32 %v14235, 7
  %v14237 = vsub.s32 %v14234, %v14236
  %v14238 = vrot.slane %v13809, %v14237
  %vm14239 = vcmask 786112
  %v14240 = vsel %vm14239, %v14238, %v14233
  %v14241 = vadd.s32 %v14159, 4294967200
  %v14242 = vlaneseq
  %v14243 = vshrl.u32 %v14242, 7
  %v14244 = vsub.s32 %v14241, %v14243
  %v14245 = vrot.slane %v13812, %v14244
  %vm14246 = vcmask 851712
  %v14247 = vsel %vm14246, %v14245, %v14240
  %v14248 = vadd.s32 %v14159, 4294967192
  %v14249 = vlaneseq
  %v14250 = vshrl.u32 %v14249, 7
  %v14251 = vsub.s32 %v14248, %v14250
  %v14252 = vrot.slane %v13815, %v14251
  %vm14253 = vcmask 917312
  %v14254 = vsel %vm14253, %v14252, %v14247
  %v14255 = vadd.s32 %v14159, 4294967184
  %v14256 = vlaneseq
  %v14257 = vshrl.u32 %v14256, 7
  %v14258 = vsub.s32 %v14255, %v14257
  %v14259 = vrot.slane %v13818, %v14258
  %vm14260 = vcmask 982912
  %v14261 = vsel %vm14260, %v14259, %v14254
  %v14262 = vadd.s32 %v14159, 4294967176
  %v14263 = vlaneseq
  %v14264 = vshrl.u32 %v14263, 7
  %v14265 = vsub.s32 %v14262, %v14264
  %v14266 = vrot.slane %v13821, %v14265
  %vm14267 = vcmask 1048512
  %v14268 = vsel %vm14267, %v14266, %v14261
  %v14269 = vlaneseq
  %v14270 = vshrl.u32 %v14269, 7
  %v14271 = vsub.s32 %v14159, %v14270
  %v14272 = vrot.slane %v13824, %v14271
  %v14273 = vlaneseq
  %v14274 = vshrl.u32 %v14273, 7
  %v14275 = vsub.s32 %v14164, %v14274
  %v14276 = vrot.slane %v13827, %v14275
  %v14277 = vsel %vm14169, %v14276, %v14272
  %v14278 = vlaneseq
  %v14279 = vshrl.u32 %v14278, 7
  %v14280 = vsub.s32 %v14171, %v14279
  %v14281 = vrot.slane %v13830, %v14280
  %v14282 = vsel %vm14176, %v14281, %v14277
  %v14283 = vlaneseq
  %v14284 = vshrl.u32 %v14283, 7
  %v14285 = vsub.s32 %v14178, %v14284
  %v14286 = vrot.slane %v13833, %v14285
  %v14287 = vsel %vm14183, %v14286, %v14282
  %v14288 = vlaneseq
  %v14289 = vshrl.u32 %v14288, 7
  %v14290 = vsub.s32 %v14185, %v14289
  %v14291 = vrot.slane %v13836, %v14290
  %v14292 = vsel %vm14190, %v14291, %v14287
  %v14293 = vlaneseq
  %v14294 = vshrl.u32 %v14293, 7
  %v14295 = vsub.s32 %v14192, %v14294
  %v14296 = vrot.slane %v13839, %v14295
  %v14297 = vsel %vm14197, %v14296, %v14292
  %v14298 = vlaneseq
  %v14299 = vshrl.u32 %v14298, 7
  %v14300 = vsub.s32 %v14199, %v14299
  %v14301 = vrot.slane %v13842, %v14300
  %v14302 = vsel %vm14204, %v14301, %v14297
  %v14303 = vlaneseq
  %v14304 = vshrl.u32 %v14303, 7
  %v14305 = vsub.s32 %v14206, %v14304
  %v14306 = vrot.slane %v13845, %v14305
  %v14307 = vsel %vm14211, %v14306, %v14302
  %v14308 = vlaneseq
  %v14309 = vshrl.u32 %v14308, 7
  %v14310 = vsub.s32 %v14213, %v14309
  %v14311 = vrot.slane %v13848, %v14310
  %v14312 = vsel %vm14218, %v14311, %v14307
  %v14313 = vlaneseq
  %v14314 = vshrl.u32 %v14313, 7
  %v14315 = vsub.s32 %v14220, %v14314
  %v14316 = vrot.slane %v13851, %v14315
  %v14317 = vsel %vm14225, %v14316, %v14312
  %v14318 = vlaneseq
  %v14319 = vshrl.u32 %v14318, 7
  %v14320 = vsub.s32 %v14227, %v14319
  %v14321 = vrot.slane %v13854, %v14320
  %v14322 = vsel %vm14232, %v14321, %v14317
  %v14323 = vlaneseq
  %v14324 = vshrl.u32 %v14323, 7
  %v14325 = vsub.s32 %v14234, %v14324
  %v14326 = vrot.slane %v13857, %v14325
  %v14327 = vsel %vm14239, %v14326, %v14322
  %v14328 = vlaneseq
  %v14329 = vshrl.u32 %v14328, 7
  %v14330 = vsub.s32 %v14241, %v14329
  %v14331 = vrot.slane %v13860, %v14330
  %v14332 = vsel %vm14246, %v14331, %v14327
  %v14333 = vlaneseq
  %v14334 = vshrl.u32 %v14333, 7
  %v14335 = vsub.s32 %v14248, %v14334
  %v14336 = vrot.slane %v13863, %v14335
  %v14337 = vsel %vm14253, %v14336, %v14332
  %v14338 = vlaneseq
  %v14339 = vshrl.u32 %v14338, 7
  %v14340 = vsub.s32 %v14255, %v14339
  %v14341 = vrot.slane %v13866, %v14340
  %v14342 = vsel %vm14260, %v14341, %v14337
  %v14343 = vlaneseq
  %v14344 = vshrl.u32 %v14343, 7
  %v14345 = vsub.s32 %v14262, %v14344
  %v14346 = vrot.slane %v13869, %v14345
  %v14347 = vsel %vm14267, %v14346, %v14342
  %v14348 = vlaneseq
  %v14349 = vshrl.u32 %v14348, 7
  %v14350 = vsub.s32 %v14159, %v14349
  %v14351 = vrot.slane %v13872, %v14350
  %v14352 = vlaneseq
  %v14353 = vshrl.u32 %v14352, 7
  %v14354 = vsub.s32 %v14164, %v14353
  %v14355 = vrot.slane %v13875, %v14354
  %v14356 = vsel %vm14169, %v14355, %v14351
  %v14357 = vlaneseq
  %v14358 = vshrl.u32 %v14357, 7
  %v14359 = vsub.s32 %v14171, %v14358
  %v14360 = vrot.slane %v13878, %v14359
  %v14361 = vsel %vm14176, %v14360, %v14356
  %v14362 = vlaneseq
  %v14363 = vshrl.u32 %v14362, 7
  %v14364 = vsub.s32 %v14178, %v14363
  %v14365 = vrot.slane %v13881, %v14364
  %v14366 = vsel %vm14183, %v14365, %v14361
  %v14367 = vlaneseq
  %v14368 = vshrl.u32 %v14367, 7
  %v14369 = vsub.s32 %v14185, %v14368
  %v14370 = vrot.slane %v13884, %v14369
  %v14371 = vsel %vm14190, %v14370, %v14366
  %v14372 = vlaneseq
  %v14373 = vshrl.u32 %v14372, 7
  %v14374 = vsub.s32 %v14192, %v14373
  %v14375 = vrot.slane %v13887, %v14374
  %v14376 = vsel %vm14197, %v14375, %v14371
  %v14377 = vlaneseq
  %v14378 = vshrl.u32 %v14377, 7
  %v14379 = vsub.s32 %v14199, %v14378
  %v14380 = vrot.slane %v13890, %v14379
  %v14381 = vsel %vm14204, %v14380, %v14376
  %v14382 = vlaneseq
  %v14383 = vshrl.u32 %v14382, 7
  %v14384 = vsub.s32 %v14206, %v14383
  %v14385 = vrot.slane %v13893, %v14384
  %v14386 = vsel %vm14211, %v14385, %v14381
  %v14387 = vlaneseq
  %v14388 = vshrl.u32 %v14387, 7
  %v14389 = vsub.s32 %v14213, %v14388
  %v14390 = vrot.slane %v13896, %v14389
  %v14391 = vsel %vm14218, %v14390, %v14386
  %v14392 = vlaneseq
  %v14393 = vshrl.u32 %v14392, 7
  %v14394 = vsub.s32 %v14220, %v14393
  %v14395 = vrot.slane %v13899, %v14394
  %v14396 = vsel %vm14225, %v14395, %v14391
  %v14397 = vlaneseq
  %v14398 = vshrl.u32 %v14397, 7
  %v14399 = vsub.s32 %v14227, %v14398
  %v14400 = vrot.slane %v13902, %v14399
  %v14401 = vsel %vm14232, %v14400, %v14396
  %v14402 = vlaneseq
  %v14403 = vshrl.u32 %v14402, 7
  %v14404 = vsub.s32 %v14234, %v14403
  %v14405 = vrot.slane %v13905, %v14404
  %v14406 = vsel %vm14239, %v14405, %v14401
  %v14407 = vlaneseq
  %v14408 = vshrl.u32 %v14407, 7
  %v14409 = vsub.s32 %v14241, %v14408
  %v14410 = vrot.slane %v13908, %v14409
  %v14411 = vsel %vm14246, %v14410, %v14406
  %v14412 = vlaneseq
  %v14413 = vshrl.u32 %v14412, 7
  %v14414 = vsub.s32 %v14248, %v14413
  %v14415 = vrot.slane %v13911, %v14414
  %v14416 = vsel %vm14253, %v14415, %v14411
  %v14417 = vlaneseq
  %v14418 = vshrl.u32 %v14417, 7
  %v14419 = vsub.s32 %v14255, %v14418
  %v14420 = vrot.slane %v13914, %v14419
  %v14421 = vsel %vm14260, %v14420, %v14416
  %v14422 = vlaneseq
  %v14423 = vshrl.u32 %v14422, 7
  %v14424 = vsub.s32 %v14262, %v14423
  %v14425 = vrot.slane %v13917, %v14424
  %v14426 = vsel %vm14267, %v14425, %v14421
  %v14427 = vlaneseq
  %v14428 = vshrl.u32 %v14427, 7
  %v14429 = vsub.s32 %v14159, %v14428
  %v14430 = vrot.slane %v13920, %v14429
  %v14431 = vlaneseq
  %v14432 = vshrl.u32 %v14431, 7
  %v14433 = vsub.s32 %v14164, %v14432
  %v14434 = vrot.slane %v13923, %v14433
  %v14435 = vsel %vm14169, %v14434, %v14430
  %v14436 = vlaneseq
  %v14437 = vshrl.u32 %v14436, 7
  %v14438 = vsub.s32 %v14171, %v14437
  %v14439 = vrot.slane %v13926, %v14438
  %v14440 = vsel %vm14176, %v14439, %v14435
  %v14441 = vlaneseq
  %v14442 = vshrl.u32 %v14441, 7
  %v14443 = vsub.s32 %v14178, %v14442
  %v14444 = vrot.slane %v13929, %v14443
  %v14445 = vsel %vm14183, %v14444, %v14440
  %v14446 = vlaneseq
  %v14447 = vshrl.u32 %v14446, 7
  %v14448 = vsub.s32 %v14185, %v14447
  %v14449 = vrot.slane %v13932, %v14448
  %v14450 = vsel %vm14190, %v14449, %v14445
  %v14451 = vlaneseq
  %v14452 = vshrl.u32 %v14451, 7
  %v14453 = vsub.s32 %v14192, %v14452
  %v14454 = vrot.slane %v13935, %v14453
  %v14455 = vsel %vm14197, %v14454, %v14450
  %v14456 = vlaneseq
  %v14457 = vshrl.u32 %v14456, 7
  %v14458 = vsub.s32 %v14199, %v14457
  %v14459 = vrot.slane %v13938, %v14458
  %v14460 = vsel %vm14204, %v14459, %v14455
  %v14461 = vlaneseq
  %v14462 = vshrl.u32 %v14461, 7
  %v14463 = vsub.s32 %v14206, %v14462
  %v14464 = vrot.slane %v13941, %v14463
  %v14465 = vsel %vm14211, %v14464, %v14460
  %v14466 = vlaneseq
  %v14467 = vshrl.u32 %v14466, 7
  %v14468 = vsub.s32 %v14213, %v14467
  %v14469 = vrot.slane %v13944, %v14468
  %v14470 = vsel %vm14218, %v14469, %v14465
  %v14471 = vlaneseq
  %v14472 = vshrl.u32 %v14471, 7
  %v14473 = vsub.s32 %v14220, %v14472
  %v14474 = vrot.slane %v13947, %v14473
  %v14475 = vsel %vm14225, %v14474, %v14470
  %v14476 = vlaneseq
  %v14477 = vshrl.u32 %v14476, 7
  %v14478 = vsub.s32 %v14227, %v14477
  %v14479 = vrot.slane %v13950, %v14478
  %v14480 = vsel %vm14232, %v14479, %v14475
  %v14481 = vlaneseq
  %v14482 = vshrl.u32 %v14481, 7
  %v14483 = vsub.s32 %v14234, %v14482
  %v14484 = vrot.slane %v13953, %v14483
  %v14485 = vsel %vm14239, %v14484, %v14480
  %v14486 = vlaneseq
  %v14487 = vshrl.u32 %v14486, 7
  %v14488 = vsub.s32 %v14241, %v14487
  %v14489 = vrot.slane %v13956, %v14488
  %v14490 = vsel %vm14246, %v14489, %v14485
  %v14491 = vlaneseq
  %v14492 = vshrl.u32 %v14491, 7
  %v14493 = vsub.s32 %v14248, %v14492
  %v14494 = vrot.slane %v13959, %v14493
  %v14495 = vsel %vm14253, %v14494, %v14490
  %v14496 = vlaneseq
  %v14497 = vshrl.u32 %v14496, 7
  %v14498 = vsub.s32 %v14255, %v14497
  %v14499 = vrot.slane %v13962, %v14498
  %v14500 = vsel %vm14260, %v14499, %v14495
  %v14501 = vlaneseq
  %v14502 = vshrl.u32 %v14501, 7
  %v14503 = vsub.s32 %v14262, %v14502
  %v14504 = vrot.slane %v13965, %v14503
  %v14505 = vsel %vm14267, %v14504, %v14500
  %v14506 = vlaneseq
  %v14507 = vshrl.u32 %v14506, 7
  %v14508 = vsub.s32 %v14159, %v14507
  %v14509 = vrot.slane %v13968, %v14508
  %v14510 = vlaneseq
  %v14511 = vshrl.u32 %v14510, 7
  %v14512 = vsub.s32 %v14164, %v14511
  %v14513 = vrot.slane %v13971, %v14512
  %v14514 = vsel %vm14169, %v14513, %v14509
  %v14515 = vlaneseq
  %v14516 = vshrl.u32 %v14515, 7
  %v14517 = vsub.s32 %v14171, %v14516
  %v14518 = vrot.slane %v13974, %v14517
  %v14519 = vsel %vm14176, %v14518, %v14514
  %v14520 = vlaneseq
  %v14521 = vshrl.u32 %v14520, 7
  %v14522 = vsub.s32 %v14178, %v14521
  %v14523 = vrot.slane %v13977, %v14522
  %v14524 = vsel %vm14183, %v14523, %v14519
  %v14525 = vlaneseq
  %v14526 = vshrl.u32 %v14525, 7
  %v14527 = vsub.s32 %v14185, %v14526
  %v14528 = vrot.slane %v13980, %v14527
  %v14529 = vsel %vm14190, %v14528, %v14524
  %v14530 = vlaneseq
  %v14531 = vshrl.u32 %v14530, 7
  %v14532 = vsub.s32 %v14192, %v14531
  %v14533 = vrot.slane %v13983, %v14532
  %v14534 = vsel %vm14197, %v14533, %v14529
  %v14535 = vlaneseq
  %v14536 = vshrl.u32 %v14535, 7
  %v14537 = vsub.s32 %v14199, %v14536
  %v14538 = vrot.slane %v13986, %v14537
  %v14539 = vsel %vm14204, %v14538, %v14534
  %v14540 = vlaneseq
  %v14541 = vshrl.u32 %v14540, 7
  %v14542 = vsub.s32 %v14206, %v14541
  %v14543 = vrot.slane %v13989, %v14542
  %v14544 = vsel %vm14211, %v14543, %v14539
  %v14545 = vlaneseq
  %v14546 = vshrl.u32 %v14545, 7
  %v14547 = vsub.s32 %v14213, %v14546
  %v14548 = vrot.slane %v13992, %v14547
  %v14549 = vsel %vm14218, %v14548, %v14544
  %v14550 = vlaneseq
  %v14551 = vshrl.u32 %v14550, 7
  %v14552 = vsub.s32 %v14220, %v14551
  %v14553 = vrot.slane %v13995, %v14552
  %v14554 = vsel %vm14225, %v14553, %v14549
  %v14555 = vlaneseq
  %v14556 = vshrl.u32 %v14555, 7
  %v14557 = vsub.s32 %v14227, %v14556
  %v14558 = vrot.slane %v13998, %v14557
  %v14559 = vsel %vm14232, %v14558, %v14554
  %v14560 = vlaneseq
  %v14561 = vshrl.u32 %v14560, 7
  %v14562 = vsub.s32 %v14234, %v14561
  %v14563 = vrot.slane %v14001, %v14562
  %v14564 = vsel %vm14239, %v14563, %v14559
  %v14565 = vlaneseq
  %v14566 = vshrl.u32 %v14565, 7
  %v14567 = vsub.s32 %v14241, %v14566
  %v14568 = vrot.slane %v14004, %v14567
  %v14569 = vsel %vm14246, %v14568, %v14564
  %v14570 = vlaneseq
  %v14571 = vshrl.u32 %v14570, 7
  %v14572 = vsub.s32 %v14248, %v14571
  %v14573 = vrot.slane %v14007, %v14572
  %v14574 = vsel %vm14253, %v14573, %v14569
  %v14575 = vlaneseq
  %v14576 = vshrl.u32 %v14575, 7
  %v14577 = vsub.s32 %v14255, %v14576
  %v14578 = vrot.slane %v14010, %v14577
  %v14579 = vsel %vm14260, %v14578, %v14574
  %v14580 = vlaneseq
  %v14581 = vshrl.u32 %v14580, 7
  %v14582 = vsub.s32 %v14262, %v14581
  %v14583 = vrot.slane %v14013, %v14582
  %v14584 = vsel %vm14267, %v14583, %v14579
  %v14585 = vlaneseq
  %v14586 = vshrl.u32 %v14585, 7
  %v14587 = vsub.s32 %v14159, %v14586
  %v14588 = vrot.slane %v14016, %v14587
  %v14589 = vlaneseq
  %v14590 = vshrl.u32 %v14589, 7
  %v14591 = vsub.s32 %v14164, %v14590
  %v14592 = vrot.slane %v14019, %v14591
  %v14593 = vsel %vm14169, %v14592, %v14588
  %v14594 = vlaneseq
  %v14595 = vshrl.u32 %v14594, 7
  %v14596 = vsub.s32 %v14171, %v14595
  %v14597 = vrot.slane %v14022, %v14596
  %v14598 = vsel %vm14176, %v14597, %v14593
  %v14599 = vlaneseq
  %v14600 = vshrl.u32 %v14599, 7
  %v14601 = vsub.s32 %v14178, %v14600
  %v14602 = vrot.slane %v14025, %v14601
  %v14603 = vsel %vm14183, %v14602, %v14598
  %v14604 = vlaneseq
  %v14605 = vshrl.u32 %v14604, 7
  %v14606 = vsub.s32 %v14185, %v14605
  %v14607 = vrot.slane %v14028, %v14606
  %v14608 = vsel %vm14190, %v14607, %v14603
  %v14609 = vlaneseq
  %v14610 = vshrl.u32 %v14609, 7
  %v14611 = vsub.s32 %v14192, %v14610
  %v14612 = vrot.slane %v14031, %v14611
  %v14613 = vsel %vm14197, %v14612, %v14608
  %v14614 = vlaneseq
  %v14615 = vshrl.u32 %v14614, 7
  %v14616 = vsub.s32 %v14199, %v14615
  %v14617 = vrot.slane %v14034, %v14616
  %v14618 = vsel %vm14204, %v14617, %v14613
  %v14619 = vlaneseq
  %v14620 = vshrl.u32 %v14619, 7
  %v14621 = vsub.s32 %v14206, %v14620
  %v14622 = vrot.slane %v14037, %v14621
  %v14623 = vsel %vm14211, %v14622, %v14618
  %v14624 = vlaneseq
  %v14625 = vshrl.u32 %v14624, 7
  %v14626 = vsub.s32 %v14213, %v14625
  %v14627 = vrot.slane %v14040, %v14626
  %v14628 = vsel %vm14218, %v14627, %v14623
  %v14629 = vlaneseq
  %v14630 = vshrl.u32 %v14629, 7
  %v14631 = vsub.s32 %v14220, %v14630
  %v14632 = vrot.slane %v14043, %v14631
  %v14633 = vsel %vm14225, %v14632, %v14628
  %v14634 = vlaneseq
  %v14635 = vshrl.u32 %v14634, 7
  %v14636 = vsub.s32 %v14227, %v14635
  %v14637 = vrot.slane %v14046, %v14636
  %v14638 = vsel %vm14232, %v14637, %v14633
  %v14639 = vlaneseq
  %v14640 = vshrl.u32 %v14639, 7
  %v14641 = vsub.s32 %v14234, %v14640
  %v14642 = vrot.slane %v14049, %v14641
  %v14643 = vsel %vm14239, %v14642, %v14638
  %v14644 = vlaneseq
  %v14645 = vshrl.u32 %v14644, 7
  %v14646 = vsub.s32 %v14241, %v14645
  %v14647 = vrot.slane %v14052, %v14646
  %v14648 = vsel %vm14246, %v14647, %v14643
  %v14649 = vlaneseq
  %v14650 = vshrl.u32 %v14649, 7
  %v14651 = vsub.s32 %v14248, %v14650
  %v14652 = vrot.slane %v14055, %v14651
  %v14653 = vsel %vm14253, %v14652, %v14648
  %v14654 = vlaneseq
  %v14655 = vshrl.u32 %v14654, 7
  %v14656 = vsub.s32 %v14255, %v14655
  %v14657 = vrot.slane %v14058, %v14656
  %v14658 = vsel %vm14260, %v14657, %v14653
  %v14659 = vlaneseq
  %v14660 = vshrl.u32 %v14659, 7
  %v14661 = vsub.s32 %v14262, %v14660
  %v14662 = vrot.slane %v14061, %v14661
  %v14663 = vsel %vm14267, %v14662, %v14658
  %v14664 = vlaneseq
  %v14665 = vshrl.u32 %v14664, 7
  %v14666 = vsub.s32 %v14159, %v14665
  %v14667 = vrot.slane %v14064, %v14666
  %v14668 = vlaneseq
  %v14669 = vshrl.u32 %v14668, 7
  %v14670 = vsub.s32 %v14164, %v14669
  %v14671 = vrot.slane %v14067, %v14670
  %v14672 = vsel %vm14169, %v14671, %v14667
  %v14673 = vlaneseq
  %v14674 = vshrl.u32 %v14673, 7
  %v14675 = vsub.s32 %v14171, %v14674
  %v14676 = vrot.slane %v14070, %v14675
  %v14677 = vsel %vm14176, %v14676, %v14672
  %v14678 = vlaneseq
  %v14679 = vshrl.u32 %v14678, 7
  %v14680 = vsub.s32 %v14178, %v14679
  %v14681 = vrot.slane %v14073, %v14680
  %v14682 = vsel %vm14183, %v14681, %v14677
  %v14683 = vlaneseq
  %v14684 = vshrl.u32 %v14683, 7
  %v14685 = vsub.s32 %v14185, %v14684
  %v14686 = vrot.slane %v14076, %v14685
  %v14687 = vsel %vm14190, %v14686, %v14682
  %v14688 = vlaneseq
  %v14689 = vshrl.u32 %v14688, 7
  %v14690 = vsub.s32 %v14192, %v14689
  %v14691 = vrot.slane %v14079, %v14690
  %v14692 = vsel %vm14197, %v14691, %v14687
  %v14693 = vlaneseq
  %v14694 = vshrl.u32 %v14693, 7
  %v14695 = vsub.s32 %v14199, %v14694
  %v14696 = vrot.slane %v14082, %v14695
  %v14697 = vsel %vm14204, %v14696, %v14692
  %v14698 = vlaneseq
  %v14699 = vshrl.u32 %v14698, 7
  %v14700 = vsub.s32 %v14206, %v14699
  %v14701 = vrot.slane %v14085, %v14700
  %v14702 = vsel %vm14211, %v14701, %v14697
  %v14703 = vlaneseq
  %v14704 = vshrl.u32 %v14703, 7
  %v14705 = vsub.s32 %v14213, %v14704
  %v14706 = vrot.slane %v14088, %v14705
  %v14707 = vsel %vm14218, %v14706, %v14702
  %v14708 = vlaneseq
  %v14709 = vshrl.u32 %v14708, 7
  %v14710 = vsub.s32 %v14220, %v14709
  %v14711 = vrot.slane %v14091, %v14710
  %v14712 = vsel %vm14225, %v14711, %v14707
  %v14713 = vlaneseq
  %v14714 = vshrl.u32 %v14713, 7
  %v14715 = vsub.s32 %v14227, %v14714
  %v14716 = vrot.slane %v14094, %v14715
  %v14717 = vsel %vm14232, %v14716, %v14712
  %v14718 = vlaneseq
  %v14719 = vshrl.u32 %v14718, 7
  %v14720 = vsub.s32 %v14234, %v14719
  %v14721 = vrot.slane %v14097, %v14720
  %v14722 = vsel %vm14239, %v14721, %v14717
  %v14723 = vlaneseq
  %v14724 = vshrl.u32 %v14723, 7
  %v14725 = vsub.s32 %v14241, %v14724
  %v14726 = vrot.slane %v14100, %v14725
  %v14727 = vsel %vm14246, %v14726, %v14722
  %v14728 = vlaneseq
  %v14729 = vshrl.u32 %v14728, 7
  %v14730 = vsub.s32 %v14248, %v14729
  %v14731 = vrot.slane %v14103, %v14730
  %v14732 = vsel %vm14253, %v14731, %v14727
  %v14733 = vlaneseq
  %v14734 = vshrl.u32 %v14733, 7
  %v14735 = vsub.s32 %v14255, %v14734
  %v14736 = vrot.slane %v14106, %v14735
  %v14737 = vsel %vm14260, %v14736, %v14732
  %v14738 = vlaneseq
  %v14739 = vshrl.u32 %v14738, 7
  %v14740 = vsub.s32 %v14262, %v14739
  %v14741 = vrot.slane %v14109, %v14740
  %v14742 = vsel %vm14267, %v14741, %v14737
  %v14743 = vlaneseq
  %v14744 = vshrl.u32 %v14743, 7
  %v14745 = vsub.s32 %v14159, %v14744
  %v14746 = vrot.slane %v14112, %v14745
  %v14747 = vlaneseq
  %v14748 = vshrl.u32 %v14747, 7
  %v14749 = vsub.s32 %v14164, %v14748
  %v14750 = vrot.slane %v14115, %v14749
  %v14751 = vsel %vm14169, %v14750, %v14746
  %v14752 = vlaneseq
  %v14753 = vshrl.u32 %v14752, 7
  %v14754 = vsub.s32 %v14171, %v14753
  %v14755 = vrot.slane %v14118, %v14754
  %v14756 = vsel %vm14176, %v14755, %v14751
  %v14757 = vlaneseq
  %v14758 = vshrl.u32 %v14757, 7
  %v14759 = vsub.s32 %v14178, %v14758
  %v14760 = vrot.slane %v14121, %v14759
  %v14761 = vsel %vm14183, %v14760, %v14756
  %v14762 = vlaneseq
  %v14763 = vshrl.u32 %v14762, 7
  %v14764 = vsub.s32 %v14185, %v14763
  %v14765 = vrot.slane %v14124, %v14764
  %v14766 = vsel %vm14190, %v14765, %v14761
  %v14767 = vlaneseq
  %v14768 = vshrl.u32 %v14767, 7
  %v14769 = vsub.s32 %v14192, %v14768
  %v14770 = vrot.slane %v14127, %v14769
  %v14771 = vsel %vm14197, %v14770, %v14766
  %v14772 = vlaneseq
  %v14773 = vshrl.u32 %v14772, 7
  %v14774 = vsub.s32 %v14199, %v14773
  %v14775 = vrot.slane %v14130, %v14774
  %v14776 = vsel %vm14204, %v14775, %v14771
  %v14777 = vlaneseq
  %v14778 = vshrl.u32 %v14777, 7
  %v14779 = vsub.s32 %v14206, %v14778
  %v14780 = vrot.slane %v14133, %v14779
  %v14781 = vsel %vm14211, %v14780, %v14776
  %v14782 = vlaneseq
  %v14783 = vshrl.u32 %v14782, 7
  %v14784 = vsub.s32 %v14213, %v14783
  %v14785 = vrot.slane %v14136, %v14784
  %v14786 = vsel %vm14218, %v14785, %v14781
  %v14787 = vlaneseq
  %v14788 = vshrl.u32 %v14787, 7
  %v14789 = vsub.s32 %v14220, %v14788
  %v14790 = vrot.slane %v14139, %v14789
  %v14791 = vsel %vm14225, %v14790, %v14786
  %v14792 = vlaneseq
  %v14793 = vshrl.u32 %v14792, 7
  %v14794 = vsub.s32 %v14227, %v14793
  %v14795 = vrot.slane %v14142, %v14794
  %v14796 = vsel %vm14232, %v14795, %v14791
  %v14797 = vlaneseq
  %v14798 = vshrl.u32 %v14797, 7
  %v14799 = vsub.s32 %v14234, %v14798
  %v14800 = vrot.slane %v14145, %v14799
  %v14801 = vsel %vm14239, %v14800, %v14796
  %v14802 = vlaneseq
  %v14803 = vshrl.u32 %v14802, 7
  %v14804 = vsub.s32 %v14241, %v14803
  %v14805 = vrot.slane %v14148, %v14804
  %v14806 = vsel %vm14246, %v14805, %v14801
  %v14807 = vlaneseq
  %v14808 = vshrl.u32 %v14807, 7
  %v14809 = vsub.s32 %v14248, %v14808
  %v14810 = vrot.slane %v14151, %v14809
  %v14811 = vsel %vm14253, %v14810, %v14806
  %v14812 = vlaneseq
  %v14813 = vshrl.u32 %v14812, 7
  %v14814 = vsub.s32 %v14255, %v14813
  %v14815 = vrot.slane %v14154, %v14814
  %v14816 = vsel %vm14260, %v14815, %v14811
  %v14817 = vlaneseq
  %v14818 = vshrl.u32 %v14817, 7
  %v14819 = vsub.s32 %v14262, %v14818
  %v14820 = vrot.slane %v14157, %v14819
  %v14821 = vsel %vm14267, %v14820, %v14816
  %v14822 = vcombine.low %v14268, %v14347
  %v14823 = vcombine.low %v14426, %v14505
  %v14824 = vcombine.low %v14584, %v14663
  %v14825 = vcombine.low %v14742, %v14821
  %v14827 = vunpack.c.l.s4 1966171168
  %v14828 = vunpack.c.0.s8 %v14827
  %v14829 = vlaneseq
  %v14830 = vshrl.u32 %v14829, 7
  %v14831 = vsub.s32 %v14828, %v14830
  %v14832 = vrot.slane %v14822, %v14831
  %v14834 = vunpack.c.l.s4 1966171168
  %v14835 = vunpack.c.0.s8 %v14834
  %v14836 = vlaneseq
  %v14837 = vshrl.u32 %v14836, 7
  %v14838 = vsub.s32 %v14835, %v14837
  %v14839 = vrot.slane %v14823, %v14838
  %v14841 = vunpack.c.l.s4 1966171168
  %v14842 = vunpack.c.0.s8 %v14841
  %v14843 = vlaneseq
  %v14844 = vshrl.u32 %v14843, 7
  %v14845 = vsub.s32 %v14842, %v14844
  %v14846 = vrot.slane %v14824, %v14845
  %v14848 = vunpack.c.l.s4 1966171168
  %v14849 = vunpack.c.0.s8 %v14848
  %v14850 = vlaneseq
  %v14851 = vshrl.u32 %v14850, 7
  %v14852 = vsub.s32 %v14849, %v14851
  %v14853 = vrot.slane %v14825, %v14852
  %v14854 = vcombine.low %v14832, %v14839
  %v14855 = vcombine.low %v14846, %v14853
  %v14857 = vunpack.c.l.s4 1966171168
  %v14858 = vunpack.c.0.s8 %v14857
  %v14859 = vlaneseq
  %v14860 = vshrl.u32 %v14859, 7
  %v14861 = vsub.s32 %v14858, %v14860
  %v14862 = vrot.slane %v14854, %v14861
  %v14864 = vunpack.c.l.s4 1966171168
  %v14865 = vunpack.c.0.s8 %v14864
  %v14866 = vlaneseq
  %v14867 = vshrl.u32 %v14866, 7
  %v14868 = vsub.s32 %v14865, %v14867
  %v14869 = vrot.slane %v14855, %v14868
  %v14870 = vcombine.low %v14862, %v14869
  %14872 = vst [vmem:[%s7] sm:$0xff] %v14870
  // Predicated region
  $region30: #{wind_speed_predictor.1} parent=0 // pred_check
    _
  $region31: #{wind_speed_predictor.1} parent=0 // pred_check_branch
    %14874 = sbr.rel (0) target = $region33
  $region32: #{wind_speed_predictor.1} parent=0 // pred_region
    _
  $region33: #{wind_speed_predictor.1} parent=0 // pred_fallthru
    _
  // Predicated region
  $region34: #{wind_speed_predictor.1} parent=0 // pred_check
    _
  $region35: #{wind_speed_predictor.1} parent=0 // pred_check_branch
    %14876 = sbr.rel (0) target = $region37
  $region36: #{wind_speed_predictor.1} parent=0 // pred_region
    _
  $region37: #{wind_speed_predictor.1} parent=0 // pred_fallthru
    _

</llo_original>
